<compile_context>
chip_gen: v6e
topology: v6e:2x2x1
jax: 0.10.0
libtpu: 0.0.40
codegen_flags: <defaults>
</compile_context>

<pallas_src>
import functools

import numpy as np
import jax
import jax.numpy as jnp
from jax.experimental import pallas as pl
from jax.experimental.pallas import tpu as pltpu

PAD = 2  # module-level `padding = (2, 2)`


# ---------------------------------------------------------------------------
# Host-side operator construction (run ONCE per weight set / input size)
# ---------------------------------------------------------------------------
def _build_col_weight(w_oihw, W, Wo, stride, pad):
    """G[kh, w*Cin+ci, j*Cout+co] = w[co, ci, kh, kw] with kw = w - stride*j + pad.

    Width padding is folded in by omission (zero-padded taps contribute nothing).
    """
    Cout, Cin, K, _ = w_oihw.shape
    G = np.zeros((K, W * Cin, Wo * Cout), np.float32)
    for kh in range(K):
        for j in range(Wo):
            for kw in range(K):
                wcol = stride * j + kw - pad
                if 0 <= wcol < W:
                    G[kh, wcol * Cin:(wcol + 1) * Cin,
                      j * Cout:(j + 1) * Cout] = w_oihw[:, :, kh, kw].T
    return G


def _bn_tiles(bn, width, fold_bias=None, eps=1e-5):
    """Eval-mode BN affine (scale, shift) tiled over width; optionally fold the
    preceding conv bias into the shift (shift += scale * bias)."""
    gamma, beta, mean, var = (np.asarray(t, np.float32) for t in bn)
    scale = gamma / np.sqrt(var + eps)
    shift = beta - mean * scale
    scale_t = np.tile(scale, width)
    shift_t = np.tile(shift, width)
    if fold_bias is not None:
        shift_t = shift_t + scale_t * np.tile(np.asarray(fold_bias, np.float32), width)
    return jnp.asarray(np.stack([scale_t, shift_t]))


def prepare_down_ops(p, H, W):
    """Build all conv/BN operators once, host-side (hoisted out of the forward)."""
    w1 = np.asarray(p['mp_w1'])
    K = int(w1.shape[2])
    Wo1 = W + 2 * PAD - K + 1             # stride-1 width
    Wo2 = (W + 2 * PAD - K) // 2 + 1      # stride-2 width
    bf16 = jnp.bfloat16

    by = (np.tile(np.asarray(p['mp_b2'], np.float32), Wo2)
          + np.tile(np.asarray(p['sc_b'], np.float32), Wo2))
    b4 = np.tile(np.asarray(p['in_b2'], np.float32), Wo2)

    ops = {
        # bf16 conv operators (MXU-native; halves weight HBM/VMEM bytes)
        'G1': jnp.asarray(_build_col_weight(np.asarray(p['mp_w1']), W,   Wo1, 1, PAD), bf16),
        'G2': jnp.asarray(_build_col_weight(np.asarray(p['mp_w2']), Wo1, Wo2, 2, PAD), bf16),
        'Gs': jnp.asarray(_build_col_weight(np.asarray(p['sc_w']),  W,   Wo2, 2, PAD), bf16),
        'G3': jnp.asarray(_build_col_weight(np.asarray(p['in_w1']), Wo2, Wo2, 1, PAD), bf16),
        'G4': jnp.asarray(_build_col_weight(np.asarray(p['in_w2']), Wo2, Wo2, 1, PAD), bf16),
        # f32 BN affine tiles; conv1/conv3 biases folded into the next BN's shift
        'bn1': _bn_tiles(p['mp_bn1'], W),
        'bn2': _bn_tiles(p['mp_bn2'], Wo1, fold_bias=p['mp_b1']),
        'bn3': _bn_tiles(p['in_bn1'], Wo2),
        'bn4': _bn_tiles(p['in_bn2'], Wo2, fold_bias=p['in_b1']),
        # remaining biases (y and x3 are used directly, so these cannot be folded)
        'by': jnp.asarray(by[None, :]),
        'b4': jnp.asarray(b4[None, :]),
    }
    return ops


# ---------------------------------------------------------------------------
# Fused Pallas kernel: whole `down` block, NB batch images per grid step
# ---------------------------------------------------------------------------
def _make_down_kernel(*, NB, Kk, PIx, PIa, Hpy, Hh, Ho1h, Ho, WCin, WCa, WCy):
    """PIx/PIa: per-image even/odd phase band rows of the padded x / padded a,
    Hpy: per-image padded-y rows, Hh=H//2, Ho1h=Ho1//2, Ho: output rows."""
    f32, bf16 = jnp.float32, jnp.bfloat16
    moff = Kk // 2        # max phase-row offset over the Kk taps
    p2 = PAD // 2         # interior start index inside each phase band

    def kernel(xpe_ref, xpo_ref, bn1_ref, bn2_ref, bn3_ref, bn4_ref,
               g1_ref, g2_ref, gs_ref, g3_ref, g4_ref, by_ref, b4_ref,
               o_ref, xqe, xqo, ape, apo, ypd, tpd):

        # Zero the padded scratch every step (pad rows must be 0; re-zeroing the
        # small buffers is cheaper/safer than scattered per-row pad stores and
        # does not rely on a program_id==0 init, which would break when the
        # "parallel" grid axis is split across TensorCores).
        for r in (xqe, xqo, ape, apo, ypd, tpd):
            r[...] = jnp.zeros(r.shape, r.dtype)

        def bn_relu(v, bn_ref):
            return jnp.maximum(v * bn_ref[0:1, :] + bn_ref[1:2, :], 0.0)

        def conv_phased(ev, od, g_ref, m, q):
            # out[r] = sum_kh phase[(q+kh)&1][r + (q+kh)//2] @ g[kh]
            # q=0/1 -> even/odd output rows of a stride-1 conv over the phase-split
            # padded input; q=0 is also exactly the stride-2 conv read pattern.
            # All LHS slices are contiguous (no strided sublane loads);
            # operands are cast to bf16 for the MXU, accumulation is f32.
            acc = None
            for kh in range(Kk):
                src = ev if ((q + kh) & 1) == 0 else od
                off = (q + kh) // 2
                lhs = src[off:off + m, :].astype(bf16)
                d = jnp.dot(lhs, g_ref[kh], preferred_element_type=f32)
                acc = d if acc is None else acc + d
            return acc

        def conv_rows(src, g_ref, m):
            acc = None
            for kh in range(Kk):
                lhs = src[kh:kh + m, :].astype(bf16)
                d = jnp.dot(lhs, g_ref[kh], preferred_element_type=f32)
                acc = d if acc is None else acc + d
            return acc

        # ---------- mpconv stage 1 input: BN1 -> ReLU, stored phase-split ----------
        for b in range(NB):
            s0 = b * PIx + p2
            xqe[s0:s0 + Hh, :] = bn_relu(xpe_ref[s0:s0 + Hh, :].astype(f32), bn1_ref)
            xqo[s0:s0 + Hh, :] = bn_relu(xpo_ref[s0:s0 + Hh, :].astype(f32), bn1_ref)

        # ---------- mpconv conv1 (s=1): even/odd output-row phases, M spans NB imgs
        m1 = NB * PIx - moff
        a_ev = conv_phased(xqe, xqo, g1_ref, m1, 0)   # row b*PIx+s  ->  a[2s]   of img b
        a_od = conv_phased(xqe, xqo, g1_ref, m1, 1)   # row b*PIx+s  ->  a[2s+1] of img b

        # BN2 -> ReLU (conv1 bias folded into the BN2 shift), re-pad phase-split
        aq_ev = bn_relu(a_ev, bn2_ref)
        aq_od = bn_relu(a_od, bn2_ref)
        for b in range(NB):
            r0, w0 = b * PIx, b * PIa + p2
            ape[w0:w0 + Ho1h, :] = aq_ev[r0:r0 + Ho1h, :]
            apo[w0:w0 + Ho1h, :] = aq_od[r0:r0 + Ho1h, :]

        # ---------- mpconv conv2 (s=2) + skip conv (s=2): contiguous phase reads ----
        y2 = conv_phased(ape, apo, g2_ref, NB * PIa - moff, 0)
        ys = conv_phased(xpe_ref, xpo_ref, gs_ref, NB * PIx - moff, 0)

        y_imgs = []
        for b in range(NB):
            y_b = (y2[b * PIa:b * PIa + Ho, :]
                   + ys[b * PIx:b * PIx + Ho, :]
                   + by_ref[...])                       # b2 + bs pre-summed
            y_imgs.append(y_b)
            # Dropout(p=0.02): identity in eval mode
            ypd[b * Hpy + PAD:b * Hpy + PAD + Ho, :] = bn_relu(y_b, bn3_ref)

        # ---------- inconv conv1 (s=1); conv bias folded into BN4 shift ----------
        m3 = NB * Hpy - (Kk - 1)
        t_full = conv_rows(ypd, g3_ref, m3)
        tq = bn_relu(t_full, bn4_ref)
        for b in range(NB):
            tpd[b * Hpy + PAD:b * Hpy + PAD + Ho, :] = tq[b * Hpy:b * Hpy + Ho, :]

        # ---------- inconv conv2 (s=1) + final residual; lane-dense store ----------
        x3_full = conv_rows(tpd, g4_ref, m3)
        outs = [y_imgs[b] + x3_full[b * Hpy:b * Hpy + Ho, :] + b4_ref[...]
                for b in range(NB)]
        # Dropout(p=0.02): identity in eval mode
        o_ref[...] = jnp.concatenate(outs, axis=-1).astype(o_ref.dtype)

    return kernel


# ---------------------------------------------------------------------------
# The `down` module forward (single fused pallas_call, jitted)
# ---------------------------------------------------------------------------
@functools.partial(jax.jit, static_argnames=("nb", "single_buffer_weights"))
def down_forward(x_nchw, ops, *, nb, single_buffer_weights=True):
    N, Cin, H, W = x_nchw.shape
    Kk = int(ops['G1'].shape[0])
    WCin = int(ops['G1'].shape[1])
    WCa = int(ops['G1'].shape[2])
    WCy = int(ops['Gs'].shape[2])
    Wo1 = W + 2 * PAD - Kk + 1
    Wo = (W + 2 * PAD - Kk) // 2 + 1
    Cout = WCy // Wo
    Ho1 = H + 2 * PAD - Kk + 1
    Ho = (H + 2 * PAD - Kk) // 2 + 1
    Hp = H + 2 * PAD               # padded input rows
    Hpa = Ho1 + 2 * PAD            # padded stage-1-output rows
    Hpy = Ho + 2 * PAD             # padded y / t rows

    assert WCin == W * Cin and WCa == Wo1 * (WCa // Wo1)
    assert N % nb == 0 and Hp % 2 == 0 and Hpa % 2 == 0 and Kk <= 2 * PAD + 1
    PIx, PIa = Hp // 2, Hpa // 2   # per-image even/odd phase band rows
    G = N // nb

    # NCHW -> (N, H, W*C) (channels on lanes), zero row-pad, split into even/odd
    # conv-row phases host-side (so the kernel never does strided sublane reads),
    # cast to bf16 (MXU operand dtype; halves input DMA).
    xf = jnp.transpose(x_nchw, (0, 2, 3, 1)).reshape(N, H, WCin)
    xp = jnp.pad(xf, ((0, 0), (PAD, PAD), (0, 0)))
    xpe = xp[:, 0::2, :].astype(jnp.bfloat16).reshape(G, nb * PIx, WCin)
    xpo = xp[:, 1::2, :].astype(jnp.bfloat16).reshape(G, nb * PIx, WCin)

    kernel = _make_down_kernel(NB=nb, Kk=Kk, PIx=PIx, PIa=PIa, Hpy=Hpy,
                               Hh=H // 2, Ho1h=Ho1 // 2, Ho=Ho,
                               WCin=WCin, WCa=WCa, WCy=WCy)

    def const_spec(shape):
        nd = len(shape)

        def idx(g):
            return (0,) * nd

        if single_buffer_weights:
            # grid-invariant operand: fetched once, no double-buffering needed
            return pl.BlockSpec(shape, idx, pipeline_mode=pl.Buffered(1))
        return pl.BlockSpec(shape, idx)

    in_specs = [
        pl.BlockSpec((None, nb * PIx, WCin), lambda g: (g, 0, 0)),   # x even phase
        pl.BlockSpec((None, nb * PIx, WCin), lambda g: (g, 0, 0)),   # x odd phase
        const_spec((2, WCin)),          # bn1 scale/shift
        const_spec((2, WCa)),           # bn2 (+ b1 folded)
        const_spec((2, WCy)),           # bn3
        const_spec((2, WCy)),           # bn4 (+ b3 folded)
        const_spec((Kk, WCin, WCa)),    # G1 (mp conv1)
        const_spec((Kk, WCa, WCy)),     # G2 (mp conv2)
        const_spec((Kk, WCin, WCy)),    # Gs (skip conv)
        const_spec((Kk, WCy, WCy)),     # G3 (in conv1)
        const_spec((Kk, WCy, WCy)),     # G4 (in conv2)
        const_spec((1, WCy)),           # by = b2 + bs
        const_spec((1, WCy)),           # b4
    ]
    out_specs = pl.BlockSpec((None, Ho, nb * WCy), lambda g: (g, 0, 0))
    scratch_shapes = [
        pltpu.VMEM((nb * PIx, WCin), jnp.float32),   # BN1-ReLU'd x, even phase
        pltpu.VMEM((nb * PIx, WCin), jnp.float32),   # BN1-ReLU'd x, odd phase
        pltpu.VMEM((nb * PIa, WCa), jnp.float32),    # BN2-ReLU'd a, even phase
        pltpu.VMEM((nb * PIa, WCa), jnp.float32),    # BN2-ReLU'd a, odd phase
        pltpu.VMEM((nb * Hpy, WCy), jnp.float32),    # BN3-ReLU'd y, padded
        pltpu.VMEM((nb * Hpy, WCy), jnp.float32),    # BN4-ReLU'd t, padded
    ]

    # Explicit VMEM budget: weights (x1 or x2 depending on buffering) +
    # double-buffered x/out blocks + scratch, with generous headroom.
    wbytes = (1 if single_buffer_weights else 2) * sum(
        int(v.size) * v.dtype.itemsize for v in ops.values())
    iobytes = 2 * (2 * nb * PIx * WCin * 2 + Ho * nb * WCy * 4)
    scbytes = 4 * (2 * nb * PIx * WCin + 2 * nb * PIa * WCa + 2 * nb * Hpy * WCy)
    vmem_limit = int(min(64 * 2**20, max(32 * 2**20,
                                         2 * (wbytes + iobytes + scbytes) + (16 << 20))))

    out = pl.pallas_call(
        kernel,
        grid_spec=pltpu.PrefetchScalarGridSpec(
            num_scalar_prefetch=0,
            grid=(G,),
            in_specs=in_specs,
            out_specs=out_specs,
            scratch_shapes=scratch_shapes,
        ),
        out_shape=jax.ShapeDtypeStruct((G, Ho, nb * WCy), jnp.float32),
        compiler_params=pltpu.CompilerParams(
            dimension_semantics=("parallel",),
            vmem_limit_bytes=vmem_limit),
    )(xpe, xpo, ops['bn1'], ops['bn2'], ops['bn3'], ops['bn4'],
      ops['G1'], ops['G2'], ops['Gs'], ops['G3'], ops['G4'],
      ops['by'], ops['b4'])

    # (G, Ho, nb*Wo*Cout) -> NCHW
    out = out.reshape(G, Ho, nb, Wo, Cout)
    return jnp.transpose(out, (0, 2, 4, 1, 3)).reshape(N, Cout, Ho, Wo)


# ---------------------------------------------------------------------------
# Pure-JAX reference (lax.conv, f32), for correctness check
# ---------------------------------------------------------------------------
def _conv_ref(x, w, b, stride):
    out = jax.lax.conv_general_dilated(
        x, w, window_strides=(stride, stride), padding=((PAD, PAD), (PAD, PAD)),
        dimension_numbers=('NCHW', 'OIHW', 'NCHW'))
    return out + b.reshape(1, -1, 1, 1)


def _bn_relu_ref(x, gamma, beta, mean, var, eps=1e-5):
    s = gamma / jnp.sqrt(var + eps)
    return jnp.maximum(x * s.reshape(1, -1, 1, 1)
                       + (beta - mean * s).reshape(1, -1, 1, 1), 0.0)


def down_ref(x, p):
    a = _conv_ref(_bn_relu_ref(x, *p['mp_bn1']), p['mp_w1'], p['mp_b1'], 1)
    x1 = _conv_ref(_bn_relu_ref(a, *p['mp_bn2']), p['mp_w2'], p['mp_b2'], 2)
    x2 = _conv_ref(x, p['sc_w'], p['sc_b'], 2)
    y = x1 + x2
    b = _conv_ref(_bn_relu_ref(y, *p['in_bn1']), p['in_w1'], p['in_b1'], 1)
    x3 = _conv_ref(_bn_relu_ref(b, *p['in_bn2']), p['in_w2'], p['in_b2'], 1)
    return y + x3


# ---------------------------------------------------------------------------
# Deterministic parameter initialization (shapes from the module __init__)
# ---------------------------------------------------------------------------
def init_params(key, in_ch, out_ch, K):
    keys = jax.random.split(key, 9)

    def conv_params(k, cin, cout):
        kw, kb = jax.random.split(k)
        w = jax.random.normal(kw, (cout, cin, K, K), jnp.float32) * 0.1
        b = jax.random.normal(kb, (cout,), jnp.float32) * 0.1
        return w, b

    def bn_params(k, c):
        k1, k2, k3, k4 = jax.random.split(k, 4)
        gamma = jax.random.uniform(k1, (c,), jnp.float32, 0.5, 1.5)
        beta = jax.random.normal(k2, (c,), jnp.float32) * 0.1
        mean = jax.random.normal(k3, (c,), jnp.float32) * 0.1
        var = jax.random.uniform(k4, (c,), jnp.float32, 0.5, 1.5)
        return gamma, beta, mean, var

    p = {}
    p['mp_bn1'] = bn_params(keys[0], in_ch)
    p['mp_w1'], p['mp_b1'] = conv_params(keys[1], in_ch, out_ch)
    p['mp_bn2'] = bn_params(keys[2], out_ch)
    p['mp_w2'], p['mp_b2'] = conv_params(keys[3], out_ch, out_ch)
    p['sc_w'], p['sc_b'] = conv_params(keys[4], in_ch, out_ch)
    p['in_bn1'] = bn_params(keys[5], out_ch)
    p['in_w1'], p['in_b1'] = conv_params(keys[6], out_ch, out_ch)
    p['in_bn2'] = bn_params(keys[7], out_ch)
    p['in_w2'], p['in_b2'] = conv_params(keys[8], out_ch, out_ch)
    return p


if __name__ == "__main__":
    key = jax.random.PRNGKey(0)
    kx, kp = jax.random.split(key)
    # kernel_Size=5 so padding=(2,2) is "same"-style for the stride-1 convs
    N, in_ch, out_ch, H, W, K = 4, 4, 8, 16, 16, 5

    x = jax.random.normal(kx, (N, in_ch, H, W), jnp.float32)
    params = init_params(kp, in_ch, out_ch, K)

    # Operator construction hoisted out of the forward path (run once, reused).
    ops = prepare_down_ops(params, H, W)

    # NB=2 images per grid step; keep the parallel grid axis >= 2 (v7x megacore).
    nb = 2 if (N % 2 == 0 and N >= 4) else 1

    ref = down_ref(x, params)

    def run_and_check(single_buffer_weights):
        out = jax.block_until_ready(
            down_forward(x, ops, nb=nb, single_buffer_weights=single_buffer_weights))
        # bf16 MXU operands with f32 accumulation -> bf16-level tolerance vs f32 ref
        np.testing.assert_allclose(np.asarray(out), np.asarray(ref),
                                   rtol=5e-2, atol=5e-2)
        return out

    try:
        out = run_and_check(True)       # single-buffered grid-invariant weights
    except Exception:                   # portability fallback: default double-buffering
        out = run_and_check(False)

    assert out.shape == (N, out_ch, H // 2, W // 2)
    print("KERNEL_OK")
</pallas_src>

<mosaic_0001>
module attributes {stable_mosaic.version = 11 : i64} {
  func.func @kernel(%arg0: i32, %arg1: memref<1x20x64xbf16, #tpu.memory_space<vmem>>, %arg2: memref<1x20x64xbf16, #tpu.memory_space<vmem>>, %arg3: memref<2x64xf32, #tpu.memory_space<vmem>>, %arg4: memref<2x128xf32, #tpu.memory_space<vmem>>, %arg5: memref<2x64xf32, #tpu.memory_space<vmem>>, %arg6: memref<2x64xf32, #tpu.memory_space<vmem>>, %arg7: memref<5x64x128xbf16, #tpu.memory_space<vmem>>, %arg8: memref<5x128x64xbf16, #tpu.memory_space<vmem>>, %arg9: memref<5x64x64xbf16, #tpu.memory_space<vmem>>, %arg10: memref<5x64x64xbf16, #tpu.memory_space<vmem>>, %arg11: memref<5x64x64xbf16, #tpu.memory_space<vmem>>, %arg12: memref<1x64xf32, #tpu.memory_space<vmem>>, %arg13: memref<1x64xf32, #tpu.memory_space<vmem>>, %arg14: memref<1x8x128xf32, #tpu.memory_space<vmem>>, %arg15: memref<20x64xf32, #tpu.memory_space<vmem>>, %arg16: memref<20x64xf32, #tpu.memory_space<vmem>>, %arg17: memref<20x128xf32, #tpu.memory_space<vmem>>, %arg18: memref<20x128xf32, #tpu.memory_space<vmem>>, %arg19: memref<24x64xf32, #tpu.memory_space<vmem>>, %arg20: memref<24x64xf32, #tpu.memory_space<vmem>>) attributes {dimension_semantics = [#tpu.dimension_semantics<parallel>], iteration_bounds = array<i64: 2>, scalar_prefetch = 0 : i64, scratch_operands = 6 : i64, tpu.core_type = #tpu.core_type<tc>, window_params = [{transform_indices = @transform_0, window_bounds = array<i64: 1, 20, 64>}, {transform_indices = @transform_1, window_bounds = array<i64: 1, 20, 64>}, {pipeline_mode = #tpu.pipeline_mode<synchronous>, transform_indices = @transform_2, window_bounds = array<i64: 2, 64>}, {pipeline_mode = #tpu.pipeline_mode<synchronous>, transform_indices = @transform_3, window_bounds = array<i64: 2, 128>}, {pipeline_mode = #tpu.pipeline_mode<synchronous>, transform_indices = @transform_4, window_bounds = array<i64: 2, 64>}, {pipeline_mode = #tpu.pipeline_mode<synchronous>, transform_indices = @transform_5, window_bounds = array<i64: 2, 64>}, {pipeline_mode = #tpu.pipeline_mode<synchronous>, transform_indices = @transform_6, window_bounds = array<i64: 5, 64, 128>}, {pipeline_mode = #tpu.pipeline_mode<synchronous>, transform_indices = @transform_7, window_bounds = array<i64: 5, 128, 64>}, {pipeline_mode = #tpu.pipeline_mode<synchronous>, transform_indices = @transform_8, window_bounds = array<i64: 5, 64, 64>}, {pipeline_mode = #tpu.pipeline_mode<synchronous>, transform_indices = @transform_9, window_bounds = array<i64: 5, 64, 64>}, {pipeline_mode = #tpu.pipeline_mode<synchronous>, transform_indices = @transform_10, window_bounds = array<i64: 5, 64, 64>}, {pipeline_mode = #tpu.pipeline_mode<synchronous>, transform_indices = @transform_11, window_bounds = array<i64: 1, 64>}, {pipeline_mode = #tpu.pipeline_mode<synchronous>, transform_indices = @transform_12, window_bounds = array<i64: 1, 64>}, {transform_indices = @transform_13, window_bounds = array<i64: 1, 8, 128>}]} {
    %cst = arith.constant 0.000000e+00 : f32
    %0 = vector.broadcast %cst : f32 to vector<20x64xf32>
    %c0 = arith.constant 0 : index
    %c0_0 = arith.constant 0 : index
    %1 = vector.load %arg15[%c0, %c0_0] : memref<20x64xf32, #tpu.memory_space<vmem>>, vector<20x64xf32>
    tpu.vector_store %arg15[%c0, %c0_0], %0 {strides = array<i32>} : memref<20x64xf32, #tpu.memory_space<vmem>>, vector<20x64xf32>,
    %cst_1 = arith.constant 0.000000e+00 : f32
    %2 = vector.broadcast %cst_1 : f32 to vector<20x64xf32>
    %c0_2 = arith.constant 0 : index
    %c0_3 = arith.constant 0 : index
    %3 = vector.load %arg16[%c0_2, %c0_3] : memref<20x64xf32, #tpu.memory_space<vmem>>, vector<20x64xf32>
    tpu.vector_store %arg16[%c0_2, %c0_3], %2 {strides = array<i32>} : memref<20x64xf32, #tpu.memory_space<vmem>>, vector<20x64xf32>,
    %cst_4 = arith.constant 0.000000e+00 : f32
    %4 = vector.broadcast %cst_4 : f32 to vector<20x128xf32>
    %c0_5 = arith.constant 0 : index
    %c0_6 = arith.constant 0 : index
    %5 = vector.load %arg17[%c0_5, %c0_6] : memref<20x128xf32, #tpu.memory_space<vmem>>, vector<20x128xf32>
    tpu.vector_store %arg17[%c0_5, %c0_6], %4 {strides = array<i32>} : memref<20x128xf32, #tpu.memory_space<vmem>>, vector<20x128xf32>,
    %cst_7 = arith.constant 0.000000e+00 : f32
    %6 = vector.broadcast %cst_7 : f32 to vector<20x128xf32>
    %c0_8 = arith.constant 0 : index
    %c0_9 = arith.constant 0 : index
    %7 = vector.load %arg18[%c0_8, %c0_9] : memref<20x128xf32, #tpu.memory_space<vmem>>, vector<20x128xf32>
    tpu.vector_store %arg18[%c0_8, %c0_9], %6 {strides = array<i32>} : memref<20x128xf32, #tpu.memory_space<vmem>>, vector<20x128xf32>,
    %cst_10 = arith.constant 0.000000e+00 : f32
    %8 = vector.broadcast %cst_10 : f32 to vector<24x64xf32>
    %c0_11 = arith.constant 0 : index
    %c0_12 = arith.constant 0 : index
    %9 = vector.load %arg19[%c0_11, %c0_12] : memref<24x64xf32, #tpu.memory_space<vmem>>, vector<24x64xf32>
    tpu.vector_store %arg19[%c0_11, %c0_12], %8 {strides = array<i32>} : memref<24x64xf32, #tpu.memory_space<vmem>>, vector<24x64xf32>,
    %cst_13 = arith.constant 0.000000e+00 : f32
    %10 = vector.broadcast %cst_13 : f32 to vector<24x64xf32>
    %c0_14 = arith.constant 0 : index
    %c0_15 = arith.constant 0 : index
    %11 = vector.load %arg20[%c0_14, %c0_15] : memref<24x64xf32, #tpu.memory_space<vmem>>, vector<24x64xf32>
    tpu.vector_store %arg20[%c0_14, %c0_15], %10 {strides = array<i32>} : memref<24x64xf32, #tpu.memory_space<vmem>>, vector<24x64xf32>,
    %c0_16 = arith.constant 0 : index
    %c1 = arith.constant 1 : index
    %c0_17 = arith.constant 0 : index
    %12 = vector.load %arg1[%c0_16, %c1, %c0_17] : memref<1x20x64xbf16, #tpu.memory_space<vmem>>, vector<1x8x64xbf16>
    %13 = vector.shape_cast %12 : vector<1x8x64xbf16> to vector<8x64xbf16>
    %14 = arith.extf %13 : vector<8x64xbf16> to vector<8x64xf32>
    %c0_18 = arith.constant 0 : index
    %c0_19 = arith.constant 0 : index
    %15 = vector.load %arg3[%c0_18, %c0_19] : memref<2x64xf32, #tpu.memory_space<vmem>>, vector<1x64xf32>
    %16 = vector.broadcast %15 : vector<1x64xf32> to vector<8x64xf32>
    %17 = arith.mulf %14, %16 : vector<8x64xf32>
    %c1_20 = arith.constant 1 : index
    %c0_21 = arith.constant 0 : index
    %18 = vector.load %arg3[%c1_20, %c0_21] : memref<2x64xf32, #tpu.memory_space<vmem>>, vector<1x64xf32>
    %19 = vector.broadcast %18 : vector<1x64xf32> to vector<8x64xf32>
    %20 = arith.addf %17, %19 : vector<8x64xf32>
    %cst_22 = arith.constant 0.000000e+00 : f32
    %21 = vector.broadcast %cst_22 : f32 to vector<8x64xf32>
    %22 = arith.maximumf %20, %21 : vector<8x64xf32>
    %c1_23 = arith.constant 1 : index
    %c0_24 = arith.constant 0 : index
    %23 = vector.load %arg15[%c1_23, %c0_24] : memref<20x64xf32, #tpu.memory_space<vmem>>, vector<8x64xf32>
    tpu.vector_store %arg15[%c1_23, %c0_24], %22 {strides = array<i32>} : memref<20x64xf32, #tpu.memory_space<vmem>>, vector<8x64xf32>,
    %c0_25 = arith.constant 0 : index
    %c1_26 = arith.constant 1 : index
    %c0_27 = arith.constant 0 : index
    %24 = vector.load %arg2[%c0_25, %c1_26, %c0_27] : memref<1x20x64xbf16, #tpu.memory_space<vmem>>, vector<1x8x64xbf16>
    %25 = vector.shape_cast %24 : vector<1x8x64xbf16> to vector<8x64xbf16>
    %26 = arith.extf %25 : vector<8x64xbf16> to vector<8x64xf32>
    %c0_28 = arith.constant 0 : index
    %c0_29 = arith.constant 0 : index
    %27 = vector.load %arg3[%c0_28, %c0_29] : memref<2x64xf32, #tpu.memory_space<vmem>>, vector<1x64xf32>
    %28 = vector.broadcast %27 : vector<1x64xf32> to vector<8x64xf32>
    %29 = arith.mulf %26, %28 : vector<8x64xf32>
    %c1_30 = arith.constant 1 : index
    %c0_31 = arith.constant 0 : index
    %30 = vector.load %arg3[%c1_30, %c0_31] : memref<2x64xf32, #tpu.memory_space<vmem>>, vector<1x64xf32>
    %31 = vector.broadcast %30 : vector<1x64xf32> to vector<8x64xf32>
    %32 = arith.addf %29, %31 : vector<8x64xf32>
    %cst_32 = arith.constant 0.000000e+00 : f32
    %33 = vector.broadcast %cst_32 : f32 to vector<8x64xf32>
    %34 = arith.maximumf %32, %33 : vector<8x64xf32>
    %c1_33 = arith.constant 1 : index
    %c0_34 = arith.constant 0 : index
    %35 = vector.load %arg16[%c1_33, %c0_34] : memref<20x64xf32, #tpu.memory_space<vmem>>, vector<8x64xf32>
    tpu.vector_store %arg16[%c1_33, %c0_34], %34 {strides = array<i32>} : memref<20x64xf32, #tpu.memory_space<vmem>>, vector<8x64xf32>,
    %c0_35 = arith.constant 0 : index
    %c11 = arith.constant 11 : index
    %c0_36 = arith.constant 0 : index
    %36 = vector.load %arg1[%c0_35, %c11, %c0_36] : memref<1x20x64xbf16, #tpu.memory_space<vmem>>, vector<1x8x64xbf16>
    %37 = vector.shape_cast %36 : vector<1x8x64xbf16> to vector<8x64xbf16>
    %38 = arith.extf %37 : vector<8x64xbf16> to vector<8x64xf32>
    %c0_37 = arith.constant 0 : index
    %c0_38 = arith.constant 0 : index
    %39 = vector.load %arg3[%c0_37, %c0_38] : memref<2x64xf32, #tpu.memory_space<vmem>>, vector<1x64xf32>
    %40 = vector.broadcast %39 : vector<1x64xf32> to vector<8x64xf32>
    %41 = arith.mulf %38, %40 : vector<8x64xf32>
    %c1_39 = arith.constant 1 : index
    %c0_40 = arith.constant 0 : index
    %42 = vector.load %arg3[%c1_39, %c0_40] : memref<2x64xf32, #tpu.memory_space<vmem>>, vector<1x64xf32>
    %43 = vector.broadcast %42 : vector<1x64xf32> to vector<8x64xf32>
    %44 = arith.addf %41, %43 : vector<8x64xf32>
    %cst_41 = arith.constant 0.000000e+00 : f32
    %45 = vector.broadcast %cst_41 : f32 to vector<8x64xf32>
    %46 = arith.maximumf %44, %45 : vector<8x64xf32>
    %c11_42 = arith.constant 11 : index
    %c0_43 = arith.constant 0 : index
    %47 = vector.load %arg15[%c11_42, %c0_43] : memref<20x64xf32, #tpu.memory_space<vmem>>, vector<8x64xf32>
    tpu.vector_store %arg15[%c11_42, %c0_43], %46 {strides = array<i32>} : memref<20x64xf32, #tpu.memory_space<vmem>>, vector<8x64xf32>,
    %c0_44 = arith.constant 0 : index
    %c11_45 = arith.constant 11 : index
    %c0_46 = arith.constant 0 : index
    %48 = vector.load %arg2[%c0_44, %c11_45, %c0_46] : memref<1x20x64xbf16, #tpu.memory_space<vmem>>, vector<1x8x64xbf16>
    %49 = vector.shape_cast %48 : vector<1x8x64xbf16> to vector<8x64xbf16>
    %50 = arith.extf %49 : vector<8x64xbf16> to vector<8x64xf32>
    %c0_47 = arith.constant 0 : index
    %c0_48 = arith.constant 0 : index
    %51 = vector.load %arg3[%c0_47, %c0_48] : memref<2x64xf32, #tpu.memory_space<vmem>>, vector<1x64xf32>
    %52 = vector.broadcast %51 : vector<1x64xf32> to vector<8x64xf32>
    %53 = arith.mulf %50, %52 : vector<8x64xf32>
    %c1_49 = arith.constant 1 : index
    %c0_50 = arith.constant 0 : index
    %54 = vector.load %arg3[%c1_49, %c0_50] : memref<2x64xf32, #tpu.memory_space<vmem>>, vector<1x64xf32>
    %55 = vector.broadcast %54 : vector<1x64xf32> to vector<8x64xf32>
    %56 = arith.addf %53, %55 : vector<8x64xf32>
    %cst_51 = arith.constant 0.000000e+00 : f32
    %57 = vector.broadcast %cst_51 : f32 to vector<8x64xf32>
    %58 = arith.maximumf %56, %57 : vector<8x64xf32>
    %c11_52 = arith.constant 11 : index
    %c0_53 = arith.constant 0 : index
    %59 = vector.load %arg16[%c11_52, %c0_53] : memref<20x64xf32, #tpu.memory_space<vmem>>, vector<8x64xf32>
    tpu.vector_store %arg16[%c11_52, %c0_53], %58 {strides = array<i32>} : memref<20x64xf32, #tpu.memory_space<vmem>>, vector<8x64xf32>,
    %c0_54 = arith.constant 0 : index
    %c0_55 = arith.constant 0 : index
    %60 = vector.load %arg15[%c0_54, %c0_55] : memref<20x64xf32, #tpu.memory_space<vmem>>, vector<18x64xf32>
    %61 = arith.truncf %60 : vector<18x64xf32> to vector<18x64xbf16>
    %c0_56 = arith.constant 0 : index
    %c0_57 = arith.constant 0 : index
    %c0_58 = arith.constant 0 : index
    %62 = vector.load %arg7[%c0_56, %c0_57, %c0_58] : memref<5x64x128xbf16, #tpu.memory_space<vmem>>, vector<1x64x128xbf16>
    %63 = vector.shape_cast %62 : vector<1x64x128xbf16> to vector<64x128xbf16>
    %cst_59 = arith.constant dense<0.000000e+00> : vector<18x128xf32>
    %64 = tpu.matmul %61, %63, %cst_59 {dimension_numbers = #tpu.dot_dimension_numbers<[1], [0], [0], [1], [0, 0, 1, 1], [], []>} : vector<18x64xbf16>, vector<64x128xbf16>, vector<18x128xf32> -> vector<18x128xf32>
    %c0_60 = arith.constant 0 : index
    %c0_61 = arith.constant 0 : index
    %65 = vector.load %arg16[%c0_60, %c0_61] : memref<20x64xf32, #tpu.memory_space<vmem>>, vector<18x64xf32>
    %66 = arith.truncf %65 : vector<18x64xf32> to vector<18x64xbf16>
    %c1_62 = arith.constant 1 : index
    %c0_63 = arith.constant 0 : index
    %c0_64 = arith.constant 0 : index
    %67 = vector.load %arg7[%c1_62, %c0_63, %c0_64] : memref<5x64x128xbf16, #tpu.memory_space<vmem>>, vector<1x64x128xbf16>
    %68 = vector.shape_cast %67 : vector<1x64x128xbf16> to vector<64x128xbf16>
    %cst_65 = arith.constant dense<0.000000e+00> : vector<18x128xf32>
    %69 = tpu.matmul %66, %68, %cst_65 {dimension_numbers = #tpu.dot_dimension_numbers<[1], [0], [0], [1], [0, 0, 1, 1], [], []>} : vector<18x64xbf16>, vector<64x128xbf16>, vector<18x128xf32> -> vector<18x128xf32>
    %70 = arith.addf %64, %69 : vector<18x128xf32>
    %c1_66 = arith.constant 1 : index
    %c0_67 = arith.constant 0 : index
    %71 = vector.load %arg15[%c1_66, %c0_67] : memref<20x64xf32, #tpu.memory_space<vmem>>, vector<18x64xf32>
    %72 = arith.truncf %71 : vector<18x64xf32> to vector<18x64xbf16>
    %c2 = arith.constant 2 : index
    %c0_68 = arith.constant 0 : index
    %c0_69 = arith.constant 0 : index
    %73 = vector.load %arg7[%c2, %c0_68, %c0_69] : memref<5x64x128xbf16, #tpu.memory_space<vmem>>, vector<1x64x128xbf16>
    %74 = vector.shape_cast %73 : vector<1x64x128xbf16> to vector<64x128xbf16>
    %cst_70 = arith.constant dense<0.000000e+00> : vector<18x128xf32>
    %75 = tpu.matmul %72, %74, %cst_70 {dimension_numbers = #tpu.dot_dimension_numbers<[1], [0], [0], [1], [0, 0, 1, 1], [], []>} : vector<18x64xbf16>, vector<64x128xbf16>, vector<18x128xf32> -> vector<18x128xf32>
    %76 = arith.addf %70, %75 : vector<18x128xf32>
    %c1_71 = arith.constant 1 : index
    %c0_72 = arith.constant 0 : index
    %77 = vector.load %arg16[%c1_71, %c0_72] : memref<20x64xf32, #tpu.memory_space<vmem>>, vector<18x64xf32>
    %78 = arith.truncf %77 : vector<18x64xf32> to vector<18x64xbf16>
    %c3 = arith.constant 3 : index
    %c0_73 = arith.constant 0 : index
    %c0_74 = arith.constant 0 : index
    %79 = vector.load %arg7[%c3, %c0_73, %c0_74] : memref<5x64x128xbf16, #tpu.memory_space<vmem>>, vector<1x64x128xbf16>
    %80 = vector.shape_cast %79 : vector<1x64x128xbf16> to vector<64x128xbf16>
    %cst_75 = arith.constant dense<0.000000e+00> : vector<18x128xf32>
    %81 = tpu.matmul %78, %80, %cst_75 {dimension_numbers = #tpu.dot_dimension_numbers<[1], [0], [0], [1], [0, 0, 1, 1], [], []>} : vector<18x64xbf16>, vector<64x128xbf16>, vector<18x128xf32> -> vector<18x128xf32>
    %82 = arith.addf %76, %81 : vector<18x128xf32>
    %c2_76 = arith.constant 2 : index
    %c0_77 = arith.constant 0 : index
    %83 = vector.load %arg15[%c2_76, %c0_77] : memref<20x64xf32, #tpu.memory_space<vmem>>, vector<18x64xf32>
    %84 = arith.truncf %83 : vector<18x64xf32> to vector<18x64xbf16>
    %c4 = arith.constant 4 : index
    %c0_78 = arith.constant 0 : index
    %c0_79 = arith.constant 0 : index
    %85 = vector.load %arg7[%c4, %c0_78, %c0_79] : memref<5x64x128xbf16, #tpu.memory_space<vmem>>, vector<1x64x128xbf16>
    %86 = vector.shape_cast %85 : vector<1x64x128xbf16> to vector<64x128xbf16>
    %cst_80 = arith.constant dense<0.000000e+00> : vector<18x128xf32>
    %87 = tpu.matmul %84, %86, %cst_80 {dimension_numbers = #tpu.dot_dimension_numbers<[1], [0], [0], [1], [0, 0, 1, 1], [], []>} : vector<18x64xbf16>, vector<64x128xbf16>, vector<18x128xf32> -> vector<18x128xf32>
    %88 = arith.addf %82, %87 : vector<18x128xf32>
    %c0_81 = arith.constant 0 : index
    %c0_82 = arith.constant 0 : index
    %89 = vector.load %arg16[%c0_81, %c0_82] : memref<20x64xf32, #tpu.memory_space<vmem>>, vector<18x64xf32>
    %90 = arith.truncf %89 : vector<18x64xf32> to vector<18x64xbf16>
    %c0_83 = arith.constant 0 : index
    %c0_84 = arith.constant 0 : index
    %c0_85 = arith.constant 0 : index
    %91 = vector.load %arg7[%c0_83, %c0_84, %c0_85] : memref<5x64x128xbf16, #tpu.memory_space<vmem>>, vector<1x64x128xbf16>
    %92 = vector.shape_cast %91 : vector<1x64x128xbf16> to vector<64x128xbf16>
    %cst_86 = arith.constant dense<0.000000e+00> : vector<18x128xf32>
    %93 = tpu.matmul %90, %92, %cst_86 {dimension_numbers = #tpu.dot_dimension_numbers<[1], [0], [0], [1], [0, 0, 1, 1], [], []>} : vector<18x64xbf16>, vector<64x128xbf16>, vector<18x128xf32> -> vector<18x128xf32>
    %c1_87 = arith.constant 1 : index
    %c0_88 = arith.constant 0 : index
    %94 = vector.load %arg15[%c1_87, %c0_88] : memref<20x64xf32, #tpu.memory_space<vmem>>, vector<18x64xf32>
    %95 = arith.truncf %94 : vector<18x64xf32> to vector<18x64xbf16>
    %c1_89 = arith.constant 1 : index
    %c0_90 = arith.constant 0 : index
    %c0_91 = arith.constant 0 : index
    %96 = vector.load %arg7[%c1_89, %c0_90, %c0_91] : memref<5x64x128xbf16, #tpu.memory_space<vmem>>, vector<1x64x128xbf16>
    %97 = vector.shape_cast %96 : vector<1x64x128xbf16> to vector<64x128xbf16>
    %cst_92 = arith.constant dense<0.000000e+00> : vector<18x128xf32>
    %98 = tpu.matmul %95, %97, %cst_92 {dimension_numbers = #tpu.dot_dimension_numbers<[1], [0], [0], [1], [0, 0, 1, 1], [], []>} : vector<18x64xbf16>, vector<64x128xbf16>, vector<18x128xf32> -> vector<18x128xf32>
    %99 = arith.addf %93, %98 : vector<18x128xf32>
    %c1_93 = arith.constant 1 : index
    %c0_94 = arith.constant 0 : index
    %100 = vector.load %arg16[%c1_93, %c0_94] : memref<20x64xf32, #tpu.memory_space<vmem>>, vector<18x64xf32>
    %101 = arith.truncf %100 : vector<18x64xf32> to vector<18x64xbf16>
    %c2_95 = arith.constant 2 : index
    %c0_96 = arith.constant 0 : index
    %c0_97 = arith.constant 0 : index
    %102 = vector.load %arg7[%c2_95, %c0_96, %c0_97] : memref<5x64x128xbf16, #tpu.memory_space<vmem>>, vector<1x64x128xbf16>
    %103 = vector.shape_cast %102 : vector<1x64x128xbf16> to vector<64x128xbf16>
    %cst_98 = arith.constant dense<0.000000e+00> : vector<18x128xf32>
    %104 = tpu.matmul %101, %103, %cst_98 {dimension_numbers = #tpu.dot_dimension_numbers<[1], [0], [0], [1], [0, 0, 1, 1], [], []>} : vector<18x64xbf16>, vector<64x128xbf16>, vector<18x128xf32> -> vector<18x128xf32>
    %105 = arith.addf %99, %104 : vector<18x128xf32>
    %c2_99 = arith.constant 2 : index
    %c0_100 = arith.constant 0 : index
    %106 = vector.load %arg15[%c2_99, %c0_100] : memref<20x64xf32, #tpu.memory_space<vmem>>, vector<18x64xf32>
    %107 = arith.truncf %106 : vector<18x64xf32> to vector<18x64xbf16>
    %c3_101 = arith.constant 3 : index
    %c0_102 = arith.constant 0 : index
    %c0_103 = arith.constant 0 : index
    %108 = vector.load %arg7[%c3_101, %c0_102, %c0_103] : memref<5x64x128xbf16, #tpu.memory_space<vmem>>, vector<1x64x128xbf16>
    %109 = vector.shape_cast %108 : vector<1x64x128xbf16> to vector<64x128xbf16>
    %cst_104 = arith.constant dense<0.000000e+00> : vector<18x128xf32>
    %110 = tpu.matmul %107, %109, %cst_104 {dimension_numbers = #tpu.dot_dimension_numbers<[1], [0], [0], [1], [0, 0, 1, 1], [], []>} : vector<18x64xbf16>, vector<64x128xbf16>, vector<18x128xf32> -> vector<18x128xf32>
    %111 = arith.addf %105, %110 : vector<18x128xf32>
    %c2_105 = arith.constant 2 : index
    %c0_106 = arith.constant 0 : index
    %112 = vector.load %arg16[%c2_105, %c0_106] : memref<20x64xf32, #tpu.memory_space<vmem>>, vector<18x64xf32>
    %113 = arith.truncf %112 : vector<18x64xf32> to vector<18x64xbf16>
    %c4_107 = arith.constant 4 : index
    %c0_108 = arith.constant 0 : index
    %c0_109 = arith.constant 0 : index
    %114 = vector.load %arg7[%c4_107, %c0_108, %c0_109] : memref<5x64x128xbf16, #tpu.memory_space<vmem>>, vector<1x64x128xbf16>
    %115 = vector.shape_cast %114 : vector<1x64x128xbf16> to vector<64x128xbf16>
    %cst_110 = arith.constant dense<0.000000e+00> : vector<18x128xf32>
    %116 = tpu.matmul %113, %115, %cst_110 {dimension_numbers = #tpu.dot_dimension_numbers<[1], [0], [0], [1], [0, 0, 1, 1], [], []>} : vector<18x64xbf16>, vector<64x128xbf16>, vector<18x128xf32> -> vector<18x128xf32>
    %117 = arith.addf %111, %116 : vector<18x128xf32>
    %c0_111 = arith.constant 0 : index
    %c0_112 = arith.constant 0 : index
    %118 = vector.load %arg4[%c0_111, %c0_112] : memref<2x128xf32, #tpu.memory_space<vmem>>, vector<1x128xf32>
    %119 = vector.broadcast %118 : vector<1x128xf32> to vector<18x128xf32>
    %120 = arith.mulf %88, %119 : vector<18x128xf32>
    %c1_113 = arith.constant 1 : index
    %c0_114 = arith.constant 0 : index
    %121 = vector.load %arg4[%c1_113, %c0_114] : memref<2x128xf32, #tpu.memory_space<vmem>>, vector<1x128xf32>
    %122 = vector.broadcast %121 : vector<1x128xf32> to vector<18x128xf32>
    %123 = arith.addf %120, %122 : vector<18x128xf32>
    %cst_115 = arith.constant 0.000000e+00 : f32
    %124 = vector.broadcast %cst_115 : f32 to vector<18x128xf32>
    %125 = arith.maximumf %123, %124 : vector<18x128xf32>
    %c0_116 = arith.constant 0 : index
    %c0_117 = arith.constant 0 : index
    %126 = vector.load %arg4[%c0_116, %c0_117] : memref<2x128xf32, #tpu.memory_space<vmem>>, vector<1x128xf32>
    %127 = vector.broadcast %126 : vector<1x128xf32> to vector<18x128xf32>
    %128 = arith.mulf %117, %127 : vector<18x128xf32>
    %c1_118 = arith.constant 1 : index
    %c0_119 = arith.constant 0 : index
    %129 = vector.load %arg4[%c1_118, %c0_119] : memref<2x128xf32, #tpu.memory_space<vmem>>, vector<1x128xf32>
    %130 = vector.broadcast %129 : vector<1x128xf32> to vector<18x128xf32>
    %131 = arith.addf %128, %130 : vector<18x128xf32>
    %cst_120 = arith.constant 0.000000e+00 : f32
    %132 = vector.broadcast %cst_120 : f32 to vector<18x128xf32>
    %133 = arith.maximumf %131, %132 : vector<18x128xf32>
    %134 = vector.extract_strided_slice %125 {offsets = [0, 0], sizes = [8, 128], strides = [1, 1]} : vector<18x128xf32> to vector<8x128xf32>
    %c1_121 = arith.constant 1 : index
    %c0_122 = arith.constant 0 : index
    %135 = vector.load %arg17[%c1_121, %c0_122] : memref<20x128xf32, #tpu.memory_space<vmem>>, vector<8x128xf32>
    tpu.vector_store %arg17[%c1_121, %c0_122], %134 {strides = array<i32>} : memref<20x128xf32, #tpu.memory_space<vmem>>, vector<8x128xf32>,
    %136 = vector.extract_strided_slice %133 {offsets = [0, 0], sizes = [8, 128], strides = [1, 1]} : vector<18x128xf32> to vector<8x128xf32>
    %c1_123 = arith.constant 1 : index
    %c0_124 = arith.constant 0 : index
    %137 = vector.load %arg18[%c1_123, %c0_124] : memref<20x128xf32, #tpu.memory_space<vmem>>, vector<8x128xf32>
    tpu.vector_store %arg18[%c1_123, %c0_124], %136 {strides = array<i32>} : memref<20x128xf32, #tpu.memory_space<vmem>>, vector<8x128xf32>,
    %138 = vector.extract_strided_slice %125 {offsets = [10, 0], sizes = [8, 128], strides = [1, 1]} : vector<18x128xf32> to vector<8x128xf32>
    %c11_125 = arith.constant 11 : index
    %c0_126 = arith.constant 0 : index
    %139 = vector.load %arg17[%c11_125, %c0_126] : memref<20x128xf32, #tpu.memory_space<vmem>>, vector<8x128xf32>
    tpu.vector_store %arg17[%c11_125, %c0_126], %138 {strides = array<i32>} : memref<20x128xf32, #tpu.memory_space<vmem>>, vector<8x128xf32>,
    %140 = vector.extract_strided_slice %133 {offsets = [10, 0], sizes = [8, 128], strides = [1, 1]} : vector<18x128xf32> to vector<8x128xf32>
    %c11_127 = arith.constant 11 : index
    %c0_128 = arith.constant 0 : index
    %141 = vector.load %arg18[%c11_127, %c0_128] : memref<20x128xf32, #tpu.memory_space<vmem>>, vector<8x128xf32>
    tpu.vector_store %arg18[%c11_127, %c0_128], %140 {strides = array<i32>} : memref<20x128xf32, #tpu.memory_space<vmem>>, vector<8x128xf32>,
    %c0_129 = arith.constant 0 : index
    %c0_130 = arith.constant 0 : index
    %142 = vector.load %arg17[%c0_129, %c0_130] : memref<20x128xf32, #tpu.memory_space<vmem>>, vector<18x128xf32>
    %143 = arith.truncf %142 : vector<18x128xf32> to vector<18x128xbf16>
    %c0_131 = arith.constant 0 : index
    %c0_132 = arith.constant 0 : index
    %c0_133 = arith.constant 0 : index
    %144 = vector.load %arg8[%c0_131, %c0_132, %c0_133] : memref<5x128x64xbf16, #tpu.memory_space<vmem>>, vector<1x128x64xbf16>
    %145 = vector.shape_cast %144 : vector<1x128x64xbf16> to vector<128x64xbf16>
    %cst_134 = arith.constant dense<0.000000e+00> : vector<18x64xf32>
    %146 = tpu.matmul %143, %145, %cst_134 {dimension_numbers = #tpu.dot_dimension_numbers<[1], [0], [0], [1], [0, 0, 1, 1], [], []>} : vector<18x128xbf16>, vector<128x64xbf16>, vector<18x64xf32> -> vector<18x64xf32>
    %c0_135 = arith.constant 0 : index
    %c0_136 = arith.constant 0 : index
    %147 = vector.load %arg18[%c0_135, %c0_136] : memref<20x128xf32, #tpu.memory_space<vmem>>, vector<18x128xf32>
    %148 = arith.truncf %147 : vector<18x128xf32> to vector<18x128xbf16>
    %c1_137 = arith.constant 1 : index
    %c0_138 = arith.constant 0 : index
    %c0_139 = arith.constant 0 : index
    %149 = vector.load %arg8[%c1_137, %c0_138, %c0_139] : memref<5x128x64xbf16, #tpu.memory_space<vmem>>, vector<1x128x64xbf16>
    %150 = vector.shape_cast %149 : vector<1x128x64xbf16> to vector<128x64xbf16>
    %cst_140 = arith.constant dense<0.000000e+00> : vector<18x64xf32>
    %151 = tpu.matmul %148, %150, %cst_140 {dimension_numbers = #tpu.dot_dimension_numbers<[1], [0], [0], [1], [0, 0, 1, 1], [], []>} : vector<18x128xbf16>, vector<128x64xbf16>, vector<18x64xf32> -> vector<18x64xf32>
    %152 = arith.addf %146, %151 : vector<18x64xf32>
    %c1_141 = arith.constant 1 : index
    %c0_142 = arith.constant 0 : index
    %153 = vector.load %arg17[%c1_141, %c0_142] : memref<20x128xf32, #tpu.memory_space<vmem>>, vector<18x128xf32>
    %154 = arith.truncf %153 : vector<18x128xf32> to vector<18x128xbf16>
    %c2_143 = arith.constant 2 : index
    %c0_144 = arith.constant 0 : index
    %c0_145 = arith.constant 0 : index
    %155 = vector.load %arg8[%c2_143, %c0_144, %c0_145] : memref<5x128x64xbf16, #tpu.memory_space<vmem>>, vector<1x128x64xbf16>
    %156 = vector.shape_cast %155 : vector<1x128x64xbf16> to vector<128x64xbf16>
    %cst_146 = arith.constant dense<0.000000e+00> : vector<18x64xf32>
    %157 = tpu.matmul %154, %156, %cst_146 {dimension_numbers = #tpu.dot_dimension_numbers<[1], [0], [0], [1], [0, 0, 1, 1], [], []>} : vector<18x128xbf16>, vector<128x64xbf16>, vector<18x64xf32> -> vector<18x64xf32>
    %158 = arith.addf %152, %157 : vector<18x64xf32>
    %c1_147 = arith.constant 1 : index
    %c0_148 = arith.constant 0 : index
    %159 = vector.load %arg18[%c1_147, %c0_148] : memref<20x128xf32, #tpu.memory_space<vmem>>, vector<18x128xf32>
    %160 = arith.truncf %159 : vector<18x128xf32> to vector<18x128xbf16>
    %c3_149 = arith.constant 3 : index
    %c0_150 = arith.constant 0 : index
    %c0_151 = arith.constant 0 : index
    %161 = vector.load %arg8[%c3_149, %c0_150, %c0_151] : memref<5x128x64xbf16, #tpu.memory_space<vmem>>, vector<1x128x64xbf16>
    %162 = vector.shape_cast %161 : vector<1x128x64xbf16> to vector<128x64xbf16>
    %cst_152 = arith.constant dense<0.000000e+00> : vector<18x64xf32>
    %163 = tpu.matmul %160, %162, %cst_152 {dimension_numbers = #tpu.dot_dimension_numbers<[1], [0], [0], [1], [0, 0, 1, 1], [], []>} : vector<18x128xbf16>, vector<128x64xbf16>, vector<18x64xf32> -> vector<18x64xf32>
    %164 = arith.addf %158, %163 : vector<18x64xf32>
    %c2_153 = arith.constant 2 : index
    %c0_154 = arith.constant 0 : index
    %165 = vector.load %arg17[%c2_153, %c0_154] : memref<20x128xf32, #tpu.memory_space<vmem>>, vector<18x128xf32>
    %166 = arith.truncf %165 : vector<18x128xf32> to vector<18x128xbf16>
    %c4_155 = arith.constant 4 : index
    %c0_156 = arith.constant 0 : index
    %c0_157 = arith.constant 0 : index
    %167 = vector.load %arg8[%c4_155, %c0_156, %c0_157] : memref<5x128x64xbf16, #tpu.memory_space<vmem>>, vector<1x128x64xbf16>
    %168 = vector.shape_cast %167 : vector<1x128x64xbf16> to vector<128x64xbf16>
    %cst_158 = arith.constant dense<0.000000e+00> : vector<18x64xf32>
    %169 = tpu.matmul %166, %168, %cst_158 {dimension_numbers = #tpu.dot_dimension_numbers<[1], [0], [0], [1], [0, 0, 1, 1], [], []>} : vector<18x128xbf16>, vector<128x64xbf16>, vector<18x64xf32> -> vector<18x64xf32>
    %170 = arith.addf %164, %169 : vector<18x64xf32>
    %c0_159 = arith.constant 0 : index
    %c0_160 = arith.constant 0 : index
    %c0_161 = arith.constant 0 : index
    %171 = vector.load %arg1[%c0_159, %c0_160, %c0_161] : memref<1x20x64xbf16, #tpu.memory_space<vmem>>, vector<1x18x64xbf16>
    %172 = vector.shape_cast %171 : vector<1x18x64xbf16> to vector<18x64xbf16>
    %c0_162 = arith.constant 0 : index
    %c0_163 = arith.constant 0 : index
    %c0_164 = arith.constant 0 : index
    %173 = vector.load %arg9[%c0_162, %c0_163, %c0_164] : memref<5x64x64xbf16, #tpu.memory_space<vmem>>, vector<1x64x64xbf16>
    %174 = vector.shape_cast %173 : vector<1x64x64xbf16> to vector<64x64xbf16>
    %cst_165 = arith.constant dense<0.000000e+00> : vector<18x64xf32>
    %175 = tpu.matmul %172, %174, %cst_165 {dimension_numbers = #tpu.dot_dimension_numbers<[1], [0], [0], [1], [0, 0, 1, 1], [], []>} : vector<18x64xbf16>, vector<64x64xbf16>, vector<18x64xf32> -> vector<18x64xf32>
    %c0_166 = arith.constant 0 : index
    %c0_167 = arith.constant 0 : index
    %c0_168 = arith.constant 0 : index
    %176 = vector.load %arg2[%c0_166, %c0_167, %c0_168] : memref<1x20x64xbf16, #tpu.memory_space<vmem>>, vector<1x18x64xbf16>
    %177 = vector.shape_cast %176 : vector<1x18x64xbf16> to vector<18x64xbf16>
    %c1_169 = arith.constant 1 : index
    %c0_170 = arith.constant 0 : index
    %c0_171 = arith.constant 0 : index
    %178 = vector.load %arg9[%c1_169, %c0_170, %c0_171] : memref<5x64x64xbf16, #tpu.memory_space<vmem>>, vector<1x64x64xbf16>
    %179 = vector.shape_cast %178 : vector<1x64x64xbf16> to vector<64x64xbf16>
    %cst_172 = arith.constant dense<0.000000e+00> : vector<18x64xf32>
    %180 = tpu.matmul %177, %179, %cst_172 {dimension_numbers = #tpu.dot_dimension_numbers<[1], [0], [0], [1], [0, 0, 1, 1], [], []>} : vector<18x64xbf16>, vector<64x64xbf16>, vector<18x64xf32> -> vector<18x64xf32>
    %181 = arith.addf %175, %180 : vector<18x64xf32>
    %c0_173 = arith.constant 0 : index
    %c1_174 = arith.constant 1 : index
    %c0_175 = arith.constant 0 : index
    %182 = vector.load %arg1[%c0_173, %c1_174, %c0_175] : memref<1x20x64xbf16, #tpu.memory_space<vmem>>, vector<1x18x64xbf16>
    %183 = vector.shape_cast %182 : vector<1x18x64xbf16> to vector<18x64xbf16>
    %c2_176 = arith.constant 2 : index
    %c0_177 = arith.constant 0 : index
    %c0_178 = arith.constant 0 : index
    %184 = vector.load %arg9[%c2_176, %c0_177, %c0_178] : memref<5x64x64xbf16, #tpu.memory_space<vmem>>, vector<1x64x64xbf16>
    %185 = vector.shape_cast %184 : vector<1x64x64xbf16> to vector<64x64xbf16>
    %cst_179 = arith.constant dense<0.000000e+00> : vector<18x64xf32>
    %186 = tpu.matmul %183, %185, %cst_179 {dimension_numbers = #tpu.dot_dimension_numbers<[1], [0], [0], [1], [0, 0, 1, 1], [], []>} : vector<18x64xbf16>, vector<64x64xbf16>, vector<18x64xf32> -> vector<18x64xf32>
    %187 = arith.addf %181, %186 : vector<18x64xf32>
    %c0_180 = arith.constant 0 : index
    %c1_181 = arith.constant 1 : index
    %c0_182 = arith.constant 0 : index
    %188 = vector.load %arg2[%c0_180, %c1_181, %c0_182] : memref<1x20x64xbf16, #tpu.memory_space<vmem>>, vector<1x18x64xbf16>
    %189 = vector.shape_cast %188 : vector<1x18x64xbf16> to vector<18x64xbf16>
    %c3_183 = arith.constant 3 : index
    %c0_184 = arith.constant 0 : index
    %c0_185 = arith.constant 0 : index
    %190 = vector.load %arg9[%c3_183, %c0_184, %c0_185] : memref<5x64x64xbf16, #tpu.memory_space<vmem>>, vector<1x64x64xbf16>
    %191 = vector.shape_cast %190 : vector<1x64x64xbf16> to vector<64x64xbf16>
    %cst_186 = arith.constant dense<0.000000e+00> : vector<18x64xf32>
    %192 = tpu.matmul %189, %191, %cst_186 {dimension_numbers = #tpu.dot_dimension_numbers<[1], [0], [0], [1], [0, 0, 1, 1], [], []>} : vector<18x64xbf16>, vector<64x64xbf16>, vector<18x64xf32> -> vector<18x64xf32>
    %193 = arith.addf %187, %192 : vector<18x64xf32>
    %c0_187 = arith.constant 0 : index
    %c2_188 = arith.constant 2 : index
    %c0_189 = arith.constant 0 : index
    %194 = vector.load %arg1[%c0_187, %c2_188, %c0_189] : memref<1x20x64xbf16, #tpu.memory_space<vmem>>, vector<1x18x64xbf16>
    %195 = vector.shape_cast %194 : vector<1x18x64xbf16> to vector<18x64xbf16>
    %c4_190 = arith.constant 4 : index
    %c0_191 = arith.constant 0 : index
    %c0_192 = arith.constant 0 : index
    %196 = vector.load %arg9[%c4_190, %c0_191, %c0_192] : memref<5x64x64xbf16, #tpu.memory_space<vmem>>, vector<1x64x64xbf16>
    %197 = vector.shape_cast %196 : vector<1x64x64xbf16> to vector<64x64xbf16>
    %cst_193 = arith.constant dense<0.000000e+00> : vector<18x64xf32>
    %198 = tpu.matmul %195, %197, %cst_193 {dimension_numbers = #tpu.dot_dimension_numbers<[1], [0], [0], [1], [0, 0, 1, 1], [], []>} : vector<18x64xbf16>, vector<64x64xbf16>, vector<18x64xf32> -> vector<18x64xf32>
    %199 = arith.addf %193, %198 : vector<18x64xf32>
    %200 = vector.extract_strided_slice %170 {offsets = [0, 0], sizes = [8, 64], strides = [1, 1]} : vector<18x64xf32> to vector<8x64xf32>
    %201 = vector.extract_strided_slice %199 {offsets = [0, 0], sizes = [8, 64], strides = [1, 1]} : vector<18x64xf32> to vector<8x64xf32>
    %202 = arith.addf %200, %201 : vector<8x64xf32>
    %c0_194 = arith.constant 0 : index
    %c0_195 = arith.constant 0 : index
    %203 = vector.load %arg12[%c0_194, %c0_195] : memref<1x64xf32, #tpu.memory_space<vmem>>, vector<1x64xf32>
    %204 = vector.broadcast %203 : vector<1x64xf32> to vector<8x64xf32>
    %205 = arith.addf %202, %204 : vector<8x64xf32>
    %c0_196 = arith.constant 0 : index
    %c0_197 = arith.constant 0 : index
    %206 = vector.load %arg5[%c0_196, %c0_197] : memref<2x64xf32, #tpu.memory_space<vmem>>, vector<1x64xf32>
    %207 = vector.broadcast %206 : vector<1x64xf32> to vector<8x64xf32>
    %208 = arith.mulf %205, %207 : vector<8x64xf32>
    %c1_198 = arith.constant 1 : index
    %c0_199 = arith.constant 0 : index
    %209 = vector.load %arg5[%c1_198, %c0_199] : memref<2x64xf32, #tpu.memory_space<vmem>>, vector<1x64xf32>
    %210 = vector.broadcast %209 : vector<1x64xf32> to vector<8x64xf32>
    %211 = arith.addf %208, %210 : vector<8x64xf32>
    %cst_200 = arith.constant 0.000000e+00 : f32
    %212 = vector.broadcast %cst_200 : f32 to vector<8x64xf32>
    %213 = arith.maximumf %211, %212 : vector<8x64xf32>
    %c2_201 = arith.constant 2 : index
    %c0_202 = arith.constant 0 : index
    %214 = vector.load %arg19[%c2_201, %c0_202] : memref<24x64xf32, #tpu.memory_space<vmem>>, vector<8x64xf32>
    tpu.vector_store %arg19[%c2_201, %c0_202], %213 {strides = array<i32>} : memref<24x64xf32, #tpu.memory_space<vmem>>, vector<8x64xf32>,
    %215 = vector.extract_strided_slice %170 {offsets = [10, 0], sizes = [8, 64], strides = [1, 1]} : vector<18x64xf32> to vector<8x64xf32>
    %216 = vector.extract_strided_slice %199 {offsets = [10, 0], sizes = [8, 64], strides = [1, 1]} : vector<18x64xf32> to vector<8x64xf32>
    %217 = arith.addf %215, %216 : vector<8x64xf32>
    %c0_203 = arith.constant 0 : index
    %c0_204 = arith.constant 0 : index
    %218 = vector.load %arg12[%c0_203, %c0_204] : memref<1x64xf32, #tpu.memory_space<vmem>>, vector<1x64xf32>
    %219 = vector.broadcast %218 : vector<1x64xf32> to vector<8x64xf32>
    %220 = arith.addf %217, %219 : vector<8x64xf32>
    %c0_205 = arith.constant 0 : index
    %c0_206 = arith.constant 0 : index
    %221 = vector.load %arg5[%c0_205, %c0_206] : memref<2x64xf32, #tpu.memory_space<vmem>>, vector<1x64xf32>
    %222 = vector.broadcast %221 : vector<1x64xf32> to vector<8x64xf32>
    %223 = arith.mulf %220, %222 : vector<8x64xf32>
    %c1_207 = arith.constant 1 : index
    %c0_208 = arith.constant 0 : index
    %224 = vector.load %arg5[%c1_207, %c0_208] : memref<2x64xf32, #tpu.memory_space<vmem>>, vector<1x64xf32>
    %225 = vector.broadcast %224 : vector<1x64xf32> to vector<8x64xf32>
    %226 = arith.addf %223, %225 : vector<8x64xf32>
    %cst_209 = arith.constant 0.000000e+00 : f32
    %227 = vector.broadcast %cst_209 : f32 to vector<8x64xf32>
    %228 = arith.maximumf %226, %227 : vector<8x64xf32>
    %c14 = arith.constant 14 : index
    %c0_210 = arith.constant 0 : index
    %229 = vector.load %arg19[%c14, %c0_210] : memref<24x64xf32, #tpu.memory_space<vmem>>, vector<8x64xf32>
    tpu.vector_store %arg19[%c14, %c0_210], %228 {strides = array<i32>} : memref<24x64xf32, #tpu.memory_space<vmem>>, vector<8x64xf32>,
    %c0_211 = arith.constant 0 : index
    %c0_212 = arith.constant 0 : index
    %230 = vector.load %arg19[%c0_211, %c0_212] : memref<24x64xf32, #tpu.memory_space<vmem>>, vector<20x64xf32>
    %231 = arith.truncf %230 : vector<20x64xf32> to vector<20x64xbf16>
    %c0_213 = arith.constant 0 : index
    %c0_214 = arith.constant 0 : index
    %c0_215 = arith.constant 0 : index
    %232 = vector.load %arg10[%c0_213, %c0_214, %c0_215] : memref<5x64x64xbf16, #tpu.memory_space<vmem>>, vector<1x64x64xbf16>
    %233 = vector.shape_cast %232 : vector<1x64x64xbf16> to vector<64x64xbf16>
    %cst_216 = arith.constant dense<0.000000e+00> : vector<20x64xf32>
    %234 = tpu.matmul %231, %233, %cst_216 {dimension_numbers = #tpu.dot_dimension_numbers<[1], [0], [0], [1], [0, 0, 1, 1], [], []>} : vector<20x64xbf16>, vector<64x64xbf16>, vector<20x64xf32> -> vector<20x64xf32>
    %c1_217 = arith.constant 1 : index
    %c0_218 = arith.constant 0 : index
    %235 = vector.load %arg19[%c1_217, %c0_218] : memref<24x64xf32, #tpu.memory_space<vmem>>, vector<20x64xf32>
    %236 = arith.truncf %235 : vector<20x64xf32> to vector<20x64xbf16>
    %c1_219 = arith.constant 1 : index
    %c0_220 = arith.constant 0 : index
    %c0_221 = arith.constant 0 : index
    %237 = vector.load %arg10[%c1_219, %c0_220, %c0_221] : memref<5x64x64xbf16, #tpu.memory_space<vmem>>, vector<1x64x64xbf16>
    %238 = vector.shape_cast %237 : vector<1x64x64xbf16> to vector<64x64xbf16>
    %cst_222 = arith.constant dense<0.000000e+00> : vector<20x64xf32>
    %239 = tpu.matmul %236, %238, %cst_222 {dimension_numbers = #tpu.dot_dimension_numbers<[1], [0], [0], [1], [0, 0, 1, 1], [], []>} : vector<20x64xbf16>, vector<64x64xbf16>, vector<20x64xf32> -> vector<20x64xf32>
    %240 = arith.addf %234, %239 : vector<20x64xf32>
    %c2_223 = arith.constant 2 : index
    %c0_224 = arith.constant 0 : index
    %241 = vector.load %arg19[%c2_223, %c0_224] : memref<24x64xf32, #tpu.memory_space<vmem>>, vector<20x64xf32>
    %242 = arith.truncf %241 : vector<20x64xf32> to vector<20x64xbf16>
    %c2_225 = arith.constant 2 : index
    %c0_226 = arith.constant 0 : index
    %c0_227 = arith.constant 0 : index
    %243 = vector.load %arg10[%c2_225, %c0_226, %c0_227] : memref<5x64x64xbf16, #tpu.memory_space<vmem>>, vector<1x64x64xbf16>
    %244 = vector.shape_cast %243 : vector<1x64x64xbf16> to vector<64x64xbf16>
    %cst_228 = arith.constant dense<0.000000e+00> : vector<20x64xf32>
    %245 = tpu.matmul %242, %244, %cst_228 {dimension_numbers = #tpu.dot_dimension_numbers<[1], [0], [0], [1], [0, 0, 1, 1], [], []>} : vector<20x64xbf16>, vector<64x64xbf16>, vector<20x64xf32> -> vector<20x64xf32>
    %246 = arith.addf %240, %245 : vector<20x64xf32>
    %c3_229 = arith.constant 3 : index
    %c0_230 = arith.constant 0 : index
    %247 = vector.load %arg19[%c3_229, %c0_230] : memref<24x64xf32, #tpu.memory_space<vmem>>, vector<20x64xf32>
    %248 = arith.truncf %247 : vector<20x64xf32> to vector<20x64xbf16>
    %c3_231 = arith.constant 3 : index
    %c0_232 = arith.constant 0 : index
    %c0_233 = arith.constant 0 : index
    %249 = vector.load %arg10[%c3_231, %c0_232, %c0_233] : memref<5x64x64xbf16, #tpu.memory_space<vmem>>, vector<1x64x64xbf16>
    %250 = vector.shape_cast %249 : vector<1x64x64xbf16> to vector<64x64xbf16>
    %cst_234 = arith.constant dense<0.000000e+00> : vector<20x64xf32>
    %251 = tpu.matmul %248, %250, %cst_234 {dimension_numbers = #tpu.dot_dimension_numbers<[1], [0], [0], [1], [0, 0, 1, 1], [], []>} : vector<20x64xbf16>, vector<64x64xbf16>, vector<20x64xf32> -> vector<20x64xf32>
    %252 = arith.addf %246, %251 : vector<20x64xf32>
    %c4_235 = arith.constant 4 : index
    %c0_236 = arith.constant 0 : index
    %253 = vector.load %arg19[%c4_235, %c0_236] : memref<24x64xf32, #tpu.memory_space<vmem>>, vector<20x64xf32>
    %254 = arith.truncf %253 : vector<20x64xf32> to vector<20x64xbf16>
    %c4_237 = arith.constant 4 : index
    %c0_238 = arith.constant 0 : index
    %c0_239 = arith.constant 0 : index
    %255 = vector.load %arg10[%c4_237, %c0_238, %c0_239] : memref<5x64x64xbf16, #tpu.memory_space<vmem>>, vector<1x64x64xbf16>
    %256 = vector.shape_cast %255 : vector<1x64x64xbf16> to vector<64x64xbf16>
    %cst_240 = arith.constant dense<0.000000e+00> : vector<20x64xf32>
    %257 = tpu.matmul %254, %256, %cst_240 {dimension_numbers = #tpu.dot_dimension_numbers<[1], [0], [0], [1], [0, 0, 1, 1], [], []>} : vector<20x64xbf16>, vector<64x64xbf16>, vector<20x64xf32> -> vector<20x64xf32>
    %258 = arith.addf %252, %257 : vector<20x64xf32>
    %c0_241 = arith.constant 0 : index
    %c0_242 = arith.constant 0 : index
    %259 = vector.load %arg6[%c0_241, %c0_242] : memref<2x64xf32, #tpu.memory_space<vmem>>, vector<1x64xf32>
    %260 = vector.broadcast %259 : vector<1x64xf32> to vector<20x64xf32>
    %261 = arith.mulf %258, %260 : vector<20x64xf32>
    %c1_243 = arith.constant 1 : index
    %c0_244 = arith.constant 0 : index
    %262 = vector.load %arg6[%c1_243, %c0_244] : memref<2x64xf32, #tpu.memory_space<vmem>>, vector<1x64xf32>
    %263 = vector.broadcast %262 : vector<1x64xf32> to vector<20x64xf32>
    %264 = arith.addf %261, %263 : vector<20x64xf32>
    %cst_245 = arith.constant 0.000000e+00 : f32
    %265 = vector.broadcast %cst_245 : f32 to vector<20x64xf32>
    %266 = arith.maximumf %264, %265 : vector<20x64xf32>
    %267 = vector.extract_strided_slice %266 {offsets = [0, 0], sizes = [8, 64], strides = [1, 1]} : vector<20x64xf32> to vector<8x64xf32>
    %c2_246 = arith.constant 2 : index
    %c0_247 = arith.constant 0 : index
    %268 = vector.load %arg20[%c2_246, %c0_247] : memref<24x64xf32, #tpu.memory_space<vmem>>, vector<8x64xf32>
    tpu.vector_store %arg20[%c2_246, %c0_247], %267 {strides = array<i32>} : memref<24x64xf32, #tpu.memory_space<vmem>>, vector<8x64xf32>,
    %269 = vector.extract_strided_slice %266 {offsets = [12, 0], sizes = [8, 64], strides = [1, 1]} : vector<20x64xf32> to vector<8x64xf32>
    %c14_248 = arith.constant 14 : index
    %c0_249 = arith.constant 0 : index
    %270 = vector.load %arg20[%c14_248, %c0_249] : memref<24x64xf32, #tpu.memory_space<vmem>>, vector<8x64xf32>
    tpu.vector_store %arg20[%c14_248, %c0_249], %269 {strides = array<i32>} : memref<24x64xf32, #tpu.memory_space<vmem>>, vector<8x64xf32>,
    %c0_250 = arith.constant 0 : index
    %c0_251 = arith.constant 0 : index
    %271 = vector.load %arg20[%c0_250, %c0_251] : memref<24x64xf32, #tpu.memory_space<vmem>>, vector<20x64xf32>
    %272 = arith.truncf %271 : vector<20x64xf32> to vector<20x64xbf16>
    %c0_252 = arith.constant 0 : index
    %c0_253 = arith.constant 0 : index
    %c0_254 = arith.constant 0 : index
    %273 = vector.load %arg11[%c0_252, %c0_253, %c0_254] : memref<5x64x64xbf16, #tpu.memory_space<vmem>>, vector<1x64x64xbf16>
    %274 = vector.shape_cast %273 : vector<1x64x64xbf16> to vector<64x64xbf16>
    %cst_255 = arith.constant dense<0.000000e+00> : vector<20x64xf32>
    %275 = tpu.matmul %272, %274, %cst_255 {dimension_numbers = #tpu.dot_dimension_numbers<[1], [0], [0], [1], [0, 0, 1, 1], [], []>} : vector<20x64xbf16>, vector<64x64xbf16>, vector<20x64xf32> -> vector<20x64xf32>
    %c1_256 = arith.constant 1 : index
    %c0_257 = arith.constant 0 : index
    %276 = vector.load %arg20[%c1_256, %c0_257] : memref<24x64xf32, #tpu.memory_space<vmem>>, vector<20x64xf32>
    %277 = arith.truncf %276 : vector<20x64xf32> to vector<20x64xbf16>
    %c1_258 = arith.constant 1 : index
    %c0_259 = arith.constant 0 : index
    %c0_260 = arith.constant 0 : index
    %278 = vector.load %arg11[%c1_258, %c0_259, %c0_260] : memref<5x64x64xbf16, #tpu.memory_space<vmem>>, vector<1x64x64xbf16>
    %279 = vector.shape_cast %278 : vector<1x64x64xbf16> to vector<64x64xbf16>
    %cst_261 = arith.constant dense<0.000000e+00> : vector<20x64xf32>
    %280 = tpu.matmul %277, %279, %cst_261 {dimension_numbers = #tpu.dot_dimension_numbers<[1], [0], [0], [1], [0, 0, 1, 1], [], []>} : vector<20x64xbf16>, vector<64x64xbf16>, vector<20x64xf32> -> vector<20x64xf32>
    %281 = arith.addf %275, %280 : vector<20x64xf32>
    %c2_262 = arith.constant 2 : index
    %c0_263 = arith.constant 0 : index
    %282 = vector.load %arg20[%c2_262, %c0_263] : memref<24x64xf32, #tpu.memory_space<vmem>>, vector<20x64xf32>
    %283 = arith.truncf %282 : vector<20x64xf32> to vector<20x64xbf16>
    %c2_264 = arith.constant 2 : index
    %c0_265 = arith.constant 0 : index
    %c0_266 = arith.constant 0 : index
    %284 = vector.load %arg11[%c2_264, %c0_265, %c0_266] : memref<5x64x64xbf16, #tpu.memory_space<vmem>>, vector<1x64x64xbf16>
    %285 = vector.shape_cast %284 : vector<1x64x64xbf16> to vector<64x64xbf16>
    %cst_267 = arith.constant dense<0.000000e+00> : vector<20x64xf32>
    %286 = tpu.matmul %283, %285, %cst_267 {dimension_numbers = #tpu.dot_dimension_numbers<[1], [0], [0], [1], [0, 0, 1, 1], [], []>} : vector<20x64xbf16>, vector<64x64xbf16>, vector<20x64xf32> -> vector<20x64xf32>
    %287 = arith.addf %281, %286 : vector<20x64xf32>
    %c3_268 = arith.constant 3 : index
    %c0_269 = arith.constant 0 : index
    %288 = vector.load %arg20[%c3_268, %c0_269] : memref<24x64xf32, #tpu.memory_space<vmem>>, vector<20x64xf32>
    %289 = arith.truncf %288 : vector<20x64xf32> to vector<20x64xbf16>
    %c3_270 = arith.constant 3 : index
    %c0_271 = arith.constant 0 : index
    %c0_272 = arith.constant 0 : index
    %290 = vector.load %arg11[%c3_270, %c0_271, %c0_272] : memref<5x64x64xbf16, #tpu.memory_space<vmem>>, vector<1x64x64xbf16>
    %291 = vector.shape_cast %290 : vector<1x64x64xbf16> to vector<64x64xbf16>
    %cst_273 = arith.constant dense<0.000000e+00> : vector<20x64xf32>
    %292 = tpu.matmul %289, %291, %cst_273 {dimension_numbers = #tpu.dot_dimension_numbers<[1], [0], [0], [1], [0, 0, 1, 1], [], []>} : vector<20x64xbf16>, vector<64x64xbf16>, vector<20x64xf32> -> vector<20x64xf32>
    %293 = arith.addf %287, %292 : vector<20x64xf32>
    %c4_274 = arith.constant 4 : index
    %c0_275 = arith.constant 0 : index
    %294 = vector.load %arg20[%c4_274, %c0_275] : memref<24x64xf32, #tpu.memory_space<vmem>>, vector<20x64xf32>
    %295 = arith.truncf %294 : vector<20x64xf32> to vector<20x64xbf16>
    %c4_276 = arith.constant 4 : index
    %c0_277 = arith.constant 0 : index
    %c0_278 = arith.constant 0 : index
    %296 = vector.load %arg11[%c4_276, %c0_277, %c0_278] : memref<5x64x64xbf16, #tpu.memory_space<vmem>>, vector<1x64x64xbf16>
    %297 = vector.shape_cast %296 : vector<1x64x64xbf16> to vector<64x64xbf16>
    %cst_279 = arith.constant dense<0.000000e+00> : vector<20x64xf32>
    %298 = tpu.matmul %295, %297, %cst_279 {dimension_numbers = #tpu.dot_dimension_numbers<[1], [0], [0], [1], [0, 0, 1, 1], [], []>} : vector<20x64xbf16>, vector<64x64xbf16>, vector<20x64xf32> -> vector<20x64xf32>
    %299 = arith.addf %293, %298 : vector<20x64xf32>
    %300 = vector.extract_strided_slice %299 {offsets = [0, 0], sizes = [8, 64], strides = [1, 1]} : vector<20x64xf32> to vector<8x64xf32>
    %301 = arith.addf %205, %300 : vector<8x64xf32>
    %c0_280 = arith.constant 0 : index
    %c0_281 = arith.constant 0 : index
    %302 = vector.load %arg13[%c0_280, %c0_281] : memref<1x64xf32, #tpu.memory_space<vmem>>, vector<1x64xf32>
    %303 = vector.broadcast %302 : vector<1x64xf32> to vector<8x64xf32>
    %304 = arith.addf %301, %303 : vector<8x64xf32>
    %305 = vector.extract_strided_slice %299 {offsets = [12, 0], sizes = [8, 64], strides = [1, 1]} : vector<20x64xf32> to vector<8x64xf32>
    %306 = arith.addf %220, %305 : vector<8x64xf32>
    %c0_282 = arith.constant 0 : index
    %c0_283 = arith.constant 0 : index
    %307 = vector.load %arg13[%c0_282, %c0_283] : memref<1x64xf32, #tpu.memory_space<vmem>>, vector<1x64xf32>
    %308 = vector.broadcast %307 : vector<1x64xf32> to vector<8x64xf32>
    %309 = arith.addf %306, %308 : vector<8x64xf32>
    %310 = tpu.concatenate %304, %309 in 1 : vector<8x64xf32>, vector<8x64xf32> -> vector<8x128xf32>
    %c0_284 = arith.constant 0 : index
    %c0_285 = arith.constant 0 : index
    %c0_286 = arith.constant 0 : index
    %311 = vector.load %arg14[%c0_284, %c0_285, %c0_286] : memref<1x8x128xf32, #tpu.memory_space<vmem>>, vector<1x8x128xf32>
    %312 = vector.shape_cast %311 : vector<1x8x128xf32> to vector<8x128xf32>
    %313 = vector.shape_cast %310 : vector<8x128xf32> to vector<1x8x128xf32>
    tpu.vector_store %arg14[%c0_284, %c0_285, %c0_286], %313 {strides = array<i32>} : memref<1x8x128xf32, #tpu.memory_space<vmem>>, vector<1x8x128xf32>,
    return
  }
  func.func @transform_0(%arg0: i32) -> (i32, i32, i32) {
    %c0_i32 = arith.constant 0 : i32
    %c0_i32_0 = arith.constant 0 : i32
    %c0_i32_1 = arith.constant 0 : i32
    return %arg0, %c0_i32, %c0_i32_0 : i32, i32, i32
  }
  func.func @transform_1(%arg0: i32) -> (i32, i32, i32) {
    %c0_i32 = arith.constant 0 : i32
    %c0_i32_0 = arith.constant 0 : i32
    %c0_i32_1 = arith.constant 0 : i32
    return %arg0, %c0_i32, %c0_i32_0 : i32, i32, i32
  }
  func.func @transform_2(%arg0: i32) -> (i32, i32) {
    %c0_i32 = arith.constant 0 : i32
    %c0_i32_0 = arith.constant 0 : i32
    %c0_i32_1 = arith.constant 0 : i32
    return %c0_i32, %c0_i32_0 : i32, i32
  }
  func.func @transform_3(%arg0: i32) -> (i32, i32) {
    %c0_i32 = arith.constant 0 : i32
    %c0_i32_0 = arith.constant 0 : i32
    %c0_i32_1 = arith.constant 0 : i32
    return %c0_i32, %c0_i32_0 : i32, i32
  }
  func.func @transform_4(%arg0: i32) -> (i32, i32) {
    %c0_i32 = arith.constant 0 : i32
    %c0_i32_0 = arith.constant 0 : i32
    %c0_i32_1 = arith.constant 0 : i32
    return %c0_i32, %c0_i32_0 : i32, i32
  }
  func.func @transform_5(%arg0: i32) -> (i32, i32) {
    %c0_i32 = arith.constant 0 : i32
    %c0_i32_0 = arith.constant 0 : i32
    %c0_i32_1 = arith.constant 0 : i32
    return %c0_i32, %c0_i32_0 : i32, i32
  }
  func.func @transform_6(%arg0: i32) -> (i32, i32, i32) {
    %c0_i32 = arith.constant 0 : i32
    %c0_i32_0 = arith.constant 0 : i32
    %c0_i32_1 = arith.constant 0 : i32
    %c0_i32_2 = arith.constant 0 : i32
    return %c0_i32, %c0_i32_0, %c0_i32_1 : i32, i32, i32
  }
  func.func @transform_7(%arg0: i32) -> (i32, i32, i32) {
    %c0_i32 = arith.constant 0 : i32
    %c0_i32_0 = arith.constant 0 : i32
    %c0_i32_1 = arith.constant 0 : i32
    %c0_i32_2 = arith.constant 0 : i32
    return %c0_i32, %c0_i32_0, %c0_i32_1 : i32, i32, i32
  }
  func.func @transform_8(%arg0: i32) -> (i32, i32, i32) {
    %c0_i32 = arith.constant 0 : i32
    %c0_i32_0 = arith.constant 0 : i32
    %c0_i32_1 = arith.constant 0 : i32
    %c0_i32_2 = arith.constant 0 : i32
    return %c0_i32, %c0_i32_0, %c0_i32_1 : i32, i32, i32
  }
  func.func @transform_9(%arg0: i32) -> (i32, i32, i32) {
    %c0_i32 = arith.constant 0 : i32
    %c0_i32_0 = arith.constant 0 : i32
    %c0_i32_1 = arith.constant 0 : i32
    %c0_i32_2 = arith.constant 0 : i32
    return %c0_i32, %c0_i32_0, %c0_i32_1 : i32, i32, i32
  }
  func.func @transform_10(%arg0: i32) -> (i32, i32, i32) {
    %c0_i32 = arith.constant 0 : i32
    %c0_i32_0 = arith.constant 0 : i32
    %c0_i32_1 = arith.constant 0 : i32
    %c0_i32_2 = arith.constant 0 : i32
    return %c0_i32, %c0_i32_0, %c0_i32_1 : i32, i32, i32
  }
  func.func @transform_11(%arg0: i32) -> (i32, i32) {
    %c0_i32 = arith.constant 0 : i32
    %c0_i32_0 = arith.constant 0 : i32
    %c0_i32_1 = arith.constant 0 : i32
    return %c0_i32, %c0_i32_0 : i32, i32
  }
  func.func @transform_12(%arg0: i32) -> (i32, i32) {
    %c0_i32 = arith.constant 0 : i32
    %c0_i32_0 = arith.constant 0 : i32
    %c0_i32_1 = arith.constant 0 : i32
    return %c0_i32, %c0_i32_0 : i32, i32
  }
  func.func @transform_13(%arg0: i32) -> (i32, i32, i32) {
    %c0_i32 = arith.constant 0 : i32
    %c0_i32_0 = arith.constant 0 : i32
    %c0_i32_1 = arith.constant 0 : i32
    return %arg0, %c0_i32, %c0_i32_0 : i32, i32, i32
  }
}

module attributes {stable_mosaic.version = 11 : i64} {
  func.func @kernel(%arg0: i32, %arg1: memref<1x20x64xbf16, #tpu.memory_space<vmem>>, %arg2: memref<1x20x64xbf16, #tpu.memory_space<vmem>>, %arg3: memref<2x64xf32, #tpu.memory_space<vmem>>, %arg4: memref<2x128xf32, #tpu.memory_space<vmem>>, %arg5: memref<2x64xf32, #tpu.memory_space<vmem>>, %arg6: memref<2x64xf32, #tpu.memory_space<vmem>>, %arg7: memref<5x64x128xbf16, #tpu.memory_space<vmem>>, %arg8: memref<5x128x64xbf16, #tpu.memory_space<vmem>>, %arg9: memref<5x64x64xbf16, #tpu.memory_space<vmem>>, %arg10: memref<5x64x64xbf16, #tpu.memory_space<vmem>>, %arg11: memref<5x64x64xbf16, #tpu.memory_space<vmem>>, %arg12: memref<1x64xf32, #tpu.memory_space<vmem>>, %arg13: memref<1x64xf32, #tpu.memory_space<vmem>>, %arg14: memref<1x8x128xf32, #tpu.memory_space<vmem>>, %arg15: memref<20x64xf32, #tpu.memory_space<vmem>>, %arg16: memref<20x64xf32, #tpu.memory_space<vmem>>, %arg17: memref<20x128xf32, #tpu.memory_space<vmem>>, %arg18: memref<20x128xf32, #tpu.memory_space<vmem>>, %arg19: memref<24x64xf32, #tpu.memory_space<vmem>>, %arg20: memref<24x64xf32, #tpu.memory_space<vmem>>) attributes {dimension_semantics = [#tpu.dimension_semantics<parallel>], iteration_bounds = array<i64: 2>, scalar_prefetch = 0 : i64, scratch_operands = 6 : i64, tpu.core_type = #tpu.core_type<tc>, window_params = [{transform_indices = @transform_0, window_bounds = array<i64: 1, 20, 64>}, {transform_indices = @transform_1, window_bounds = array<i64: 1, 20, 64>}, {pipeline_mode = #tpu.pipeline_mode<synchronous>, transform_indices = @transform_2, window_bounds = array<i64: 2, 64>}, {pipeline_mode = #tpu.pipeline_mode<synchronous>, transform_indices = @transform_3, window_bounds = array<i64: 2, 128>}, {pipeline_mode = #tpu.pipeline_mode<synchronous>, transform_indices = @transform_4, window_bounds = array<i64: 2, 64>}, {pipeline_mode = #tpu.pipeline_mode<synchronous>, transform_indices = @transform_5, window_bounds = array<i64: 2, 64>}, {pipeline_mode = #tpu.pipeline_mode<synchronous>, transform_indices = @transform_6, window_bounds = array<i64: 5, 64, 128>}, {pipeline_mode = #tpu.pipeline_mode<synchronous>, transform_indices = @transform_7, window_bounds = array<i64: 5, 128, 64>}, {pipeline_mode = #tpu.pipeline_mode<synchronous>, transform_indices = @transform_8, window_bounds = array<i64: 5, 64, 64>}, {pipeline_mode = #tpu.pipeline_mode<synchronous>, transform_indices = @transform_9, window_bounds = array<i64: 5, 64, 64>}, {pipeline_mode = #tpu.pipeline_mode<synchronous>, transform_indices = @transform_10, window_bounds = array<i64: 5, 64, 64>}, {pipeline_mode = #tpu.pipeline_mode<synchronous>, transform_indices = @transform_11, window_bounds = array<i64: 1, 64>}, {pipeline_mode = #tpu.pipeline_mode<synchronous>, transform_indices = @transform_12, window_bounds = array<i64: 1, 64>}, {transform_indices = @transform_13, window_bounds = array<i64: 1, 8, 128>}]} {
    %cst = arith.constant 0.000000e+00 : f32
    %0 = vector.broadcast %cst : f32 to vector<20x64xf32>
    %c0 = arith.constant 0 : index
    %c0_0 = arith.constant 0 : index
    %1 = vector.load %arg15[%c0, %c0_0] : memref<20x64xf32, #tpu.memory_space<vmem>>, vector<20x64xf32>
    tpu.vector_store %arg15[%c0, %c0_0], %0 {strides = array<i32>} : memref<20x64xf32, #tpu.memory_space<vmem>>, vector<20x64xf32>,
    %cst_1 = arith.constant 0.000000e+00 : f32
    %2 = vector.broadcast %cst_1 : f32 to vector<20x64xf32>
    %c0_2 = arith.constant 0 : index
    %c0_3 = arith.constant 0 : index
    %3 = vector.load %arg16[%c0_2, %c0_3] : memref<20x64xf32, #tpu.memory_space<vmem>>, vector<20x64xf32>
    tpu.vector_store %arg16[%c0_2, %c0_3], %2 {strides = array<i32>} : memref<20x64xf32, #tpu.memory_space<vmem>>, vector<20x64xf32>,
    %cst_4 = arith.constant 0.000000e+00 : f32
    %4 = vector.broadcast %cst_4 : f32 to vector<20x128xf32>
    %c0_5 = arith.constant 0 : index
    %c0_6 = arith.constant 0 : index
    %5 = vector.load %arg17[%c0_5, %c0_6] : memref<20x128xf32, #tpu.memory_space<vmem>>, vector<20x128xf32>
    tpu.vector_store %arg17[%c0_5, %c0_6], %4 {strides = array<i32>} : memref<20x128xf32, #tpu.memory_space<vmem>>, vector<20x128xf32>,
    %cst_7 = arith.constant 0.000000e+00 : f32
    %6 = vector.broadcast %cst_7 : f32 to vector<20x128xf32>
    %c0_8 = arith.constant 0 : index
    %c0_9 = arith.constant 0 : index
    %7 = vector.load %arg18[%c0_8, %c0_9] : memref<20x128xf32, #tpu.memory_space<vmem>>, vector<20x128xf32>
    tpu.vector_store %arg18[%c0_8, %c0_9], %6 {strides = array<i32>} : memref<20x128xf32, #tpu.memory_space<vmem>>, vector<20x128xf32>,
    %cst_10 = arith.constant 0.000000e+00 : f32
    %8 = vector.broadcast %cst_10 : f32 to vector<24x64xf32>
    %c0_11 = arith.constant 0 : index
    %c0_12 = arith.constant 0 : index
    %9 = vector.load %arg19[%c0_11, %c0_12] : memref<24x64xf32, #tpu.memory_space<vmem>>, vector<24x64xf32>
    tpu.vector_store %arg19[%c0_11, %c0_12], %8 {strides = array<i32>} : memref<24x64xf32, #tpu.memory_space<vmem>>, vector<24x64xf32>,
    %cst_13 = arith.constant 0.000000e+00 : f32
    %10 = vector.broadcast %cst_13 : f32 to vector<24x64xf32>
    %c0_14 = arith.constant 0 : index
    %c0_15 = arith.constant 0 : index
    %11 = vector.load %arg20[%c0_14, %c0_15] : memref<24x64xf32, #tpu.memory_space<vmem>>, vector<24x64xf32>
    tpu.vector_store %arg20[%c0_14, %c0_15], %10 {strides = array<i32>} : memref<24x64xf32, #tpu.memory_space<vmem>>, vector<24x64xf32>,
    %c0_16 = arith.constant 0 : index
    %c1 = arith.constant 1 : index
    %c0_17 = arith.constant 0 : index
    %12 = vector.load %arg1[%c0_16, %c1, %c0_17] : memref<1x20x64xbf16, #tpu.memory_space<vmem>>, vector<1x8x64xbf16>
    %13 = vector.shape_cast %12 : vector<1x8x64xbf16> to vector<8x64xbf16>
    %14 = arith.extf %13 : vector<8x64xbf16> to vector<8x64xf32>
    %c0_18 = arith.constant 0 : index
    %c0_19 = arith.constant 0 : index
    %15 = vector.load %arg3[%c0_18, %c0_19] : memref<2x64xf32, #tpu.memory_space<vmem>>, vector<1x64xf32>
    %16 = vector.broadcast %15 : vector<1x64xf32> to vector<8x64xf32>
    %17 = arith.mulf %14, %16 : vector<8x64xf32>
    %c1_20 = arith.constant 1 : index
    %c0_21 = arith.constant 0 : index
    %18 = vector.load %arg3[%c1_20, %c0_21] : memref<2x64xf32, #tpu.memory_space<vmem>>, vector<1x64xf32>
    %19 = vector.broadcast %18 : vector<1x64xf32> to vector<8x64xf32>
    %20 = arith.addf %17, %19 : vector<8x64xf32>
    %cst_22 = arith.constant 0.000000e+00 : f32
    %21 = vector.broadcast %cst_22 : f32 to vector<8x64xf32>
    %22 = arith.maximumf %20, %21 : vector<8x64xf32>
    %c1_23 = arith.constant 1 : index
    %c0_24 = arith.constant 0 : index
    %23 = vector.load %arg15[%c1_23, %c0_24] : memref<20x64xf32, #tpu.memory_space<vmem>>, vector<8x64xf32>
    tpu.vector_store %arg15[%c1_23, %c0_24], %22 {strides = array<i32>} : memref<20x64xf32, #tpu.memory_space<vmem>>, vector<8x64xf32>,
    %c0_25 = arith.constant 0 : index
    %c1_26 = arith.constant 1 : index
    %c0_27 = arith.constant 0 : index
    %24 = vector.load %arg2[%c0_25, %c1_26, %c0_27] : memref<1x20x64xbf16, #tpu.memory_space<vmem>>, vector<1x8x64xbf16>
    %25 = vector.shape_cast %24 : vector<1x8x64xbf16> to vector<8x64xbf16>
    %26 = arith.extf %25 : vector<8x64xbf16> to vector<8x64xf32>
    %c0_28 = arith.constant 0 : index
    %c0_29 = arith.constant 0 : index
    %27 = vector.load %arg3[%c0_28, %c0_29] : memref<2x64xf32, #tpu.memory_space<vmem>>, vector<1x64xf32>
    %28 = vector.broadcast %27 : vector<1x64xf32> to vector<8x64xf32>
    %29 = arith.mulf %26, %28 : vector<8x64xf32>
    %c1_30 = arith.constant 1 : index
    %c0_31 = arith.constant 0 : index
    %30 = vector.load %arg3[%c1_30, %c0_31] : memref<2x64xf32, #tpu.memory_space<vmem>>, vector<1x64xf32>
    %31 = vector.broadcast %30 : vector<1x64xf32> to vector<8x64xf32>
    %32 = arith.addf %29, %31 : vector<8x64xf32>
    %cst_32 = arith.constant 0.000000e+00 : f32
    %33 = vector.broadcast %cst_32 : f32 to vector<8x64xf32>
    %34 = arith.maximumf %32, %33 : vector<8x64xf32>
    %c1_33 = arith.constant 1 : index
    %c0_34 = arith.constant 0 : index
    %35 = vector.load %arg16[%c1_33, %c0_34] : memref<20x64xf32, #tpu.memory_space<vmem>>, vector<8x64xf32>
    tpu.vector_store %arg16[%c1_33, %c0_34], %34 {strides = array<i32>} : memref<20x64xf32, #tpu.memory_space<vmem>>, vector<8x64xf32>,
    %c0_35 = arith.constant 0 : index
    %c11 = arith.constant 11 : index
    %c0_36 = arith.constant 0 : index
    %36 = vector.load %arg1[%c0_35, %c11, %c0_36] : memref<1x20x64xbf16, #tpu.memory_space<vmem>>, vector<1x8x64xbf16>
    %37 = vector.shape_cast %36 : vector<1x8x64xbf16> to vector<8x64xbf16>
    %38 = arith.extf %37 : vector<8x64xbf16> to vector<8x64xf32>
    %c0_37 = arith.constant 0 : index
    %c0_38 = arith.constant 0 : index
    %39 = vector.load %arg3[%c0_37, %c0_38] : memref<2x64xf32, #tpu.memory_space<vmem>>, vector<1x64xf32>
    %40 = vector.broadcast %39 : vector<1x64xf32> to vector<8x64xf32>
    %41 = arith.mulf %38, %40 : vector<8x64xf32>
    %c1_39 = arith.constant 1 : index
    %c0_40 = arith.constant 0 : index
    %42 = vector.load %arg3[%c1_39, %c0_40] : memref<2x64xf32, #tpu.memory_space<vmem>>, vector<1x64xf32>
    %43 = vector.broadcast %42 : vector<1x64xf32> to vector<8x64xf32>
    %44 = arith.addf %41, %43 : vector<8x64xf32>
    %cst_41 = arith.constant 0.000000e+00 : f32
    %45 = vector.broadcast %cst_41 : f32 to vector<8x64xf32>
    %46 = arith.maximumf %44, %45 : vector<8x64xf32>
    %c11_42 = arith.constant 11 : index
    %c0_43 = arith.constant 0 : index
    %47 = vector.load %arg15[%c11_42, %c0_43] : memref<20x64xf32, #tpu.memory_space<vmem>>, vector<8x64xf32>
    tpu.vector_store %arg15[%c11_42, %c0_43], %46 {strides = array<i32>} : memref<20x64xf32, #tpu.memory_space<vmem>>, vector<8x64xf32>,
    %c0_44 = arith.constant 0 : index
    %c11_45 = arith.constant 11 : index
    %c0_46 = arith.constant 0 : index
    %48 = vector.load %arg2[%c0_44, %c11_45, %c0_46] : memref<1x20x64xbf16, #tpu.memory_space<vmem>>, vector<1x8x64xbf16>
    %49 = vector.shape_cast %48 : vector<1x8x64xbf16> to vector<8x64xbf16>
    %50 = arith.extf %49 : vector<8x64xbf16> to vector<8x64xf32>
    %c0_47 = arith.constant 0 : index
    %c0_48 = arith.constant 0 : index
    %51 = vector.load %arg3[%c0_47, %c0_48] : memref<2x64xf32, #tpu.memory_space<vmem>>, vector<1x64xf32>
    %52 = vector.broadcast %51 : vector<1x64xf32> to vector<8x64xf32>
    %53 = arith.mulf %50, %52 : vector<8x64xf32>
    %c1_49 = arith.constant 1 : index
    %c0_50 = arith.constant 0 : index
    %54 = vector.load %arg3[%c1_49, %c0_50] : memref<2x64xf32, #tpu.memory_space<vmem>>, vector<1x64xf32>
    %55 = vector.broadcast %54 : vector<1x64xf32> to vector<8x64xf32>
    %56 = arith.addf %53, %55 : vector<8x64xf32>
    %cst_51 = arith.constant 0.000000e+00 : f32
    %57 = vector.broadcast %cst_51 : f32 to vector<8x64xf32>
    %58 = arith.maximumf %56, %57 : vector<8x64xf32>
    %c11_52 = arith.constant 11 : index
    %c0_53 = arith.constant 0 : index
    %59 = vector.load %arg16[%c11_52, %c0_53] : memref<20x64xf32, #tpu.memory_space<vmem>>, vector<8x64xf32>
    tpu.vector_store %arg16[%c11_52, %c0_53], %58 {strides = array<i32>} : memref<20x64xf32, #tpu.memory_space<vmem>>, vector<8x64xf32>,
    %c0_54 = arith.constant 0 : index
    %c0_55 = arith.constant 0 : index
    %60 = vector.load %arg15[%c0_54, %c0_55] : memref<20x64xf32, #tpu.memory_space<vmem>>, vector<18x64xf32>
    %61 = arith.truncf %60 : vector<18x64xf32> to vector<18x64xbf16>
    %c0_56 = arith.constant 0 : index
    %c0_57 = arith.constant 0 : index
    %c0_58 = arith.constant 0 : index
    %62 = vector.load %arg7[%c0_56, %c0_57, %c0_58] : memref<5x64x128xbf16, #tpu.memory_space<vmem>>, vector<1x64x128xbf16>
    %63 = vector.shape_cast %62 : vector<1x64x128xbf16> to vector<64x128xbf16>
    %cst_59 = arith.constant dense<0.000000e+00> : vector<18x128xf32>
    %64 = tpu.matmul %61, %63, %cst_59 {dimension_numbers = #tpu.dot_dimension_numbers<[1], [0], [0], [1], [0, 0, 1, 1], [], []>} : vector<18x64xbf16>, vector<64x128xbf16>, vector<18x128xf32> -> vector<18x128xf32>
    %c0_60 = arith.constant 0 : index
    %c0_61 = arith.constant 0 : index
    %65 = vector.load %arg16[%c0_60, %c0_61] : memref<20x64xf32, #tpu.memory_space<vmem>>, vector<18x64xf32>
    %66 = arith.truncf %65 : vector<18x64xf32> to vector<18x64xbf16>
    %c1_62 = arith.constant 1 : index
    %c0_63 = arith.constant 0 : index
    %c0_64 = arith.constant 0 : index
    %67 = vector.load %arg7[%c1_62, %c0_63, %c0_64] : memref<5x64x128xbf16, #tpu.memory_space<vmem>>, vector<1x64x128xbf16>
    %68 = vector.shape_cast %67 : vector<1x64x128xbf16> to vector<64x128xbf16>
    %cst_65 = arith.constant dense<0.000000e+00> : vector<18x128xf32>
    %69 = tpu.matmul %66, %68, %cst_65 {dimension_numbers = #tpu.dot_dimension_numbers<[1], [0], [0], [1], [0, 0, 1, 1], [], []>} : vector<18x64xbf16>, vector<64x128xbf16>, vector<18x128xf32> -> vector<18x128xf32>
    %70 = arith.addf %64, %69 : vector<18x128xf32>
    %c1_66 = arith.constant 1 : index
    %c0_67 = arith.constant 0 : index
    %71 = vector.load %arg15[%c1_66, %c0_67] : memref<20x64xf32, #tpu.memory_space<vmem>>, vector<18x64xf32>
    %72 = arith.truncf %71 : vector<18x64xf32> to vector<18x64xbf16>
    %c2 = arith.constant 2 : index
    %c0_68 = arith.constant 0 : index
    %c0_69 = arith.constant 0 : index
    %73 = vector.load %arg7[%c2, %c0_68, %c0_69] : memref<5x64x128xbf16, #tpu.memory_space<vmem>>, vector<1x64x128xbf16>
    %74 = vector.shape_cast %73 : vector<1x64x128xbf16> to vector<64x128xbf16>
    %cst_70 = arith.constant dense<0.000000e+00> : vector<18x128xf32>
    %75 = tpu.matmul %72, %74, %cst_70 {dimension_numbers = #tpu.dot_dimension_numbers<[1], [0], [0], [1], [0, 0, 1, 1], [], []>} : vector<18x64xbf16>, vector<64x128xbf16>, vector<18x128xf32> -> vector<18x128xf32>
    %76 = arith.addf %70, %75 : vector<18x128xf32>
    %c1_71 = arith.constant 1 : index
    %c0_72 = arith.constant 0 : index
    %77 = vector.load %arg16[%c1_71, %c0_72] : memref<20x64xf32, #tpu.memory_space<vmem>>, vector<18x64xf32>
    %78 = arith.truncf %77 : vector<18x64xf32> to vector<18x64xbf16>
    %c3 = arith.constant 3 : index
    %c0_73 = arith.constant 0 : index
    %c0_74 = arith.constant 0 : index
    %79 = vector.load %arg7[%c3, %c0_73, %c0_74] : memref<5x64x128xbf16, #tpu.memory_space<vmem>>, vector<1x64x128xbf16>
    %80 = vector.shape_cast %79 : vector<1x64x128xbf16> to vector<64x128xbf16>
    %cst_75 = arith.constant dense<0.000000e+00> : vector<18x128xf32>
    %81 = tpu.matmul %78, %80, %cst_75 {dimension_numbers = #tpu.dot_dimension_numbers<[1], [0], [0], [1], [0, 0, 1, 1], [], []>} : vector<18x64xbf16>, vector<64x128xbf16>, vector<18x128xf32> -> vector<18x128xf32>
    %82 = arith.addf %76, %81 : vector<18x128xf32>
    %c2_76 = arith.constant 2 : index
    %c0_77 = arith.constant 0 : index
    %83 = vector.load %arg15[%c2_76, %c0_77] : memref<20x64xf32, #tpu.memory_space<vmem>>, vector<18x64xf32>
    %84 = arith.truncf %83 : vector<18x64xf32> to vector<18x64xbf16>
    %c4 = arith.constant 4 : index
    %c0_78 = arith.constant 0 : index
    %c0_79 = arith.constant 0 : index
    %85 = vector.load %arg7[%c4, %c0_78, %c0_79] : memref<5x64x128xbf16, #tpu.memory_space<vmem>>, vector<1x64x128xbf16>
    %86 = vector.shape_cast %85 : vector<1x64x128xbf16> to vector<64x128xbf16>
    %cst_80 = arith.constant dense<0.000000e+00> : vector<18x128xf32>
    %87 = tpu.matmul %84, %86, %cst_80 {dimension_numbers = #tpu.dot_dimension_numbers<[1], [0], [0], [1], [0, 0, 1, 1], [], []>} : vector<18x64xbf16>, vector<64x128xbf16>, vector<18x128xf32> -> vector<18x128xf32>
    %88 = arith.addf %82, %87 : vector<18x128xf32>
    %c0_81 = arith.constant 0 : index
    %c0_82 = arith.constant 0 : index
    %89 = vector.load %arg16[%c0_81, %c0_82] : memref<20x64xf32, #tpu.memory_space<vmem>>, vector<18x64xf32>
    %90 = arith.truncf %89 : vector<18x64xf32> to vector<18x64xbf16>
    %c0_83 = arith.constant 0 : index
    %c0_84 = arith.constant 0 : index
    %c0_85 = arith.constant 0 : index
    %91 = vector.load %arg7[%c0_83, %c0_84, %c0_85] : memref<5x64x128xbf16, #tpu.memory_space<vmem>>, vector<1x64x128xbf16>
    %92 = vector.shape_cast %91 : vector<1x64x128xbf16> to vector<64x128xbf16>
    %cst_86 = arith.constant dense<0.000000e+00> : vector<18x128xf32>
    %93 = tpu.matmul %90, %92, %cst_86 {dimension_numbers = #tpu.dot_dimension_numbers<[1], [0], [0], [1], [0, 0, 1, 1], [], []>} : vector<18x64xbf16>, vector<64x128xbf16>, vector<18x128xf32> -> vector<18x128xf32>
    %c1_87 = arith.constant 1 : index
    %c0_88 = arith.constant 0 : index
    %94 = vector.load %arg15[%c1_87, %c0_88] : memref<20x64xf32, #tpu.memory_space<vmem>>, vector<18x64xf32>
    %95 = arith.truncf %94 : vector<18x64xf32> to vector<18x64xbf16>
    %c1_89 = arith.constant 1 : index
    %c0_90 = arith.constant 0 : index
    %c0_91 = arith.constant 0 : index
    %96 = vector.load %arg7[%c1_89, %c0_90, %c0_91] : memref<5x64x128xbf16, #tpu.memory_space<vmem>>, vector<1x64x128xbf16>
    %97 = vector.shape_cast %96 : vector<1x64x128xbf16> to vector<64x128xbf16>
    %cst_92 = arith.constant dense<0.000000e+00> : vector<18x128xf32>
    %98 = tpu.matmul %95, %97, %cst_92 {dimension_numbers = #tpu.dot_dimension_numbers<[1], [0], [0], [1], [0, 0, 1, 1], [], []>} : vector<18x64xbf16>, vector<64x128xbf16>, vector<18x128xf32> -> vector<18x128xf32>
    %99 = arith.addf %93, %98 : vector<18x128xf32>
    %c1_93 = arith.constant 1 : index
    %c0_94 = arith.constant 0 : index
    %100 = vector.load %arg16[%c1_93, %c0_94] : memref<20x64xf32, #tpu.memory_space<vmem>>, vector<18x64xf32>
    %101 = arith.truncf %100 : vector<18x64xf32> to vector<18x64xbf16>
    %c2_95 = arith.constant 2 : index
    %c0_96 = arith.constant 0 : index
    %c0_97 = arith.constant 0 : index
    %102 = vector.load %arg7[%c2_95, %c0_96, %c0_97] : memref<5x64x128xbf16, #tpu.memory_space<vmem>>, vector<1x64x128xbf16>
    %103 = vector.shape_cast %102 : vector<1x64x128xbf16> to vector<64x128xbf16>
    %cst_98 = arith.constant dense<0.000000e+00> : vector<18x128xf32>
    %104 = tpu.matmul %101, %103, %cst_98 {dimension_numbers = #tpu.dot_dimension_numbers<[1], [0], [0], [1], [0, 0, 1, 1], [], []>} : vector<18x64xbf16>, vector<64x128xbf16>, vector<18x128xf32> -> vector<18x128xf32>
    %105 = arith.addf %99, %104 : vector<18x128xf32>
    %c2_99 = arith.constant 2 : index
    %c0_100 = arith.constant 0 : index
    %106 = vector.load %arg15[%c2_99, %c0_100] : memref<20x64xf32, #tpu.memory_space<vmem>>, vector<18x64xf32>
    %107 = arith.truncf %106 : vector<18x64xf32> to vector<18x64xbf16>
    %c3_101 = arith.constant 3 : index
    %c0_102 = arith.constant 0 : index
    %c0_103 = arith.constant 0 : index
    %108 = vector.load %arg7[%c3_101, %c0_102, %c0_103] : memref<5x64x128xbf16, #tpu.memory_space<vmem>>, vector<1x64x128xbf16>
    %109 = vector.shape_cast %108 : vector<1x64x128xbf16> to vector<64x128xbf16>
    %cst_104 = arith.constant dense<0.000000e+00> : vector<18x128xf32>
    %110 = tpu.matmul %107, %109, %cst_104 {dimension_numbers = #tpu.dot_dimension_numbers<[1], [0], [0], [1], [0, 0, 1, 1], [], []>} : vector<18x64xbf16>, vector<64x128xbf16>, vector<18x128xf32> -> vector<18x128xf32>
    %111 = arith.addf %105, %110 : vector<18x128xf32>
    %c2_105 = arith.constant 2 : index
    %c0_106 = arith.constant 0 : index
    %112 = vector.load %arg16[%c2_105, %c0_106] : memref<20x64xf32, #tpu.memory_space<vmem>>, vector<18x64xf32>
    %113 = arith.truncf %112 : vector<18x64xf32> to vector<18x64xbf16>
    %c4_107 = arith.constant 4 : index
    %c0_108 = arith.constant 0 : index
    %c0_109 = arith.constant 0 : index
    %114 = vector.load %arg7[%c4_107, %c0_108, %c0_109] : memref<5x64x128xbf16, #tpu.memory_space<vmem>>, vector<1x64x128xbf16>
    %115 = vector.shape_cast %114 : vector<1x64x128xbf16> to vector<64x128xbf16>
    %cst_110 = arith.constant dense<0.000000e+00> : vector<18x128xf32>
    %116 = tpu.matmul %113, %115, %cst_110 {dimension_numbers = #tpu.dot_dimension_numbers<[1], [0], [0], [1], [0, 0, 1, 1], [], []>} : vector<18x64xbf16>, vector<64x128xbf16>, vector<18x128xf32> -> vector<18x128xf32>
    %117 = arith.addf %111, %116 : vector<18x128xf32>
    %c0_111 = arith.constant 0 : index
    %c0_112 = arith.constant 0 : index
    %118 = vector.load %arg4[%c0_111, %c0_112] : memref<2x128xf32, #tpu.memory_space<vmem>>, vector<1x128xf32>
    %119 = vector.broadcast %118 : vector<1x128xf32> to vector<18x128xf32>
    %120 = arith.mulf %88, %119 : vector<18x128xf32>
    %c1_113 = arith.constant 1 : index
    %c0_114 = arith.constant 0 : index
    %121 = vector.load %arg4[%c1_113, %c0_114] : memref<2x128xf32, #tpu.memory_space<vmem>>, vector<1x128xf32>
    %122 = vector.broadcast %121 : vector<1x128xf32> to vector<18x128xf32>
    %123 = arith.addf %120, %122 : vector<18x128xf32>
    %cst_115 = arith.constant 0.000000e+00 : f32
    %124 = vector.broadcast %cst_115 : f32 to vector<18x128xf32>
    %125 = arith.maximumf %123, %124 : vector<18x128xf32>
    %c0_116 = arith.constant 0 : index
    %c0_117 = arith.constant 0 : index
    %126 = vector.load %arg4[%c0_116, %c0_117] : memref<2x128xf32, #tpu.memory_space<vmem>>, vector<1x128xf32>
    %127 = vector.broadcast %126 : vector<1x128xf32> to vector<18x128xf32>
    %128 = arith.mulf %117, %127 : vector<18x128xf32>
    %c1_118 = arith.constant 1 : index
    %c0_119 = arith.constant 0 : index
    %129 = vector.load %arg4[%c1_118, %c0_119] : memref<2x128xf32, #tpu.memory_space<vmem>>, vector<1x128xf32>
    %130 = vector.broadcast %129 : vector<1x128xf32> to vector<18x128xf32>
    %131 = arith.addf %128, %130 : vector<18x128xf32>
    %cst_120 = arith.constant 0.000000e+00 : f32
    %132 = vector.broadcast %cst_120 : f32 to vector<18x128xf32>
    %133 = arith.maximumf %131, %132 : vector<18x128xf32>
    %134 = vector.extract_strided_slice %125 {offsets = [0, 0], sizes = [8, 128], strides = [1, 1]} : vector<18x128xf32> to vector<8x128xf32>
    %c1_121 = arith.constant 1 : index
    %c0_122 = arith.constant 0 : index
    %135 = vector.load %arg17[%c1_121, %c0_122] : memref<20x128xf32, #tpu.memory_space<vmem>>, vector<8x128xf32>
    tpu.vector_store %arg17[%c1_121, %c0_122], %134 {strides = array<i32>} : memref<20x128xf32, #tpu.memory_space<vmem>>, vector<8x128xf32>,
    %136 = vector.extract_strided_slice %133 {offsets = [0, 0], sizes = [8, 128], strides = [1, 1]} : vector<18x128xf32> to vector<8x128xf32>
    %c1_123 = arith.constant 1 : index
    %c0_124 = arith.constant 0 : index
    %137 = vector.load %arg18[%c1_123, %c0_124] : memref<20x128xf32, #tpu.memory_space<vmem>>, vector<8x128xf32>
    tpu.vector_store %arg18[%c1_123, %c0_124], %136 {strides = array<i32>} : memref<20x128xf32, #tpu.memory_space<vmem>>, vector<8x128xf32>,
    %138 = vector.extract_strided_slice %125 {offsets = [10, 0], sizes = [8, 128], strides = [1, 1]} : vector<18x128xf32> to vector<8x128xf32>
    %c11_125 = arith.constant 11 : index
    %c0_126 = arith.constant 0 : index
    %139 = vector.load %arg17[%c11_125, %c0_126] : memref<20x128xf32, #tpu.memory_space<vmem>>, vector<8x128xf32>
    tpu.vector_store %arg17[%c11_125, %c0_126], %138 {strides = array<i32>} : memref<20x128xf32, #tpu.memory_space<vmem>>, vector<8x128xf32>,
    %140 = vector.extract_strided_slice %133 {offsets = [10, 0], sizes = [8, 128], strides = [1, 1]} : vector<18x128xf32> to vector<8x128xf32>
    %c11_127 = arith.constant 11 : index
    %c0_128 = arith.constant 0 : index
    %141 = vector.load %arg18[%c11_127, %c0_128] : memref<20x128xf32, #tpu.memory_space<vmem>>, vector<8x128xf32>
    tpu.vector_store %arg18[%c11_127, %c0_128], %140 {strides = array<i32>} : memref<20x128xf32, #tpu.memory_space<vmem>>, vector<8x128xf32>,
    %c0_129 = arith.constant 0 : index
    %c0_130 = arith.constant 0 : index
    %142 = vector.load %arg17[%c0_129, %c0_130] : memref<20x128xf32, #tpu.memory_space<vmem>>, vector<18x128xf32>
    %143 = arith.truncf %142 : vector<18x128xf32> to vector<18x128xbf16>
    %c0_131 = arith.constant 0 : index
    %c0_132 = arith.constant 0 : index
    %c0_133 = arith.constant 0 : index
    %144 = vector.load %arg8[%c0_131, %c0_132, %c0_133] : memref<5x128x64xbf16, #tpu.memory_space<vmem>>, vector<1x128x64xbf16>
    %145 = vector.shape_cast %144 : vector<1x128x64xbf16> to vector<128x64xbf16>
    %cst_134 = arith.constant dense<0.000000e+00> : vector<18x64xf32>
    %146 = tpu.matmul %143, %145, %cst_134 {dimension_numbers = #tpu.dot_dimension_numbers<[1], [0], [0], [1], [0, 0, 1, 1], [], []>} : vector<18x128xbf16>, vector<128x64xbf16>, vector<18x64xf32> -> vector<18x64xf32>
    %c0_135 = arith.constant 0 : index
    %c0_136 = arith.constant 0 : index
    %147 = vector.load %arg18[%c0_135, %c0_136] : memref<20x128xf32, #tpu.memory_space<vmem>>, vector<18x128xf32>
    %148 = arith.truncf %147 : vector<18x128xf32> to vector<18x128xbf16>
    %c1_137 = arith.constant 1 : index
    %c0_138 = arith.constant 0 : index
    %c0_139 = arith.constant 0 : index
    %149 = vector.load %arg8[%c1_137, %c0_138, %c0_139] : memref<5x128x64xbf16, #tpu.memory_space<vmem>>, vector<1x128x64xbf16>
    %150 = vector.shape_cast %149 : vector<1x128x64xbf16> to vector<128x64xbf16>
    %cst_140 = arith.constant dense<0.000000e+00> : vector<18x64xf32>
    %151 = tpu.matmul %148, %150, %cst_140 {dimension_numbers = #tpu.dot_dimension_numbers<[1], [0], [0], [1], [0, 0, 1, 1], [], []>} : vector<18x128xbf16>, vector<128x64xbf16>, vector<18x64xf32> -> vector<18x64xf32>
    %152 = arith.addf %146, %151 : vector<18x64xf32>
    %c1_141 = arith.constant 1 : index
    %c0_142 = arith.constant 0 : index
    %153 = vector.load %arg17[%c1_141, %c0_142] : memref<20x128xf32, #tpu.memory_space<vmem>>, vector<18x128xf32>
    %154 = arith.truncf %153 : vector<18x128xf32> to vector<18x128xbf16>
    %c2_143 = arith.constant 2 : index
    %c0_144 = arith.constant 0 : index
    %c0_145 = arith.constant 0 : index
    %155 = vector.load %arg8[%c2_143, %c0_144, %c0_145] : memref<5x128x64xbf16, #tpu.memory_space<vmem>>, vector<1x128x64xbf16>
    %156 = vector.shape_cast %155 : vector<1x128x64xbf16> to vector<128x64xbf16>
    %cst_146 = arith.constant dense<0.000000e+00> : vector<18x64xf32>
    %157 = tpu.matmul %154, %156, %cst_146 {dimension_numbers = #tpu.dot_dimension_numbers<[1], [0], [0], [1], [0, 0, 1, 1], [], []>} : vector<18x128xbf16>, vector<128x64xbf16>, vector<18x64xf32> -> vector<18x64xf32>
    %158 = arith.addf %152, %157 : vector<18x64xf32>
    %c1_147 = arith.constant 1 : index
    %c0_148 = arith.constant 0 : index
    %159 = vector.load %arg18[%c1_147, %c0_148] : memref<20x128xf32, #tpu.memory_space<vmem>>, vector<18x128xf32>
    %160 = arith.truncf %159 : vector<18x128xf32> to vector<18x128xbf16>
    %c3_149 = arith.constant 3 : index
    %c0_150 = arith.constant 0 : index
    %c0_151 = arith.constant 0 : index
    %161 = vector.load %arg8[%c3_149, %c0_150, %c0_151] : memref<5x128x64xbf16, #tpu.memory_space<vmem>>, vector<1x128x64xbf16>
    %162 = vector.shape_cast %161 : vector<1x128x64xbf16> to vector<128x64xbf16>
    %cst_152 = arith.constant dense<0.000000e+00> : vector<18x64xf32>
    %163 = tpu.matmul %160, %162, %cst_152 {dimension_numbers = #tpu.dot_dimension_numbers<[1], [0], [0], [1], [0, 0, 1, 1], [], []>} : vector<18x128xbf16>, vector<128x64xbf16>, vector<18x64xf32> -> vector<18x64xf32>
    %164 = arith.addf %158, %163 : vector<18x64xf32>
    %c2_153 = arith.constant 2 : index
    %c0_154 = arith.constant 0 : index
    %165 = vector.load %arg17[%c2_153, %c0_154] : memref<20x128xf32, #tpu.memory_space<vmem>>, vector<18x128xf32>
    %166 = arith.truncf %165 : vector<18x128xf32> to vector<18x128xbf16>
    %c4_155 = arith.constant 4 : index
    %c0_156 = arith.constant 0 : index
    %c0_157 = arith.constant 0 : index
    %167 = vector.load %arg8[%c4_155, %c0_156, %c0_157] : memref<5x128x64xbf16, #tpu.memory_space<vmem>>, vector<1x128x64xbf16>
    %168 = vector.shape_cast %167 : vector<1x128x64xbf16> to vector<128x64xbf16>
    %cst_158 = arith.constant dense<0.000000e+00> : vector<18x64xf32>
    %169 = tpu.matmul %166, %168, %cst_158 {dimension_numbers = #tpu.dot_dimension_numbers<[1], [0], [0], [1], [0, 0, 1, 1], [], []>} : vector<18x128xbf16>, vector<128x64xbf16>, vector<18x64xf32> -> vector<18x64xf32>
    %170 = arith.addf %164, %169 : vector<18x64xf32>
    %c0_159 = arith.constant 0 : index
    %c0_160 = arith.constant 0 : index
    %c0_161 = arith.constant 0 : index
    %171 = vector.load %arg1[%c0_159, %c0_160, %c0_161] : memref<1x20x64xbf16, #tpu.memory_space<vmem>>, vector<1x18x64xbf16>
    %172 = vector.shape_cast %171 : vector<1x18x64xbf16> to vector<18x64xbf16>
    %c0_162 = arith.constant 0 : index
    %c0_163 = arith.constant 0 : index
    %c0_164 = arith.constant 0 : index
    %173 = vector.load %arg9[%c0_162, %c0_163, %c0_164] : memref<5x64x64xbf16, #tpu.memory_space<vmem>>, vector<1x64x64xbf16>
    %174 = vector.shape_cast %173 : vector<1x64x64xbf16> to vector<64x64xbf16>
    %cst_165 = arith.constant dense<0.000000e+00> : vector<18x64xf32>
    %175 = tpu.matmul %172, %174, %cst_165 {dimension_numbers = #tpu.dot_dimension_numbers<[1], [0], [0], [1], [0, 0, 1, 1], [], []>} : vector<18x64xbf16>, vector<64x64xbf16>, vector<18x64xf32> -> vector<18x64xf32>
    %c0_166 = arith.constant 0 : index
    %c0_167 = arith.constant 0 : index
    %c0_168 = arith.constant 0 : index
    %176 = vector.load %arg2[%c0_166, %c0_167, %c0_168] : memref<1x20x64xbf16, #tpu.memory_space<vmem>>, vector<1x18x64xbf16>
    %177 = vector.shape_cast %176 : vector<1x18x64xbf16> to vector<18x64xbf16>
    %c1_169 = arith.constant 1 : index
    %c0_170 = arith.constant 0 : index
    %c0_171 = arith.constant 0 : index
    %178 = vector.load %arg9[%c1_169, %c0_170, %c0_171] : memref<5x64x64xbf16, #tpu.memory_space<vmem>>, vector<1x64x64xbf16>
    %179 = vector.shape_cast %178 : vector<1x64x64xbf16> to vector<64x64xbf16>
    %cst_172 = arith.constant dense<0.000000e+00> : vector<18x64xf32>
    %180 = tpu.matmul %177, %179, %cst_172 {dimension_numbers = #tpu.dot_dimension_numbers<[1], [0], [0], [1], [0, 0, 1, 1], [], []>} : vector<18x64xbf16>, vector<64x64xbf16>, vector<18x64xf32> -> vector<18x64xf32>
    %181 = arith.addf %175, %180 : vector<18x64xf32>
    %c0_173 = arith.constant 0 : index
    %c1_174 = arith.constant 1 : index
    %c0_175 = arith.constant 0 : index
    %182 = vector.load %arg1[%c0_173, %c1_174, %c0_175] : memref<1x20x64xbf16, #tpu.memory_space<vmem>>, vector<1x18x64xbf16>
    %183 = vector.shape_cast %182 : vector<1x18x64xbf16> to vector<18x64xbf16>
    %c2_176 = arith.constant 2 : index
    %c0_177 = arith.constant 0 : index
    %c0_178 = arith.constant 0 : index
    %184 = vector.load %arg9[%c2_176, %c0_177, %c0_178] : memref<5x64x64xbf16, #tpu.memory_space<vmem>>, vector<1x64x64xbf16>
    %185 = vector.shape_cast %184 : vector<1x64x64xbf16> to vector<64x64xbf16>
    %cst_179 = arith.constant dense<0.000000e+00> : vector<18x64xf32>
    %186 = tpu.matmul %183, %185, %cst_179 {dimension_numbers = #tpu.dot_dimension_numbers<[1], [0], [0], [1], [0, 0, 1, 1], [], []>} : vector<18x64xbf16>, vector<64x64xbf16>, vector<18x64xf32> -> vector<18x64xf32>
    %187 = arith.addf %181, %186 : vector<18x64xf32>
    %c0_180 = arith.constant 0 : index
    %c1_181 = arith.constant 1 : index
    %c0_182 = arith.constant 0 : index
    %188 = vector.load %arg2[%c0_180, %c1_181, %c0_182] : memref<1x20x64xbf16, #tpu.memory_space<vmem>>, vector<1x18x64xbf16>
    %189 = vector.shape_cast %188 : vector<1x18x64xbf16> to vector<18x64xbf16>
    %c3_183 = arith.constant 3 : index
    %c0_184 = arith.constant 0 : index
    %c0_185 = arith.constant 0 : index
    %190 = vector.load %arg9[%c3_183, %c0_184, %c0_185] : memref<5x64x64xbf16, #tpu.memory_space<vmem>>, vector<1x64x64xbf16>
    %191 = vector.shape_cast %190 : vector<1x64x64xbf16> to vector<64x64xbf16>
    %cst_186 = arith.constant dense<0.000000e+00> : vector<18x64xf32>
    %192 = tpu.matmul %189, %191, %cst_186 {dimension_numbers = #tpu.dot_dimension_numbers<[1], [0], [0], [1], [0, 0, 1, 1], [], []>} : vector<18x64xbf16>, vector<64x64xbf16>, vector<18x64xf32> -> vector<18x64xf32>
    %193 = arith.addf %187, %192 : vector<18x64xf32>
    %c0_187 = arith.constant 0 : index
    %c2_188 = arith.constant 2 : index
    %c0_189 = arith.constant 0 : index
    %194 = vector.load %arg1[%c0_187, %c2_188, %c0_189] : memref<1x20x64xbf16, #tpu.memory_space<vmem>>, vector<1x18x64xbf16>
    %195 = vector.shape_cast %194 : vector<1x18x64xbf16> to vector<18x64xbf16>
    %c4_190 = arith.constant 4 : index
    %c0_191 = arith.constant 0 : index
    %c0_192 = arith.constant 0 : index
    %196 = vector.load %arg9[%c4_190, %c0_191, %c0_192] : memref<5x64x64xbf16, #tpu.memory_space<vmem>>, vector<1x64x64xbf16>
    %197 = vector.shape_cast %196 : vector<1x64x64xbf16> to vector<64x64xbf16>
    %cst_193 = arith.constant dense<0.000000e+00> : vector<18x64xf32>
    %198 = tpu.matmul %195, %197, %cst_193 {dimension_numbers = #tpu.dot_dimension_numbers<[1], [0], [0], [1], [0, 0, 1, 1], [], []>} : vector<18x64xbf16>, vector<64x64xbf16>, vector<18x64xf32> -> vector<18x64xf32>
    %199 = arith.addf %193, %198 : vector<18x64xf32>
    %200 = vector.extract_strided_slice %170 {offsets = [0, 0], sizes = [8, 64], strides = [1, 1]} : vector<18x64xf32> to vector<8x64xf32>
    %201 = vector.extract_strided_slice %199 {offsets = [0, 0], sizes = [8, 64], strides = [1, 1]} : vector<18x64xf32> to vector<8x64xf32>
    %202 = arith.addf %200, %201 : vector<8x64xf32>
    %c0_194 = arith.constant 0 : index
    %c0_195 = arith.constant 0 : index
    %203 = vector.load %arg12[%c0_194, %c0_195] : memref<1x64xf32, #tpu.memory_space<vmem>>, vector<1x64xf32>
    %204 = vector.broadcast %203 : vector<1x64xf32> to vector<8x64xf32>
    %205 = arith.addf %202, %204 : vector<8x64xf32>
    %c0_196 = arith.constant 0 : index
    %c0_197 = arith.constant 0 : index
    %206 = vector.load %arg5[%c0_196, %c0_197] : memref<2x64xf32, #tpu.memory_space<vmem>>, vector<1x64xf32>
    %207 = vector.broadcast %206 : vector<1x64xf32> to vector<8x64xf32>
    %208 = arith.mulf %205, %207 : vector<8x64xf32>
    %c1_198 = arith.constant 1 : index
    %c0_199 = arith.constant 0 : index
    %209 = vector.load %arg5[%c1_198, %c0_199] : memref<2x64xf32, #tpu.memory_space<vmem>>, vector<1x64xf32>
    %210 = vector.broadcast %209 : vector<1x64xf32> to vector<8x64xf32>
    %211 = arith.addf %208, %210 : vector<8x64xf32>
    %cst_200 = arith.constant 0.000000e+00 : f32
    %212 = vector.broadcast %cst_200 : f32 to vector<8x64xf32>
    %213 = arith.maximumf %211, %212 : vector<8x64xf32>
    %c2_201 = arith.constant 2 : index
    %c0_202 = arith.constant 0 : index
    %214 = vector.load %arg19[%c2_201, %c0_202] : memref<24x64xf32, #tpu.memory_space<vmem>>, vector<8x64xf32>
    tpu.vector_store %arg19[%c2_201, %c0_202], %213 {strides = array<i32>} : memref<24x64xf32, #tpu.memory_space<vmem>>, vector<8x64xf32>,
    %215 = vector.extract_strided_slice %170 {offsets = [10, 0], sizes = [8, 64], strides = [1, 1]} : vector<18x64xf32> to vector<8x64xf32>
    %216 = vector.extract_strided_slice %199 {offsets = [10, 0], sizes = [8, 64], strides = [1, 1]} : vector<18x64xf32> to vector<8x64xf32>
    %217 = arith.addf %215, %216 : vector<8x64xf32>
    %c0_203 = arith.constant 0 : index
    %c0_204 = arith.constant 0 : index
    %218 = vector.load %arg12[%c0_203, %c0_204] : memref<1x64xf32, #tpu.memory_space<vmem>>, vector<1x64xf32>
    %219 = vector.broadcast %218 : vector<1x64xf32> to vector<8x64xf32>
    %220 = arith.addf %217, %219 : vector<8x64xf32>
    %c0_205 = arith.constant 0 : index
    %c0_206 = arith.constant 0 : index
    %221 = vector.load %arg5[%c0_205, %c0_206] : memref<2x64xf32, #tpu.memory_space<vmem>>, vector<1x64xf32>
    %222 = vector.broadcast %221 : vector<1x64xf32> to vector<8x64xf32>
    %223 = arith.mulf %220, %222 : vector<8x64xf32>
    %c1_207 = arith.constant 1 : index
    %c0_208 = arith.constant 0 : index
    %224 = vector.load %arg5[%c1_207, %c0_208] : memref<2x64xf32, #tpu.memory_space<vmem>>, vector<1x64xf32>
    %225 = vector.broadcast %224 : vector<1x64xf32> to vector<8x64xf32>
    %226 = arith.addf %223, %225 : vector<8x64xf32>
    %cst_209 = arith.constant 0.000000e+00 : f32
    %227 = vector.broadcast %cst_209 : f32 to vector<8x64xf32>
    %228 = arith.maximumf %226, %227 : vector<8x64xf32>
    %c14 = arith.constant 14 : index
    %c0_210 = arith.constant 0 : index
    %229 = vector.load %arg19[%c14, %c0_210] : memref<24x64xf32, #tpu.memory_space<vmem>>, vector<8x64xf32>
    tpu.vector_store %arg19[%c14, %c0_210], %228 {strides = array<i32>} : memref<24x64xf32, #tpu.memory_space<vmem>>, vector<8x64xf32>,
    %c0_211 = arith.constant 0 : index
    %c0_212 = arith.constant 0 : index
    %230 = vector.load %arg19[%c0_211, %c0_212] : memref<24x64xf32, #tpu.memory_space<vmem>>, vector<20x64xf32>
    %231 = arith.truncf %230 : vector<20x64xf32> to vector<20x64xbf16>
    %c0_213 = arith.constant 0 : index
    %c0_214 = arith.constant 0 : index
    %c0_215 = arith.constant 0 : index
    %232 = vector.load %arg10[%c0_213, %c0_214, %c0_215] : memref<5x64x64xbf16, #tpu.memory_space<vmem>>, vector<1x64x64xbf16>
    %233 = vector.shape_cast %232 : vector<1x64x64xbf16> to vector<64x64xbf16>
    %cst_216 = arith.constant dense<0.000000e+00> : vector<20x64xf32>
    %234 = tpu.matmul %231, %233, %cst_216 {dimension_numbers = #tpu.dot_dimension_numbers<[1], [0], [0], [1], [0, 0, 1, 1], [], []>} : vector<20x64xbf16>, vector<64x64xbf16>, vector<20x64xf32> -> vector<20x64xf32>
    %c1_217 = arith.constant 1 : index
    %c0_218 = arith.constant 0 : index
    %235 = vector.load %arg19[%c1_217, %c0_218] : memref<24x64xf32, #tpu.memory_space<vmem>>, vector<20x64xf32>
    %236 = arith.truncf %235 : vector<20x64xf32> to vector<20x64xbf16>
    %c1_219 = arith.constant 1 : index
    %c0_220 = arith.constant 0 : index
    %c0_221 = arith.constant 0 : index
    %237 = vector.load %arg10[%c1_219, %c0_220, %c0_221] : memref<5x64x64xbf16, #tpu.memory_space<vmem>>, vector<1x64x64xbf16>
    %238 = vector.shape_cast %237 : vector<1x64x64xbf16> to vector<64x64xbf16>
    %cst_222 = arith.constant dense<0.000000e+00> : vector<20x64xf32>
    %239 = tpu.matmul %236, %238, %cst_222 {dimension_numbers = #tpu.dot_dimension_numbers<[1], [0], [0], [1], [0, 0, 1, 1], [], []>} : vector<20x64xbf16>, vector<64x64xbf16>, vector<20x64xf32> -> vector<20x64xf32>
    %240 = arith.addf %234, %239 : vector<20x64xf32>
    %c2_223 = arith.constant 2 : index
    %c0_224 = arith.constant 0 : index
    %241 = vector.load %arg19[%c2_223, %c0_224] : memref<24x64xf32, #tpu.memory_space<vmem>>, vector<20x64xf32>
    %242 = arith.truncf %241 : vector<20x64xf32> to vector<20x64xbf16>
    %c2_225 = arith.constant 2 : index
    %c0_226 = arith.constant 0 : index
    %c0_227 = arith.constant 0 : index
    %243 = vector.load %arg10[%c2_225, %c0_226, %c0_227] : memref<5x64x64xbf16, #tpu.memory_space<vmem>>, vector<1x64x64xbf16>
    %244 = vector.shape_cast %243 : vector<1x64x64xbf16> to vector<64x64xbf16>
    %cst_228 = arith.constant dense<0.000000e+00> : vector<20x64xf32>
    %245 = tpu.matmul %242, %244, %cst_228 {dimension_numbers = #tpu.dot_dimension_numbers<[1], [0], [0], [1], [0, 0, 1, 1], [], []>} : vector<20x64xbf16>, vector<64x64xbf16>, vector<20x64xf32> -> vector<20x64xf32>
    %246 = arith.addf %240, %245 : vector<20x64xf32>
    %c3_229 = arith.constant 3 : index
    %c0_230 = arith.constant 0 : index
    %247 = vector.load %arg19[%c3_229, %c0_230] : memref<24x64xf32, #tpu.memory_space<vmem>>, vector<20x64xf32>
    %248 = arith.truncf %247 : vector<20x64xf32> to vector<20x64xbf16>
    %c3_231 = arith.constant 3 : index
    %c0_232 = arith.constant 0 : index
    %c0_233 = arith.constant 0 : index
    %249 = vector.load %arg10[%c3_231, %c0_232, %c0_233] : memref<5x64x64xbf16, #tpu.memory_space<vmem>>, vector<1x64x64xbf16>
    %250 = vector.shape_cast %249 : vector<1x64x64xbf16> to vector<64x64xbf16>
    %cst_234 = arith.constant dense<0.000000e+00> : vector<20x64xf32>
    %251 = tpu.matmul %248, %250, %cst_234 {dimension_numbers = #tpu.dot_dimension_numbers<[1], [0], [0], [1], [0, 0, 1, 1], [], []>} : vector<20x64xbf16>, vector<64x64xbf16>, vector<20x64xf32> -> vector<20x64xf32>
    %252 = arith.addf %246, %251 : vector<20x64xf32>
    %c4_235 = arith.constant 4 : index
    %c0_236 = arith.constant 0 : index
    %253 = vector.load %arg19[%c4_235, %c0_236] : memref<24x64xf32, #tpu.memory_space<vmem>>, vector<20x64xf32>
    %254 = arith.truncf %253 : vector<20x64xf32> to vector<20x64xbf16>
    %c4_237 = arith.constant 4 : index
    %c0_238 = arith.constant 0 : index
    %c0_239 = arith.constant 0 : index
    %255 = vector.load %arg10[%c4_237, %c0_238, %c0_239] : memref<5x64x64xbf16, #tpu.memory_space<vmem>>, vector<1x64x64xbf16>
    %256 = vector.shape_cast %255 : vector<1x64x64xbf16> to vector<64x64xbf16>
    %cst_240 = arith.constant dense<0.000000e+00> : vector<20x64xf32>
    %257 = tpu.matmul %254, %256, %cst_240 {dimension_numbers = #tpu.dot_dimension_numbers<[1], [0], [0], [1], [0, 0, 1, 1], [], []>} : vector<20x64xbf16>, vector<64x64xbf16>, vector<20x64xf32> -> vector<20x64xf32>
    %258 = arith.addf %252, %257 : vector<20x64xf32>
    %c0_241 = arith.constant 0 : index
    %c0_242 = arith.constant 0 : index
    %259 = vector.load %arg6[%c0_241, %c0_242] : memref<2x64xf32, #tpu.memory_space<vmem>>, vector<1x64xf32>
    %260 = vector.broadcast %259 : vector<1x64xf32> to vector<20x64xf32>
    %261 = arith.mulf %258, %260 : vector<20x64xf32>
    %c1_243 = arith.constant 1 : index
    %c0_244 = arith.constant 0 : index
    %262 = vector.load %arg6[%c1_243, %c0_244] : memref<2x64xf32, #tpu.memory_space<vmem>>, vector<1x64xf32>
    %263 = vector.broadcast %262 : vector<1x64xf32> to vector<20x64xf32>
    %264 = arith.addf %261, %263 : vector<20x64xf32>
    %cst_245 = arith.constant 0.000000e+00 : f32
    %265 = vector.broadcast %cst_245 : f32 to vector<20x64xf32>
    %266 = arith.maximumf %264, %265 : vector<20x64xf32>
    %267 = vector.extract_strided_slice %266 {offsets = [0, 0], sizes = [8, 64], strides = [1, 1]} : vector<20x64xf32> to vector<8x64xf32>
    %c2_246 = arith.constant 2 : index
    %c0_247 = arith.constant 0 : index
    %268 = vector.load %arg20[%c2_246, %c0_247] : memref<24x64xf32, #tpu.memory_space<vmem>>, vector<8x64xf32>
    tpu.vector_store %arg20[%c2_246, %c0_247], %267 {strides = array<i32>} : memref<24x64xf32, #tpu.memory_space<vmem>>, vector<8x64xf32>,
    %269 = vector.extract_strided_slice %266 {offsets = [12, 0], sizes = [8, 64], strides = [1, 1]} : vector<20x64xf32> to vector<8x64xf32>
    %c14_248 = arith.constant 14 : index
    %c0_249 = arith.constant 0 : index
    %270 = vector.load %arg20[%c14_248, %c0_249] : memref<24x64xf32, #tpu.memory_space<vmem>>, vector<8x64xf32>
    tpu.vector_store %arg20[%c14_248, %c0_249], %269 {strides = array<i32>} : memref<24x64xf32, #tpu.memory_space<vmem>>, vector<8x64xf32>,
    %c0_250 = arith.constant 0 : index
    %c0_251 = arith.constant 0 : index
    %271 = vector.load %arg20[%c0_250, %c0_251] : memref<24x64xf32, #tpu.memory_space<vmem>>, vector<20x64xf32>
    %272 = arith.truncf %271 : vector<20x64xf32> to vector<20x64xbf16>
    %c0_252 = arith.constant 0 : index
    %c0_253 = arith.constant 0 : index
    %c0_254 = arith.constant 0 : index
    %273 = vector.load %arg11[%c0_252, %c0_253, %c0_254] : memref<5x64x64xbf16, #tpu.memory_space<vmem>>, vector<1x64x64xbf16>
    %274 = vector.shape_cast %273 : vector<1x64x64xbf16> to vector<64x64xbf16>
    %cst_255 = arith.constant dense<0.000000e+00> : vector<20x64xf32>
    %275 = tpu.matmul %272, %274, %cst_255 {dimension_numbers = #tpu.dot_dimension_numbers<[1], [0], [0], [1], [0, 0, 1, 1], [], []>} : vector<20x64xbf16>, vector<64x64xbf16>, vector<20x64xf32> -> vector<20x64xf32>
    %c1_256 = arith.constant 1 : index
    %c0_257 = arith.constant 0 : index
    %276 = vector.load %arg20[%c1_256, %c0_257] : memref<24x64xf32, #tpu.memory_space<vmem>>, vector<20x64xf32>
    %277 = arith.truncf %276 : vector<20x64xf32> to vector<20x64xbf16>
    %c1_258 = arith.constant 1 : index
    %c0_259 = arith.constant 0 : index
    %c0_260 = arith.constant 0 : index
    %278 = vector.load %arg11[%c1_258, %c0_259, %c0_260] : memref<5x64x64xbf16, #tpu.memory_space<vmem>>, vector<1x64x64xbf16>
    %279 = vector.shape_cast %278 : vector<1x64x64xbf16> to vector<64x64xbf16>
    %cst_261 = arith.constant dense<0.000000e+00> : vector<20x64xf32>
    %280 = tpu.matmul %277, %279, %cst_261 {dimension_numbers = #tpu.dot_dimension_numbers<[1], [0], [0], [1], [0, 0, 1, 1], [], []>} : vector<20x64xbf16>, vector<64x64xbf16>, vector<20x64xf32> -> vector<20x64xf32>
    %281 = arith.addf %275, %280 : vector<20x64xf32>
    %c2_262 = arith.constant 2 : index
    %c0_263 = arith.constant 0 : index
    %282 = vector.load %arg20[%c2_262, %c0_263] : memref<24x64xf32, #tpu.memory_space<vmem>>, vector<20x64xf32>
    %283 = arith.truncf %282 : vector<20x64xf32> to vector<20x64xbf16>
    %c2_264 = arith.constant 2 : index
    %c0_265 = arith.constant 0 : index
    %c0_266 = arith.constant 0 : index
    %284 = vector.load %arg11[%c2_264, %c0_265, %c0_266] : memref<5x64x64xbf16, #tpu.memory_space<vmem>>, vector<1x64x64xbf16>
    %285 = vector.shape_cast %284 : vector<1x64x64xbf16> to vector<64x64xbf16>
    %cst_267 = arith.constant dense<0.000000e+00> : vector<20x64xf32>
    %286 = tpu.matmul %283, %285, %cst_267 {dimension_numbers = #tpu.dot_dimension_numbers<[1], [0], [0], [1], [0, 0, 1, 1], [], []>} : vector<20x64xbf16>, vector<64x64xbf16>, vector<20x64xf32> -> vector<20x64xf32>
    %287 = arith.addf %281, %286 : vector<20x64xf32>
    %c3_268 = arith.constant 3 : index
    %c0_269 = arith.constant 0 : index
    %288 = vector.load %arg20[%c3_268, %c0_269] : memref<24x64xf32, #tpu.memory_space<vmem>>, vector<20x64xf32>
    %289 = arith.truncf %288 : vector<20x64xf32> to vector<20x64xbf16>
    %c3_270 = arith.constant 3 : index
    %c0_271 = arith.constant 0 : index
    %c0_272 = arith.constant 0 : index
    %290 = vector.load %arg11[%c3_270, %c0_271, %c0_272] : memref<5x64x64xbf16, #tpu.memory_space<vmem>>, vector<1x64x64xbf16>
    %291 = vector.shape_cast %290 : vector<1x64x64xbf16> to vector<64x64xbf16>
    %cst_273 = arith.constant dense<0.000000e+00> : vector<20x64xf32>
    %292 = tpu.matmul %289, %291, %cst_273 {dimension_numbers = #tpu.dot_dimension_numbers<[1], [0], [0], [1], [0, 0, 1, 1], [], []>} : vector<20x64xbf16>, vector<64x64xbf16>, vector<20x64xf32> -> vector<20x64xf32>
    %293 = arith.addf %287, %292 : vector<20x64xf32>
    %c4_274 = arith.constant 4 : index
    %c0_275 = arith.constant 0 : index
    %294 = vector.load %arg20[%c4_274, %c0_275] : memref<24x64xf32, #tpu.memory_space<vmem>>, vector<20x64xf32>
    %295 = arith.truncf %294 : vector<20x64xf32> to vector<20x64xbf16>
    %c4_276 = arith.constant 4 : index
    %c0_277 = arith.constant 0 : index
    %c0_278 = arith.constant 0 : index
    %296 = vector.load %arg11[%c4_276, %c0_277, %c0_278] : memref<5x64x64xbf16, #tpu.memory_space<vmem>>, vector<1x64x64xbf16>
    %297 = vector.shape_cast %296 : vector<1x64x64xbf16> to vector<64x64xbf16>
    %cst_279 = arith.constant dense<0.000000e+00> : vector<20x64xf32>
    %298 = tpu.matmul %295, %297, %cst_279 {dimension_numbers = #tpu.dot_dimension_numbers<[1], [0], [0], [1], [0, 0, 1, 1], [], []>} : vector<20x64xbf16>, vector<64x64xbf16>, vector<20x64xf32> -> vector<20x64xf32>
    %299 = arith.addf %293, %298 : vector<20x64xf32>
    %300 = vector.extract_strided_slice %299 {offsets = [0, 0], sizes = [8, 64], strides = [1, 1]} : vector<20x64xf32> to vector<8x64xf32>
    %301 = arith.addf %205, %300 : vector<8x64xf32>
    %c0_280 = arith.constant 0 : index
    %c0_281 = arith.constant 0 : index
    %302 = vector.load %arg13[%c0_280, %c0_281] : memref<1x64xf32, #tpu.memory_space<vmem>>, vector<1x64xf32>
    %303 = vector.broadcast %302 : vector<1x64xf32> to vector<8x64xf32>
    %304 = arith.addf %301, %303 : vector<8x64xf32>
    %305 = vector.extract_strided_slice %299 {offsets = [12, 0], sizes = [8, 64], strides = [1, 1]} : vector<20x64xf32> to vector<8x64xf32>
    %306 = arith.addf %220, %305 : vector<8x64xf32>
    %c0_282 = arith.constant 0 : index
    %c0_283 = arith.constant 0 : index
    %307 = vector.load %arg13[%c0_282, %c0_283] : memref<1x64xf32, #tpu.memory_space<vmem>>, vector<1x64xf32>
    %308 = vector.broadcast %307 : vector<1x64xf32> to vector<8x64xf32>
    %309 = arith.addf %306, %308 : vector<8x64xf32>
    %310 = tpu.concatenate %304, %309 in 1 : vector<8x64xf32>, vector<8x64xf32> -> vector<8x128xf32>
    %c0_284 = arith.constant 0 : index
    %c0_285 = arith.constant 0 : index
    %c0_286 = arith.constant 0 : index
    %311 = vector.load %arg14[%c0_284, %c0_285, %c0_286] : memref<1x8x128xf32, #tpu.memory_space<vmem>>, vector<1x8x128xf32>
    %312 = vector.shape_cast %311 : vector<1x8x128xf32> to vector<8x128xf32>
    %313 = vector.shape_cast %310 : vector<8x128xf32> to vector<1x8x128xf32>
    tpu.vector_store %arg14[%c0_284, %c0_285, %c0_286], %313 {strides = array<i32>} : memref<1x8x128xf32, #tpu.memory_space<vmem>>, vector<1x8x128xf32>,
    return
  }
  func.func @transform_0(%arg0: i32) -> (i32, i32, i32) {
    %c0_i32 = arith.constant 0 : i32
    %c0_i32_0 = arith.constant 0 : i32
    %c0_i32_1 = arith.constant 0 : i32
    return %arg0, %c0_i32, %c0_i32_0 : i32, i32, i32
  }
  func.func @transform_1(%arg0: i32) -> (i32, i32, i32) {
    %c0_i32 = arith.constant 0 : i32
    %c0_i32_0 = arith.constant 0 : i32
    %c0_i32_1 = arith.constant 0 : i32
    return %arg0, %c0_i32, %c0_i32_0 : i32, i32, i32
  }
  func.func @transform_2(%arg0: i32) -> (i32, i32) {
    %c0_i32 = arith.constant 0 : i32
    %c0_i32_0 = arith.constant 0 : i32
    %c0_i32_1 = arith.constant 0 : i32
    return %c0_i32, %c0_i32_0 : i32, i32
  }
  func.func @transform_3(%arg0: i32) -> (i32, i32) {
    %c0_i32 = arith.constant 0 : i32
    %c0_i32_0 = arith.constant 0 : i32
    %c0_i32_1 = arith.constant 0 : i32
    return %c0_i32, %c0_i32_0 : i32, i32
  }
  func.func @transform_4(%arg0: i32) -> (i32, i32) {
    %c0_i32 = arith.constant 0 : i32
    %c0_i32_0 = arith.constant 0 : i32
    %c0_i32_1 = arith.constant 0 : i32
    return %c0_i32, %c0_i32_0 : i32, i32
  }
  func.func @transform_5(%arg0: i32) -> (i32, i32) {
    %c0_i32 = arith.constant 0 : i32
    %c0_i32_0 = arith.constant 0 : i32
    %c0_i32_1 = arith.constant 0 : i32
    return %c0_i32, %c0_i32_0 : i32, i32
  }
  func.func @transform_6(%arg0: i32) -> (i32, i32, i32) {
    %c0_i32 = arith.constant 0 : i32
    %c0_i32_0 = arith.constant 0 : i32
    %c0_i32_1 = arith.constant 0 : i32
    %c0_i32_2 = arith.constant 0 : i32
    return %c0_i32, %c0_i32_0, %c0_i32_1 : i32, i32, i32
  }
  func.func @transform_7(%arg0: i32) -> (i32, i32, i32) {
    %c0_i32 = arith.constant 0 : i32
    %c0_i32_0 = arith.constant 0 : i32
    %c0_i32_1 = arith.constant 0 : i32
    %c0_i32_2 = arith.constant 0 : i32
    return %c0_i32, %c0_i32_0, %c0_i32_1 : i32, i32, i32
  }
  func.func @transform_8(%arg0: i32) -> (i32, i32, i32) {
    %c0_i32 = arith.constant 0 : i32
    %c0_i32_0 = arith.constant 0 : i32
    %c0_i32_1 = arith.constant 0 : i32
    %c0_i32_2 = arith.constant 0 : i32
    return %c0_i32, %c0_i32_0, %c0_i32_1 : i32, i32, i32
  }
  func.func @transform_9(%arg0: i32) -> (i32, i32, i32) {
    %c0_i32 = arith.constant 0 : i32
    %c0_i32_0 = arith.constant 0 : i32
    %c0_i32_1 = arith.constant 0 : i32
    %c0_i32_2 = arith.constant 0 : i32
    return %c0_i32, %c0_i32_0, %c0_i32_1 : i32, i32, i32
  }
  func.func @transform_10(%arg0: i32) -> (i32, i32, i32) {
    %c0_i32 = arith.constant 0 : i32
    %c0_i32_0 = arith.constant 0 : i32
    %c0_i32_1 = arith.constant 0 : i32
    %c0_i32_2 = arith.constant 0 : i32
    return %c0_i32, %c0_i32_0, %c0_i32_1 : i32, i32, i32
  }
  func.func @transform_11(%arg0: i32) -> (i32, i32) {
    %c0_i32 = arith.constant 0 : i32
    %c0_i32_0 = arith.constant 0 : i32
    %c0_i32_1 = arith.constant 0 : i32
    return %c0_i32, %c0_i32_0 : i32, i32
  }
  func.func @transform_12(%arg0: i32) -> (i32, i32) {
    %c0_i32 = arith.constant 0 : i32
    %c0_i32_0 = arith.constant 0 : i32
    %c0_i32_1 = arith.constant 0 : i32
    return %c0_i32, %c0_i32_0 : i32, i32
  }
  func.func @transform_13(%arg0: i32) -> (i32, i32, i32) {
    %c0_i32 = arith.constant 0 : i32
    %c0_i32_0 = arith.constant 0 : i32
    %c0_i32_1 = arith.constant 0 : i32
    return %arg0, %c0_i32, %c0_i32_0 : i32, i32, i32
  }
}

</mosaic_0001>

<llo_original>
// kernel: down_forward.1
$region0: #{down_forward.1}
  #allocation0 [shape = 'u32[]', space=smem, size = 0x4, offset = 0x4, fixed_abs, tag = 'smem constant byte address 0x4 - core index']
  #allocation1 [shape = 'u32[144,128]{1,0:T(1,128)}', space=vmem, size = 0x12000, scoped, tag = 'internal scratch']
  #allocation2 [shape = 'f32[20,64]{1,0:T(8,128)}', space=vmem, size = 0x3000, scoped, tag = 'scratch operand']
  #allocation3 [shape = 'f32[20,64]{1,0:T(8,128)}', space=vmem, size = 0x3000, scoped, tag = 'scratch operand']
  #allocation4 [shape = 'f32[20,128]{1,0:T(8,128)}', space=vmem, size = 0x3000, scoped, tag = 'scratch operand']
  #allocation5 [shape = 'f32[20,128]{1,0:T(8,128)}', space=vmem, size = 0x3000, scoped, tag = 'scratch operand']
  #allocation6 [shape = 'f32[24,64]{1,0:T(8,128)}', space=vmem, size = 0x3000, scoped, tag = 'scratch operand']
  #allocation7 [shape = 'f32[24,64]{1,0:T(8,128)}', space=vmem, size = 0x3000, scoped, tag = 'scratch operand']
  %s0 = inlined_call_operand.vmem [shape: bf16[2,20,64], index: 0, kind: input, shape index: {}]
  %s1 = inlined_call_operand.vmem [shape: bf16[2,20,64], index: 1, kind: input, shape index: {}]
  %s2 = inlined_call_operand.vmem [shape: f32[2,64], index: 2, kind: input, shape index: {}]
  %s3 = inlined_call_operand.vmem [shape: f32[2,128], index: 3, kind: input, shape index: {}]
  %s4 = inlined_call_operand.vmem [shape: f32[2,64], index: 4, kind: input, shape index: {}]
  %s5 = inlined_call_operand.vmem [shape: f32[2,64], index: 5, kind: input, shape index: {}]
  %s6 = inlined_call_operand.vmem [shape: bf16[5,64,128], index: 6, kind: input, shape index: {}]
  %s7 = inlined_call_operand.vmem [shape: bf16[5,128,64], index: 7, kind: input, shape index: {}]
  %s8 = inlined_call_operand.vmem [shape: bf16[5,64,64], index: 8, kind: input, shape index: {}]
  %s9 = inlined_call_operand.vmem [shape: bf16[5,64,64], index: 9, kind: input, shape index: {}]
  %s10 = inlined_call_operand.vmem [shape: bf16[5,64,64], index: 10, kind: input, shape index: {}]
  %s11 = inlined_call_operand.vmem [shape: f32[1,64], index: 11, kind: input, shape index: {}]
  %s12 = inlined_call_operand.vmem [shape: f32[1,64], index: 12, kind: input, shape index: {}]
  %s13 = inlined_call_operand.vmem [shape: f32[2,8,128], index: 13, kind: output, shape index: {}]
  %s14 = sld [smem:[#allocation0]]
  $region85: #{down_forward.1} parent=0
    _
  %s16 = ssub.s32 1, %s14
  %s17 = scalar_select 0, %s16, %s14
  loop: start=0, step=1, limit=4
  $region2: #{down_forward.1} parent=0 // loop_pre_header
    _
  $region3: #{down_forward.1} parent=0 // loop_header
    %s19 = sphi 0, %s23
    %p20 = scmp.ge.s32.totalorder %s19, 4
    %s29 = sphi 0, %s31
    %s32 = sphi 0, %s29
    %s33 = sphi 0, %s32
    %s49 = sphi 0, %s33
    %s55 = sphi 0, %s57
    %s58 = sphi 0, %s55
    %s59 = sphi 0, %s58
    %s75 = sphi 0, %s59
    %s79 = sphi 0, %s79
    %s81 = sphi 0, %s79
    %s82 = sphi 0, %s81
    %s96 = sphi 0, %s82
    %s100 = sphi 0, %s100
    %s102 = sphi 0, %s100
    %s103 = sphi 0, %s102
    %s117 = sphi 0, %s103
    %s121 = sphi 0, %s121
    %s123 = sphi 0, %s121
    %s124 = sphi 0, %s123
    %s138 = sphi 0, %s124
    %s142 = sphi 0, %s142
    %s144 = sphi 0, %s142
    %s145 = sphi 0, %s144
    %s159 = sphi 0, %s145
    %s163 = sphi 0, %s163
    %s165 = sphi 0, %s163
    %s166 = sphi 0, %s165
    %s180 = sphi 0, %s166
    %s184 = sphi 0, %s184
    %s186 = sphi 0, %s184
    %s187 = sphi 0, %s186
    %s201 = sphi 0, %s187
    %s205 = sphi 0, %s205
    %s207 = sphi 0, %s205
    %s208 = sphi 0, %s207
    %s222 = sphi 0, %s208
    %s226 = sphi 0, %s226
    %s228 = sphi 0, %s226
    %s229 = sphi 0, %s228
    %s243 = sphi 0, %s229
    %s247 = sphi 0, %s247
    %s249 = sphi 0, %s247
    %s250 = sphi 0, %s249
    %s264 = sphi 0, %s250
    %s268 = sphi 0, %s268
    %s270 = sphi 0, %s268
    %s271 = sphi 0, %s270
    %s285 = sphi 0, %s271
    %s289 = sphi 0, %s289
    %s291 = sphi 0, %s289
    %s292 = sphi 0, %s291
    %s306 = sphi 0, %s292
    %s312 = sphi 0, %s314
    %s315 = sphi 0, %s312
    %s316 = sphi 0, %s315
    %s332 = sphi 0, %s316
  $region4: #{down_forward.1} parent=0 // loop_header_branch
    %22 = sbr.rel (%p20) target = $region8
  $region5: #{down_forward.1} parent=0 // loop_body
    %s24 = ssub.s32 %s19, 1
    %s25 = ssub.s32 %s19, 2
    %s26 = sadd.s32 %s19, 1
    %s27 = ssub.s32 %s19, %s26
    %p28 = scmp.eq.s32.totalorder %s27, 0
    %s30 = sadd.s32 %s29, 1
    %s31 = scalar_select %p28, %s29, %s30
    %p34 = pneg %p28
    %p35 = scmp.eq.s32.totalorder %s19, 1
    %p36 = por %p34, %p35
    %p37 = scmp.ne.s32.totalorder %s29, %s32
    %p38 = scmp.eq.s32.totalorder %s19, 0
    %p39 = por %p37, %p38
    %p40 = scmp.ne.s32.totalorder %s29, %s32
    %p41 = scmp.eq.s32.totalorder %s24, 1
    %p42 = por %p40, %p41
    %p43 = scmp.ne.s32.totalorder %s32, %s33
    %p44 = scmp.eq.s32.totalorder %s24, 0
    %p45 = por %p43, %p44
    %p46 = scmp.ne.s32.totalorder %s32, %s33
    %p47 = scmp.eq.s32.totalorder %s25, 1
    %p48 = por %p46, %p47
    %p50 = scmp.ne.s32.totalorder %s33, %s49
    %p51 = scmp.eq.s32.totalorder %s25, 0
    %p52 = por %p50, %p51
    %s53 = ssub.s32 %s19, %s26
    %p54 = scmp.eq.s32.totalorder %s53, 0
    %s56 = sadd.s32 %s55, 1
    %s57 = scalar_select %p54, %s55, %s56
    %p60 = pneg %p54
    %p61 = scmp.eq.s32.totalorder %s19, 1
    %p62 = por %p60, %p61
    %p63 = scmp.ne.s32.totalorder %s55, %s58
    %p64 = scmp.eq.s32.totalorder %s19, 0
    %p65 = por %p63, %p64
    %p66 = scmp.ne.s32.totalorder %s55, %s58
    %p67 = scmp.eq.s32.totalorder %s24, 1
    %p68 = por %p66, %p67
    %p69 = scmp.ne.s32.totalorder %s58, %s59
    %p70 = scmp.eq.s32.totalorder %s24, 0
    %p71 = por %p69, %p70
    %p72 = scmp.ne.s32.totalorder %s58, %s59
    %p73 = scmp.eq.s32.totalorder %s25, 1
    %p74 = por %p72, %p73
    %p76 = scmp.ne.s32.totalorder %s59, %s75
    %p77 = scmp.eq.s32.totalorder %s25, 0
    %p78 = por %p76, %p77
    %s80 = sadd.s32 %s79, 1
    %p83 = scmp.eq.s32.totalorder %s19, 1
    %p84 = scmp.ne.s32.totalorder %s79, %s81
    %p85 = scmp.eq.s32.totalorder %s19, 0
    %p86 = por %p84, %p85
    %p87 = scmp.ne.s32.totalorder %s79, %s81
    %p88 = scmp.eq.s32.totalorder %s24, 1
    %p89 = por %p87, %p88
    %p90 = scmp.ne.s32.totalorder %s81, %s82
    %p91 = scmp.eq.s32.totalorder %s24, 0
    %p92 = por %p90, %p91
    %p93 = scmp.ne.s32.totalorder %s81, %s82
    %p94 = scmp.eq.s32.totalorder %s25, 1
    %p95 = por %p93, %p94
    %p97 = scmp.ne.s32.totalorder %s82, %s96
    %p98 = scmp.eq.s32.totalorder %s25, 0
    %p99 = por %p97, %p98
    %s101 = sadd.s32 %s100, 1
    %p104 = scmp.eq.s32.totalorder %s19, 1
    %p105 = scmp.ne.s32.totalorder %s100, %s102
    %p106 = scmp.eq.s32.totalorder %s19, 0
    %p107 = por %p105, %p106
    %p108 = scmp.ne.s32.totalorder %s100, %s102
    %p109 = scmp.eq.s32.totalorder %s24, 1
    %p110 = por %p108, %p109
    %p111 = scmp.ne.s32.totalorder %s102, %s103
    %p112 = scmp.eq.s32.totalorder %s24, 0
    %p113 = por %p111, %p112
    %p114 = scmp.ne.s32.totalorder %s102, %s103
    %p115 = scmp.eq.s32.totalorder %s25, 1
    %p116 = por %p114, %p115
    %p118 = scmp.ne.s32.totalorder %s103, %s117
    %p119 = scmp.eq.s32.totalorder %s25, 0
    %p120 = por %p118, %p119
    %s122 = sadd.s32 %s121, 1
    %p125 = scmp.eq.s32.totalorder %s19, 1
    %p126 = scmp.ne.s32.totalorder %s121, %s123
    %p127 = scmp.eq.s32.totalorder %s19, 0
    %p128 = por %p126, %p127
    %p129 = scmp.ne.s32.totalorder %s121, %s123
    %p130 = scmp.eq.s32.totalorder %s24, 1
    %p131 = por %p129, %p130
    %p132 = scmp.ne.s32.totalorder %s123, %s124
    %p133 = scmp.eq.s32.totalorder %s24, 0
    %p134 = por %p132, %p133
    %p135 = scmp.ne.s32.totalorder %s123, %s124
    %p136 = scmp.eq.s32.totalorder %s25, 1
    %p137 = por %p135, %p136
    %p139 = scmp.ne.s32.totalorder %s124, %s138
    %p140 = scmp.eq.s32.totalorder %s25, 0
    %p141 = por %p139, %p140
    %s143 = sadd.s32 %s142, 1
    %p146 = scmp.eq.s32.totalorder %s19, 1
    %p147 = scmp.ne.s32.totalorder %s142, %s144
    %p148 = scmp.eq.s32.totalorder %s19, 0
    %p149 = por %p147, %p148
    %p150 = scmp.ne.s32.totalorder %s142, %s144
    %p151 = scmp.eq.s32.totalorder %s24, 1
    %p152 = por %p150, %p151
    %p153 = scmp.ne.s32.totalorder %s144, %s145
    %p154 = scmp.eq.s32.totalorder %s24, 0
    %p155 = por %p153, %p154
    %p156 = scmp.ne.s32.totalorder %s144, %s145
    %p157 = scmp.eq.s32.totalorder %s25, 1
    %p158 = por %p156, %p157
    %p160 = scmp.ne.s32.totalorder %s145, %s159
    %p161 = scmp.eq.s32.totalorder %s25, 0
    %p162 = por %p160, %p161
    %s164 = sadd.s32 %s163, 1
    %p167 = scmp.eq.s32.totalorder %s19, 1
    %p168 = scmp.ne.s32.totalorder %s163, %s165
    %p169 = scmp.eq.s32.totalorder %s19, 0
    %p170 = por %p168, %p169
    %p171 = scmp.ne.s32.totalorder %s163, %s165
    %p172 = scmp.eq.s32.totalorder %s24, 1
    %p173 = por %p171, %p172
    %p174 = scmp.ne.s32.totalorder %s165, %s166
    %p175 = scmp.eq.s32.totalorder %s24, 0
    %p176 = por %p174, %p175
    %p177 = scmp.ne.s32.totalorder %s165, %s166
    %p178 = scmp.eq.s32.totalorder %s25, 1
    %p179 = por %p177, %p178
    %p181 = scmp.ne.s32.totalorder %s166, %s180
    %p182 = scmp.eq.s32.totalorder %s25, 0
    %p183 = por %p181, %p182
    %s185 = sadd.s32 %s184, 1
    %p188 = scmp.eq.s32.totalorder %s19, 1
    %p189 = scmp.ne.s32.totalorder %s184, %s186
    %p190 = scmp.eq.s32.totalorder %s19, 0
    %p191 = por %p189, %p190
    %p192 = scmp.ne.s32.totalorder %s184, %s186
    %p193 = scmp.eq.s32.totalorder %s24, 1
    %p194 = por %p192, %p193
    %p195 = scmp.ne.s32.totalorder %s186, %s187
    %p196 = scmp.eq.s32.totalorder %s24, 0
    %p197 = por %p195, %p196
    %p198 = scmp.ne.s32.totalorder %s186, %s187
    %p199 = scmp.eq.s32.totalorder %s25, 1
    %p200 = por %p198, %p199
    %p202 = scmp.ne.s32.totalorder %s187, %s201
    %p203 = scmp.eq.s32.totalorder %s25, 0
    %p204 = por %p202, %p203
    %s206 = sadd.s32 %s205, 1
    %p209 = scmp.eq.s32.totalorder %s19, 1
    %p210 = scmp.ne.s32.totalorder %s205, %s207
    %p211 = scmp.eq.s32.totalorder %s19, 0
    %p212 = por %p210, %p211
    %p213 = scmp.ne.s32.totalorder %s205, %s207
    %p214 = scmp.eq.s32.totalorder %s24, 1
    %p215 = por %p213, %p214
    %p216 = scmp.ne.s32.totalorder %s207, %s208
    %p217 = scmp.eq.s32.totalorder %s24, 0
    %p218 = por %p216, %p217
    %p219 = scmp.ne.s32.totalorder %s207, %s208
    %p220 = scmp.eq.s32.totalorder %s25, 1
    %p221 = por %p219, %p220
    %p223 = scmp.ne.s32.totalorder %s208, %s222
    %p224 = scmp.eq.s32.totalorder %s25, 0
    %p225 = por %p223, %p224
    %s227 = sadd.s32 %s226, 1
    %p230 = scmp.eq.s32.totalorder %s19, 1
    %p231 = scmp.ne.s32.totalorder %s226, %s228
    %p232 = scmp.eq.s32.totalorder %s19, 0
    %p233 = por %p231, %p232
    %p234 = scmp.ne.s32.totalorder %s226, %s228
    %p235 = scmp.eq.s32.totalorder %s24, 1
    %p236 = por %p234, %p235
    %p237 = scmp.ne.s32.totalorder %s228, %s229
    %p238 = scmp.eq.s32.totalorder %s24, 0
    %p239 = por %p237, %p238
    %p240 = scmp.ne.s32.totalorder %s228, %s229
    %p241 = scmp.eq.s32.totalorder %s25, 1
    %p242 = por %p240, %p241
    %p244 = scmp.ne.s32.totalorder %s229, %s243
    %p245 = scmp.eq.s32.totalorder %s25, 0
    %p246 = por %p244, %p245
    %s248 = sadd.s32 %s247, 1
    %p251 = scmp.eq.s32.totalorder %s19, 1
    %p252 = scmp.ne.s32.totalorder %s247, %s249
    %p253 = scmp.eq.s32.totalorder %s19, 0
    %p254 = por %p252, %p253
    %p255 = scmp.ne.s32.totalorder %s247, %s249
    %p256 = scmp.eq.s32.totalorder %s24, 1
    %p257 = por %p255, %p256
    %p258 = scmp.ne.s32.totalorder %s249, %s250
    %p259 = scmp.eq.s32.totalorder %s24, 0
    %p260 = por %p258, %p259
    %p261 = scmp.ne.s32.totalorder %s249, %s250
    %p262 = scmp.eq.s32.totalorder %s25, 1
    %p263 = por %p261, %p262
    %p265 = scmp.ne.s32.totalorder %s250, %s264
    %p266 = scmp.eq.s32.totalorder %s25, 0
    %p267 = por %p265, %p266
    %s269 = sadd.s32 %s268, 1
    %p272 = scmp.eq.s32.totalorder %s19, 1
    %p273 = scmp.ne.s32.totalorder %s268, %s270
    %p274 = scmp.eq.s32.totalorder %s19, 0
    %p275 = por %p273, %p274
    %p276 = scmp.ne.s32.totalorder %s268, %s270
    %p277 = scmp.eq.s32.totalorder %s24, 1
    %p278 = por %p276, %p277
    %p279 = scmp.ne.s32.totalorder %s270, %s271
    %p280 = scmp.eq.s32.totalorder %s24, 0
    %p281 = por %p279, %p280
    %p282 = scmp.ne.s32.totalorder %s270, %s271
    %p283 = scmp.eq.s32.totalorder %s25, 1
    %p284 = por %p282, %p283
    %p286 = scmp.ne.s32.totalorder %s271, %s285
    %p287 = scmp.eq.s32.totalorder %s25, 0
    %p288 = por %p286, %p287
    %s290 = sadd.s32 %s289, 1
    %p293 = scmp.eq.s32.totalorder %s19, 1
    %p294 = scmp.ne.s32.totalorder %s289, %s291
    %p295 = scmp.eq.s32.totalorder %s19, 0
    %p296 = por %p294, %p295
    %p297 = scmp.ne.s32.totalorder %s289, %s291
    %p298 = scmp.eq.s32.totalorder %s24, 1
    %p299 = por %p297, %p298
    %p300 = scmp.ne.s32.totalorder %s291, %s292
    %p301 = scmp.eq.s32.totalorder %s24, 0
    %p302 = por %p300, %p301
    %p303 = scmp.ne.s32.totalorder %s291, %s292
    %p304 = scmp.eq.s32.totalorder %s25, 1
    %p305 = por %p303, %p304
    %p307 = scmp.ne.s32.totalorder %s292, %s306
    %p308 = scmp.eq.s32.totalorder %s25, 0
    %p309 = por %p307, %p308
    %s310 = ssub.s32 %s19, %s26
    %p311 = scmp.eq.s32.totalorder %s310, 0
    %s313 = sadd.s32 %s312, 1
    %s314 = scalar_select %p311, %s312, %s313
    %p317 = pneg %p311
    %p318 = scmp.eq.s32.totalorder %s19, 1
    %p319 = por %p317, %p318
    %p320 = scmp.ne.s32.totalorder %s312, %s315
    %p321 = scmp.eq.s32.totalorder %s19, 0
    %p322 = por %p320, %p321
    %p323 = scmp.ne.s32.totalorder %s312, %s315
    %p324 = scmp.eq.s32.totalorder %s24, 1
    %p325 = por %p323, %p324
    %p326 = scmp.ne.s32.totalorder %s315, %s316
    %p327 = scmp.eq.s32.totalorder %s24, 0
    %p328 = por %p326, %p327
    %p329 = scmp.ne.s32.totalorder %s315, %s316
    %p330 = scmp.eq.s32.totalorder %s25, 1
    %p331 = por %p329, %p330
    %p333 = scmp.ne.s32.totalorder %s316, %s332
    %p334 = scmp.eq.s32.totalorder %s25, 0
    %p335 = por %p333, %p334
    %p336 = scmp.le.s32.totalorder 1, %s19
    %p337 = scmp.lt.s32.totalorder %s19, 3
    %p338 = pnand %p336, %p337
    %p339 = pneg %p338
    // Predicated region
    $region9: #{down_forward.1} parent=5 // pred_check
      _
    $region10: #{down_forward.1} parent=5 // pred_check_branch
      %341 = sbr.rel (%p338) target = $region12
    $region11: #{down_forward.1} parent=5 // pred_region
      %s342 = ssub.s32 %s19, 1
      // Predicated region
      $region13: #{down_forward.1} parent=11 // pred_check
        %p343 = pneg %p92
      $region14: #{down_forward.1} parent=11 // pred_check_branch
        %345 = sbr.rel (%p343) target = $region16
      $region15: #{down_forward.1} parent=11 // pred_region
        _
      $region16: #{down_forward.1} parent=11 // pred_fallthru
        _
      // Predicated region
      $region17: #{down_forward.1} parent=11 // pred_check
        %p346 = pneg %p113
      $region18: #{down_forward.1} parent=11 // pred_check_branch
        %348 = sbr.rel (%p346) target = $region20
      $region19: #{down_forward.1} parent=11 // pred_region
        _
      $region20: #{down_forward.1} parent=11 // pred_fallthru
        _
      // Predicated region
      $region21: #{down_forward.1} parent=11 // pred_check
        %p349 = pneg %p134
      $region22: #{down_forward.1} parent=11 // pred_check_branch
        %351 = sbr.rel (%p349) target = $region24
      $region23: #{down_forward.1} parent=11 // pred_region
        _
      $region24: #{down_forward.1} parent=11 // pred_fallthru
        _
      // Predicated region
      $region25: #{down_forward.1} parent=11 // pred_check
        %p352 = pneg %p155
      $region26: #{down_forward.1} parent=11 // pred_check_branch
        %354 = sbr.rel (%p352) target = $region28
      $region27: #{down_forward.1} parent=11 // pred_region
        _
      $region28: #{down_forward.1} parent=11 // pred_fallthru
        _
      // Predicated region
      $region29: #{down_forward.1} parent=11 // pred_check
        %p355 = pneg %p176
      $region30: #{down_forward.1} parent=11 // pred_check_branch
        %357 = sbr.rel (%p355) target = $region32
      $region31: #{down_forward.1} parent=11 // pred_region
        _
      $region32: #{down_forward.1} parent=11 // pred_fallthru
        _
      // Predicated region
      $region33: #{down_forward.1} parent=11 // pred_check
        %p358 = pneg %p197
      $region34: #{down_forward.1} parent=11 // pred_check_branch
        %360 = sbr.rel (%p358) target = $region36
      $region35: #{down_forward.1} parent=11 // pred_region
        _
      $region36: #{down_forward.1} parent=11 // pred_fallthru
        _
      // Predicated region
      $region37: #{down_forward.1} parent=11 // pred_check
        %p361 = pneg %p218
      $region38: #{down_forward.1} parent=11 // pred_check_branch
        %363 = sbr.rel (%p361) target = $region40
      $region39: #{down_forward.1} parent=11 // pred_region
        _
      $region40: #{down_forward.1} parent=11 // pred_fallthru
        _
      // Predicated region
      $region41: #{down_forward.1} parent=11 // pred_check
        %p364 = pneg %p239
      $region42: #{down_forward.1} parent=11 // pred_check_branch
        %366 = sbr.rel (%p364) target = $region44
      $region43: #{down_forward.1} parent=11 // pred_region
        _
      $region44: #{down_forward.1} parent=11 // pred_fallthru
        _
      // Predicated region
      $region45: #{down_forward.1} parent=11 // pred_check
        %p367 = pneg %p260
      $region46: #{down_forward.1} parent=11 // pred_check_branch
        %369 = sbr.rel (%p367) target = $region48
      $region47: #{down_forward.1} parent=11 // pred_region
        _
      $region48: #{down_forward.1} parent=11 // pred_fallthru
        _
      // Predicated region
      $region49: #{down_forward.1} parent=11 // pred_check
        %p370 = pneg %p281
      $region50: #{down_forward.1} parent=11 // pred_check_branch
        %372 = sbr.rel (%p370) target = $region52
      $region51: #{down_forward.1} parent=11 // pred_region
        _
      $region52: #{down_forward.1} parent=11 // pred_fallthru
        _
      // Predicated region
      $region53: #{down_forward.1} parent=11 // pred_check
        %p373 = pneg %p302
      $region54: #{down_forward.1} parent=11 // pred_check_branch
        %375 = sbr.rel (%p373) target = $region56
      $region55: #{down_forward.1} parent=11 // pred_region
        _
      $region56: #{down_forward.1} parent=11 // pred_fallthru
        _
    $region12: #{down_forward.1} parent=5 // pred_fallthru
      _
    %p376 = scmp.lt.s32.totalorder %s19, 2
    // Predicated region
    $region57: #{down_forward.1} parent=5 // pred_check
      %p377 = pneg %p376
    $region58: #{down_forward.1} parent=5 // pred_check_branch
      %379 = sbr.rel (%p377) target = $region60
    $region59: #{down_forward.1} parent=5 // pred_region
      // Predicated region
      $region61: #{down_forward.1} parent=59 // pred_check
        %p380 = pneg %p39
      $region62: #{down_forward.1} parent=59 // pred_check_branch
        %382 = sbr.rel (%p380) target = $region64
      $region63: #{down_forward.1} parent=59 // pred_region
        %p383 = scmp.lt.s32.totalorder %s19, 1
        %s384 = scalar_select %p383, %s19, 1
        %s385 = smul.addr %s384, 3
        %s386 = smul.addr %s385, 4
        %s387 = scalar_lea.vmem %s0, %s386
      $region64: #{down_forward.1} parent=59 // pred_fallthru
        _
      // Predicated region
      $region65: #{down_forward.1} parent=59 // pred_check
        %p388 = pneg %p65
      $region66: #{down_forward.1} parent=59 // pred_check_branch
        %390 = sbr.rel (%p388) target = $region68
      $region67: #{down_forward.1} parent=59 // pred_region
        %p391 = scmp.lt.s32.totalorder %s19, 1
        %s392 = scalar_select %p391, %s19, 1
        %s393 = smul.addr %s392, 3
        %s394 = smul.addr %s393, 4
        %s395 = scalar_lea.vmem %s1, %s394
      $region68: #{down_forward.1} parent=59 // pred_fallthru
        _
    $region60: #{down_forward.1} parent=5 // pred_fallthru
      _
    %p396 = scmp.le.s32.totalorder 1, %s19
    %p397 = scmp.lt.s32.totalorder %s19, 3
    %p398 = pnand %p396, %p397
    %p399 = pneg %p398
    // Predicated region
    $region69: #{down_forward.1} parent=5 // pred_check
      _
    $region70: #{down_forward.1} parent=5 // pred_check_branch
      %401 = sbr.rel (%p398) target = $region72
    $region71: #{down_forward.1} parent=5 // pred_region
      %s402 = ssub.s32 %s19, 1
      %p403 = scmp.lt.s32.totalorder %s24, 1
      %s404 = scalar_select %p403, %s24, 1
      %s405 = smul.addr %s404, 3
      %s406 = smul.addr %s405, 4
      %s407 = scalar_lea.vmem %s0, %s406
      %p408 = pneg %p45
      %p409 = pneg %p42
      %p410 = scmp.lt.s32.totalorder %s24, 1
      %s411 = scalar_select %p410, %s24, 1
      %s412 = smul.addr %s411, 3
      %s413 = smul.addr %s412, 4
      %s414 = scalar_lea.vmem %s1, %s413
      %p415 = pneg %p71
      %p416 = pneg %p68
      %p417 = pneg %p92
      %p418 = pneg %p89
      %p419 = pneg %p113
      %p420 = pneg %p110
      %p421 = pneg %p134
      %p422 = pneg %p131
      %p423 = pneg %p155
      %p424 = pneg %p152
      %p425 = pneg %p176
      %p426 = pneg %p173
      %p427 = pneg %p197
      %p428 = pneg %p194
      %p429 = pneg %p218
      %p430 = pneg %p215
      %p431 = pneg %p239
      %p432 = pneg %p236
      %p433 = pneg %p260
      %p434 = pneg %p257
      %p435 = pneg %p281
      %p436 = pneg %p278
      %p437 = pneg %p302
      %p438 = pneg %p299
      %p439 = pneg %p328
      %p440 = pneg %p325
      %p441 = scmp.lt.s32.totalorder %s24, 1
      %s442 = scalar_select %p441, %s24, 1
      %s443 = smul.addr %s442, 8
      %s444 = scalar_lea.vmem %s13, %s443
      %p445 = scmp.lt.s32.totalorder %s24, 1
      %s446 = scalar_select %p445, %s24, 1
      %s447 = smul.addr %s446, 3
      %s448 = smul.addr %s447, 4
      %s449 = scalar_lea.vmem %s0, %s448
      %p450 = scmp.lt.s32.totalorder %s24, 1
      %s451 = scalar_select %p450, %s24, 1
      %s452 = smul.addr %s451, 3
      %s453 = smul.addr %s452, 4
      %s454 = scalar_lea.vmem %s1, %s453
      %p455 = scmp.lt.s32.totalorder %s24, 1
      %s456 = scalar_select %p455, %s24, 1
      %s457 = smul.addr %s456, 8
      %s458 = scalar_lea.vmem %s13, %s457
      %vm460 = vcmask 523264
      %461 = vst.msk [vmem:[#allocation2] sm:$0xff] %vm460, 0.0
      %462 = vst.msk [vmem:[#allocation2 + $0x8] sm:$0xff] %vm460, 0.0
      %vm463 = vcmask 519168
      %464 = vst.msk [vmem:[#allocation2 + $0x10] sm:$0xf] %vm463, 0.0
      %465 = vst.msk [vmem:[#allocation3] sm:$0xff] %vm460, 0.0
      %466 = vst.msk [vmem:[#allocation3 + $0x8] sm:$0xff] %vm460, 0.0
      %467 = vst.msk [vmem:[#allocation3 + $0x10] sm:$0xf] %vm463, 0.0
      %468 = vst [vmem:[#allocation4] sm:$0xff] 0.0
      %469 = vst [vmem:[#allocation4 + $0x8] sm:$0xff] 0.0
      %470 = vst [vmem:[#allocation4 + $0x10] sm:$0xf] 0.0
      %471 = vst [vmem:[#allocation5] sm:$0xff] 0.0
      %472 = vst [vmem:[#allocation5 + $0x8] sm:$0xff] 0.0
      %473 = vst [vmem:[#allocation5 + $0x10] sm:$0xf] 0.0
      %474 = vst.msk [vmem:[#allocation6] sm:$0xff] %vm460, 0.0
      %475 = vst.msk [vmem:[#allocation6 + $0x8] sm:$0xff] %vm460, 0.0
      %476 = vst.msk [vmem:[#allocation6 + $0x10] sm:$0xff] %vm460, 0.0
      %477 = vst.msk [vmem:[#allocation7] sm:$0xff] %vm460, 0.0
      %478 = vst.msk [vmem:[#allocation7 + $0x8] sm:$0xff] %vm460, 0.0
      %479 = vst.msk [vmem:[#allocation7 + $0x10] sm:$0xff] %vm460, 0.0
      %v480 = vld [vmem:[%s449] sm:$0xf]
      %v481 = vld [vmem:[%s449 + $0x4] sm:$0x1]
      %v482 = vunpack.c.l.bf16 %v480
      %v483 = vunpack.c.l.bf16 %v481
      %v484 = vld [vmem:[%s2] sm:$0x1]
      %v485 = vlaneseq
      %v486 = vshrl.u32 %v485, 7
      %v487 = vsub.s32 0, %v486
      %v488 = vrot.slane %v484, %v487
      %v489 = vmul.f32 %v482, %v488
      %v490 = vmul.f32 %v483, %v488
      %v491 = vld [vmem:[%s2 + $0x1] sm:$0x1]
      %v492 = vlaneseq
      %v493 = vshrl.u32 %v492, 7
      %v494 = vsub.s32 0, %v493
      %v495 = vrot.slane %v491, %v494
      %v496 = vadd.f32 %v489, %v495
      %v497 = vadd.f32 %v490, %v495
      %v498 = vmax.f32 %v496, 0.0
      %v499 = vmax.f32 %v497, 0.0
      %vm500 = vcmask 523265
      %501 = vst.msk [vmem:[#allocation2] sm:$0xfe] %vm500, %v498
      %vm502 = vcmask 516096
      %503 = vst.msk [vmem:[#allocation2 + $0x8] sm:$0x1] %vm502, %v499
      %v504 = vld [vmem:[%s454] sm:$0xf]
      %v505 = vld [vmem:[%s454 + $0x4] sm:$0x1]
      %v506 = vunpack.c.l.bf16 %v504
      %v507 = vunpack.c.l.bf16 %v505
      %v508 = vld [vmem:[%s2] sm:$0x1]
      %v509 = vlaneseq
      %v510 = vshrl.u32 %v509, 7
      %v511 = vsub.s32 0, %v510
      %v512 = vrot.slane %v508, %v511
      %v513 = vmul.f32 %v506, %v512
      %v514 = vmul.f32 %v507, %v512
      %v515 = vld [vmem:[%s2 + $0x1] sm:$0x1]
      %v516 = vlaneseq
      %v517 = vshrl.u32 %v516, 7
      %v518 = vsub.s32 0, %v517
      %v519 = vrot.slane %v515, %v518
      %v520 = vadd.f32 %v513, %v519
      %v521 = vadd.f32 %v514, %v519
      %v522 = vmax.f32 %v520, 0.0
      %v523 = vmax.f32 %v521, 0.0
      %524 = vst.msk [vmem:[#allocation3] sm:$0xfe] %vm500, %v522
      %525 = vst.msk [vmem:[#allocation3 + $0x8] sm:$0x1] %vm502, %v523
      %v526 = vld [vmem:[%s449 + $0x4] sm:$0xe]
      %v527 = vld [vmem:[%s449 + $0x8] sm:$0x3]
      %v528 = vunpack.c.l.bf16 %v526
      %v529 = vunpack.c.l.bf16 %v527
      %v530 = vld [vmem:[%s2] sm:$0x1]
      %v531 = vlaneseq
      %v532 = vshrl.u32 %v531, 7
      %v533 = vsub.s32 0, %v532
      %v534 = vrot.slane %v530, %v533
      %v535 = vmul.f32 %v528, %v534
      %v536 = vmul.f32 %v529, %v534
      %v537 = vld [vmem:[%s2 + $0x1] sm:$0x1]
      %v538 = vlaneseq
      %v539 = vshrl.u32 %v538, 7
      %v540 = vsub.s32 0, %v539
      %v541 = vrot.slane %v537, %v540
      %v542 = vadd.f32 %v535, %v541
      %v543 = vadd.f32 %v536, %v541
      %v544 = vmax.f32 %v542, 0.0
      %v545 = vmax.f32 %v543, 0.0
      %vm546 = vcmask 523267
      %547 = vst.msk [vmem:[#allocation2 + $0x8] sm:$0xf8] %vm546, %v544
      %vm548 = vcmask 518144
      %549 = vst.msk [vmem:[#allocation2 + $0x10] sm:$0x7] %vm548, %v545
      %v550 = vld [vmem:[%s454 + $0x4] sm:$0xe]
      %v551 = vld [vmem:[%s454 + $0x8] sm:$0x3]
      %v552 = vunpack.c.l.bf16 %v550
      %v553 = vunpack.c.l.bf16 %v551
      %v554 = vld [vmem:[%s2] sm:$0x1]
      %v555 = vlaneseq
      %v556 = vshrl.u32 %v555, 7
      %v557 = vsub.s32 0, %v556
      %v558 = vrot.slane %v554, %v557
      %v559 = vmul.f32 %v552, %v558
      %v560 = vmul.f32 %v553, %v558
      %v561 = vld [vmem:[%s2 + $0x1] sm:$0x1]
      %v562 = vlaneseq
      %v563 = vshrl.u32 %v562, 7
      %v564 = vsub.s32 0, %v563
      %v565 = vrot.slane %v561, %v564
      %v566 = vadd.f32 %v559, %v565
      %v567 = vadd.f32 %v560, %v565
      %v568 = vmax.f32 %v566, 0.0
      %v569 = vmax.f32 %v567, 0.0
      %570 = vst.msk [vmem:[#allocation3 + $0x8] sm:$0xf8] %vm546, %v568
      %571 = vst.msk [vmem:[#allocation3 + $0x10] sm:$0x7] %vm548, %v569
      %v572 = vld [vmem:[#allocation2] sm:$0xff]
      %v573 = vld [vmem:[#allocation2 + $0x8] sm:$0xff]
      %v574 = vld [vmem:[#allocation2 + $0x10] sm:$0x3]
      %v575 = vpack.c.bf16 %v573, %v572
      %v576 = vpack.c.bf16 %v574, %v574
      %v577 = vld [vmem:[%s6] sm:$0xf]
      %v578 = vld [vmem:[%s6 + $0x4] sm:$0xf]
      %v579 = vld [vmem:[%s6 + $0x8] sm:$0xf]
      %v580 = vld [vmem:[%s6 + $0xc] sm:$0xf]
      %v581 = vld [vmem:[%s6 + $0x10] sm:$0xf]
      %v582 = vld [vmem:[%s6 + $0x14] sm:$0xf]
      %v583 = vld [vmem:[%s6 + $0x18] sm:$0xf]
      %v584 = vld [vmem:[%s6 + $0x1c] sm:$0xf]
      %v585 = vld [vmem:[#allocation3] sm:$0xff]
      %v586 = vld [vmem:[#allocation3 + $0x8] sm:$0xff]
      %v587 = vld [vmem:[#allocation3 + $0x10] sm:$0x3]
      %v588 = vpack.c.bf16 %v586, %v585
      %v589 = vpack.c.bf16 %v587, %v587
      %s590 = scalar_lea.vmem %s6, 32
      %v591 = vld [vmem:[%s590] sm:$0xf]
      %v592 = vld [vmem:[%s590 + $0x4] sm:$0xf]
      %v593 = vld [vmem:[%s590 + $0x8] sm:$0xf]
      %v594 = vld [vmem:[%s590 + $0xc] sm:$0xf]
      %v595 = vld [vmem:[%s590 + $0x10] sm:$0xf]
      %v596 = vld [vmem:[%s590 + $0x14] sm:$0xf]
      %v597 = vld [vmem:[%s590 + $0x18] sm:$0xf]
      %v598 = vld [vmem:[%s590 + $0x1c] sm:$0xf]
      %v607 = vunpack.c.l.b16 %v591
      %v608 = vunpack.c.l.b16 %v592
      %v609 = vunpack.c.l.b16 %v593
      %v610 = vunpack.c.l.b16 %v594
      %v611 = vunpack.c.l.b16 %v595
      %v612 = vunpack.c.l.b16 %v596
      %v613 = vunpack.c.l.b16 %v597
      %v614 = vunpack.c.l.b16 %v598
      %v615 = vpack.c.b16 %v608, %v607
      %v616 = vpack.c.b16 %v610, %v609
      %v617 = vpack.c.b16 %v612, %v611
      %v618 = vpack.c.b16 %v614, %v613
      %v624 = vsel %vm460, %v588, 0
      %v627 = vsel %vm460, %v589, 0
      %629 = vmatprep.subr.bf16.mxu0 0
      %630 = vmatpush1.bf16.msra.mxu0 0
      %631 = vmatprep.subr.bf16.mxu0 0
      %632 = vmatpush1.bf16.msra.mxu0 0
      %633 = vmatprep.subr.bf16.mxu0 0
      %634 = vmatpush1.bf16.msra.mxu0 0
      %635 = vmatprep.subr.bf16.mxu0 0
      %636 = vmatpush1.bf16.msra.mxu0 0
      %637 = vmatprep.subr.bf16.mxu0 0
      %638 = vmatpush1.bf16.msra.mxu0 %v618
      %639 = vmatprep.subr.bf16.mxu0 0
      %640 = vmatpush1.bf16.msra.mxu0 %v617
      %641 = vmatprep.subr.bf16.mxu0 0
      %642 = vmatpush1.bf16.msra.mxu0 %v616
      %643 = vmatprep.subr.bf16.mxu0 0
      %644 = vmatpush1.bf16.msra.mxu0 %v615
      %645 = vmatprep.subr.bf16.mxu0 0
      %646 = vmatpush2.bf16.msra.mxu0 0
      %647 = vmatprep.subr.bf16.mxu0 0
      %648 = vmatpush2.bf16.msra.mxu0 0
      %649 = vmatprep.subr.bf16.mxu0 0
      %650 = vmatpush2.bf16.msra.mxu0 0
      %651 = vmatprep.subr.bf16.mxu0 0
      %652 = vmatpush2.bf16.msra.mxu0 0
      %653 = vmatprep.subr.bf16.mxu0 0
      %654 = vmatpush2.bf16.msra.mxu0 0
      %655 = vmatprep.subr.bf16.mxu0 0
      %656 = vmatpush2.bf16.msra.mxu0 0
      %657 = vmatprep.subr.bf16.mxu0 0
      %658 = vmatpush2.bf16.msra.mxu0 0
      %659 = vmatprep.subr.bf16.mxu0 0
      %660 = vmatpush2.bf16.msra.mxu0 0
      %661 = vmatprep.mubr.bf16.mxu0 0
      %662 = vmatmul.mubr.bf16.gmra.mxu0 %v624
      %v663 = vpop.f32.mrf.mxu0
      %v664 = vadd.f32 0.0, %v663
      %v665 = vpop.f32.mrf.mxu0
      %v666 = vpop.f32.mrf.mxu0
      %v667 = vadd.f32 0.0, %v666
      %v668 = vpop.f32.mrf.mxu0
      %669 = vmatprep.mubr.bf16.mxu0 0
      %670 = vmatmul.mubr.bf16.gmra.mxu0 %v627
      %v671 = vpop.f32.mrf.mxu0
      %v672 = vadd.f32 0.0, %v671
      %v673 = vpop.f32.mrf.mxu0
      %v674 = vpop.f32.mrf.mxu0
      %v675 = vpop.f32.mrf.mxu0
      %676 = vdwg.mxu0
      %v685 = vunpack.c.l.b16 %v577
      %v686 = vunpack.c.l.b16 %v578
      %v687 = vunpack.c.l.b16 %v579
      %v688 = vunpack.c.l.b16 %v580
      %v689 = vunpack.c.l.b16 %v581
      %v690 = vunpack.c.l.b16 %v582
      %v691 = vunpack.c.l.b16 %v583
      %v692 = vunpack.c.l.b16 %v584
      %v693 = vpack.c.b16 %v686, %v685
      %v694 = vpack.c.b16 %v688, %v687
      %v695 = vpack.c.b16 %v690, %v689
      %v696 = vpack.c.b16 %v692, %v691
      %v702 = vsel %vm460, %v575, 0
      %v705 = vsel %vm460, %v576, 0
      %707 = vmatprep.subr.bf16.mxu0 0
      %708 = vmatpush1.bf16.msra.mxu0 0
      %709 = vmatprep.subr.bf16.mxu0 0
      %710 = vmatpush1.bf16.msra.mxu0 0
      %711 = vmatprep.subr.bf16.mxu0 0
      %712 = vmatpush1.bf16.msra.mxu0 0
      %713 = vmatprep.subr.bf16.mxu0 0
      %714 = vmatpush1.bf16.msra.mxu0 0
      %715 = vmatprep.subr.bf16.mxu0 0
      %716 = vmatpush1.bf16.msra.mxu0 %v696
      %717 = vmatprep.subr.bf16.mxu0 0
      %718 = vmatpush1.bf16.msra.mxu0 %v695
      %719 = vmatprep.subr.bf16.mxu0 0
      %720 = vmatpush1.bf16.msra.mxu0 %v694
      %721 = vmatprep.subr.bf16.mxu0 0
      %722 = vmatpush1.bf16.msra.mxu0 %v693
      %723 = vmatprep.subr.bf16.mxu0 0
      %724 = vmatpush2.bf16.msra.mxu0 0
      %725 = vmatprep.subr.bf16.mxu0 0
      %726 = vmatpush2.bf16.msra.mxu0 0
      %727 = vmatprep.subr.bf16.mxu0 0
      %728 = vmatpush2.bf16.msra.mxu0 0
      %729 = vmatprep.subr.bf16.mxu0 0
      %730 = vmatpush2.bf16.msra.mxu0 0
      %731 = vmatprep.subr.bf16.mxu0 0
      %732 = vmatpush2.bf16.msra.mxu0 0
      %733 = vmatprep.subr.bf16.mxu0 0
      %734 = vmatpush2.bf16.msra.mxu0 0
      %735 = vmatprep.subr.bf16.mxu0 0
      %736 = vmatpush2.bf16.msra.mxu0 0
      %737 = vmatprep.subr.bf16.mxu0 0
      %738 = vmatpush2.bf16.msra.mxu0 0
      %739 = vmatprep.mubr.bf16.mxu0 0
      %740 = vmatmul.mubr.bf16.gmra.mxu0 %v702
      %v741 = vpop.f32.mrf.mxu0
      %v742 = vadd.f32 %v664, %v741
      %v743 = vpop.f32.mrf.mxu0
      %v744 = vpop.f32.mrf.mxu0
      %v745 = vadd.f32 %v667, %v744
      %v746 = vpop.f32.mrf.mxu0
      %747 = vmatprep.mubr.bf16.mxu0 0
      %748 = vmatmul.mubr.bf16.gmra.mxu0 %v705
      %v749 = vpop.f32.mrf.mxu0
      %v750 = vadd.f32 %v672, %v749
      %v751 = vpop.f32.mrf.mxu0
      %v752 = vpop.f32.mrf.mxu0
      %v753 = vpop.f32.mrf.mxu0
      %754 = vdwg.mxu0
      %v755 = vld [vmem:[#allocation2 + $0x1] sm:$0xff]
      %v756 = vld [vmem:[#allocation2 + $0x9] sm:$0xff]
      %v757 = vld [vmem:[#allocation2 + $0x11] sm:$0x3]
      %v758 = vpack.c.bf16 %v756, %v755
      %v759 = vpack.c.bf16 %v757, %v757
      %s760 = scalar_lea.vmem %s6, 64
      %v761 = vld [vmem:[%s760] sm:$0xf]
      %v762 = vld [vmem:[%s760 + $0x4] sm:$0xf]
      %v763 = vld [vmem:[%s760 + $0x8] sm:$0xf]
      %v764 = vld [vmem:[%s760 + $0xc] sm:$0xf]
      %v765 = vld [vmem:[%s760 + $0x10] sm:$0xf]
      %v766 = vld [vmem:[%s760 + $0x14] sm:$0xf]
      %v767 = vld [vmem:[%s760 + $0x18] sm:$0xf]
      %v768 = vld [vmem:[%s760 + $0x1c] sm:$0xf]
      %v777 = vunpack.c.l.b16 %v761
      %v778 = vunpack.c.l.b16 %v762
      %v779 = vunpack.c.l.b16 %v763
      %v780 = vunpack.c.l.b16 %v764
      %v781 = vunpack.c.l.b16 %v765
      %v782 = vunpack.c.l.b16 %v766
      %v783 = vunpack.c.l.b16 %v767
      %v784 = vunpack.c.l.b16 %v768
      %v785 = vpack.c.b16 %v778, %v777
      %v786 = vpack.c.b16 %v780, %v779
      %v787 = vpack.c.b16 %v782, %v781
      %v788 = vpack.c.b16 %v784, %v783
      %v794 = vsel %vm460, %v758, 0
      %v797 = vsel %vm460, %v759, 0
      %799 = vmatprep.subr.bf16.mxu0 0
      %800 = vmatpush1.bf16.msra.mxu0 0
      %801 = vmatprep.subr.bf16.mxu0 0
      %802 = vmatpush1.bf16.msra.mxu0 0
      %803 = vmatprep.subr.bf16.mxu0 0
      %804 = vmatpush1.bf16.msra.mxu0 0
      %805 = vmatprep.subr.bf16.mxu0 0
      %806 = vmatpush1.bf16.msra.mxu0 0
      %807 = vmatprep.subr.bf16.mxu0 0
      %808 = vmatpush1.bf16.msra.mxu0 %v788
      %809 = vmatprep.subr.bf16.mxu0 0
      %810 = vmatpush1.bf16.msra.mxu0 %v787
      %811 = vmatprep.subr.bf16.mxu0 0
      %812 = vmatpush1.bf16.msra.mxu0 %v786
      %813 = vmatprep.subr.bf16.mxu0 0
      %814 = vmatpush1.bf16.msra.mxu0 %v785
      %815 = vmatprep.subr.bf16.mxu0 0
      %816 = vmatpush2.bf16.msra.mxu0 0
      %817 = vmatprep.subr.bf16.mxu0 0
      %818 = vmatpush2.bf16.msra.mxu0 0
      %819 = vmatprep.subr.bf16.mxu0 0
      %820 = vmatpush2.bf16.msra.mxu0 0
      %821 = vmatprep.subr.bf16.mxu0 0
      %822 = vmatpush2.bf16.msra.mxu0 0
      %823 = vmatprep.subr.bf16.mxu0 0
      %824 = vmatpush2.bf16.msra.mxu0 0
      %825 = vmatprep.subr.bf16.mxu0 0
      %826 = vmatpush2.bf16.msra.mxu0 0
      %827 = vmatprep.subr.bf16.mxu0 0
      %828 = vmatpush2.bf16.msra.mxu0 0
      %829 = vmatprep.subr.bf16.mxu0 0
      %830 = vmatpush2.bf16.msra.mxu0 0
      %831 = vmatprep.mubr.bf16.mxu0 0
      %832 = vmatmul.mubr.bf16.gmra.mxu0 %v794
      %v833 = vpop.f32.mrf.mxu0
      %v834 = vadd.f32 0.0, %v833
      %v835 = vpop.f32.mrf.mxu0
      %v836 = vpop.f32.mrf.mxu0
      %v837 = vadd.f32 0.0, %v836
      %v838 = vpop.f32.mrf.mxu0
      %839 = vmatprep.mubr.bf16.mxu0 0
      %840 = vmatmul.mubr.bf16.gmra.mxu0 %v797
      %v841 = vpop.f32.mrf.mxu0
      %v842 = vadd.f32 0.0, %v841
      %v843 = vpop.f32.mrf.mxu0
      %v844 = vpop.f32.mrf.mxu0
      %v845 = vpop.f32.mrf.mxu0
      %846 = vdwg.mxu0
      %v847 = vadd.f32 %v742, %v834
      %v848 = vadd.f32 %v745, %v837
      %v849 = vadd.f32 %v750, %v842
      %v850 = vld [vmem:[#allocation3 + $0x1] sm:$0xff]
      %v851 = vld [vmem:[#allocation3 + $0x9] sm:$0xff]
      %v852 = vld [vmem:[#allocation3 + $0x11] sm:$0x3]
      %v853 = vpack.c.bf16 %v851, %v850
      %v854 = vpack.c.bf16 %v852, %v852
      %s855 = scalar_lea.vmem %s6, 96
      %v856 = vld [vmem:[%s855] sm:$0xf]
      %v857 = vld [vmem:[%s855 + $0x4] sm:$0xf]
      %v858 = vld [vmem:[%s855 + $0x8] sm:$0xf]
      %v859 = vld [vmem:[%s855 + $0xc] sm:$0xf]
      %v860 = vld [vmem:[%s855 + $0x10] sm:$0xf]
      %v861 = vld [vmem:[%s855 + $0x14] sm:$0xf]
      %v862 = vld [vmem:[%s855 + $0x18] sm:$0xf]
      %v863 = vld [vmem:[%s855 + $0x1c] sm:$0xf]
      %v872 = vunpack.c.l.b16 %v856
      %v873 = vunpack.c.l.b16 %v857
      %v874 = vunpack.c.l.b16 %v858
      %v875 = vunpack.c.l.b16 %v859
      %v876 = vunpack.c.l.b16 %v860
      %v877 = vunpack.c.l.b16 %v861
      %v878 = vunpack.c.l.b16 %v862
      %v879 = vunpack.c.l.b16 %v863
      %v880 = vpack.c.b16 %v873, %v872
      %v881 = vpack.c.b16 %v875, %v874
      %v882 = vpack.c.b16 %v877, %v876
      %v883 = vpack.c.b16 %v879, %v878
      %v889 = vsel %vm460, %v853, 0
      %v892 = vsel %vm460, %v854, 0
      %894 = vmatprep.subr.bf16.mxu0 0
      %895 = vmatpush1.bf16.msra.mxu0 0
      %896 = vmatprep.subr.bf16.mxu0 0
      %897 = vmatpush1.bf16.msra.mxu0 0
      %898 = vmatprep.subr.bf16.mxu0 0
      %899 = vmatpush1.bf16.msra.mxu0 0
      %900 = vmatprep.subr.bf16.mxu0 0
      %901 = vmatpush1.bf16.msra.mxu0 0
      %902 = vmatprep.subr.bf16.mxu0 0
      %903 = vmatpush1.bf16.msra.mxu0 %v883
      %904 = vmatprep.subr.bf16.mxu0 0
      %905 = vmatpush1.bf16.msra.mxu0 %v882
      %906 = vmatprep.subr.bf16.mxu0 0
      %907 = vmatpush1.bf16.msra.mxu0 %v881
      %908 = vmatprep.subr.bf16.mxu0 0
      %909 = vmatpush1.bf16.msra.mxu0 %v880
      %910 = vmatprep.subr.bf16.mxu0 0
      %911 = vmatpush2.bf16.msra.mxu0 0
      %912 = vmatprep.subr.bf16.mxu0 0
      %913 = vmatpush2.bf16.msra.mxu0 0
      %914 = vmatprep.subr.bf16.mxu0 0
      %915 = vmatpush2.bf16.msra.mxu0 0
      %916 = vmatprep.subr.bf16.mxu0 0
      %917 = vmatpush2.bf16.msra.mxu0 0
      %918 = vmatprep.subr.bf16.mxu0 0
      %919 = vmatpush2.bf16.msra.mxu0 0
      %920 = vmatprep.subr.bf16.mxu0 0
      %921 = vmatpush2.bf16.msra.mxu0 0
      %922 = vmatprep.subr.bf16.mxu0 0
      %923 = vmatpush2.bf16.msra.mxu0 0
      %924 = vmatprep.subr.bf16.mxu0 0
      %925 = vmatpush2.bf16.msra.mxu0 0
      %926 = vmatprep.mubr.bf16.mxu0 0
      %927 = vmatmul.mubr.bf16.gmra.mxu0 %v889
      %v928 = vpop.f32.mrf.mxu0
      %v929 = vadd.f32 0.0, %v928
      %v930 = vpop.f32.mrf.mxu0
      %v931 = vpop.f32.mrf.mxu0
      %v932 = vadd.f32 0.0, %v931
      %v933 = vpop.f32.mrf.mxu0
      %934 = vmatprep.mubr.bf16.mxu0 0
      %935 = vmatmul.mubr.bf16.gmra.mxu0 %v892
      %v936 = vpop.f32.mrf.mxu0
      %v937 = vadd.f32 0.0, %v936
      %v938 = vpop.f32.mrf.mxu0
      %v939 = vpop.f32.mrf.mxu0
      %v940 = vpop.f32.mrf.mxu0
      %941 = vdwg.mxu0
      %v942 = vadd.f32 %v847, %v929
      %v943 = vadd.f32 %v848, %v932
      %v944 = vadd.f32 %v849, %v937
      %v945 = vld [vmem:[#allocation2 + $0x2] sm:$0xff]
      %v946 = vld [vmem:[#allocation2 + $0xa] sm:$0xff]
      %v947 = vld [vmem:[#allocation2 + $0x12] sm:$0x3]
      %v948 = vpack.c.bf16 %v946, %v945
      %v949 = vpack.c.bf16 %v947, %v947
      %s950 = scalar_lea.vmem %s6, 128
      %v951 = vld [vmem:[%s950] sm:$0xf]
      %v952 = vld [vmem:[%s950 + $0x4] sm:$0xf]
      %v953 = vld [vmem:[%s950 + $0x8] sm:$0xf]
      %v954 = vld [vmem:[%s950 + $0xc] sm:$0xf]
      %v955 = vld [vmem:[%s950 + $0x10] sm:$0xf]
      %v956 = vld [vmem:[%s950 + $0x14] sm:$0xf]
      %v957 = vld [vmem:[%s950 + $0x18] sm:$0xf]
      %v958 = vld [vmem:[%s950 + $0x1c] sm:$0xf]
      %v967 = vunpack.c.l.b16 %v951
      %v968 = vunpack.c.l.b16 %v952
      %v969 = vunpack.c.l.b16 %v953
      %v970 = vunpack.c.l.b16 %v954
      %v971 = vunpack.c.l.b16 %v955
      %v972 = vunpack.c.l.b16 %v956
      %v973 = vunpack.c.l.b16 %v957
      %v974 = vunpack.c.l.b16 %v958
      %v975 = vpack.c.b16 %v968, %v967
      %v976 = vpack.c.b16 %v970, %v969
      %v977 = vpack.c.b16 %v972, %v971
      %v978 = vpack.c.b16 %v974, %v973
      %v984 = vsel %vm460, %v948, 0
      %v987 = vsel %vm460, %v949, 0
      %989 = vmatprep.subr.bf16.mxu0 0
      %990 = vmatpush1.bf16.msra.mxu0 0
      %991 = vmatprep.subr.bf16.mxu0 0
      %992 = vmatpush1.bf16.msra.mxu0 0
      %993 = vmatprep.subr.bf16.mxu0 0
      %994 = vmatpush1.bf16.msra.mxu0 0
      %995 = vmatprep.subr.bf16.mxu0 0
      %996 = vmatpush1.bf16.msra.mxu0 0
      %997 = vmatprep.subr.bf16.mxu0 0
      %998 = vmatpush1.bf16.msra.mxu0 %v978
      %999 = vmatprep.subr.bf16.mxu0 0
      %1000 = vmatpush1.bf16.msra.mxu0 %v977
      %1001 = vmatprep.subr.bf16.mxu0 0
      %1002 = vmatpush1.bf16.msra.mxu0 %v976
      %1003 = vmatprep.subr.bf16.mxu0 0
      %1004 = vmatpush1.bf16.msra.mxu0 %v975
      %1005 = vmatprep.subr.bf16.mxu0 0
      %1006 = vmatpush2.bf16.msra.mxu0 0
      %1007 = vmatprep.subr.bf16.mxu0 0
      %1008 = vmatpush2.bf16.msra.mxu0 0
      %1009 = vmatprep.subr.bf16.mxu0 0
      %1010 = vmatpush2.bf16.msra.mxu0 0
      %1011 = vmatprep.subr.bf16.mxu0 0
      %1012 = vmatpush2.bf16.msra.mxu0 0
      %1013 = vmatprep.subr.bf16.mxu0 0
      %1014 = vmatpush2.bf16.msra.mxu0 0
      %1015 = vmatprep.subr.bf16.mxu0 0
      %1016 = vmatpush2.bf16.msra.mxu0 0
      %1017 = vmatprep.subr.bf16.mxu0 0
      %1018 = vmatpush2.bf16.msra.mxu0 0
      %1019 = vmatprep.subr.bf16.mxu0 0
      %1020 = vmatpush2.bf16.msra.mxu0 0
      %1021 = vmatprep.mubr.bf16.mxu0 0
      %1022 = vmatmul.mubr.bf16.gmra.mxu0 %v984
      %v1023 = vpop.f32.mrf.mxu0
      %v1024 = vadd.f32 0.0, %v1023
      %v1025 = vpop.f32.mrf.mxu0
      %v1026 = vpop.f32.mrf.mxu0
      %v1027 = vadd.f32 0.0, %v1026
      %v1028 = vpop.f32.mrf.mxu0
      %1029 = vmatprep.mubr.bf16.mxu0 0
      %1030 = vmatmul.mubr.bf16.gmra.mxu0 %v987
      %v1031 = vpop.f32.mrf.mxu0
      %v1032 = vadd.f32 0.0, %v1031
      %v1033 = vpop.f32.mrf.mxu0
      %v1034 = vpop.f32.mrf.mxu0
      %v1035 = vpop.f32.mrf.mxu0
      %1036 = vdwg.mxu0
      %v1037 = vadd.f32 %v942, %v1024
      %v1038 = vadd.f32 %v943, %v1027
      %v1039 = vadd.f32 %v944, %v1032
      %1040 = vmatprep.subr.bf16.mxu0 0
      %1041 = vmatpush1.bf16.msra.mxu0 0
      %1042 = vmatprep.subr.bf16.mxu0 0
      %1043 = vmatpush1.bf16.msra.mxu0 0
      %1044 = vmatprep.subr.bf16.mxu0 0
      %1045 = vmatpush1.bf16.msra.mxu0 0
      %1046 = vmatprep.subr.bf16.mxu0 0
      %1047 = vmatpush1.bf16.msra.mxu0 0
      %1048 = vmatprep.subr.bf16.mxu0 0
      %1049 = vmatpush1.bf16.msra.mxu0 %v618
      %1050 = vmatprep.subr.bf16.mxu0 0
      %1051 = vmatpush1.bf16.msra.mxu0 %v617
      %1052 = vmatprep.subr.bf16.mxu0 0
      %1053 = vmatpush1.bf16.msra.mxu0 %v616
      %1054 = vmatprep.subr.bf16.mxu0 0
      %1055 = vmatpush1.bf16.msra.mxu0 %v615
      %1056 = vmatprep.subr.bf16.mxu0 0
      %1057 = vmatpush2.bf16.msra.mxu0 0
      %1058 = vmatprep.subr.bf16.mxu0 0
      %1059 = vmatpush2.bf16.msra.mxu0 0
      %1060 = vmatprep.subr.bf16.mxu0 0
      %1061 = vmatpush2.bf16.msra.mxu0 0
      %1062 = vmatprep.subr.bf16.mxu0 0
      %1063 = vmatpush2.bf16.msra.mxu0 0
      %1064 = vmatprep.subr.bf16.mxu0 0
      %1065 = vmatpush2.bf16.msra.mxu0 0
      %1066 = vmatprep.subr.bf16.mxu0 0
      %1067 = vmatpush2.bf16.msra.mxu0 0
      %1068 = vmatprep.subr.bf16.mxu0 0
      %1069 = vmatpush2.bf16.msra.mxu0 0
      %1070 = vmatprep.subr.bf16.mxu0 0
      %1071 = vmatpush2.bf16.msra.mxu0 0
      %1072 = vmatprep.mubr.bf16.mxu0 0
      %1073 = vmatmul.mubr.bf16.gmra.mxu0 %v794
      %v1074 = vpop.f32.mrf.mxu0
      %v1075 = vadd.f32 0.0, %v1074
      %v1076 = vpop.f32.mrf.mxu0
      %v1077 = vpop.f32.mrf.mxu0
      %v1078 = vadd.f32 0.0, %v1077
      %v1079 = vpop.f32.mrf.mxu0
      %1080 = vmatprep.mubr.bf16.mxu0 0
      %1081 = vmatmul.mubr.bf16.gmra.mxu0 %v797
      %v1082 = vpop.f32.mrf.mxu0
      %v1083 = vadd.f32 0.0, %v1082
      %v1084 = vpop.f32.mrf.mxu0
      %v1085 = vpop.f32.mrf.mxu0
      %v1086 = vpop.f32.mrf.mxu0
      %1087 = vdwg.mxu0
      %1088 = vmatprep.subr.bf16.mxu0 0
      %1089 = vmatpush1.bf16.msra.mxu0 0
      %1090 = vmatprep.subr.bf16.mxu0 0
      %1091 = vmatpush1.bf16.msra.mxu0 0
      %1092 = vmatprep.subr.bf16.mxu0 0
      %1093 = vmatpush1.bf16.msra.mxu0 0
      %1094 = vmatprep.subr.bf16.mxu0 0
      %1095 = vmatpush1.bf16.msra.mxu0 0
      %1096 = vmatprep.subr.bf16.mxu0 0
      %1097 = vmatpush1.bf16.msra.mxu0 %v696
      %1098 = vmatprep.subr.bf16.mxu0 0
      %1099 = vmatpush1.bf16.msra.mxu0 %v695
      %1100 = vmatprep.subr.bf16.mxu0 0
      %1101 = vmatpush1.bf16.msra.mxu0 %v694
      %1102 = vmatprep.subr.bf16.mxu0 0
      %1103 = vmatpush1.bf16.msra.mxu0 %v693
      %1104 = vmatprep.subr.bf16.mxu0 0
      %1105 = vmatpush2.bf16.msra.mxu0 0
      %1106 = vmatprep.subr.bf16.mxu0 0
      %1107 = vmatpush2.bf16.msra.mxu0 0
      %1108 = vmatprep.subr.bf16.mxu0 0
      %1109 = vmatpush2.bf16.msra.mxu0 0
      %1110 = vmatprep.subr.bf16.mxu0 0
      %1111 = vmatpush2.bf16.msra.mxu0 0
      %1112 = vmatprep.subr.bf16.mxu0 0
      %1113 = vmatpush2.bf16.msra.mxu0 0
      %1114 = vmatprep.subr.bf16.mxu0 0
      %1115 = vmatpush2.bf16.msra.mxu0 0
      %1116 = vmatprep.subr.bf16.mxu0 0
      %1117 = vmatpush2.bf16.msra.mxu0 0
      %1118 = vmatprep.subr.bf16.mxu0 0
      %1119 = vmatpush2.bf16.msra.mxu0 0
      %1120 = vmatprep.mubr.bf16.mxu0 0
      %1121 = vmatmul.mubr.bf16.gmra.mxu0 %v624
      %v1122 = vpop.f32.mrf.mxu0
      %v1123 = vadd.f32 %v1075, %v1122
      %v1124 = vpop.f32.mrf.mxu0
      %v1125 = vpop.f32.mrf.mxu0
      %v1126 = vadd.f32 %v1078, %v1125
      %v1127 = vpop.f32.mrf.mxu0
      %1128 = vmatprep.mubr.bf16.mxu0 0
      %1129 = vmatmul.mubr.bf16.gmra.mxu0 %v627
      %v1130 = vpop.f32.mrf.mxu0
      %v1131 = vadd.f32 %v1083, %v1130
      %v1132 = vpop.f32.mrf.mxu0
      %v1133 = vpop.f32.mrf.mxu0
      %v1134 = vpop.f32.mrf.mxu0
      %1135 = vdwg.mxu0
      %1136 = vmatprep.subr.bf16.mxu0 0
      %1137 = vmatpush1.bf16.msra.mxu0 0
      %1138 = vmatprep.subr.bf16.mxu0 0
      %1139 = vmatpush1.bf16.msra.mxu0 0
      %1140 = vmatprep.subr.bf16.mxu0 0
      %1141 = vmatpush1.bf16.msra.mxu0 0
      %1142 = vmatprep.subr.bf16.mxu0 0
      %1143 = vmatpush1.bf16.msra.mxu0 0
      %1144 = vmatprep.subr.bf16.mxu0 0
      %1145 = vmatpush1.bf16.msra.mxu0 %v788
      %1146 = vmatprep.subr.bf16.mxu0 0
      %1147 = vmatpush1.bf16.msra.mxu0 %v787
      %1148 = vmatprep.subr.bf16.mxu0 0
      %1149 = vmatpush1.bf16.msra.mxu0 %v786
      %1150 = vmatprep.subr.bf16.mxu0 0
      %1151 = vmatpush1.bf16.msra.mxu0 %v785
      %1152 = vmatprep.subr.bf16.mxu0 0
      %1153 = vmatpush2.bf16.msra.mxu0 0
      %1154 = vmatprep.subr.bf16.mxu0 0
      %1155 = vmatpush2.bf16.msra.mxu0 0
      %1156 = vmatprep.subr.bf16.mxu0 0
      %1157 = vmatpush2.bf16.msra.mxu0 0
      %1158 = vmatprep.subr.bf16.mxu0 0
      %1159 = vmatpush2.bf16.msra.mxu0 0
      %1160 = vmatprep.subr.bf16.mxu0 0
      %1161 = vmatpush2.bf16.msra.mxu0 0
      %1162 = vmatprep.subr.bf16.mxu0 0
      %1163 = vmatpush2.bf16.msra.mxu0 0
      %1164 = vmatprep.subr.bf16.mxu0 0
      %1165 = vmatpush2.bf16.msra.mxu0 0
      %1166 = vmatprep.subr.bf16.mxu0 0
      %1167 = vmatpush2.bf16.msra.mxu0 0
      %1168 = vmatprep.mubr.bf16.mxu0 0
      %1169 = vmatmul.mubr.bf16.gmra.mxu0 %v889
      %v1170 = vpop.f32.mrf.mxu0
      %v1171 = vadd.f32 0.0, %v1170
      %v1172 = vpop.f32.mrf.mxu0
      %v1173 = vpop.f32.mrf.mxu0
      %v1174 = vadd.f32 0.0, %v1173
      %v1175 = vpop.f32.mrf.mxu0
      %1176 = vmatprep.mubr.bf16.mxu0 0
      %1177 = vmatmul.mubr.bf16.gmra.mxu0 %v892
      %v1178 = vpop.f32.mrf.mxu0
      %v1179 = vadd.f32 0.0, %v1178
      %v1180 = vpop.f32.mrf.mxu0
      %v1181 = vpop.f32.mrf.mxu0
      %v1182 = vpop.f32.mrf.mxu0
      %1183 = vdwg.mxu0
      %v1184 = vadd.f32 %v1123, %v1171
      %v1185 = vadd.f32 %v1126, %v1174
      %v1186 = vadd.f32 %v1131, %v1179
      %1187 = vmatprep.subr.bf16.mxu0 0
      %1188 = vmatpush1.bf16.msra.mxu0 0
      %1189 = vmatprep.subr.bf16.mxu0 0
      %1190 = vmatpush1.bf16.msra.mxu0 0
      %1191 = vmatprep.subr.bf16.mxu0 0
      %1192 = vmatpush1.bf16.msra.mxu0 0
      %1193 = vmatprep.subr.bf16.mxu0 0
      %1194 = vmatpush1.bf16.msra.mxu0 0
      %1195 = vmatprep.subr.bf16.mxu0 0
      %1196 = vmatpush1.bf16.msra.mxu0 %v883
      %1197 = vmatprep.subr.bf16.mxu0 0
      %1198 = vmatpush1.bf16.msra.mxu0 %v882
      %1199 = vmatprep.subr.bf16.mxu0 0
      %1200 = vmatpush1.bf16.msra.mxu0 %v881
      %1201 = vmatprep.subr.bf16.mxu0 0
      %1202 = vmatpush1.bf16.msra.mxu0 %v880
      %1203 = vmatprep.subr.bf16.mxu0 0
      %1204 = vmatpush2.bf16.msra.mxu0 0
      %1205 = vmatprep.subr.bf16.mxu0 0
      %1206 = vmatpush2.bf16.msra.mxu0 0
      %1207 = vmatprep.subr.bf16.mxu0 0
      %1208 = vmatpush2.bf16.msra.mxu0 0
      %1209 = vmatprep.subr.bf16.mxu0 0
      %1210 = vmatpush2.bf16.msra.mxu0 0
      %1211 = vmatprep.subr.bf16.mxu0 0
      %1212 = vmatpush2.bf16.msra.mxu0 0
      %1213 = vmatprep.subr.bf16.mxu0 0
      %1214 = vmatpush2.bf16.msra.mxu0 0
      %1215 = vmatprep.subr.bf16.mxu0 0
      %1216 = vmatpush2.bf16.msra.mxu0 0
      %1217 = vmatprep.subr.bf16.mxu0 0
      %1218 = vmatpush2.bf16.msra.mxu0 0
      %1219 = vmatprep.mubr.bf16.mxu0 0
      %1220 = vmatmul.mubr.bf16.gmra.mxu0 %v984
      %v1221 = vpop.f32.mrf.mxu0
      %v1222 = vadd.f32 0.0, %v1221
      %v1223 = vpop.f32.mrf.mxu0
      %v1224 = vpop.f32.mrf.mxu0
      %v1225 = vadd.f32 0.0, %v1224
      %v1226 = vpop.f32.mrf.mxu0
      %1227 = vmatprep.mubr.bf16.mxu0 0
      %1228 = vmatmul.mubr.bf16.gmra.mxu0 %v987
      %v1229 = vpop.f32.mrf.mxu0
      %v1230 = vadd.f32 0.0, %v1229
      %v1231 = vpop.f32.mrf.mxu0
      %v1232 = vpop.f32.mrf.mxu0
      %v1233 = vpop.f32.mrf.mxu0
      %1234 = vdwg.mxu0
      %v1235 = vadd.f32 %v1184, %v1222
      %v1236 = vadd.f32 %v1185, %v1225
      %v1237 = vadd.f32 %v1186, %v1230
      %v1238 = vld [vmem:[#allocation3 + $0x2] sm:$0xff]
      %v1239 = vld [vmem:[#allocation3 + $0xa] sm:$0xff]
      %v1240 = vld [vmem:[#allocation3 + $0x12] sm:$0x3]
      %v1241 = vpack.c.bf16 %v1239, %v1238
      %v1242 = vpack.c.bf16 %v1240, %v1240
      %v1244 = vsel %vm460, %v1241, 0
      %v1247 = vsel %vm460, %v1242, 0
      %1249 = vmatprep.subr.bf16.mxu0 0
      %1250 = vmatpush1.bf16.msra.mxu0 0
      %1251 = vmatprep.subr.bf16.mxu0 0
      %1252 = vmatpush1.bf16.msra.mxu0 0
      %1253 = vmatprep.subr.bf16.mxu0 0
      %1254 = vmatpush1.bf16.msra.mxu0 0
      %1255 = vmatprep.subr.bf16.mxu0 0
      %1256 = vmatpush1.bf16.msra.mxu0 0
      %1257 = vmatprep.subr.bf16.mxu0 0
      %1258 = vmatpush1.bf16.msra.mxu0 %v978
      %1259 = vmatprep.subr.bf16.mxu0 0
      %1260 = vmatpush1.bf16.msra.mxu0 %v977
      %1261 = vmatprep.subr.bf16.mxu0 0
      %1262 = vmatpush1.bf16.msra.mxu0 %v976
      %1263 = vmatprep.subr.bf16.mxu0 0
      %1264 = vmatpush1.bf16.msra.mxu0 %v975
      %1265 = vmatprep.subr.bf16.mxu0 0
      %1266 = vmatpush2.bf16.msra.mxu0 0
      %1267 = vmatprep.subr.bf16.mxu0 0
      %1268 = vmatpush2.bf16.msra.mxu0 0
      %1269 = vmatprep.subr.bf16.mxu0 0
      %1270 = vmatpush2.bf16.msra.mxu0 0
      %1271 = vmatprep.subr.bf16.mxu0 0
      %1272 = vmatpush2.bf16.msra.mxu0 0
      %1273 = vmatprep.subr.bf16.mxu0 0
      %1274 = vmatpush2.bf16.msra.mxu0 0
      %1275 = vmatprep.subr.bf16.mxu0 0
      %1276 = vmatpush2.bf16.msra.mxu0 0
      %1277 = vmatprep.subr.bf16.mxu0 0
      %1278 = vmatpush2.bf16.msra.mxu0 0
      %1279 = vmatprep.subr.bf16.mxu0 0
      %1280 = vmatpush2.bf16.msra.mxu0 0
      %1281 = vmatprep.mubr.bf16.mxu0 0
      %1282 = vmatmul.mubr.bf16.gmra.mxu0 %v1244
      %v1283 = vpop.f32.mrf.mxu0
      %v1284 = vadd.f32 0.0, %v1283
      %v1285 = vpop.f32.mrf.mxu0
      %v1286 = vpop.f32.mrf.mxu0
      %v1287 = vadd.f32 0.0, %v1286
      %v1288 = vpop.f32.mrf.mxu0
      %1289 = vmatprep.mubr.bf16.mxu0 0
      %1290 = vmatmul.mubr.bf16.gmra.mxu0 %v1247
      %v1291 = vpop.f32.mrf.mxu0
      %v1292 = vadd.f32 0.0, %v1291
      %v1293 = vpop.f32.mrf.mxu0
      %v1294 = vpop.f32.mrf.mxu0
      %v1295 = vpop.f32.mrf.mxu0
      %1296 = vdwg.mxu0
      %v1297 = vadd.f32 %v1235, %v1284
      %v1298 = vadd.f32 %v1236, %v1287
      %v1299 = vadd.f32 %v1237, %v1292
      %v1300 = vld [vmem:[%s3] sm:$0x1]
      %v1301 = vlaneseq
      %v1302 = vshrl.u32 %v1301, 7
      %v1303 = vsub.s32 0, %v1302
      %v1304 = vrot.slane %v1300, %v1303
      %v1305 = vmul.f32 %v1037, %v1304
      %v1306 = vmul.f32 %v1038, %v1304
      %v1307 = vmul.f32 %v1039, %v1304
      %v1308 = vld [vmem:[%s3 + $0x1] sm:$0x1]
      %v1309 = vlaneseq
      %v1310 = vshrl.u32 %v1309, 7
      %v1311 = vsub.s32 0, %v1310
      %v1312 = vrot.slane %v1308, %v1311
      %v1313 = vadd.f32 %v1305, %v1312
      %v1314 = vadd.f32 %v1306, %v1312
      %v1315 = vadd.f32 %v1307, %v1312
      %v1316 = vmax.f32 %v1313, 0.0
      %v1317 = vmax.f32 %v1314, 0.0
      %v1318 = vmax.f32 %v1315, 0.0
      %v1319 = vmul.f32 %v1297, %v1304
      %v1320 = vmul.f32 %v1298, %v1304
      %v1321 = vmul.f32 %v1299, %v1304
      %v1322 = vadd.f32 %v1319, %v1312
      %v1323 = vadd.f32 %v1320, %v1312
      %v1324 = vadd.f32 %v1321, %v1312
      %v1325 = vmax.f32 %v1322, 0.0
      %v1326 = vmax.f32 %v1323, 0.0
      %v1327 = vmax.f32 %v1324, 0.0
      %1328 = vst [vmem:[#allocation4 + $0x1] sm:$0xff] %v1316
      %1329 = vst [vmem:[#allocation5 + $0x1] sm:$0xff] %v1325
      %1330 = vst [vmem:[#allocation4 + $0x9] sm:$0xfc] %v1317
      %1331 = vst [vmem:[#allocation4 + $0x11] sm:$0x3] %v1318
      %1332 = vst [vmem:[#allocation5 + $0x9] sm:$0xfc] %v1326
      %1333 = vst [vmem:[#allocation5 + $0x11] sm:$0x3] %v1327
      %v1334 = vld [vmem:[#allocation4] sm:$0xff]
      %v1335 = vld [vmem:[#allocation4 + $0x8] sm:$0xff]
      %v1336 = vld [vmem:[#allocation4 + $0x10] sm:$0x3]
      %v1337 = vpack.c.bf16 %v1335, %v1334
      %v1338 = vpack.c.bf16 %v1336, %v1336
      %v1339 = vld [vmem:[%s7] sm:$0xf]
      %v1340 = vld [vmem:[%s7 + $0x4] sm:$0xf]
      %v1341 = vld [vmem:[%s7 + $0x8] sm:$0xf]
      %v1342 = vld [vmem:[%s7 + $0xc] sm:$0xf]
      %v1343 = vld [vmem:[%s7 + $0x10] sm:$0xf]
      %v1344 = vld [vmem:[%s7 + $0x14] sm:$0xf]
      %v1345 = vld [vmem:[%s7 + $0x18] sm:$0xf]
      %v1346 = vld [vmem:[%s7 + $0x1c] sm:$0xf]
      %v1347 = vld [vmem:[%s7 + $0x20] sm:$0xf]
      %v1348 = vld [vmem:[%s7 + $0x24] sm:$0xf]
      %v1349 = vld [vmem:[%s7 + $0x28] sm:$0xf]
      %v1350 = vld [vmem:[%s7 + $0x2c] sm:$0xf]
      %v1351 = vld [vmem:[%s7 + $0x30] sm:$0xf]
      %v1352 = vld [vmem:[%s7 + $0x34] sm:$0xf]
      %v1353 = vld [vmem:[%s7 + $0x38] sm:$0xf]
      %v1354 = vld [vmem:[%s7 + $0x3c] sm:$0xf]
      %v1355 = vld [vmem:[#allocation5] sm:$0xff]
      %v1356 = vld [vmem:[#allocation5 + $0x8] sm:$0xff]
      %v1357 = vld [vmem:[#allocation5 + $0x10] sm:$0x3]
      %v1358 = vpack.c.bf16 %v1356, %v1355
      %v1359 = vpack.c.bf16 %v1357, %v1357
      %s1360 = scalar_lea.vmem %s7, 64
      %v1361 = vld [vmem:[%s1360] sm:$0xf]
      %v1362 = vld [vmem:[%s1360 + $0x4] sm:$0xf]
      %v1363 = vld [vmem:[%s1360 + $0x8] sm:$0xf]
      %v1364 = vld [vmem:[%s1360 + $0xc] sm:$0xf]
      %v1365 = vld [vmem:[%s1360 + $0x10] sm:$0xf]
      %v1366 = vld [vmem:[%s1360 + $0x14] sm:$0xf]
      %v1367 = vld [vmem:[%s1360 + $0x18] sm:$0xf]
      %v1368 = vld [vmem:[%s1360 + $0x1c] sm:$0xf]
      %v1369 = vld [vmem:[%s1360 + $0x20] sm:$0xf]
      %v1370 = vld [vmem:[%s1360 + $0x24] sm:$0xf]
      %v1371 = vld [vmem:[%s1360 + $0x28] sm:$0xf]
      %v1372 = vld [vmem:[%s1360 + $0x2c] sm:$0xf]
      %v1373 = vld [vmem:[%s1360 + $0x30] sm:$0xf]
      %v1374 = vld [vmem:[%s1360 + $0x34] sm:$0xf]
      %v1375 = vld [vmem:[%s1360 + $0x38] sm:$0xf]
      %v1376 = vld [vmem:[%s1360 + $0x3c] sm:$0xf]
      %v1393 = vunpack.c.l.b16 %v1361
      %v1394 = vunpack.c.l.b16 %v1362
      %v1395 = vunpack.c.l.b16 %v1363
      %v1396 = vunpack.c.l.b16 %v1364
      %v1397 = vunpack.c.l.b16 %v1365
      %v1398 = vunpack.c.l.b16 %v1366
      %v1399 = vunpack.c.l.b16 %v1367
      %v1400 = vunpack.c.l.b16 %v1368
      %v1401 = vunpack.c.l.b16 %v1369
      %v1402 = vunpack.c.l.b16 %v1370
      %v1403 = vunpack.c.l.b16 %v1371
      %v1404 = vunpack.c.l.b16 %v1372
      %v1405 = vunpack.c.l.b16 %v1373
      %v1406 = vunpack.c.l.b16 %v1374
      %v1407 = vunpack.c.l.b16 %v1375
      %v1408 = vunpack.c.l.b16 %v1376
      %v1409 = vpack.c.b16 %v1394, %v1393
      %v1410 = vpack.c.b16 %v1396, %v1395
      %v1411 = vpack.c.b16 %v1398, %v1397
      %v1412 = vpack.c.b16 %v1400, %v1399
      %v1413 = vpack.c.b16 %v1402, %v1401
      %v1414 = vpack.c.b16 %v1404, %v1403
      %v1415 = vpack.c.b16 %v1406, %v1405
      %v1416 = vpack.c.b16 %v1408, %v1407
      %1425 = vmatprep.subr.bf16.mxu0 0
      %1426 = vmatpush1.bf16.msra.mxu0 %v1416
      %1427 = vmatprep.subr.bf16.mxu0 0
      %1428 = vmatpush1.bf16.msra.mxu0 %v1415
      %1429 = vmatprep.subr.bf16.mxu0 0
      %1430 = vmatpush1.bf16.msra.mxu0 %v1414
      %1431 = vmatprep.subr.bf16.mxu0 0
      %1432 = vmatpush1.bf16.msra.mxu0 %v1413
      %1433 = vmatprep.subr.bf16.mxu0 0
      %1434 = vmatpush1.bf16.msra.mxu0 %v1412
      %1435 = vmatprep.subr.bf16.mxu0 0
      %1436 = vmatpush1.bf16.msra.mxu0 %v1411
      %1437 = vmatprep.subr.bf16.mxu0 0
      %1438 = vmatpush1.bf16.msra.mxu0 %v1410
      %1439 = vmatprep.subr.bf16.mxu0 0
      %1440 = vmatpush1.bf16.msra.mxu0 %v1409
      %1441 = vmatprep.subr.bf16.mxu0 0
      %1442 = vmatpush2.bf16.msra.mxu0 0
      %1443 = vmatprep.subr.bf16.mxu0 0
      %1444 = vmatpush2.bf16.msra.mxu0 0
      %1445 = vmatprep.subr.bf16.mxu0 0
      %1446 = vmatpush2.bf16.msra.mxu0 0
      %1447 = vmatprep.subr.bf16.mxu0 0
      %1448 = vmatpush2.bf16.msra.mxu0 0
      %1449 = vmatprep.subr.bf16.mxu0 0
      %1450 = vmatpush2.bf16.msra.mxu0 0
      %1451 = vmatprep.subr.bf16.mxu0 0
      %1452 = vmatpush2.bf16.msra.mxu0 0
      %1453 = vmatprep.subr.bf16.mxu0 0
      %1454 = vmatpush2.bf16.msra.mxu0 0
      %1455 = vmatprep.subr.bf16.mxu0 0
      %1456 = vmatpush2.bf16.msra.mxu0 0
      %1457 = vmatprep.mubr.bf16.mxu0 0
      %1458 = vmatmul.mubr.bf16.gmra.mxu0 %v1358
      %v1459 = vpop.f32.mrf.mxu0
      %v1460 = vadd.f32 0.0, %v1459
      %v1461 = vpop.f32.mrf.mxu0
      %v1462 = vpop.f32.mrf.mxu0
      %v1463 = vadd.f32 0.0, %v1462
      %v1464 = vpop.f32.mrf.mxu0
      %1465 = vmatprep.mubr.bf16.mxu0 0
      %1466 = vmatmul.mubr.bf16.gmra.mxu0 %v1359
      %v1467 = vpop.f32.mrf.mxu0
      %v1468 = vadd.f32 0.0, %v1467
      %v1469 = vpop.f32.mrf.mxu0
      %v1470 = vpop.f32.mrf.mxu0
      %v1471 = vpop.f32.mrf.mxu0
      %1472 = vdwg.mxu0
      %v1489 = vunpack.c.l.b16 %v1339
      %v1490 = vunpack.c.l.b16 %v1340
      %v1491 = vunpack.c.l.b16 %v1341
      %v1492 = vunpack.c.l.b16 %v1342
      %v1493 = vunpack.c.l.b16 %v1343
      %v1494 = vunpack.c.l.b16 %v1344
      %v1495 = vunpack.c.l.b16 %v1345
      %v1496 = vunpack.c.l.b16 %v1346
      %v1497 = vunpack.c.l.b16 %v1347
      %v1498 = vunpack.c.l.b16 %v1348
      %v1499 = vunpack.c.l.b16 %v1349
      %v1500 = vunpack.c.l.b16 %v1350
      %v1501 = vunpack.c.l.b16 %v1351
      %v1502 = vunpack.c.l.b16 %v1352
      %v1503 = vunpack.c.l.b16 %v1353
      %v1504 = vunpack.c.l.b16 %v1354
      %v1505 = vpack.c.b16 %v1490, %v1489
      %v1506 = vpack.c.b16 %v1492, %v1491
      %v1507 = vpack.c.b16 %v1494, %v1493
      %v1508 = vpack.c.b16 %v1496, %v1495
      %v1509 = vpack.c.b16 %v1498, %v1497
      %v1510 = vpack.c.b16 %v1500, %v1499
      %v1511 = vpack.c.b16 %v1502, %v1501
      %v1512 = vpack.c.b16 %v1504, %v1503
      %1521 = vmatprep.subr.bf16.mxu0 0
      %1522 = vmatpush1.bf16.msra.mxu0 %v1512
      %1523 = vmatprep.subr.bf16.mxu0 0
      %1524 = vmatpush1.bf16.msra.mxu0 %v1511
      %1525 = vmatprep.subr.bf16.mxu0 0
      %1526 = vmatpush1.bf16.msra.mxu0 %v1510
      %1527 = vmatprep.subr.bf16.mxu0 0
      %1528 = vmatpush1.bf16.msra.mxu0 %v1509
      %1529 = vmatprep.subr.bf16.mxu0 0
      %1530 = vmatpush1.bf16.msra.mxu0 %v1508
      %1531 = vmatprep.subr.bf16.mxu0 0
      %1532 = vmatpush1.bf16.msra.mxu0 %v1507
      %1533 = vmatprep.subr.bf16.mxu0 0
      %1534 = vmatpush1.bf16.msra.mxu0 %v1506
      %1535 = vmatprep.subr.bf16.mxu0 0
      %1536 = vmatpush1.bf16.msra.mxu0 %v1505
      %1537 = vmatprep.subr.bf16.mxu0 0
      %1538 = vmatpush2.bf16.msra.mxu0 0
      %1539 = vmatprep.subr.bf16.mxu0 0
      %1540 = vmatpush2.bf16.msra.mxu0 0
      %1541 = vmatprep.subr.bf16.mxu0 0
      %1542 = vmatpush2.bf16.msra.mxu0 0
      %1543 = vmatprep.subr.bf16.mxu0 0
      %1544 = vmatpush2.bf16.msra.mxu0 0
      %1545 = vmatprep.subr.bf16.mxu0 0
      %1546 = vmatpush2.bf16.msra.mxu0 0
      %1547 = vmatprep.subr.bf16.mxu0 0
      %1548 = vmatpush2.bf16.msra.mxu0 0
      %1549 = vmatprep.subr.bf16.mxu0 0
      %1550 = vmatpush2.bf16.msra.mxu0 0
      %1551 = vmatprep.subr.bf16.mxu0 0
      %1552 = vmatpush2.bf16.msra.mxu0 0
      %1553 = vmatprep.mubr.bf16.mxu0 0
      %1554 = vmatmul.mubr.bf16.gmra.mxu0 %v1337
      %v1555 = vpop.f32.mrf.mxu0
      %v1556 = vadd.f32 %v1460, %v1555
      %v1557 = vpop.f32.mrf.mxu0
      %v1558 = vpop.f32.mrf.mxu0
      %v1559 = vadd.f32 %v1463, %v1558
      %v1560 = vpop.f32.mrf.mxu0
      %1561 = vmatprep.mubr.bf16.mxu0 0
      %1562 = vmatmul.mubr.bf16.gmra.mxu0 %v1338
      %v1563 = vpop.f32.mrf.mxu0
      %v1564 = vadd.f32 %v1468, %v1563
      %v1565 = vpop.f32.mrf.mxu0
      %v1566 = vpop.f32.mrf.mxu0
      %v1567 = vpop.f32.mrf.mxu0
      %1568 = vdwg.mxu0
      %v1569 = vld [vmem:[#allocation4 + $0x1] sm:$0xff]
      %v1570 = vld [vmem:[#allocation4 + $0x9] sm:$0xff]
      %v1571 = vld [vmem:[#allocation4 + $0x11] sm:$0x3]
      %v1572 = vpack.c.bf16 %v1570, %v1569
      %v1573 = vpack.c.bf16 %v1571, %v1571
      %s1574 = scalar_lea.vmem %s7, 128
      %v1575 = vld [vmem:[%s1574] sm:$0xf]
      %v1576 = vld [vmem:[%s1574 + $0x4] sm:$0xf]
      %v1577 = vld [vmem:[%s1574 + $0x8] sm:$0xf]
      %v1578 = vld [vmem:[%s1574 + $0xc] sm:$0xf]
      %v1579 = vld [vmem:[%s1574 + $0x10] sm:$0xf]
      %v1580 = vld [vmem:[%s1574 + $0x14] sm:$0xf]
      %v1581 = vld [vmem:[%s1574 + $0x18] sm:$0xf]
      %v1582 = vld [vmem:[%s1574 + $0x1c] sm:$0xf]
      %v1583 = vld [vmem:[%s1574 + $0x20] sm:$0xf]
      %v1584 = vld [vmem:[%s1574 + $0x24] sm:$0xf]
      %v1585 = vld [vmem:[%s1574 + $0x28] sm:$0xf]
      %v1586 = vld [vmem:[%s1574 + $0x2c] sm:$0xf]
      %v1587 = vld [vmem:[%s1574 + $0x30] sm:$0xf]
      %v1588 = vld [vmem:[%s1574 + $0x34] sm:$0xf]
      %v1589 = vld [vmem:[%s1574 + $0x38] sm:$0xf]
      %v1590 = vld [vmem:[%s1574 + $0x3c] sm:$0xf]
      %v1607 = vunpack.c.l.b16 %v1575
      %v1608 = vunpack.c.l.b16 %v1576
      %v1609 = vunpack.c.l.b16 %v1577
      %v1610 = vunpack.c.l.b16 %v1578
      %v1611 = vunpack.c.l.b16 %v1579
      %v1612 = vunpack.c.l.b16 %v1580
      %v1613 = vunpack.c.l.b16 %v1581
      %v1614 = vunpack.c.l.b16 %v1582
      %v1615 = vunpack.c.l.b16 %v1583
      %v1616 = vunpack.c.l.b16 %v1584
      %v1617 = vunpack.c.l.b16 %v1585
      %v1618 = vunpack.c.l.b16 %v1586
      %v1619 = vunpack.c.l.b16 %v1587
      %v1620 = vunpack.c.l.b16 %v1588
      %v1621 = vunpack.c.l.b16 %v1589
      %v1622 = vunpack.c.l.b16 %v1590
      %v1623 = vpack.c.b16 %v1608, %v1607
      %v1624 = vpack.c.b16 %v1610, %v1609
      %v1625 = vpack.c.b16 %v1612, %v1611
      %v1626 = vpack.c.b16 %v1614, %v1613
      %v1627 = vpack.c.b16 %v1616, %v1615
      %v1628 = vpack.c.b16 %v1618, %v1617
      %v1629 = vpack.c.b16 %v1620, %v1619
      %v1630 = vpack.c.b16 %v1622, %v1621
      %1639 = vmatprep.subr.bf16.mxu0 0
      %1640 = vmatpush1.bf16.msra.mxu0 %v1630
      %1641 = vmatprep.subr.bf16.mxu0 0
      %1642 = vmatpush1.bf16.msra.mxu0 %v1629
      %1643 = vmatprep.subr.bf16.mxu0 0
      %1644 = vmatpush1.bf16.msra.mxu0 %v1628
      %1645 = vmatprep.subr.bf16.mxu0 0
      %1646 = vmatpush1.bf16.msra.mxu0 %v1627
      %1647 = vmatprep.subr.bf16.mxu0 0
      %1648 = vmatpush1.bf16.msra.mxu0 %v1626
      %1649 = vmatprep.subr.bf16.mxu0 0
      %1650 = vmatpush1.bf16.msra.mxu0 %v1625
      %1651 = vmatprep.subr.bf16.mxu0 0
      %1652 = vmatpush1.bf16.msra.mxu0 %v1624
      %1653 = vmatprep.subr.bf16.mxu0 0
      %1654 = vmatpush1.bf16.msra.mxu0 %v1623
      %1655 = vmatprep.subr.bf16.mxu0 0
      %1656 = vmatpush2.bf16.msra.mxu0 0
      %1657 = vmatprep.subr.bf16.mxu0 0
      %1658 = vmatpush2.bf16.msra.mxu0 0
      %1659 = vmatprep.subr.bf16.mxu0 0
      %1660 = vmatpush2.bf16.msra.mxu0 0
      %1661 = vmatprep.subr.bf16.mxu0 0
      %1662 = vmatpush2.bf16.msra.mxu0 0
      %1663 = vmatprep.subr.bf16.mxu0 0
      %1664 = vmatpush2.bf16.msra.mxu0 0
      %1665 = vmatprep.subr.bf16.mxu0 0
      %1666 = vmatpush2.bf16.msra.mxu0 0
      %1667 = vmatprep.subr.bf16.mxu0 0
      %1668 = vmatpush2.bf16.msra.mxu0 0
      %1669 = vmatprep.subr.bf16.mxu0 0
      %1670 = vmatpush2.bf16.msra.mxu0 0
      %1671 = vmatprep.mubr.bf16.mxu0 0
      %1672 = vmatmul.mubr.bf16.gmra.mxu0 %v1572
      %v1673 = vpop.f32.mrf.mxu0
      %v1674 = vadd.f32 0.0, %v1673
      %v1675 = vpop.f32.mrf.mxu0
      %v1676 = vpop.f32.mrf.mxu0
      %v1677 = vadd.f32 0.0, %v1676
      %v1678 = vpop.f32.mrf.mxu0
      %1679 = vmatprep.mubr.bf16.mxu0 0
      %1680 = vmatmul.mubr.bf16.gmra.mxu0 %v1573
      %v1681 = vpop.f32.mrf.mxu0
      %v1682 = vadd.f32 0.0, %v1681
      %v1683 = vpop.f32.mrf.mxu0
      %v1684 = vpop.f32.mrf.mxu0
      %v1685 = vpop.f32.mrf.mxu0
      %1686 = vdwg.mxu0
      %v1687 = vadd.f32 %v1556, %v1674
      %v1688 = vadd.f32 %v1559, %v1677
      %v1689 = vadd.f32 %v1564, %v1682
      %v1690 = vld [vmem:[#allocation5 + $0x1] sm:$0xff]
      %v1691 = vld [vmem:[#allocation5 + $0x9] sm:$0xff]
      %v1692 = vld [vmem:[#allocation5 + $0x11] sm:$0x3]
      %v1693 = vpack.c.bf16 %v1691, %v1690
      %v1694 = vpack.c.bf16 %v1692, %v1692
      %s1695 = scalar_lea.vmem %s7, 192
      %v1696 = vld [vmem:[%s1695] sm:$0xf]
      %v1697 = vld [vmem:[%s1695 + $0x4] sm:$0xf]
      %v1698 = vld [vmem:[%s1695 + $0x8] sm:$0xf]
      %v1699 = vld [vmem:[%s1695 + $0xc] sm:$0xf]
      %v1700 = vld [vmem:[%s1695 + $0x10] sm:$0xf]
      %v1701 = vld [vmem:[%s1695 + $0x14] sm:$0xf]
      %v1702 = vld [vmem:[%s1695 + $0x18] sm:$0xf]
      %v1703 = vld [vmem:[%s1695 + $0x1c] sm:$0xf]
      %v1704 = vld [vmem:[%s1695 + $0x20] sm:$0xf]
      %v1705 = vld [vmem:[%s1695 + $0x24] sm:$0xf]
      %v1706 = vld [vmem:[%s1695 + $0x28] sm:$0xf]
      %v1707 = vld [vmem:[%s1695 + $0x2c] sm:$0xf]
      %v1708 = vld [vmem:[%s1695 + $0x30] sm:$0xf]
      %v1709 = vld [vmem:[%s1695 + $0x34] sm:$0xf]
      %v1710 = vld [vmem:[%s1695 + $0x38] sm:$0xf]
      %v1711 = vld [vmem:[%s1695 + $0x3c] sm:$0xf]
      %v1728 = vunpack.c.l.b16 %v1696
      %v1729 = vunpack.c.l.b16 %v1697
      %v1730 = vunpack.c.l.b16 %v1698
      %v1731 = vunpack.c.l.b16 %v1699
      %v1732 = vunpack.c.l.b16 %v1700
      %v1733 = vunpack.c.l.b16 %v1701
      %v1734 = vunpack.c.l.b16 %v1702
      %v1735 = vunpack.c.l.b16 %v1703
      %v1736 = vunpack.c.l.b16 %v1704
      %v1737 = vunpack.c.l.b16 %v1705
      %v1738 = vunpack.c.l.b16 %v1706
      %v1739 = vunpack.c.l.b16 %v1707
      %v1740 = vunpack.c.l.b16 %v1708
      %v1741 = vunpack.c.l.b16 %v1709
      %v1742 = vunpack.c.l.b16 %v1710
      %v1743 = vunpack.c.l.b16 %v1711
      %v1744 = vpack.c.b16 %v1729, %v1728
      %v1745 = vpack.c.b16 %v1731, %v1730
      %v1746 = vpack.c.b16 %v1733, %v1732
      %v1747 = vpack.c.b16 %v1735, %v1734
      %v1748 = vpack.c.b16 %v1737, %v1736
      %v1749 = vpack.c.b16 %v1739, %v1738
      %v1750 = vpack.c.b16 %v1741, %v1740
      %v1751 = vpack.c.b16 %v1743, %v1742
      %1760 = vmatprep.subr.bf16.mxu0 0
      %1761 = vmatpush1.bf16.msra.mxu0 %v1751
      %1762 = vmatprep.subr.bf16.mxu0 0
      %1763 = vmatpush1.bf16.msra.mxu0 %v1750
      %1764 = vmatprep.subr.bf16.mxu0 0
      %1765 = vmatpush1.bf16.msra.mxu0 %v1749
      %1766 = vmatprep.subr.bf16.mxu0 0
      %1767 = vmatpush1.bf16.msra.mxu0 %v1748
      %1768 = vmatprep.subr.bf16.mxu0 0
      %1769 = vmatpush1.bf16.msra.mxu0 %v1747
      %1770 = vmatprep.subr.bf16.mxu0 0
      %1771 = vmatpush1.bf16.msra.mxu0 %v1746
      %1772 = vmatprep.subr.bf16.mxu0 0
      %1773 = vmatpush1.bf16.msra.mxu0 %v1745
      %1774 = vmatprep.subr.bf16.mxu0 0
      %1775 = vmatpush1.bf16.msra.mxu0 %v1744
      %1776 = vmatprep.subr.bf16.mxu0 0
      %1777 = vmatpush2.bf16.msra.mxu0 0
      %1778 = vmatprep.subr.bf16.mxu0 0
      %1779 = vmatpush2.bf16.msra.mxu0 0
      %1780 = vmatprep.subr.bf16.mxu0 0
      %1781 = vmatpush2.bf16.msra.mxu0 0
      %1782 = vmatprep.subr.bf16.mxu0 0
      %1783 = vmatpush2.bf16.msra.mxu0 0
      %1784 = vmatprep.subr.bf16.mxu0 0
      %1785 = vmatpush2.bf16.msra.mxu0 0
      %1786 = vmatprep.subr.bf16.mxu0 0
      %1787 = vmatpush2.bf16.msra.mxu0 0
      %1788 = vmatprep.subr.bf16.mxu0 0
      %1789 = vmatpush2.bf16.msra.mxu0 0
      %1790 = vmatprep.subr.bf16.mxu0 0
      %1791 = vmatpush2.bf16.msra.mxu0 0
      %1792 = vmatprep.mubr.bf16.mxu0 0
      %1793 = vmatmul.mubr.bf16.gmra.mxu0 %v1693
      %v1794 = vpop.f32.mrf.mxu0
      %v1795 = vadd.f32 0.0, %v1794
      %v1796 = vpop.f32.mrf.mxu0
      %v1797 = vpop.f32.mrf.mxu0
      %v1798 = vadd.f32 0.0, %v1797
      %v1799 = vpop.f32.mrf.mxu0
      %1800 = vmatprep.mubr.bf16.mxu0 0
      %1801 = vmatmul.mubr.bf16.gmra.mxu0 %v1694
      %v1802 = vpop.f32.mrf.mxu0
      %v1803 = vadd.f32 0.0, %v1802
      %v1804 = vpop.f32.mrf.mxu0
      %v1805 = vpop.f32.mrf.mxu0
      %v1806 = vpop.f32.mrf.mxu0
      %1807 = vdwg.mxu0
      %v1808 = vadd.f32 %v1687, %v1795
      %v1809 = vadd.f32 %v1688, %v1798
      %v1810 = vadd.f32 %v1689, %v1803
      %v1811 = vld [vmem:[#allocation4 + $0x2] sm:$0xff]
      %v1812 = vld [vmem:[#allocation4 + $0xa] sm:$0xff]
      %v1813 = vld [vmem:[#allocation4 + $0x12] sm:$0x3]
      %v1814 = vpack.c.bf16 %v1812, %v1811
      %v1815 = vpack.c.bf16 %v1813, %v1813
      %s1816 = scalar_lea.vmem %s7, 256
      %v1817 = vld [vmem:[%s1816] sm:$0xf]
      %v1818 = vld [vmem:[%s1816 + $0x4] sm:$0xf]
      %v1819 = vld [vmem:[%s1816 + $0x8] sm:$0xf]
      %v1820 = vld [vmem:[%s1816 + $0xc] sm:$0xf]
      %v1821 = vld [vmem:[%s1816 + $0x10] sm:$0xf]
      %v1822 = vld [vmem:[%s1816 + $0x14] sm:$0xf]
      %v1823 = vld [vmem:[%s1816 + $0x18] sm:$0xf]
      %v1824 = vld [vmem:[%s1816 + $0x1c] sm:$0xf]
      %v1825 = vld [vmem:[%s1816 + $0x20] sm:$0xf]
      %v1826 = vld [vmem:[%s1816 + $0x24] sm:$0xf]
      %v1827 = vld [vmem:[%s1816 + $0x28] sm:$0xf]
      %v1828 = vld [vmem:[%s1816 + $0x2c] sm:$0xf]
      %v1829 = vld [vmem:[%s1816 + $0x30] sm:$0xf]
      %v1830 = vld [vmem:[%s1816 + $0x34] sm:$0xf]
      %v1831 = vld [vmem:[%s1816 + $0x38] sm:$0xf]
      %v1832 = vld [vmem:[%s1816 + $0x3c] sm:$0xf]
      %v1849 = vunpack.c.l.b16 %v1817
      %v1850 = vunpack.c.l.b16 %v1818
      %v1851 = vunpack.c.l.b16 %v1819
      %v1852 = vunpack.c.l.b16 %v1820
      %v1853 = vunpack.c.l.b16 %v1821
      %v1854 = vunpack.c.l.b16 %v1822
      %v1855 = vunpack.c.l.b16 %v1823
      %v1856 = vunpack.c.l.b16 %v1824
      %v1857 = vunpack.c.l.b16 %v1825
      %v1858 = vunpack.c.l.b16 %v1826
      %v1859 = vunpack.c.l.b16 %v1827
      %v1860 = vunpack.c.l.b16 %v1828
      %v1861 = vunpack.c.l.b16 %v1829
      %v1862 = vunpack.c.l.b16 %v1830
      %v1863 = vunpack.c.l.b16 %v1831
      %v1864 = vunpack.c.l.b16 %v1832
      %v1865 = vpack.c.b16 %v1850, %v1849
      %v1866 = vpack.c.b16 %v1852, %v1851
      %v1867 = vpack.c.b16 %v1854, %v1853
      %v1868 = vpack.c.b16 %v1856, %v1855
      %v1869 = vpack.c.b16 %v1858, %v1857
      %v1870 = vpack.c.b16 %v1860, %v1859
      %v1871 = vpack.c.b16 %v1862, %v1861
      %v1872 = vpack.c.b16 %v1864, %v1863
      %1881 = vmatprep.subr.bf16.mxu0 0
      %1882 = vmatpush1.bf16.msra.mxu0 %v1872
      %1883 = vmatprep.subr.bf16.mxu0 0
      %1884 = vmatpush1.bf16.msra.mxu0 %v1871
      %1885 = vmatprep.subr.bf16.mxu0 0
      %1886 = vmatpush1.bf16.msra.mxu0 %v1870
      %1887 = vmatprep.subr.bf16.mxu0 0
      %1888 = vmatpush1.bf16.msra.mxu0 %v1869
      %1889 = vmatprep.subr.bf16.mxu0 0
      %1890 = vmatpush1.bf16.msra.mxu0 %v1868
      %1891 = vmatprep.subr.bf16.mxu0 0
      %1892 = vmatpush1.bf16.msra.mxu0 %v1867
      %1893 = vmatprep.subr.bf16.mxu0 0
      %1894 = vmatpush1.bf16.msra.mxu0 %v1866
      %1895 = vmatprep.subr.bf16.mxu0 0
      %1896 = vmatpush1.bf16.msra.mxu0 %v1865
      %1897 = vmatprep.subr.bf16.mxu0 0
      %1898 = vmatpush2.bf16.msra.mxu0 0
      %1899 = vmatprep.subr.bf16.mxu0 0
      %1900 = vmatpush2.bf16.msra.mxu0 0
      %1901 = vmatprep.subr.bf16.mxu0 0
      %1902 = vmatpush2.bf16.msra.mxu0 0
      %1903 = vmatprep.subr.bf16.mxu0 0
      %1904 = vmatpush2.bf16.msra.mxu0 0
      %1905 = vmatprep.subr.bf16.mxu0 0
      %1906 = vmatpush2.bf16.msra.mxu0 0
      %1907 = vmatprep.subr.bf16.mxu0 0
      %1908 = vmatpush2.bf16.msra.mxu0 0
      %1909 = vmatprep.subr.bf16.mxu0 0
      %1910 = vmatpush2.bf16.msra.mxu0 0
      %1911 = vmatprep.subr.bf16.mxu0 0
      %1912 = vmatpush2.bf16.msra.mxu0 0
      %1913 = vmatprep.mubr.bf16.mxu0 0
      %1914 = vmatmul.mubr.bf16.gmra.mxu0 %v1814
      %v1915 = vpop.f32.mrf.mxu0
      %v1916 = vadd.f32 0.0, %v1915
      %v1917 = vpop.f32.mrf.mxu0
      %v1918 = vpop.f32.mrf.mxu0
      %v1919 = vadd.f32 0.0, %v1918
      %v1920 = vpop.f32.mrf.mxu0
      %1921 = vmatprep.mubr.bf16.mxu0 0
      %1922 = vmatmul.mubr.bf16.gmra.mxu0 %v1815
      %v1923 = vpop.f32.mrf.mxu0
      %v1924 = vadd.f32 0.0, %v1923
      %v1925 = vpop.f32.mrf.mxu0
      %v1926 = vpop.f32.mrf.mxu0
      %v1927 = vpop.f32.mrf.mxu0
      %1928 = vdwg.mxu0
      %v1929 = vadd.f32 %v1808, %v1916
      %v1930 = vadd.f32 %v1809, %v1919
      %v1931 = vadd.f32 %v1810, %v1924
      %v1932 = vld [vmem:[%s449] sm:$0xf]
      %v1933 = vld [vmem:[%s449 + $0x4] sm:$0xf]
      %v1934 = vld [vmem:[%s449 + $0x8] sm:$0x1]
      %v1935 = vld [vmem:[%s8] sm:$0xf]
      %v1936 = vld [vmem:[%s8 + $0x4] sm:$0xf]
      %v1937 = vld [vmem:[%s8 + $0x8] sm:$0xf]
      %v1938 = vld [vmem:[%s8 + $0xc] sm:$0xf]
      %v1939 = vld [vmem:[%s8 + $0x10] sm:$0xf]
      %v1940 = vld [vmem:[%s8 + $0x14] sm:$0xf]
      %v1941 = vld [vmem:[%s8 + $0x18] sm:$0xf]
      %v1942 = vld [vmem:[%s8 + $0x1c] sm:$0xf]
      %v1943 = vld [vmem:[%s454] sm:$0xf]
      %v1944 = vld [vmem:[%s454 + $0x4] sm:$0xf]
      %v1945 = vld [vmem:[%s454 + $0x8] sm:$0x1]
      %s1946 = scalar_lea.vmem %s8, 32
      %v1947 = vld [vmem:[%s1946] sm:$0xf]
      %v1948 = vld [vmem:[%s1946 + $0x4] sm:$0xf]
      %v1949 = vld [vmem:[%s1946 + $0x8] sm:$0xf]
      %v1950 = vld [vmem:[%s1946 + $0xc] sm:$0xf]
      %v1951 = vld [vmem:[%s1946 + $0x10] sm:$0xf]
      %v1952 = vld [vmem:[%s1946 + $0x14] sm:$0xf]
      %v1953 = vld [vmem:[%s1946 + $0x18] sm:$0xf]
      %v1954 = vld [vmem:[%s1946 + $0x1c] sm:$0xf]
      %v1958 = vunpack.c.l.b16 %v1943
      %v1959 = vunpack.c.l.b16 %v1944
      %v1960 = vunpack.c.l.b16 %v1945
      %v1961 = vpack.c.b16 %v1959, %v1958
      %v1962 = vpack.c.b16 %v1960, %v1960
      %v1971 = vunpack.c.l.b16 %v1947
      %v1972 = vunpack.c.l.b16 %v1948
      %v1973 = vunpack.c.l.b16 %v1949
      %v1974 = vunpack.c.l.b16 %v1950
      %v1975 = vunpack.c.l.b16 %v1951
      %v1976 = vunpack.c.l.b16 %v1952
      %v1977 = vunpack.c.l.b16 %v1953
      %v1978 = vunpack.c.l.b16 %v1954
      %v1979 = vpack.c.b16 %v1972, %v1971
      %v1980 = vpack.c.b16 %v1974, %v1973
      %v1981 = vpack.c.b16 %v1976, %v1975
      %v1982 = vpack.c.b16 %v1978, %v1977
      %v1988 = vsel %vm460, %v1961, 0
      %v1991 = vsel %vm460, %v1962, 0
      %1993 = vmatprep.subr.bf16.mxu0 0
      %1994 = vmatpush1.bf16.msra.mxu0 0
      %1995 = vmatprep.subr.bf16.mxu0 0
      %1996 = vmatpush1.bf16.msra.mxu0 0
      %1997 = vmatprep.subr.bf16.mxu0 0
      %1998 = vmatpush1.bf16.msra.mxu0 0
      %1999 = vmatprep.subr.bf16.mxu0 0
      %2000 = vmatpush1.bf16.msra.mxu0 0
      %2001 = vmatprep.subr.bf16.mxu0 0
      %2002 = vmatpush1.bf16.msra.mxu0 %v1982
      %2003 = vmatprep.subr.bf16.mxu0 0
      %2004 = vmatpush1.bf16.msra.mxu0 %v1981
      %2005 = vmatprep.subr.bf16.mxu0 0
      %2006 = vmatpush1.bf16.msra.mxu0 %v1980
      %2007 = vmatprep.subr.bf16.mxu0 0
      %2008 = vmatpush1.bf16.msra.mxu0 %v1979
      %2009 = vmatprep.subr.bf16.mxu0 0
      %2010 = vmatpush2.bf16.msra.mxu0 0
      %2011 = vmatprep.subr.bf16.mxu0 0
      %2012 = vmatpush2.bf16.msra.mxu0 0
      %2013 = vmatprep.subr.bf16.mxu0 0
      %2014 = vmatpush2.bf16.msra.mxu0 0
      %2015 = vmatprep.subr.bf16.mxu0 0
      %2016 = vmatpush2.bf16.msra.mxu0 0
      %2017 = vmatprep.subr.bf16.mxu0 0
      %2018 = vmatpush2.bf16.msra.mxu0 0
      %2019 = vmatprep.subr.bf16.mxu0 0
      %2020 = vmatpush2.bf16.msra.mxu0 0
      %2021 = vmatprep.subr.bf16.mxu0 0
      %2022 = vmatpush2.bf16.msra.mxu0 0
      %2023 = vmatprep.subr.bf16.mxu0 0
      %2024 = vmatpush2.bf16.msra.mxu0 0
      %2025 = vmatprep.mubr.bf16.mxu0 0
      %2026 = vmatmul.mubr.bf16.gmra.mxu0 %v1988
      %v2027 = vpop.f32.mrf.mxu0
      %v2028 = vadd.f32 0.0, %v2027
      %v2029 = vpop.f32.mrf.mxu0
      %v2030 = vpop.f32.mrf.mxu0
      %v2031 = vadd.f32 0.0, %v2030
      %v2032 = vpop.f32.mrf.mxu0
      %2033 = vmatprep.mubr.bf16.mxu0 0
      %2034 = vmatmul.mubr.bf16.gmra.mxu0 %v1991
      %v2035 = vpop.f32.mrf.mxu0
      %v2036 = vadd.f32 0.0, %v2035
      %v2037 = vpop.f32.mrf.mxu0
      %v2038 = vpop.f32.mrf.mxu0
      %v2039 = vpop.f32.mrf.mxu0
      %2040 = vdwg.mxu0
      %v2044 = vunpack.c.l.b16 %v1932
      %v2045 = vunpack.c.l.b16 %v1933
      %v2046 = vunpack.c.l.b16 %v1934
      %v2047 = vpack.c.b16 %v2045, %v2044
      %v2048 = vpack.c.b16 %v2046, %v2046
      %v2057 = vunpack.c.l.b16 %v1935
      %v2058 = vunpack.c.l.b16 %v1936
      %v2059 = vunpack.c.l.b16 %v1937
      %v2060 = vunpack.c.l.b16 %v1938
      %v2061 = vunpack.c.l.b16 %v1939
      %v2062 = vunpack.c.l.b16 %v1940
      %v2063 = vunpack.c.l.b16 %v1941
      %v2064 = vunpack.c.l.b16 %v1942
      %v2065 = vpack.c.b16 %v2058, %v2057
      %v2066 = vpack.c.b16 %v2060, %v2059
      %v2067 = vpack.c.b16 %v2062, %v2061
      %v2068 = vpack.c.b16 %v2064, %v2063
      %v2074 = vsel %vm460, %v2047, 0
      %v2077 = vsel %vm460, %v2048, 0
      %2079 = vmatprep.subr.bf16.mxu0 0
      %2080 = vmatpush1.bf16.msra.mxu0 0
      %2081 = vmatprep.subr.bf16.mxu0 0
      %2082 = vmatpush1.bf16.msra.mxu0 0
      %2083 = vmatprep.subr.bf16.mxu0 0
      %2084 = vmatpush1.bf16.msra.mxu0 0
      %2085 = vmatprep.subr.bf16.mxu0 0
      %2086 = vmatpush1.bf16.msra.mxu0 0
      %2087 = vmatprep.subr.bf16.mxu0 0
      %2088 = vmatpush1.bf16.msra.mxu0 %v2068
      %2089 = vmatprep.subr.bf16.mxu0 0
      %2090 = vmatpush1.bf16.msra.mxu0 %v2067
      %2091 = vmatprep.subr.bf16.mxu0 0
      %2092 = vmatpush1.bf16.msra.mxu0 %v2066
      %2093 = vmatprep.subr.bf16.mxu0 0
      %2094 = vmatpush1.bf16.msra.mxu0 %v2065
      %2095 = vmatprep.subr.bf16.mxu0 0
      %2096 = vmatpush2.bf16.msra.mxu0 0
      %2097 = vmatprep.subr.bf16.mxu0 0
      %2098 = vmatpush2.bf16.msra.mxu0 0
      %2099 = vmatprep.subr.bf16.mxu0 0
      %2100 = vmatpush2.bf16.msra.mxu0 0
      %2101 = vmatprep.subr.bf16.mxu0 0
      %2102 = vmatpush2.bf16.msra.mxu0 0
      %2103 = vmatprep.subr.bf16.mxu0 0
      %2104 = vmatpush2.bf16.msra.mxu0 0
      %2105 = vmatprep.subr.bf16.mxu0 0
      %2106 = vmatpush2.bf16.msra.mxu0 0
      %2107 = vmatprep.subr.bf16.mxu0 0
      %2108 = vmatpush2.bf16.msra.mxu0 0
      %2109 = vmatprep.subr.bf16.mxu0 0
      %2110 = vmatpush2.bf16.msra.mxu0 0
      %2111 = vmatprep.mubr.bf16.mxu0 0
      %2112 = vmatmul.mubr.bf16.gmra.mxu0 %v2074
      %v2113 = vpop.f32.mrf.mxu0
      %v2114 = vadd.f32 %v2028, %v2113
      %v2115 = vpop.f32.mrf.mxu0
      %v2116 = vpop.f32.mrf.mxu0
      %v2117 = vadd.f32 %v2031, %v2116
      %v2118 = vpop.f32.mrf.mxu0
      %2119 = vmatprep.mubr.bf16.mxu0 0
      %2120 = vmatmul.mubr.bf16.gmra.mxu0 %v2077
      %v2121 = vpop.f32.mrf.mxu0
      %v2122 = vadd.f32 %v2036, %v2121
      %v2123 = vpop.f32.mrf.mxu0
      %v2124 = vpop.f32.mrf.mxu0
      %v2125 = vpop.f32.mrf.mxu0
      %2126 = vdwg.mxu0
      %v2127 = vld [vmem:[%s449 + $0x8] sm:$0x3]
      %s2128 = scalar_lea.vmem %s8, 64
      %v2129 = vld [vmem:[%s2128] sm:$0xf]
      %v2130 = vld [vmem:[%s2128 + $0x4] sm:$0xf]
      %v2131 = vld [vmem:[%s2128 + $0x8] sm:$0xf]
      %v2132 = vld [vmem:[%s2128 + $0xc] sm:$0xf]
      %v2133 = vld [vmem:[%s2128 + $0x10] sm:$0xf]
      %v2134 = vld [vmem:[%s2128 + $0x14] sm:$0xf]
      %v2135 = vld [vmem:[%s2128 + $0x18] sm:$0xf]
      %v2136 = vld [vmem:[%s2128 + $0x1c] sm:$0xf]
      %v2138 = vunpack.c.l.b16 %v2127
      %v2139 = vpack.c.b16 %v2138, %v2138
      %vm2140 = vsmask.f32 7424
      %v2141 = vshrl.u32 %v2047, 16
      %v2143 = vshll.u32 %v2047, 16
      %v2145 = vrot.slane %v2143, 1
      %v2146 = vor.u32 %v2141, %v2145
      %v2148 = vshll.u32 %v2139, 16
      %v2150 = vrot.slane %v2148, 1
      %v2151 = vsel %vm2140, %v2146, %v2150
      %v2152 = vshrl.u32 %v2139, 16
      %v2154 = vor.u32 %v2152, %v2150
      %v2163 = vunpack.c.l.b16 %v2129
      %v2164 = vunpack.c.l.b16 %v2130
      %v2165 = vunpack.c.l.b16 %v2131
      %v2166 = vunpack.c.l.b16 %v2132
      %v2167 = vunpack.c.l.b16 %v2133
      %v2168 = vunpack.c.l.b16 %v2134
      %v2169 = vunpack.c.l.b16 %v2135
      %v2170 = vunpack.c.l.b16 %v2136
      %v2171 = vpack.c.b16 %v2164, %v2163
      %v2172 = vpack.c.b16 %v2166, %v2165
      %v2173 = vpack.c.b16 %v2168, %v2167
      %v2174 = vpack.c.b16 %v2170, %v2169
      %v2180 = vsel %vm460, %v2151, 0
      %v2183 = vsel %vm460, %v2154, 0
      %2185 = vmatprep.subr.bf16.mxu0 0
      %2186 = vmatpush1.bf16.msra.mxu0 0
      %2187 = vmatprep.subr.bf16.mxu0 0
      %2188 = vmatpush1.bf16.msra.mxu0 0
      %2189 = vmatprep.subr.bf16.mxu0 0
      %2190 = vmatpush1.bf16.msra.mxu0 0
      %2191 = vmatprep.subr.bf16.mxu0 0
      %2192 = vmatpush1.bf16.msra.mxu0 0
      %2193 = vmatprep.subr.bf16.mxu0 0
      %2194 = vmatpush1.bf16.msra.mxu0 %v2174
      %2195 = vmatprep.subr.bf16.mxu0 0
      %2196 = vmatpush1.bf16.msra.mxu0 %v2173
      %2197 = vmatprep.subr.bf16.mxu0 0
      %2198 = vmatpush1.bf16.msra.mxu0 %v2172
      %2199 = vmatprep.subr.bf16.mxu0 0
      %2200 = vmatpush1.bf16.msra.mxu0 %v2171
      %2201 = vmatprep.subr.bf16.mxu0 0
      %2202 = vmatpush2.bf16.msra.mxu0 0
      %2203 = vmatprep.subr.bf16.mxu0 0
      %2204 = vmatpush2.bf16.msra.mxu0 0
      %2205 = vmatprep.subr.bf16.mxu0 0
      %2206 = vmatpush2.bf16.msra.mxu0 0
      %2207 = vmatprep.subr.bf16.mxu0 0
      %2208 = vmatpush2.bf16.msra.mxu0 0
      %2209 = vmatprep.subr.bf16.mxu0 0
      %2210 = vmatpush2.bf16.msra.mxu0 0
      %2211 = vmatprep.subr.bf16.mxu0 0
      %2212 = vmatpush2.bf16.msra.mxu0 0
      %2213 = vmatprep.subr.bf16.mxu0 0
      %2214 = vmatpush2.bf16.msra.mxu0 0
      %2215 = vmatprep.subr.bf16.mxu0 0
      %2216 = vmatpush2.bf16.msra.mxu0 0
      %2217 = vmatprep.mubr.bf16.mxu0 0
      %2218 = vmatmul.mubr.bf16.gmra.mxu0 %v2180
      %v2219 = vpop.f32.mrf.mxu0
      %v2220 = vadd.f32 0.0, %v2219
      %v2221 = vpop.f32.mrf.mxu0
      %v2222 = vpop.f32.mrf.mxu0
      %v2223 = vadd.f32 0.0, %v2222
      %v2224 = vpop.f32.mrf.mxu0
      %2225 = vmatprep.mubr.bf16.mxu0 0
      %2226 = vmatmul.mubr.bf16.gmra.mxu0 %v2183
      %v2227 = vpop.f32.mrf.mxu0
      %v2228 = vadd.f32 0.0, %v2227
      %v2229 = vpop.f32.mrf.mxu0
      %v2230 = vpop.f32.mrf.mxu0
      %v2231 = vpop.f32.mrf.mxu0
      %2232 = vdwg.mxu0
      %v2233 = vadd.f32 %v2114, %v2220
      %v2234 = vadd.f32 %v2117, %v2223
      %v2235 = vadd.f32 %v2122, %v2228
      %v2236 = vld [vmem:[%s454 + $0x8] sm:$0x3]
      %s2237 = scalar_lea.vmem %s8, 96
      %v2238 = vld [vmem:[%s2237] sm:$0xf]
      %v2239 = vld [vmem:[%s2237 + $0x4] sm:$0xf]
      %v2240 = vld [vmem:[%s2237 + $0x8] sm:$0xf]
      %v2241 = vld [vmem:[%s2237 + $0xc] sm:$0xf]
      %v2242 = vld [vmem:[%s2237 + $0x10] sm:$0xf]
      %v2243 = vld [vmem:[%s2237 + $0x14] sm:$0xf]
      %v2244 = vld [vmem:[%s2237 + $0x18] sm:$0xf]
      %v2245 = vld [vmem:[%s2237 + $0x1c] sm:$0xf]
      %v2247 = vunpack.c.l.b16 %v2236
      %v2248 = vpack.c.b16 %v2247, %v2247
      %v2249 = vshrl.u32 %v1961, 16
      %v2251 = vshll.u32 %v1961, 16
      %v2253 = vrot.slane %v2251, 1
      %v2254 = vor.u32 %v2249, %v2253
      %v2256 = vshll.u32 %v2248, 16
      %v2258 = vrot.slane %v2256, 1
      %v2259 = vsel %vm2140, %v2254, %v2258
      %v2260 = vshrl.u32 %v2248, 16
      %v2262 = vor.u32 %v2260, %v2258
      %v2271 = vunpack.c.l.b16 %v2238
      %v2272 = vunpack.c.l.b16 %v2239
      %v2273 = vunpack.c.l.b16 %v2240
      %v2274 = vunpack.c.l.b16 %v2241
      %v2275 = vunpack.c.l.b16 %v2242
      %v2276 = vunpack.c.l.b16 %v2243
      %v2277 = vunpack.c.l.b16 %v2244
      %v2278 = vunpack.c.l.b16 %v2245
      %v2279 = vpack.c.b16 %v2272, %v2271
      %v2280 = vpack.c.b16 %v2274, %v2273
      %v2281 = vpack.c.b16 %v2276, %v2275
      %v2282 = vpack.c.b16 %v2278, %v2277
      %v2288 = vsel %vm460, %v2259, 0
      %v2291 = vsel %vm460, %v2262, 0
      %2293 = vmatprep.subr.bf16.mxu0 0
      %2294 = vmatpush1.bf16.msra.mxu0 0
      %2295 = vmatprep.subr.bf16.mxu0 0
      %2296 = vmatpush1.bf16.msra.mxu0 0
      %2297 = vmatprep.subr.bf16.mxu0 0
      %2298 = vmatpush1.bf16.msra.mxu0 0
      %2299 = vmatprep.subr.bf16.mxu0 0
      %2300 = vmatpush1.bf16.msra.mxu0 0
      %2301 = vmatprep.subr.bf16.mxu0 0
      %2302 = vmatpush1.bf16.msra.mxu0 %v2282
      %2303 = vmatprep.subr.bf16.mxu0 0
      %2304 = vmatpush1.bf16.msra.mxu0 %v2281
      %2305 = vmatprep.subr.bf16.mxu0 0
      %2306 = vmatpush1.bf16.msra.mxu0 %v2280
      %2307 = vmatprep.subr.bf16.mxu0 0
      %2308 = vmatpush1.bf16.msra.mxu0 %v2279
      %2309 = vmatprep.subr.bf16.mxu0 0
      %2310 = vmatpush2.bf16.msra.mxu0 0
      %2311 = vmatprep.subr.bf16.mxu0 0
      %2312 = vmatpush2.bf16.msra.mxu0 0
      %2313 = vmatprep.subr.bf16.mxu0 0
      %2314 = vmatpush2.bf16.msra.mxu0 0
      %2315 = vmatprep.subr.bf16.mxu0 0
      %2316 = vmatpush2.bf16.msra.mxu0 0
      %2317 = vmatprep.subr.bf16.mxu0 0
      %2318 = vmatpush2.bf16.msra.mxu0 0
      %2319 = vmatprep.subr.bf16.mxu0 0
      %2320 = vmatpush2.bf16.msra.mxu0 0
      %2321 = vmatprep.subr.bf16.mxu0 0
      %2322 = vmatpush2.bf16.msra.mxu0 0
      %2323 = vmatprep.subr.bf16.mxu0 0
      %2324 = vmatpush2.bf16.msra.mxu0 0
      %2325 = vmatprep.mubr.bf16.mxu0 0
      %2326 = vmatmul.mubr.bf16.gmra.mxu0 %v2288
      %v2327 = vpop.f32.mrf.mxu0
      %v2328 = vadd.f32 0.0, %v2327
      %v2329 = vpop.f32.mrf.mxu0
      %v2330 = vpop.f32.mrf.mxu0
      %v2331 = vadd.f32 0.0, %v2330
      %v2332 = vpop.f32.mrf.mxu0
      %2333 = vmatprep.mubr.bf16.mxu0 0
      %2334 = vmatmul.mubr.bf16.gmra.mxu0 %v2291
      %v2335 = vpop.f32.mrf.mxu0
      %v2336 = vadd.f32 0.0, %v2335
      %v2337 = vpop.f32.mrf.mxu0
      %v2338 = vpop.f32.mrf.mxu0
      %v2339 = vpop.f32.mrf.mxu0
      %2340 = vdwg.mxu0
      %v2341 = vadd.f32 %v2233, %v2328
      %v2342 = vadd.f32 %v2234, %v2331
      %v2343 = vadd.f32 %v2235, %v2336
      %v2344 = vld [vmem:[%s449] sm:$0xe]
      %s2345 = scalar_lea.vmem %s8, 128
      %v2346 = vld [vmem:[%s2345] sm:$0xf]
      %v2347 = vld [vmem:[%s2345 + $0x4] sm:$0xf]
      %v2348 = vld [vmem:[%s2345 + $0x8] sm:$0xf]
      %v2349 = vld [vmem:[%s2345 + $0xc] sm:$0xf]
      %v2350 = vld [vmem:[%s2345 + $0x10] sm:$0xf]
      %v2351 = vld [vmem:[%s2345 + $0x14] sm:$0xf]
      %v2352 = vld [vmem:[%s2345 + $0x18] sm:$0xf]
      %v2353 = vld [vmem:[%s2345 + $0x1c] sm:$0xf]
      %v2355 = vunpack.c.l.b16 %v2344
      %v2356 = vpack.c.b16 %v2045, %v2355
      %vm2357 = vcmask 1046528
      %v2358 = vrot.slane %v2356, 1
      %v2359 = vrot.slane %v2139, 1
      %v2360 = vsel %vm2357, %v2358, %v2359
      %v2369 = vunpack.c.l.b16 %v2346
      %v2370 = vunpack.c.l.b16 %v2347
      %v2371 = vunpack.c.l.b16 %v2348
      %v2372 = vunpack.c.l.b16 %v2349
      %v2373 = vunpack.c.l.b16 %v2350
      %v2374 = vunpack.c.l.b16 %v2351
      %v2375 = vunpack.c.l.b16 %v2352
      %v2376 = vunpack.c.l.b16 %v2353
      %v2377 = vpack.c.b16 %v2370, %v2369
      %v2378 = vpack.c.b16 %v2372, %v2371
      %v2379 = vpack.c.b16 %v2374, %v2373
      %v2380 = vpack.c.b16 %v2376, %v2375
      %v2386 = vsel %vm460, %v2360, 0
      %v2389 = vsel %vm460, %v2359, 0
      %2391 = vmatprep.subr.bf16.mxu0 0
      %2392 = vmatpush1.bf16.msra.mxu0 0
      %2393 = vmatprep.subr.bf16.mxu0 0
      %2394 = vmatpush1.bf16.msra.mxu0 0
      %2395 = vmatprep.subr.bf16.mxu0 0
      %2396 = vmatpush1.bf16.msra.mxu0 0
      %2397 = vmatprep.subr.bf16.mxu0 0
      %2398 = vmatpush1.bf16.msra.mxu0 0
      %2399 = vmatprep.subr.bf16.mxu0 0
      %2400 = vmatpush1.bf16.msra.mxu0 %v2380
      %2401 = vmatprep.subr.bf16.mxu0 0
      %2402 = vmatpush1.bf16.msra.mxu0 %v2379
      %2403 = vmatprep.subr.bf16.mxu0 0
      %2404 = vmatpush1.bf16.msra.mxu0 %v2378
      %2405 = vmatprep.subr.bf16.mxu0 0
      %2406 = vmatpush1.bf16.msra.mxu0 %v2377
      %2407 = vmatprep.subr.bf16.mxu0 0
      %2408 = vmatpush2.bf16.msra.mxu0 0
      %2409 = vmatprep.subr.bf16.mxu0 0
      %2410 = vmatpush2.bf16.msra.mxu0 0
      %2411 = vmatprep.subr.bf16.mxu0 0
      %2412 = vmatpush2.bf16.msra.mxu0 0
      %2413 = vmatprep.subr.bf16.mxu0 0
      %2414 = vmatpush2.bf16.msra.mxu0 0
      %2415 = vmatprep.subr.bf16.mxu0 0
      %2416 = vmatpush2.bf16.msra.mxu0 0
      %2417 = vmatprep.subr.bf16.mxu0 0
      %2418 = vmatpush2.bf16.msra.mxu0 0
      %2419 = vmatprep.subr.bf16.mxu0 0
      %2420 = vmatpush2.bf16.msra.mxu0 0
      %2421 = vmatprep.subr.bf16.mxu0 0
      %2422 = vmatpush2.bf16.msra.mxu0 0
      %2423 = vmatprep.mubr.bf16.mxu0 0
      %2424 = vmatmul.mubr.bf16.gmra.mxu0 %v2386
      %v2425 = vpop.f32.mrf.mxu0
      %v2426 = vadd.f32 0.0, %v2425
      %v2427 = vpop.f32.mrf.mxu0
      %v2428 = vpop.f32.mrf.mxu0
      %v2429 = vadd.f32 0.0, %v2428
      %v2430 = vpop.f32.mrf.mxu0
      %2431 = vmatprep.mubr.bf16.mxu0 0
      %2432 = vmatmul.mubr.bf16.gmra.mxu0 %v2389
      %v2433 = vpop.f32.mrf.mxu0
      %v2434 = vadd.f32 0.0, %v2433
      %v2435 = vpop.f32.mrf.mxu0
      %v2436 = vpop.f32.mrf.mxu0
      %v2437 = vpop.f32.mrf.mxu0
      %2438 = vdwg.mxu0
      %v2439 = vadd.f32 %v2341, %v2426
      %v2440 = vadd.f32 %v2342, %v2429
      %v2441 = vadd.f32 %v2343, %v2434
      %v2442 = vadd.f32 %v1929, %v2439
      %v2443 = vld [vmem:[%s11] sm:$0x1]
      %v2445 = vlaneseq
      %v2446 = vshrl.u32 %v2445, 7
      %v2447 = vsub.s32 0, %v2446
      %v2448 = vrot.slane %v2443, %v2447
      %v2450 = vadd.f32 %v2442, %v2448
      %v2451 = vld [vmem:[%s4] sm:$0x1]
      %v2452 = vlaneseq
      %v2453 = vshrl.u32 %v2452, 7
      %v2454 = vsub.s32 0, %v2453
      %v2455 = vrot.slane %v2451, %v2454
      %v2456 = vmul.f32 %v2450, %v2455
      %v2457 = vld [vmem:[%s4 + $0x1] sm:$0x1]
      %v2458 = vlaneseq
      %v2459 = vshrl.u32 %v2458, 7
      %v2460 = vsub.s32 0, %v2459
      %v2461 = vrot.slane %v2457, %v2460
      %v2462 = vadd.f32 %v2456, %v2461
      %v2463 = vmax.f32 %v2462, 0.0
      %2464 = vst.msk [vmem:[#allocation6 + $0x2] sm:$0xff] %vm460, %v2463
      %v2465 = vadd.f32 %v1930, %v2440
      %v2466 = vadd.f32 %v1931, %v2441
      %v2467 = vld [vmem:[%s11] sm:$0x1]
      %v2469 = vlaneseq
      %v2470 = vshrl.u32 %v2469, 7
      %v2471 = vsub.s32 0, %v2470
      %v2472 = vrot.slane %v2467, %v2471
      %v2474 = vadd.f32 %v2465, %v2472
      %v2475 = vadd.f32 %v2466, %v2472
      %v2476 = vld [vmem:[%s4] sm:$0x1]
      %v2477 = vlaneseq
      %v2478 = vshrl.u32 %v2477, 7
      %v2479 = vsub.s32 0, %v2478
      %v2480 = vrot.slane %v2476, %v2479
      %v2481 = vmul.f32 %v2474, %v2480
      %v2482 = vmul.f32 %v2475, %v2480
      %v2483 = vld [vmem:[%s4 + $0x1] sm:$0x1]
      %v2484 = vlaneseq
      %v2485 = vshrl.u32 %v2484, 7
      %v2486 = vsub.s32 0, %v2485
      %v2487 = vrot.slane %v2483, %v2486
      %v2488 = vadd.f32 %v2481, %v2487
      %v2489 = vadd.f32 %v2482, %v2487
      %v2490 = vmax.f32 %v2488, 0.0
      %v2491 = vmax.f32 %v2489, 0.0
      %vm2492 = vcmask 523266
      %2493 = vst.msk [vmem:[#allocation6 + $0xc] sm:$0xfc] %vm2492, %v2490
      %vm2494 = vcmask 517120
      %2495 = vst.msk [vmem:[#allocation6 + $0x14] sm:$0x3] %vm2494, %v2491
      %v2496 = vld [vmem:[#allocation6] sm:$0xff]
      %v2497 = vld [vmem:[#allocation6 + $0x8] sm:$0xff]
      %v2498 = vld [vmem:[#allocation6 + $0x10] sm:$0xf]
      %v2499 = vpack.c.bf16 %v2497, %v2496
      %v2500 = vpack.c.bf16 %v2498, %v2498
      %v2501 = vld [vmem:[%s9] sm:$0xf]
      %v2502 = vld [vmem:[%s9 + $0x4] sm:$0xf]
      %v2503 = vld [vmem:[%s9 + $0x8] sm:$0xf]
      %v2504 = vld [vmem:[%s9 + $0xc] sm:$0xf]
      %v2505 = vld [vmem:[%s9 + $0x10] sm:$0xf]
      %v2506 = vld [vmem:[%s9 + $0x14] sm:$0xf]
      %v2507 = vld [vmem:[%s9 + $0x18] sm:$0xf]
      %v2508 = vld [vmem:[%s9 + $0x1c] sm:$0xf]
      %v2509 = vld [vmem:[#allocation6 + $0x1] sm:$0xff]
      %v2510 = vld [vmem:[#allocation6 + $0x9] sm:$0xff]
      %v2511 = vld [vmem:[#allocation6 + $0x11] sm:$0xf]
      %v2512 = vpack.c.bf16 %v2510, %v2509
      %v2513 = vpack.c.bf16 %v2511, %v2511
      %s2514 = scalar_lea.vmem %s9, 32
      %v2515 = vld [vmem:[%s2514] sm:$0xf]
      %v2516 = vld [vmem:[%s2514 + $0x4] sm:$0xf]
      %v2517 = vld [vmem:[%s2514 + $0x8] sm:$0xf]
      %v2518 = vld [vmem:[%s2514 + $0xc] sm:$0xf]
      %v2519 = vld [vmem:[%s2514 + $0x10] sm:$0xf]
      %v2520 = vld [vmem:[%s2514 + $0x14] sm:$0xf]
      %v2521 = vld [vmem:[%s2514 + $0x18] sm:$0xf]
      %v2522 = vld [vmem:[%s2514 + $0x1c] sm:$0xf]
      %v2531 = vunpack.c.l.b16 %v2515
      %v2532 = vunpack.c.l.b16 %v2516
      %v2533 = vunpack.c.l.b16 %v2517
      %v2534 = vunpack.c.l.b16 %v2518
      %v2535 = vunpack.c.l.b16 %v2519
      %v2536 = vunpack.c.l.b16 %v2520
      %v2537 = vunpack.c.l.b16 %v2521
      %v2538 = vunpack.c.l.b16 %v2522
      %v2539 = vpack.c.b16 %v2532, %v2531
      %v2540 = vpack.c.b16 %v2534, %v2533
      %v2541 = vpack.c.b16 %v2536, %v2535
      %v2542 = vpack.c.b16 %v2538, %v2537
      %v2548 = vsel %vm460, %v2512, 0
      %v2551 = vsel %vm460, %v2513, 0
      %2553 = vmatprep.subr.bf16.mxu0 0
      %2554 = vmatpush1.bf16.msra.mxu0 0
      %2555 = vmatprep.subr.bf16.mxu0 0
      %2556 = vmatpush1.bf16.msra.mxu0 0
      %2557 = vmatprep.subr.bf16.mxu0 0
      %2558 = vmatpush1.bf16.msra.mxu0 0
      %2559 = vmatprep.subr.bf16.mxu0 0
      %2560 = vmatpush1.bf16.msra.mxu0 0
      %2561 = vmatprep.subr.bf16.mxu0 0
      %2562 = vmatpush1.bf16.msra.mxu0 %v2542
      %2563 = vmatprep.subr.bf16.mxu0 0
      %2564 = vmatpush1.bf16.msra.mxu0 %v2541
      %2565 = vmatprep.subr.bf16.mxu0 0
      %2566 = vmatpush1.bf16.msra.mxu0 %v2540
      %2567 = vmatprep.subr.bf16.mxu0 0
      %2568 = vmatpush1.bf16.msra.mxu0 %v2539
      %2569 = vmatprep.subr.bf16.mxu0 0
      %2570 = vmatpush2.bf16.msra.mxu0 0
      %2571 = vmatprep.subr.bf16.mxu0 0
      %2572 = vmatpush2.bf16.msra.mxu0 0
      %2573 = vmatprep.subr.bf16.mxu0 0
      %2574 = vmatpush2.bf16.msra.mxu0 0
      %2575 = vmatprep.subr.bf16.mxu0 0
      %2576 = vmatpush2.bf16.msra.mxu0 0
      %2577 = vmatprep.subr.bf16.mxu0 0
      %2578 = vmatpush2.bf16.msra.mxu0 0
      %2579 = vmatprep.subr.bf16.mxu0 0
      %2580 = vmatpush2.bf16.msra.mxu0 0
      %2581 = vmatprep.subr.bf16.mxu0 0
      %2582 = vmatpush2.bf16.msra.mxu0 0
      %2583 = vmatprep.subr.bf16.mxu0 0
      %2584 = vmatpush2.bf16.msra.mxu0 0
      %2585 = vmatprep.mubr.bf16.mxu0 0
      %2586 = vmatmul.mubr.bf16.gmra.mxu0 %v2548
      %v2587 = vpop.f32.mrf.mxu0
      %v2588 = vadd.f32 0.0, %v2587
      %v2589 = vpop.f32.mrf.mxu0
      %v2590 = vpop.f32.mrf.mxu0
      %v2591 = vadd.f32 0.0, %v2590
      %v2592 = vpop.f32.mrf.mxu0
      %2593 = vmatprep.mubr.bf16.mxu0 0
      %2594 = vmatmul.mubr.bf16.gmra.mxu0 %v2551
      %v2595 = vpop.f32.mrf.mxu0
      %v2596 = vadd.f32 0.0, %v2595
      %v2597 = vpop.f32.mrf.mxu0
      %v2598 = vpop.f32.mrf.mxu0
      %v2599 = vpop.f32.mrf.mxu0
      %2600 = vdwg.mxu0
      %v2609 = vunpack.c.l.b16 %v2501
      %v2610 = vunpack.c.l.b16 %v2502
      %v2611 = vunpack.c.l.b16 %v2503
      %v2612 = vunpack.c.l.b16 %v2504
      %v2613 = vunpack.c.l.b16 %v2505
      %v2614 = vunpack.c.l.b16 %v2506
      %v2615 = vunpack.c.l.b16 %v2507
      %v2616 = vunpack.c.l.b16 %v2508
      %v2617 = vpack.c.b16 %v2610, %v2609
      %v2618 = vpack.c.b16 %v2612, %v2611
      %v2619 = vpack.c.b16 %v2614, %v2613
      %v2620 = vpack.c.b16 %v2616, %v2615
      %v2626 = vsel %vm460, %v2499, 0
      %v2629 = vsel %vm460, %v2500, 0
      %2631 = vmatprep.subr.bf16.mxu0 0
      %2632 = vmatpush1.bf16.msra.mxu0 0
      %2633 = vmatprep.subr.bf16.mxu0 0
      %2634 = vmatpush1.bf16.msra.mxu0 0
      %2635 = vmatprep.subr.bf16.mxu0 0
      %2636 = vmatpush1.bf16.msra.mxu0 0
      %2637 = vmatprep.subr.bf16.mxu0 0
      %2638 = vmatpush1.bf16.msra.mxu0 0
      %2639 = vmatprep.subr.bf16.mxu0 0
      %2640 = vmatpush1.bf16.msra.mxu0 %v2620
      %2641 = vmatprep.subr.bf16.mxu0 0
      %2642 = vmatpush1.bf16.msra.mxu0 %v2619
      %2643 = vmatprep.subr.bf16.mxu0 0
      %2644 = vmatpush1.bf16.msra.mxu0 %v2618
      %2645 = vmatprep.subr.bf16.mxu0 0
      %2646 = vmatpush1.bf16.msra.mxu0 %v2617
      %2647 = vmatprep.subr.bf16.mxu0 0
      %2648 = vmatpush2.bf16.msra.mxu0 0
      %2649 = vmatprep.subr.bf16.mxu0 0
      %2650 = vmatpush2.bf16.msra.mxu0 0
      %2651 = vmatprep.subr.bf16.mxu0 0
      %2652 = vmatpush2.bf16.msra.mxu0 0
      %2653 = vmatprep.subr.bf16.mxu0 0
      %2654 = vmatpush2.bf16.msra.mxu0 0
      %2655 = vmatprep.subr.bf16.mxu0 0
      %2656 = vmatpush2.bf16.msra.mxu0 0
      %2657 = vmatprep.subr.bf16.mxu0 0
      %2658 = vmatpush2.bf16.msra.mxu0 0
      %2659 = vmatprep.subr.bf16.mxu0 0
      %2660 = vmatpush2.bf16.msra.mxu0 0
      %2661 = vmatprep.subr.bf16.mxu0 0
      %2662 = vmatpush2.bf16.msra.mxu0 0
      %2663 = vmatprep.mubr.bf16.mxu0 0
      %2664 = vmatmul.mubr.bf16.gmra.mxu0 %v2626
      %v2665 = vpop.f32.mrf.mxu0
      %v2666 = vadd.f32 %v2588, %v2665
      %v2667 = vpop.f32.mrf.mxu0
      %v2668 = vpop.f32.mrf.mxu0
      %v2669 = vadd.f32 %v2591, %v2668
      %v2670 = vpop.f32.mrf.mxu0
      %2671 = vmatprep.mubr.bf16.mxu0 0
      %2672 = vmatmul.mubr.bf16.gmra.mxu0 %v2629
      %v2673 = vpop.f32.mrf.mxu0
      %v2674 = vadd.f32 %v2596, %v2673
      %v2675 = vpop.f32.mrf.mxu0
      %v2676 = vpop.f32.mrf.mxu0
      %v2677 = vpop.f32.mrf.mxu0
      %2678 = vdwg.mxu0
      %v2679 = vld [vmem:[#allocation6 + $0x2] sm:$0xff]
      %v2680 = vld [vmem:[#allocation6 + $0xa] sm:$0xff]
      %v2681 = vld [vmem:[#allocation6 + $0x12] sm:$0xf]
      %v2682 = vpack.c.bf16 %v2680, %v2679
      %v2683 = vpack.c.bf16 %v2681, %v2681
      %s2684 = scalar_lea.vmem %s9, 64
      %v2685 = vld [vmem:[%s2684] sm:$0xf]
      %v2686 = vld [vmem:[%s2684 + $0x4] sm:$0xf]
      %v2687 = vld [vmem:[%s2684 + $0x8] sm:$0xf]
      %v2688 = vld [vmem:[%s2684 + $0xc] sm:$0xf]
      %v2689 = vld [vmem:[%s2684 + $0x10] sm:$0xf]
      %v2690 = vld [vmem:[%s2684 + $0x14] sm:$0xf]
      %v2691 = vld [vmem:[%s2684 + $0x18] sm:$0xf]
      %v2692 = vld [vmem:[%s2684 + $0x1c] sm:$0xf]
      %v2701 = vunpack.c.l.b16 %v2685
      %v2702 = vunpack.c.l.b16 %v2686
      %v2703 = vunpack.c.l.b16 %v2687
      %v2704 = vunpack.c.l.b16 %v2688
      %v2705 = vunpack.c.l.b16 %v2689
      %v2706 = vunpack.c.l.b16 %v2690
      %v2707 = vunpack.c.l.b16 %v2691
      %v2708 = vunpack.c.l.b16 %v2692
      %v2709 = vpack.c.b16 %v2702, %v2701
      %v2710 = vpack.c.b16 %v2704, %v2703
      %v2711 = vpack.c.b16 %v2706, %v2705
      %v2712 = vpack.c.b16 %v2708, %v2707
      %v2718 = vsel %vm460, %v2682, 0
      %v2721 = vsel %vm460, %v2683, 0
      %2723 = vmatprep.subr.bf16.mxu0 0
      %2724 = vmatpush1.bf16.msra.mxu0 0
      %2725 = vmatprep.subr.bf16.mxu0 0
      %2726 = vmatpush1.bf16.msra.mxu0 0
      %2727 = vmatprep.subr.bf16.mxu0 0
      %2728 = vmatpush1.bf16.msra.mxu0 0
      %2729 = vmatprep.subr.bf16.mxu0 0
      %2730 = vmatpush1.bf16.msra.mxu0 0
      %2731 = vmatprep.subr.bf16.mxu0 0
      %2732 = vmatpush1.bf16.msra.mxu0 %v2712
      %2733 = vmatprep.subr.bf16.mxu0 0
      %2734 = vmatpush1.bf16.msra.mxu0 %v2711
      %2735 = vmatprep.subr.bf16.mxu0 0
      %2736 = vmatpush1.bf16.msra.mxu0 %v2710
      %2737 = vmatprep.subr.bf16.mxu0 0
      %2738 = vmatpush1.bf16.msra.mxu0 %v2709
      %2739 = vmatprep.subr.bf16.mxu0 0
      %2740 = vmatpush2.bf16.msra.mxu0 0
      %2741 = vmatprep.subr.bf16.mxu0 0
      %2742 = vmatpush2.bf16.msra.mxu0 0
      %2743 = vmatprep.subr.bf16.mxu0 0
      %2744 = vmatpush2.bf16.msra.mxu0 0
      %2745 = vmatprep.subr.bf16.mxu0 0
      %2746 = vmatpush2.bf16.msra.mxu0 0
      %2747 = vmatprep.subr.bf16.mxu0 0
      %2748 = vmatpush2.bf16.msra.mxu0 0
      %2749 = vmatprep.subr.bf16.mxu0 0
      %2750 = vmatpush2.bf16.msra.mxu0 0
      %2751 = vmatprep.subr.bf16.mxu0 0
      %2752 = vmatpush2.bf16.msra.mxu0 0
      %2753 = vmatprep.subr.bf16.mxu0 0
      %2754 = vmatpush2.bf16.msra.mxu0 0
      %2755 = vmatprep.mubr.bf16.mxu0 0
      %2756 = vmatmul.mubr.bf16.gmra.mxu0 %v2718
      %v2757 = vpop.f32.mrf.mxu0
      %v2758 = vadd.f32 0.0, %v2757
      %v2759 = vpop.f32.mrf.mxu0
      %v2760 = vpop.f32.mrf.mxu0
      %v2761 = vadd.f32 0.0, %v2760
      %v2762 = vpop.f32.mrf.mxu0
      %2763 = vmatprep.mubr.bf16.mxu0 0
      %2764 = vmatmul.mubr.bf16.gmra.mxu0 %v2721
      %v2765 = vpop.f32.mrf.mxu0
      %v2766 = vadd.f32 0.0, %v2765
      %v2767 = vpop.f32.mrf.mxu0
      %v2768 = vpop.f32.mrf.mxu0
      %v2769 = vpop.f32.mrf.mxu0
      %2770 = vdwg.mxu0
      %v2771 = vadd.f32 %v2666, %v2758
      %v2772 = vadd.f32 %v2669, %v2761
      %v2773 = vadd.f32 %v2674, %v2766
      %v2774 = vld [vmem:[#allocation6 + $0x3] sm:$0xff]
      %v2775 = vld [vmem:[#allocation6 + $0xb] sm:$0xff]
      %v2776 = vld [vmem:[#allocation6 + $0x13] sm:$0xf]
      %v2777 = vpack.c.bf16 %v2775, %v2774
      %v2778 = vpack.c.bf16 %v2776, %v2776
      %s2779 = scalar_lea.vmem %s9, 96
      %v2780 = vld [vmem:[%s2779] sm:$0xf]
      %v2781 = vld [vmem:[%s2779 + $0x4] sm:$0xf]
      %v2782 = vld [vmem:[%s2779 + $0x8] sm:$0xf]
      %v2783 = vld [vmem:[%s2779 + $0xc] sm:$0xf]
      %v2784 = vld [vmem:[%s2779 + $0x10] sm:$0xf]
      %v2785 = vld [vmem:[%s2779 + $0x14] sm:$0xf]
      %v2786 = vld [vmem:[%s2779 + $0x18] sm:$0xf]
      %v2787 = vld [vmem:[%s2779 + $0x1c] sm:$0xf]
      %v2796 = vunpack.c.l.b16 %v2780
      %v2797 = vunpack.c.l.b16 %v2781
      %v2798 = vunpack.c.l.b16 %v2782
      %v2799 = vunpack.c.l.b16 %v2783
      %v2800 = vunpack.c.l.b16 %v2784
      %v2801 = vunpack.c.l.b16 %v2785
      %v2802 = vunpack.c.l.b16 %v2786
      %v2803 = vunpack.c.l.b16 %v2787
      %v2804 = vpack.c.b16 %v2797, %v2796
      %v2805 = vpack.c.b16 %v2799, %v2798
      %v2806 = vpack.c.b16 %v2801, %v2800
      %v2807 = vpack.c.b16 %v2803, %v2802
      %v2813 = vsel %vm460, %v2777, 0
      %v2816 = vsel %vm460, %v2778, 0
      %2818 = vmatprep.subr.bf16.mxu0 0
      %2819 = vmatpush1.bf16.msra.mxu0 0
      %2820 = vmatprep.subr.bf16.mxu0 0
      %2821 = vmatpush1.bf16.msra.mxu0 0
      %2822 = vmatprep.subr.bf16.mxu0 0
      %2823 = vmatpush1.bf16.msra.mxu0 0
      %2824 = vmatprep.subr.bf16.mxu0 0
      %2825 = vmatpush1.bf16.msra.mxu0 0
      %2826 = vmatprep.subr.bf16.mxu0 0
      %2827 = vmatpush1.bf16.msra.mxu0 %v2807
      %2828 = vmatprep.subr.bf16.mxu0 0
      %2829 = vmatpush1.bf16.msra.mxu0 %v2806
      %2830 = vmatprep.subr.bf16.mxu0 0
      %2831 = vmatpush1.bf16.msra.mxu0 %v2805
      %2832 = vmatprep.subr.bf16.mxu0 0
      %2833 = vmatpush1.bf16.msra.mxu0 %v2804
      %2834 = vmatprep.subr.bf16.mxu0 0
      %2835 = vmatpush2.bf16.msra.mxu0 0
      %2836 = vmatprep.subr.bf16.mxu0 0
      %2837 = vmatpush2.bf16.msra.mxu0 0
      %2838 = vmatprep.subr.bf16.mxu0 0
      %2839 = vmatpush2.bf16.msra.mxu0 0
      %2840 = vmatprep.subr.bf16.mxu0 0
      %2841 = vmatpush2.bf16.msra.mxu0 0
      %2842 = vmatprep.subr.bf16.mxu0 0
      %2843 = vmatpush2.bf16.msra.mxu0 0
      %2844 = vmatprep.subr.bf16.mxu0 0
      %2845 = vmatpush2.bf16.msra.mxu0 0
      %2846 = vmatprep.subr.bf16.mxu0 0
      %2847 = vmatpush2.bf16.msra.mxu0 0
      %2848 = vmatprep.subr.bf16.mxu0 0
      %2849 = vmatpush2.bf16.msra.mxu0 0
      %2850 = vmatprep.mubr.bf16.mxu0 0
      %2851 = vmatmul.mubr.bf16.gmra.mxu0 %v2813
      %v2852 = vpop.f32.mrf.mxu0
      %v2853 = vadd.f32 0.0, %v2852
      %v2854 = vpop.f32.mrf.mxu0
      %v2855 = vpop.f32.mrf.mxu0
      %v2856 = vadd.f32 0.0, %v2855
      %v2857 = vpop.f32.mrf.mxu0
      %2858 = vmatprep.mubr.bf16.mxu0 0
      %2859 = vmatmul.mubr.bf16.gmra.mxu0 %v2816
      %v2860 = vpop.f32.mrf.mxu0
      %v2861 = vadd.f32 0.0, %v2860
      %v2862 = vpop.f32.mrf.mxu0
      %v2863 = vpop.f32.mrf.mxu0
      %v2864 = vpop.f32.mrf.mxu0
      %2865 = vdwg.mxu0
      %v2866 = vadd.f32 %v2771, %v2853
      %v2867 = vadd.f32 %v2772, %v2856
      %v2868 = vadd.f32 %v2773, %v2861
      %v2869 = vld [vmem:[#allocation6 + $0x4] sm:$0xff]
      %v2870 = vld [vmem:[#allocation6 + $0xc] sm:$0xff]
      %v2871 = vld [vmem:[#allocation6 + $0x14] sm:$0xf]
      %v2872 = vpack.c.bf16 %v2870, %v2869
      %v2873 = vpack.c.bf16 %v2871, %v2871
      %s2874 = scalar_lea.vmem %s9, 128
      %v2875 = vld [vmem:[%s2874] sm:$0xf]
      %v2876 = vld [vmem:[%s2874 + $0x4] sm:$0xf]
      %v2877 = vld [vmem:[%s2874 + $0x8] sm:$0xf]
      %v2878 = vld [vmem:[%s2874 + $0xc] sm:$0xf]
      %v2879 = vld [vmem:[%s2874 + $0x10] sm:$0xf]
      %v2880 = vld [vmem:[%s2874 + $0x14] sm:$0xf]
      %v2881 = vld [vmem:[%s2874 + $0x18] sm:$0xf]
      %v2882 = vld [vmem:[%s2874 + $0x1c] sm:$0xf]
      %v2891 = vunpack.c.l.b16 %v2875
      %v2892 = vunpack.c.l.b16 %v2876
      %v2893 = vunpack.c.l.b16 %v2877
      %v2894 = vunpack.c.l.b16 %v2878
      %v2895 = vunpack.c.l.b16 %v2879
      %v2896 = vunpack.c.l.b16 %v2880
      %v2897 = vunpack.c.l.b16 %v2881
      %v2898 = vunpack.c.l.b16 %v2882
      %v2899 = vpack.c.b16 %v2892, %v2891
      %v2900 = vpack.c.b16 %v2894, %v2893
      %v2901 = vpack.c.b16 %v2896, %v2895
      %v2902 = vpack.c.b16 %v2898, %v2897
      %v2908 = vsel %vm460, %v2872, 0
      %v2911 = vsel %vm460, %v2873, 0
      %2913 = vmatprep.subr.bf16.mxu0 0
      %2914 = vmatpush1.bf16.msra.mxu0 0
      %2915 = vmatprep.subr.bf16.mxu0 0
      %2916 = vmatpush1.bf16.msra.mxu0 0
      %2917 = vmatprep.subr.bf16.mxu0 0
      %2918 = vmatpush1.bf16.msra.mxu0 0
      %2919 = vmatprep.subr.bf16.mxu0 0
      %2920 = vmatpush1.bf16.msra.mxu0 0
      %2921 = vmatprep.subr.bf16.mxu0 0
      %2922 = vmatpush1.bf16.msra.mxu0 %v2902
      %2923 = vmatprep.subr.bf16.mxu0 0
      %2924 = vmatpush1.bf16.msra.mxu0 %v2901
      %2925 = vmatprep.subr.bf16.mxu0 0
      %2926 = vmatpush1.bf16.msra.mxu0 %v2900
      %2927 = vmatprep.subr.bf16.mxu0 0
      %2928 = vmatpush1.bf16.msra.mxu0 %v2899
      %2929 = vmatprep.subr.bf16.mxu0 0
      %2930 = vmatpush2.bf16.msra.mxu0 0
      %2931 = vmatprep.subr.bf16.mxu0 0
      %2932 = vmatpush2.bf16.msra.mxu0 0
      %2933 = vmatprep.subr.bf16.mxu0 0
      %2934 = vmatpush2.bf16.msra.mxu0 0
      %2935 = vmatprep.subr.bf16.mxu0 0
      %2936 = vmatpush2.bf16.msra.mxu0 0
      %2937 = vmatprep.subr.bf16.mxu0 0
      %2938 = vmatpush2.bf16.msra.mxu0 0
      %2939 = vmatprep.subr.bf16.mxu0 0
      %2940 = vmatpush2.bf16.msra.mxu0 0
      %2941 = vmatprep.subr.bf16.mxu0 0
      %2942 = vmatpush2.bf16.msra.mxu0 0
      %2943 = vmatprep.subr.bf16.mxu0 0
      %2944 = vmatpush2.bf16.msra.mxu0 0
      %2945 = vmatprep.mubr.bf16.mxu0 0
      %2946 = vmatmul.mubr.bf16.gmra.mxu0 %v2908
      %v2947 = vpop.f32.mrf.mxu0
      %v2948 = vadd.f32 0.0, %v2947
      %v2949 = vpop.f32.mrf.mxu0
      %v2950 = vpop.f32.mrf.mxu0
      %v2951 = vadd.f32 0.0, %v2950
      %v2952 = vpop.f32.mrf.mxu0
      %2953 = vmatprep.mubr.bf16.mxu0 0
      %2954 = vmatmul.mubr.bf16.gmra.mxu0 %v2911
      %v2955 = vpop.f32.mrf.mxu0
      %v2956 = vadd.f32 0.0, %v2955
      %v2957 = vpop.f32.mrf.mxu0
      %v2958 = vpop.f32.mrf.mxu0
      %v2959 = vpop.f32.mrf.mxu0
      %2960 = vdwg.mxu0
      %v2961 = vadd.f32 %v2866, %v2948
      %v2962 = vadd.f32 %v2867, %v2951
      %v2963 = vadd.f32 %v2868, %v2956
      %v2964 = vld [vmem:[%s5] sm:$0x1]
      %v2965 = vlaneseq
      %v2966 = vshrl.u32 %v2965, 7
      %v2967 = vsub.s32 0, %v2966
      %v2968 = vrot.slane %v2964, %v2967
      %v2969 = vmul.f32 %v2961, %v2968
      %v2970 = vmul.f32 %v2962, %v2968
      %v2971 = vmul.f32 %v2963, %v2968
      %v2972 = vld [vmem:[%s5 + $0x1] sm:$0x1]
      %v2973 = vlaneseq
      %v2974 = vshrl.u32 %v2973, 7
      %v2975 = vsub.s32 0, %v2974
      %v2976 = vrot.slane %v2972, %v2975
      %v2977 = vadd.f32 %v2969, %v2976
      %v2978 = vadd.f32 %v2970, %v2976
      %v2979 = vadd.f32 %v2971, %v2976
      %v2980 = vmax.f32 %v2977, 0.0
      %v2981 = vmax.f32 %v2978, 0.0
      %v2982 = vmax.f32 %v2979, 0.0
      %2983 = vst.msk [vmem:[#allocation7 + $0x2] sm:$0xff] %vm460, %v2980
      %vm2984 = vcmask 523268
      %2985 = vst.msk [vmem:[#allocation7 + $0xa] sm:$0xf0] %vm2984, %v2981
      %2986 = vst.msk [vmem:[#allocation7 + $0x12] sm:$0xf] %vm463, %v2982
      %v2987 = vld [vmem:[#allocation7] sm:$0xff]
      %v2988 = vld [vmem:[#allocation7 + $0x8] sm:$0xff]
      %v2989 = vld [vmem:[#allocation7 + $0x10] sm:$0xf]
      %v2990 = vpack.c.bf16 %v2988, %v2987
      %v2991 = vpack.c.bf16 %v2989, %v2989
      %v2992 = vld [vmem:[%s10] sm:$0xf]
      %v2993 = vld [vmem:[%s10 + $0x4] sm:$0xf]
      %v2994 = vld [vmem:[%s10 + $0x8] sm:$0xf]
      %v2995 = vld [vmem:[%s10 + $0xc] sm:$0xf]
      %v2996 = vld [vmem:[%s10 + $0x10] sm:$0xf]
      %v2997 = vld [vmem:[%s10 + $0x14] sm:$0xf]
      %v2998 = vld [vmem:[%s10 + $0x18] sm:$0xf]
      %v2999 = vld [vmem:[%s10 + $0x1c] sm:$0xf]
      %v3000 = vld [vmem:[#allocation7 + $0x1] sm:$0xff]
      %v3001 = vld [vmem:[#allocation7 + $0x9] sm:$0xff]
      %v3002 = vld [vmem:[#allocation7 + $0x11] sm:$0xf]
      %v3003 = vpack.c.bf16 %v3001, %v3000
      %v3004 = vpack.c.bf16 %v3002, %v3002
      %s3005 = scalar_lea.vmem %s10, 32
      %v3006 = vld [vmem:[%s3005] sm:$0xf]
      %v3007 = vld [vmem:[%s3005 + $0x4] sm:$0xf]
      %v3008 = vld [vmem:[%s3005 + $0x8] sm:$0xf]
      %v3009 = vld [vmem:[%s3005 + $0xc] sm:$0xf]
      %v3010 = vld [vmem:[%s3005 + $0x10] sm:$0xf]
      %v3011 = vld [vmem:[%s3005 + $0x14] sm:$0xf]
      %v3012 = vld [vmem:[%s3005 + $0x18] sm:$0xf]
      %v3013 = vld [vmem:[%s3005 + $0x1c] sm:$0xf]
      %v3022 = vunpack.c.l.b16 %v3006
      %v3023 = vunpack.c.l.b16 %v3007
      %v3024 = vunpack.c.l.b16 %v3008
      %v3025 = vunpack.c.l.b16 %v3009
      %v3026 = vunpack.c.l.b16 %v3010
      %v3027 = vunpack.c.l.b16 %v3011
      %v3028 = vunpack.c.l.b16 %v3012
      %v3029 = vunpack.c.l.b16 %v3013
      %v3030 = vpack.c.b16 %v3023, %v3022
      %v3031 = vpack.c.b16 %v3025, %v3024
      %v3032 = vpack.c.b16 %v3027, %v3026
      %v3033 = vpack.c.b16 %v3029, %v3028
      %v3039 = vsel %vm460, %v3003, 0
      %v3042 = vsel %vm460, %v3004, 0
      %3044 = vmatprep.subr.bf16.mxu0 0
      %3045 = vmatpush1.bf16.msra.mxu0 0
      %3046 = vmatprep.subr.bf16.mxu0 0
      %3047 = vmatpush1.bf16.msra.mxu0 0
      %3048 = vmatprep.subr.bf16.mxu0 0
      %3049 = vmatpush1.bf16.msra.mxu0 0
      %3050 = vmatprep.subr.bf16.mxu0 0
      %3051 = vmatpush1.bf16.msra.mxu0 0
      %3052 = vmatprep.subr.bf16.mxu0 0
      %3053 = vmatpush1.bf16.msra.mxu0 %v3033
      %3054 = vmatprep.subr.bf16.mxu0 0
      %3055 = vmatpush1.bf16.msra.mxu0 %v3032
      %3056 = vmatprep.subr.bf16.mxu0 0
      %3057 = vmatpush1.bf16.msra.mxu0 %v3031
      %3058 = vmatprep.subr.bf16.mxu0 0
      %3059 = vmatpush1.bf16.msra.mxu0 %v3030
      %3060 = vmatprep.subr.bf16.mxu0 0
      %3061 = vmatpush2.bf16.msra.mxu0 0
      %3062 = vmatprep.subr.bf16.mxu0 0
      %3063 = vmatpush2.bf16.msra.mxu0 0
      %3064 = vmatprep.subr.bf16.mxu0 0
      %3065 = vmatpush2.bf16.msra.mxu0 0
      %3066 = vmatprep.subr.bf16.mxu0 0
      %3067 = vmatpush2.bf16.msra.mxu0 0
      %3068 = vmatprep.subr.bf16.mxu0 0
      %3069 = vmatpush2.bf16.msra.mxu0 0
      %3070 = vmatprep.subr.bf16.mxu0 0
      %3071 = vmatpush2.bf16.msra.mxu0 0
      %3072 = vmatprep.subr.bf16.mxu0 0
      %3073 = vmatpush2.bf16.msra.mxu0 0
      %3074 = vmatprep.subr.bf16.mxu0 0
      %3075 = vmatpush2.bf16.msra.mxu0 0
      %3076 = vmatprep.mubr.bf16.mxu0 0
      %3077 = vmatmul.mubr.bf16.gmra.mxu0 %v3039
      %v3078 = vpop.f32.mrf.mxu0
      %v3079 = vadd.f32 0.0, %v3078
      %v3080 = vpop.f32.mrf.mxu0
      %v3081 = vpop.f32.mrf.mxu0
      %v3082 = vadd.f32 0.0, %v3081
      %v3083 = vpop.f32.mrf.mxu0
      %3084 = vmatprep.mubr.bf16.mxu0 0
      %3085 = vmatmul.mubr.bf16.gmra.mxu0 %v3042
      %v3086 = vpop.f32.mrf.mxu0
      %v3087 = vadd.f32 0.0, %v3086
      %v3088 = vpop.f32.mrf.mxu0
      %v3089 = vpop.f32.mrf.mxu0
      %v3090 = vpop.f32.mrf.mxu0
      %3091 = vdwg.mxu0
      %v3100 = vunpack.c.l.b16 %v2992
      %v3101 = vunpack.c.l.b16 %v2993
      %v3102 = vunpack.c.l.b16 %v2994
      %v3103 = vunpack.c.l.b16 %v2995
      %v3104 = vunpack.c.l.b16 %v2996
      %v3105 = vunpack.c.l.b16 %v2997
      %v3106 = vunpack.c.l.b16 %v2998
      %v3107 = vunpack.c.l.b16 %v2999
      %v3108 = vpack.c.b16 %v3101, %v3100
      %v3109 = vpack.c.b16 %v3103, %v3102
      %v3110 = vpack.c.b16 %v3105, %v3104
      %v3111 = vpack.c.b16 %v3107, %v3106
      %v3117 = vsel %vm460, %v2990, 0
      %v3120 = vsel %vm460, %v2991, 0
      %3122 = vmatprep.subr.bf16.mxu0 0
      %3123 = vmatpush1.bf16.msra.mxu0 0
      %3124 = vmatprep.subr.bf16.mxu0 0
      %3125 = vmatpush1.bf16.msra.mxu0 0
      %3126 = vmatprep.subr.bf16.mxu0 0
      %3127 = vmatpush1.bf16.msra.mxu0 0
      %3128 = vmatprep.subr.bf16.mxu0 0
      %3129 = vmatpush1.bf16.msra.mxu0 0
      %3130 = vmatprep.subr.bf16.mxu0 0
      %3131 = vmatpush1.bf16.msra.mxu0 %v3111
      %3132 = vmatprep.subr.bf16.mxu0 0
      %3133 = vmatpush1.bf16.msra.mxu0 %v3110
      %3134 = vmatprep.subr.bf16.mxu0 0
      %3135 = vmatpush1.bf16.msra.mxu0 %v3109
      %3136 = vmatprep.subr.bf16.mxu0 0
      %3137 = vmatpush1.bf16.msra.mxu0 %v3108
      %3138 = vmatprep.subr.bf16.mxu0 0
      %3139 = vmatpush2.bf16.msra.mxu0 0
      %3140 = vmatprep.subr.bf16.mxu0 0
      %3141 = vmatpush2.bf16.msra.mxu0 0
      %3142 = vmatprep.subr.bf16.mxu0 0
      %3143 = vmatpush2.bf16.msra.mxu0 0
      %3144 = vmatprep.subr.bf16.mxu0 0
      %3145 = vmatpush2.bf16.msra.mxu0 0
      %3146 = vmatprep.subr.bf16.mxu0 0
      %3147 = vmatpush2.bf16.msra.mxu0 0
      %3148 = vmatprep.subr.bf16.mxu0 0
      %3149 = vmatpush2.bf16.msra.mxu0 0
      %3150 = vmatprep.subr.bf16.mxu0 0
      %3151 = vmatpush2.bf16.msra.mxu0 0
      %3152 = vmatprep.subr.bf16.mxu0 0
      %3153 = vmatpush2.bf16.msra.mxu0 0
      %3154 = vmatprep.mubr.bf16.mxu0 0
      %3155 = vmatmul.mubr.bf16.gmra.mxu0 %v3117
      %v3156 = vpop.f32.mrf.mxu0
      %v3157 = vadd.f32 %v3079, %v3156
      %v3158 = vpop.f32.mrf.mxu0
      %v3159 = vpop.f32.mrf.mxu0
      %v3160 = vadd.f32 %v3082, %v3159
      %v3161 = vpop.f32.mrf.mxu0
      %3162 = vmatprep.mubr.bf16.mxu0 0
      %3163 = vmatmul.mubr.bf16.gmra.mxu0 %v3120
      %v3164 = vpop.f32.mrf.mxu0
      %v3165 = vadd.f32 %v3087, %v3164
      %v3166 = vpop.f32.mrf.mxu0
      %v3167 = vpop.f32.mrf.mxu0
      %v3168 = vpop.f32.mrf.mxu0
      %3169 = vdwg.mxu0
      %v3170 = vld [vmem:[#allocation7 + $0x2] sm:$0xff]
      %v3171 = vld [vmem:[#allocation7 + $0xa] sm:$0xff]
      %v3172 = vld [vmem:[#allocation7 + $0x12] sm:$0xf]
      %v3173 = vpack.c.bf16 %v3171, %v3170
      %v3174 = vpack.c.bf16 %v3172, %v3172
      %s3175 = scalar_lea.vmem %s10, 64
      %v3176 = vld [vmem:[%s3175] sm:$0xf]
      %v3177 = vld [vmem:[%s3175 + $0x4] sm:$0xf]
      %v3178 = vld [vmem:[%s3175 + $0x8] sm:$0xf]
      %v3179 = vld [vmem:[%s3175 + $0xc] sm:$0xf]
      %v3180 = vld [vmem:[%s3175 + $0x10] sm:$0xf]
      %v3181 = vld [vmem:[%s3175 + $0x14] sm:$0xf]
      %v3182 = vld [vmem:[%s3175 + $0x18] sm:$0xf]
      %v3183 = vld [vmem:[%s3175 + $0x1c] sm:$0xf]
      %v3192 = vunpack.c.l.b16 %v3176
      %v3193 = vunpack.c.l.b16 %v3177
      %v3194 = vunpack.c.l.b16 %v3178
      %v3195 = vunpack.c.l.b16 %v3179
      %v3196 = vunpack.c.l.b16 %v3180
      %v3197 = vunpack.c.l.b16 %v3181
      %v3198 = vunpack.c.l.b16 %v3182
      %v3199 = vunpack.c.l.b16 %v3183
      %v3200 = vpack.c.b16 %v3193, %v3192
      %v3201 = vpack.c.b16 %v3195, %v3194
      %v3202 = vpack.c.b16 %v3197, %v3196
      %v3203 = vpack.c.b16 %v3199, %v3198
      %v3209 = vsel %vm460, %v3173, 0
      %v3212 = vsel %vm460, %v3174, 0
      %3214 = vmatprep.subr.bf16.mxu0 0
      %3215 = vmatpush1.bf16.msra.mxu0 0
      %3216 = vmatprep.subr.bf16.mxu0 0
      %3217 = vmatpush1.bf16.msra.mxu0 0
      %3218 = vmatprep.subr.bf16.mxu0 0
      %3219 = vmatpush1.bf16.msra.mxu0 0
      %3220 = vmatprep.subr.bf16.mxu0 0
      %3221 = vmatpush1.bf16.msra.mxu0 0
      %3222 = vmatprep.subr.bf16.mxu0 0
      %3223 = vmatpush1.bf16.msra.mxu0 %v3203
      %3224 = vmatprep.subr.bf16.mxu0 0
      %3225 = vmatpush1.bf16.msra.mxu0 %v3202
      %3226 = vmatprep.subr.bf16.mxu0 0
      %3227 = vmatpush1.bf16.msra.mxu0 %v3201
      %3228 = vmatprep.subr.bf16.mxu0 0
      %3229 = vmatpush1.bf16.msra.mxu0 %v3200
      %3230 = vmatprep.subr.bf16.mxu0 0
      %3231 = vmatpush2.bf16.msra.mxu0 0
      %3232 = vmatprep.subr.bf16.mxu0 0
      %3233 = vmatpush2.bf16.msra.mxu0 0
      %3234 = vmatprep.subr.bf16.mxu0 0
      %3235 = vmatpush2.bf16.msra.mxu0 0
      %3236 = vmatprep.subr.bf16.mxu0 0
      %3237 = vmatpush2.bf16.msra.mxu0 0
      %3238 = vmatprep.subr.bf16.mxu0 0
      %3239 = vmatpush2.bf16.msra.mxu0 0
      %3240 = vmatprep.subr.bf16.mxu0 0
      %3241 = vmatpush2.bf16.msra.mxu0 0
      %3242 = vmatprep.subr.bf16.mxu0 0
      %3243 = vmatpush2.bf16.msra.mxu0 0
      %3244 = vmatprep.subr.bf16.mxu0 0
      %3245 = vmatpush2.bf16.msra.mxu0 0
      %3246 = vmatprep.mubr.bf16.mxu0 0
      %3247 = vmatmul.mubr.bf16.gmra.mxu0 %v3209
      %v3248 = vpop.f32.mrf.mxu0
      %v3249 = vadd.f32 0.0, %v3248
      %v3250 = vpop.f32.mrf.mxu0
      %v3251 = vpop.f32.mrf.mxu0
      %v3252 = vadd.f32 0.0, %v3251
      %v3253 = vpop.f32.mrf.mxu0
      %3254 = vmatprep.mubr.bf16.mxu0 0
      %3255 = vmatmul.mubr.bf16.gmra.mxu0 %v3212
      %v3256 = vpop.f32.mrf.mxu0
      %v3257 = vadd.f32 0.0, %v3256
      %v3258 = vpop.f32.mrf.mxu0
      %v3259 = vpop.f32.mrf.mxu0
      %v3260 = vpop.f32.mrf.mxu0
      %3261 = vdwg.mxu0
      %v3262 = vadd.f32 %v3157, %v3249
      %v3263 = vadd.f32 %v3160, %v3252
      %v3264 = vadd.f32 %v3165, %v3257
      %v3265 = vld [vmem:[#allocation7 + $0x3] sm:$0xff]
      %v3266 = vld [vmem:[#allocation7 + $0xb] sm:$0xff]
      %v3267 = vld [vmem:[#allocation7 + $0x13] sm:$0xf]
      %v3268 = vpack.c.bf16 %v3266, %v3265
      %v3269 = vpack.c.bf16 %v3267, %v3267
      %s3270 = scalar_lea.vmem %s10, 96
      %v3271 = vld [vmem:[%s3270] sm:$0xf]
      %v3272 = vld [vmem:[%s3270 + $0x4] sm:$0xf]
      %v3273 = vld [vmem:[%s3270 + $0x8] sm:$0xf]
      %v3274 = vld [vmem:[%s3270 + $0xc] sm:$0xf]
      %v3275 = vld [vmem:[%s3270 + $0x10] sm:$0xf]
      %v3276 = vld [vmem:[%s3270 + $0x14] sm:$0xf]
      %v3277 = vld [vmem:[%s3270 + $0x18] sm:$0xf]
      %v3278 = vld [vmem:[%s3270 + $0x1c] sm:$0xf]
      %v3287 = vunpack.c.l.b16 %v3271
      %v3288 = vunpack.c.l.b16 %v3272
      %v3289 = vunpack.c.l.b16 %v3273
      %v3290 = vunpack.c.l.b16 %v3274
      %v3291 = vunpack.c.l.b16 %v3275
      %v3292 = vunpack.c.l.b16 %v3276
      %v3293 = vunpack.c.l.b16 %v3277
      %v3294 = vunpack.c.l.b16 %v3278
      %v3295 = vpack.c.b16 %v3288, %v3287
      %v3296 = vpack.c.b16 %v3290, %v3289
      %v3297 = vpack.c.b16 %v3292, %v3291
      %v3298 = vpack.c.b16 %v3294, %v3293
      %v3304 = vsel %vm460, %v3268, 0
      %v3307 = vsel %vm460, %v3269, 0
      %3309 = vmatprep.subr.bf16.mxu0 0
      %3310 = vmatpush1.bf16.msra.mxu0 0
      %3311 = vmatprep.subr.bf16.mxu0 0
      %3312 = vmatpush1.bf16.msra.mxu0 0
      %3313 = vmatprep.subr.bf16.mxu0 0
      %3314 = vmatpush1.bf16.msra.mxu0 0
      %3315 = vmatprep.subr.bf16.mxu0 0
      %3316 = vmatpush1.bf16.msra.mxu0 0
      %3317 = vmatprep.subr.bf16.mxu0 0
      %3318 = vmatpush1.bf16.msra.mxu0 %v3298
      %3319 = vmatprep.subr.bf16.mxu0 0
      %3320 = vmatpush1.bf16.msra.mxu0 %v3297
      %3321 = vmatprep.subr.bf16.mxu0 0
      %3322 = vmatpush1.bf16.msra.mxu0 %v3296
      %3323 = vmatprep.subr.bf16.mxu0 0
      %3324 = vmatpush1.bf16.msra.mxu0 %v3295
      %3325 = vmatprep.subr.bf16.mxu0 0
      %3326 = vmatpush2.bf16.msra.mxu0 0
      %3327 = vmatprep.subr.bf16.mxu0 0
      %3328 = vmatpush2.bf16.msra.mxu0 0
      %3329 = vmatprep.subr.bf16.mxu0 0
      %3330 = vmatpush2.bf16.msra.mxu0 0
      %3331 = vmatprep.subr.bf16.mxu0 0
      %3332 = vmatpush2.bf16.msra.mxu0 0
      %3333 = vmatprep.subr.bf16.mxu0 0
      %3334 = vmatpush2.bf16.msra.mxu0 0
      %3335 = vmatprep.subr.bf16.mxu0 0
      %3336 = vmatpush2.bf16.msra.mxu0 0
      %3337 = vmatprep.subr.bf16.mxu0 0
      %3338 = vmatpush2.bf16.msra.mxu0 0
      %3339 = vmatprep.subr.bf16.mxu0 0
      %3340 = vmatpush2.bf16.msra.mxu0 0
      %3341 = vmatprep.mubr.bf16.mxu0 0
      %3342 = vmatmul.mubr.bf16.gmra.mxu0 %v3304
      %v3343 = vpop.f32.mrf.mxu0
      %v3344 = vadd.f32 0.0, %v3343
      %v3345 = vpop.f32.mrf.mxu0
      %v3346 = vpop.f32.mrf.mxu0
      %v3347 = vadd.f32 0.0, %v3346
      %v3348 = vpop.f32.mrf.mxu0
      %3349 = vmatprep.mubr.bf16.mxu0 0
      %3350 = vmatmul.mubr.bf16.gmra.mxu0 %v3307
      %v3351 = vpop.f32.mrf.mxu0
      %v3352 = vadd.f32 0.0, %v3351
      %v3353 = vpop.f32.mrf.mxu0
      %v3354 = vpop.f32.mrf.mxu0
      %v3355 = vpop.f32.mrf.mxu0
      %3356 = vdwg.mxu0
      %v3357 = vadd.f32 %v3262, %v3344
      %v3358 = vadd.f32 %v3263, %v3347
      %v3359 = vadd.f32 %v3264, %v3352
      %v3360 = vld [vmem:[#allocation7 + $0x4] sm:$0xff]
      %v3361 = vld [vmem:[#allocation7 + $0xc] sm:$0xff]
      %v3362 = vld [vmem:[#allocation7 + $0x14] sm:$0xf]
      %v3363 = vpack.c.bf16 %v3361, %v3360
      %v3364 = vpack.c.bf16 %v3362, %v3362
      %s3365 = scalar_lea.vmem %s10, 128
      %v3366 = vld [vmem:[%s3365] sm:$0xf]
      %v3367 = vld [vmem:[%s3365 + $0x4] sm:$0xf]
      %v3368 = vld [vmem:[%s3365 + $0x8] sm:$0xf]
      %v3369 = vld [vmem:[%s3365 + $0xc] sm:$0xf]
      %v3370 = vld [vmem:[%s3365 + $0x10] sm:$0xf]
      %v3371 = vld [vmem:[%s3365 + $0x14] sm:$0xf]
      %v3372 = vld [vmem:[%s3365 + $0x18] sm:$0xf]
      %v3373 = vld [vmem:[%s3365 + $0x1c] sm:$0xf]
      %v3382 = vunpack.c.l.b16 %v3366
      %v3383 = vunpack.c.l.b16 %v3367
      %v3384 = vunpack.c.l.b16 %v3368
      %v3385 = vunpack.c.l.b16 %v3369
      %v3386 = vunpack.c.l.b16 %v3370
      %v3387 = vunpack.c.l.b16 %v3371
      %v3388 = vunpack.c.l.b16 %v3372
      %v3389 = vunpack.c.l.b16 %v3373
      %v3390 = vpack.c.b16 %v3383, %v3382
      %v3391 = vpack.c.b16 %v3385, %v3384
      %v3392 = vpack.c.b16 %v3387, %v3386
      %v3393 = vpack.c.b16 %v3389, %v3388
      %v3399 = vsel %vm460, %v3363, 0
      %v3402 = vsel %vm460, %v3364, 0
      %3404 = vmatprep.subr.bf16.mxu0 0
      %3405 = vmatpush1.bf16.msra.mxu0 0
      %3406 = vmatprep.subr.bf16.mxu0 0
      %3407 = vmatpush1.bf16.msra.mxu0 0
      %3408 = vmatprep.subr.bf16.mxu0 0
      %3409 = vmatpush1.bf16.msra.mxu0 0
      %3410 = vmatprep.subr.bf16.mxu0 0
      %3411 = vmatpush1.bf16.msra.mxu0 0
      %3412 = vmatprep.subr.bf16.mxu0 0
      %3413 = vmatpush1.bf16.msra.mxu0 %v3393
      %3414 = vmatprep.subr.bf16.mxu0 0
      %3415 = vmatpush1.bf16.msra.mxu0 %v3392
      %3416 = vmatprep.subr.bf16.mxu0 0
      %3417 = vmatpush1.bf16.msra.mxu0 %v3391
      %3418 = vmatprep.subr.bf16.mxu0 0
      %3419 = vmatpush1.bf16.msra.mxu0 %v3390
      %3420 = vmatprep.subr.bf16.mxu0 0
      %3421 = vmatpush2.bf16.msra.mxu0 0
      %3422 = vmatprep.subr.bf16.mxu0 0
      %3423 = vmatpush2.bf16.msra.mxu0 0
      %3424 = vmatprep.subr.bf16.mxu0 0
      %3425 = vmatpush2.bf16.msra.mxu0 0
      %3426 = vmatprep.subr.bf16.mxu0 0
      %3427 = vmatpush2.bf16.msra.mxu0 0
      %3428 = vmatprep.subr.bf16.mxu0 0
      %3429 = vmatpush2.bf16.msra.mxu0 0
      %3430 = vmatprep.subr.bf16.mxu0 0
      %3431 = vmatpush2.bf16.msra.mxu0 0
      %3432 = vmatprep.subr.bf16.mxu0 0
      %3433 = vmatpush2.bf16.msra.mxu0 0
      %3434 = vmatprep.subr.bf16.mxu0 0
      %3435 = vmatpush2.bf16.msra.mxu0 0
      %3436 = vmatprep.mubr.bf16.mxu0 0
      %3437 = vmatmul.mubr.bf16.gmra.mxu0 %v3399
      %v3438 = vpop.f32.mrf.mxu0
      %v3439 = vadd.f32 0.0, %v3438
      %v3440 = vpop.f32.mrf.mxu0
      %v3441 = vpop.f32.mrf.mxu0
      %v3442 = vadd.f32 0.0, %v3441
      %v3443 = vpop.f32.mrf.mxu0
      %3444 = vmatprep.mubr.bf16.mxu0 0
      %3445 = vmatmul.mubr.bf16.gmra.mxu0 %v3402
      %v3446 = vpop.f32.mrf.mxu0
      %v3447 = vadd.f32 0.0, %v3446
      %v3448 = vpop.f32.mrf.mxu0
      %v3449 = vpop.f32.mrf.mxu0
      %v3450 = vpop.f32.mrf.mxu0
      %3451 = vdwg.mxu0
      %v3452 = vadd.f32 %v3357, %v3439
      %v3453 = vadd.f32 %v3358, %v3442
      %v3454 = vadd.f32 %v3359, %v3447
      %v3455 = vadd.f32 %v2450, %v3452
      %v3456 = vld [vmem:[%s12] sm:$0x1]
      %v3458 = vlaneseq
      %v3459 = vshrl.u32 %v3458, 7
      %v3460 = vsub.s32 0, %v3459
      %v3461 = vrot.slane %v3456, %v3460
      %v3463 = vadd.f32 %v3455, %v3461
      %vm3466 = vcmask 1045504
      %v3467 = vrot.slane %v3453, 2
      %v3468 = vrot.slane %v3454, 2
      %v3469 = vsel %vm3466, %v3467, %v3468
      %v3472 = vadd.f32 %v2474, %v3469
      %v3473 = vadd.f32 %v2475, %v3468
      %v3474 = vadd.f32 %v3472, %v3461
      %v3475 = vadd.f32 %v3473, %v3461
      %v3478 = vrot.slane %v3474, 2
      %v3479 = vrot.slane %v3475, 2
      %v3480 = vsel %vm3466, %v3478, %v3479
      %3481 = vrot.lane.b32.xlu0 %v3480, 64
      %v3482 = vpop.permute.xlu0 %3481
      %v3484 = vsel %vm460, %v3463, %v3482
      %3485 = vst [vmem:[%s458] sm:$0xff] %v3484
      %p3486 = scmp.lt.s32.totalorder %s24, 1
      %s3487 = scalar_select %p3486, %s24, 1
      %s3488 = smul.addr %s3487, 8
      %s3489 = scalar_lea.vmem %s13, %s3488
      // Predicated region
      $region73: #{down_forward.1} parent=71 // pred_check
        %p3490 = pneg %p325
      $region74: #{down_forward.1} parent=71 // pred_check_branch
        %3492 = sbr.rel (%p3490) target = $region76
      $region75: #{down_forward.1} parent=71 // pred_region
        _
      $region76: #{down_forward.1} parent=71 // pred_fallthru
        _
    $region72: #{down_forward.1} parent=5 // pred_fallthru
      _
    %p3493 = scmp.le.s32.totalorder 2, %s19
    // Predicated region
    $region77: #{down_forward.1} parent=5 // pred_check
      %p3494 = pneg %p3493
    $region78: #{down_forward.1} parent=5 // pred_check_branch
      %3496 = sbr.rel (%p3494) target = $region80
    $region79: #{down_forward.1} parent=5 // pred_region
      %s3497 = ssub.s32 %s19, 2
      // Predicated region
      $region81: #{down_forward.1} parent=79 // pred_check
        %p3498 = pneg %p331
      $region82: #{down_forward.1} parent=79 // pred_check_branch
        %3500 = sbr.rel (%p3498) target = $region84
      $region83: #{down_forward.1} parent=79 // pred_region
        %p3501 = scmp.lt.s32.totalorder %s25, 1
        %s3502 = scalar_select %p3501, %s25, 1
        %s3503 = smul.addr %s3502, 8
        %s3504 = scalar_lea.vmem %s13, %s3503
      $region84: #{down_forward.1} parent=79 // pred_fallthru
        _
    $region80: #{down_forward.1} parent=5 // pred_fallthru
      _
  $region6: #{down_forward.1} parent=0 // loop_footer
    %s23 = sadd.s32 1, %s19
  $region7: #{down_forward.1} parent=0 // loop_footer_branch
    %18 = sbr.rel target = $region3
  $region8: #{down_forward.1} parent=0 // loop_exit
    _

// kernel: down_forward.1
$region0: #{down_forward.1}
  #allocation0 [shape = 'u32[]', space=smem, size = 0x4, offset = 0x4, fixed_abs, tag = 'smem constant byte address 0x4 - core index']
  #allocation1 [shape = 'u32[144,128]{1,0:T(1,128)}', space=vmem, size = 0x12000, scoped, tag = 'internal scratch']
  #allocation2 [shape = 'f32[20,64]{1,0:T(8,128)}', space=vmem, size = 0x3000, scoped, tag = 'scratch operand']
  #allocation3 [shape = 'f32[20,64]{1,0:T(8,128)}', space=vmem, size = 0x3000, scoped, tag = 'scratch operand']
  #allocation4 [shape = 'f32[20,128]{1,0:T(8,128)}', space=vmem, size = 0x3000, scoped, tag = 'scratch operand']
  #allocation5 [shape = 'f32[20,128]{1,0:T(8,128)}', space=vmem, size = 0x3000, scoped, tag = 'scratch operand']
  #allocation6 [shape = 'f32[24,64]{1,0:T(8,128)}', space=vmem, size = 0x3000, scoped, tag = 'scratch operand']
  #allocation7 [shape = 'f32[24,64]{1,0:T(8,128)}', space=vmem, size = 0x3000, scoped, tag = 'scratch operand']
  %s0 = inlined_call_operand.vmem [shape: bf16[2,20,64], index: 0, kind: input, shape index: {}]
  %s1 = inlined_call_operand.vmem [shape: bf16[2,20,64], index: 1, kind: input, shape index: {}]
  %s2 = inlined_call_operand.vmem [shape: f32[2,64], index: 2, kind: input, shape index: {}]
  %s3 = inlined_call_operand.vmem [shape: f32[2,128], index: 3, kind: input, shape index: {}]
  %s4 = inlined_call_operand.vmem [shape: f32[2,64], index: 4, kind: input, shape index: {}]
  %s5 = inlined_call_operand.vmem [shape: f32[2,64], index: 5, kind: input, shape index: {}]
  %s6 = inlined_call_operand.vmem [shape: bf16[5,64,128], index: 6, kind: input, shape index: {}]
  %s7 = inlined_call_operand.vmem [shape: bf16[5,128,64], index: 7, kind: input, shape index: {}]
  %s8 = inlined_call_operand.vmem [shape: bf16[5,64,64], index: 8, kind: input, shape index: {}]
  %s9 = inlined_call_operand.vmem [shape: bf16[5,64,64], index: 9, kind: input, shape index: {}]
  %s10 = inlined_call_operand.vmem [shape: bf16[5,64,64], index: 10, kind: input, shape index: {}]
  %s11 = inlined_call_operand.vmem [shape: f32[1,64], index: 11, kind: input, shape index: {}]
  %s12 = inlined_call_operand.vmem [shape: f32[1,64], index: 12, kind: input, shape index: {}]
  %s13 = inlined_call_operand.vmem [shape: f32[2,8,128], index: 13, kind: output, shape index: {}]
  %s14 = sld [smem:[#allocation0]]
  $region85: #{down_forward.1} parent=0
    _
  %s16 = ssub.s32 1, %s14
  %s17 = scalar_select 0, %s16, %s14
  loop: start=0, step=1, limit=4
  $region2: #{down_forward.1} parent=0 // loop_pre_header
    _
  $region3: #{down_forward.1} parent=0 // loop_header
    %s19 = sphi 0, %s23
    %p20 = scmp.ge.s32.totalorder %s19, 4
    %s29 = sphi 0, %s31
    %s32 = sphi 0, %s29
    %s33 = sphi 0, %s32
    %s49 = sphi 0, %s33
    %s55 = sphi 0, %s57
    %s58 = sphi 0, %s55
    %s59 = sphi 0, %s58
    %s75 = sphi 0, %s59
    %s79 = sphi 0, %s79
    %s81 = sphi 0, %s79
    %s82 = sphi 0, %s81
    %s96 = sphi 0, %s82
    %s100 = sphi 0, %s100
    %s102 = sphi 0, %s100
    %s103 = sphi 0, %s102
    %s117 = sphi 0, %s103
    %s121 = sphi 0, %s121
    %s123 = sphi 0, %s121
    %s124 = sphi 0, %s123
    %s138 = sphi 0, %s124
    %s142 = sphi 0, %s142
    %s144 = sphi 0, %s142
    %s145 = sphi 0, %s144
    %s159 = sphi 0, %s145
    %s163 = sphi 0, %s163
    %s165 = sphi 0, %s163
    %s166 = sphi 0, %s165
    %s180 = sphi 0, %s166
    %s184 = sphi 0, %s184
    %s186 = sphi 0, %s184
    %s187 = sphi 0, %s186
    %s201 = sphi 0, %s187
    %s205 = sphi 0, %s205
    %s207 = sphi 0, %s205
    %s208 = sphi 0, %s207
    %s222 = sphi 0, %s208
    %s226 = sphi 0, %s226
    %s228 = sphi 0, %s226
    %s229 = sphi 0, %s228
    %s243 = sphi 0, %s229
    %s247 = sphi 0, %s247
    %s249 = sphi 0, %s247
    %s250 = sphi 0, %s249
    %s264 = sphi 0, %s250
    %s268 = sphi 0, %s268
    %s270 = sphi 0, %s268
    %s271 = sphi 0, %s270
    %s285 = sphi 0, %s271
    %s289 = sphi 0, %s289
    %s291 = sphi 0, %s289
    %s292 = sphi 0, %s291
    %s306 = sphi 0, %s292
    %s312 = sphi 0, %s314
    %s315 = sphi 0, %s312
    %s316 = sphi 0, %s315
    %s332 = sphi 0, %s316
  $region4: #{down_forward.1} parent=0 // loop_header_branch
    %22 = sbr.rel (%p20) target = $region8
  $region5: #{down_forward.1} parent=0 // loop_body
    %s24 = ssub.s32 %s19, 1
    %s25 = ssub.s32 %s19, 2
    %s26 = sadd.s32 %s19, 1
    %s27 = ssub.s32 %s19, %s26
    %p28 = scmp.eq.s32.totalorder %s27, 0
    %s30 = sadd.s32 %s29, 1
    %s31 = scalar_select %p28, %s29, %s30
    %p34 = pneg %p28
    %p35 = scmp.eq.s32.totalorder %s19, 1
    %p36 = por %p34, %p35
    %p37 = scmp.ne.s32.totalorder %s29, %s32
    %p38 = scmp.eq.s32.totalorder %s19, 0
    %p39 = por %p37, %p38
    %p40 = scmp.ne.s32.totalorder %s29, %s32
    %p41 = scmp.eq.s32.totalorder %s24, 1
    %p42 = por %p40, %p41
    %p43 = scmp.ne.s32.totalorder %s32, %s33
    %p44 = scmp.eq.s32.totalorder %s24, 0
    %p45 = por %p43, %p44
    %p46 = scmp.ne.s32.totalorder %s32, %s33
    %p47 = scmp.eq.s32.totalorder %s25, 1
    %p48 = por %p46, %p47
    %p50 = scmp.ne.s32.totalorder %s33, %s49
    %p51 = scmp.eq.s32.totalorder %s25, 0
    %p52 = por %p50, %p51
    %s53 = ssub.s32 %s19, %s26
    %p54 = scmp.eq.s32.totalorder %s53, 0
    %s56 = sadd.s32 %s55, 1
    %s57 = scalar_select %p54, %s55, %s56
    %p60 = pneg %p54
    %p61 = scmp.eq.s32.totalorder %s19, 1
    %p62 = por %p60, %p61
    %p63 = scmp.ne.s32.totalorder %s55, %s58
    %p64 = scmp.eq.s32.totalorder %s19, 0
    %p65 = por %p63, %p64
    %p66 = scmp.ne.s32.totalorder %s55, %s58
    %p67 = scmp.eq.s32.totalorder %s24, 1
    %p68 = por %p66, %p67
    %p69 = scmp.ne.s32.totalorder %s58, %s59
    %p70 = scmp.eq.s32.totalorder %s24, 0
    %p71 = por %p69, %p70
    %p72 = scmp.ne.s32.totalorder %s58, %s59
    %p73 = scmp.eq.s32.totalorder %s25, 1
    %p74 = por %p72, %p73
    %p76 = scmp.ne.s32.totalorder %s59, %s75
    %p77 = scmp.eq.s32.totalorder %s25, 0
    %p78 = por %p76, %p77
    %s80 = sadd.s32 %s79, 1
    %p83 = scmp.eq.s32.totalorder %s19, 1
    %p84 = scmp.ne.s32.totalorder %s79, %s81
    %p85 = scmp.eq.s32.totalorder %s19, 0
    %p86 = por %p84, %p85
    %p87 = scmp.ne.s32.totalorder %s79, %s81
    %p88 = scmp.eq.s32.totalorder %s24, 1
    %p89 = por %p87, %p88
    %p90 = scmp.ne.s32.totalorder %s81, %s82
    %p91 = scmp.eq.s32.totalorder %s24, 0
    %p92 = por %p90, %p91
    %p93 = scmp.ne.s32.totalorder %s81, %s82
    %p94 = scmp.eq.s32.totalorder %s25, 1
    %p95 = por %p93, %p94
    %p97 = scmp.ne.s32.totalorder %s82, %s96
    %p98 = scmp.eq.s32.totalorder %s25, 0
    %p99 = por %p97, %p98
    %s101 = sadd.s32 %s100, 1
    %p104 = scmp.eq.s32.totalorder %s19, 1
    %p105 = scmp.ne.s32.totalorder %s100, %s102
    %p106 = scmp.eq.s32.totalorder %s19, 0
    %p107 = por %p105, %p106
    %p108 = scmp.ne.s32.totalorder %s100, %s102
    %p109 = scmp.eq.s32.totalorder %s24, 1
    %p110 = por %p108, %p109
    %p111 = scmp.ne.s32.totalorder %s102, %s103
    %p112 = scmp.eq.s32.totalorder %s24, 0
    %p113 = por %p111, %p112
    %p114 = scmp.ne.s32.totalorder %s102, %s103
    %p115 = scmp.eq.s32.totalorder %s25, 1
    %p116 = por %p114, %p115
    %p118 = scmp.ne.s32.totalorder %s103, %s117
    %p119 = scmp.eq.s32.totalorder %s25, 0
    %p120 = por %p118, %p119
    %s122 = sadd.s32 %s121, 1
    %p125 = scmp.eq.s32.totalorder %s19, 1
    %p126 = scmp.ne.s32.totalorder %s121, %s123
    %p127 = scmp.eq.s32.totalorder %s19, 0
    %p128 = por %p126, %p127
    %p129 = scmp.ne.s32.totalorder %s121, %s123
    %p130 = scmp.eq.s32.totalorder %s24, 1
    %p131 = por %p129, %p130
    %p132 = scmp.ne.s32.totalorder %s123, %s124
    %p133 = scmp.eq.s32.totalorder %s24, 0
    %p134 = por %p132, %p133
    %p135 = scmp.ne.s32.totalorder %s123, %s124
    %p136 = scmp.eq.s32.totalorder %s25, 1
    %p137 = por %p135, %p136
    %p139 = scmp.ne.s32.totalorder %s124, %s138
    %p140 = scmp.eq.s32.totalorder %s25, 0
    %p141 = por %p139, %p140
    %s143 = sadd.s32 %s142, 1
    %p146 = scmp.eq.s32.totalorder %s19, 1
    %p147 = scmp.ne.s32.totalorder %s142, %s144
    %p148 = scmp.eq.s32.totalorder %s19, 0
    %p149 = por %p147, %p148
    %p150 = scmp.ne.s32.totalorder %s142, %s144
    %p151 = scmp.eq.s32.totalorder %s24, 1
    %p152 = por %p150, %p151
    %p153 = scmp.ne.s32.totalorder %s144, %s145
    %p154 = scmp.eq.s32.totalorder %s24, 0
    %p155 = por %p153, %p154
    %p156 = scmp.ne.s32.totalorder %s144, %s145
    %p157 = scmp.eq.s32.totalorder %s25, 1
    %p158 = por %p156, %p157
    %p160 = scmp.ne.s32.totalorder %s145, %s159
    %p161 = scmp.eq.s32.totalorder %s25, 0
    %p162 = por %p160, %p161
    %s164 = sadd.s32 %s163, 1
    %p167 = scmp.eq.s32.totalorder %s19, 1
    %p168 = scmp.ne.s32.totalorder %s163, %s165
    %p169 = scmp.eq.s32.totalorder %s19, 0
    %p170 = por %p168, %p169
    %p171 = scmp.ne.s32.totalorder %s163, %s165
    %p172 = scmp.eq.s32.totalorder %s24, 1
    %p173 = por %p171, %p172
    %p174 = scmp.ne.s32.totalorder %s165, %s166
    %p175 = scmp.eq.s32.totalorder %s24, 0
    %p176 = por %p174, %p175
    %p177 = scmp.ne.s32.totalorder %s165, %s166
    %p178 = scmp.eq.s32.totalorder %s25, 1
    %p179 = por %p177, %p178
    %p181 = scmp.ne.s32.totalorder %s166, %s180
    %p182 = scmp.eq.s32.totalorder %s25, 0
    %p183 = por %p181, %p182
    %s185 = sadd.s32 %s184, 1
    %p188 = scmp.eq.s32.totalorder %s19, 1
    %p189 = scmp.ne.s32.totalorder %s184, %s186
    %p190 = scmp.eq.s32.totalorder %s19, 0
    %p191 = por %p189, %p190
    %p192 = scmp.ne.s32.totalorder %s184, %s186
    %p193 = scmp.eq.s32.totalorder %s24, 1
    %p194 = por %p192, %p193
    %p195 = scmp.ne.s32.totalorder %s186, %s187
    %p196 = scmp.eq.s32.totalorder %s24, 0
    %p197 = por %p195, %p196
    %p198 = scmp.ne.s32.totalorder %s186, %s187
    %p199 = scmp.eq.s32.totalorder %s25, 1
    %p200 = por %p198, %p199
    %p202 = scmp.ne.s32.totalorder %s187, %s201
    %p203 = scmp.eq.s32.totalorder %s25, 0
    %p204 = por %p202, %p203
    %s206 = sadd.s32 %s205, 1
    %p209 = scmp.eq.s32.totalorder %s19, 1
    %p210 = scmp.ne.s32.totalorder %s205, %s207
    %p211 = scmp.eq.s32.totalorder %s19, 0
    %p212 = por %p210, %p211
    %p213 = scmp.ne.s32.totalorder %s205, %s207
    %p214 = scmp.eq.s32.totalorder %s24, 1
    %p215 = por %p213, %p214
    %p216 = scmp.ne.s32.totalorder %s207, %s208
    %p217 = scmp.eq.s32.totalorder %s24, 0
    %p218 = por %p216, %p217
    %p219 = scmp.ne.s32.totalorder %s207, %s208
    %p220 = scmp.eq.s32.totalorder %s25, 1
    %p221 = por %p219, %p220
    %p223 = scmp.ne.s32.totalorder %s208, %s222
    %p224 = scmp.eq.s32.totalorder %s25, 0
    %p225 = por %p223, %p224
    %s227 = sadd.s32 %s226, 1
    %p230 = scmp.eq.s32.totalorder %s19, 1
    %p231 = scmp.ne.s32.totalorder %s226, %s228
    %p232 = scmp.eq.s32.totalorder %s19, 0
    %p233 = por %p231, %p232
    %p234 = scmp.ne.s32.totalorder %s226, %s228
    %p235 = scmp.eq.s32.totalorder %s24, 1
    %p236 = por %p234, %p235
    %p237 = scmp.ne.s32.totalorder %s228, %s229
    %p238 = scmp.eq.s32.totalorder %s24, 0
    %p239 = por %p237, %p238
    %p240 = scmp.ne.s32.totalorder %s228, %s229
    %p241 = scmp.eq.s32.totalorder %s25, 1
    %p242 = por %p240, %p241
    %p244 = scmp.ne.s32.totalorder %s229, %s243
    %p245 = scmp.eq.s32.totalorder %s25, 0
    %p246 = por %p244, %p245
    %s248 = sadd.s32 %s247, 1
    %p251 = scmp.eq.s32.totalorder %s19, 1
    %p252 = scmp.ne.s32.totalorder %s247, %s249
    %p253 = scmp.eq.s32.totalorder %s19, 0
    %p254 = por %p252, %p253
    %p255 = scmp.ne.s32.totalorder %s247, %s249
    %p256 = scmp.eq.s32.totalorder %s24, 1
    %p257 = por %p255, %p256
    %p258 = scmp.ne.s32.totalorder %s249, %s250
    %p259 = scmp.eq.s32.totalorder %s24, 0
    %p260 = por %p258, %p259
    %p261 = scmp.ne.s32.totalorder %s249, %s250
    %p262 = scmp.eq.s32.totalorder %s25, 1
    %p263 = por %p261, %p262
    %p265 = scmp.ne.s32.totalorder %s250, %s264
    %p266 = scmp.eq.s32.totalorder %s25, 0
    %p267 = por %p265, %p266
    %s269 = sadd.s32 %s268, 1
    %p272 = scmp.eq.s32.totalorder %s19, 1
    %p273 = scmp.ne.s32.totalorder %s268, %s270
    %p274 = scmp.eq.s32.totalorder %s19, 0
    %p275 = por %p273, %p274
    %p276 = scmp.ne.s32.totalorder %s268, %s270
    %p277 = scmp.eq.s32.totalorder %s24, 1
    %p278 = por %p276, %p277
    %p279 = scmp.ne.s32.totalorder %s270, %s271
    %p280 = scmp.eq.s32.totalorder %s24, 0
    %p281 = por %p279, %p280
    %p282 = scmp.ne.s32.totalorder %s270, %s271
    %p283 = scmp.eq.s32.totalorder %s25, 1
    %p284 = por %p282, %p283
    %p286 = scmp.ne.s32.totalorder %s271, %s285
    %p287 = scmp.eq.s32.totalorder %s25, 0
    %p288 = por %p286, %p287
    %s290 = sadd.s32 %s289, 1
    %p293 = scmp.eq.s32.totalorder %s19, 1
    %p294 = scmp.ne.s32.totalorder %s289, %s291
    %p295 = scmp.eq.s32.totalorder %s19, 0
    %p296 = por %p294, %p295
    %p297 = scmp.ne.s32.totalorder %s289, %s291
    %p298 = scmp.eq.s32.totalorder %s24, 1
    %p299 = por %p297, %p298
    %p300 = scmp.ne.s32.totalorder %s291, %s292
    %p301 = scmp.eq.s32.totalorder %s24, 0
    %p302 = por %p300, %p301
    %p303 = scmp.ne.s32.totalorder %s291, %s292
    %p304 = scmp.eq.s32.totalorder %s25, 1
    %p305 = por %p303, %p304
    %p307 = scmp.ne.s32.totalorder %s292, %s306
    %p308 = scmp.eq.s32.totalorder %s25, 0
    %p309 = por %p307, %p308
    %s310 = ssub.s32 %s19, %s26
    %p311 = scmp.eq.s32.totalorder %s310, 0
    %s313 = sadd.s32 %s312, 1
    %s314 = scalar_select %p311, %s312, %s313
    %p317 = pneg %p311
    %p318 = scmp.eq.s32.totalorder %s19, 1
    %p319 = por %p317, %p318
    %p320 = scmp.ne.s32.totalorder %s312, %s315
    %p321 = scmp.eq.s32.totalorder %s19, 0
    %p322 = por %p320, %p321
    %p323 = scmp.ne.s32.totalorder %s312, %s315
    %p324 = scmp.eq.s32.totalorder %s24, 1
    %p325 = por %p323, %p324
    %p326 = scmp.ne.s32.totalorder %s315, %s316
    %p327 = scmp.eq.s32.totalorder %s24, 0
    %p328 = por %p326, %p327
    %p329 = scmp.ne.s32.totalorder %s315, %s316
    %p330 = scmp.eq.s32.totalorder %s25, 1
    %p331 = por %p329, %p330
    %p333 = scmp.ne.s32.totalorder %s316, %s332
    %p334 = scmp.eq.s32.totalorder %s25, 0
    %p335 = por %p333, %p334
    %p336 = scmp.le.s32.totalorder 1, %s19
    %p337 = scmp.lt.s32.totalorder %s19, 3
    %p338 = pnand %p336, %p337
    %p339 = pneg %p338
    // Predicated region
    $region9: #{down_forward.1} parent=5 // pred_check
      _
    $region10: #{down_forward.1} parent=5 // pred_check_branch
      %341 = sbr.rel (%p338) target = $region12
    $region11: #{down_forward.1} parent=5 // pred_region
      %s342 = ssub.s32 %s19, 1
      // Predicated region
      $region13: #{down_forward.1} parent=11 // pred_check
        %p343 = pneg %p92
      $region14: #{down_forward.1} parent=11 // pred_check_branch
        %345 = sbr.rel (%p343) target = $region16
      $region15: #{down_forward.1} parent=11 // pred_region
        _
      $region16: #{down_forward.1} parent=11 // pred_fallthru
        _
      // Predicated region
      $region17: #{down_forward.1} parent=11 // pred_check
        %p346 = pneg %p113
      $region18: #{down_forward.1} parent=11 // pred_check_branch
        %348 = sbr.rel (%p346) target = $region20
      $region19: #{down_forward.1} parent=11 // pred_region
        _
      $region20: #{down_forward.1} parent=11 // pred_fallthru
        _
      // Predicated region
      $region21: #{down_forward.1} parent=11 // pred_check
        %p349 = pneg %p134
      $region22: #{down_forward.1} parent=11 // pred_check_branch
        %351 = sbr.rel (%p349) target = $region24
      $region23: #{down_forward.1} parent=11 // pred_region
        _
      $region24: #{down_forward.1} parent=11 // pred_fallthru
        _
      // Predicated region
      $region25: #{down_forward.1} parent=11 // pred_check
        %p352 = pneg %p155
      $region26: #{down_forward.1} parent=11 // pred_check_branch
        %354 = sbr.rel (%p352) target = $region28
      $region27: #{down_forward.1} parent=11 // pred_region
        _
      $region28: #{down_forward.1} parent=11 // pred_fallthru
        _
      // Predicated region
      $region29: #{down_forward.1} parent=11 // pred_check
        %p355 = pneg %p176
      $region30: #{down_forward.1} parent=11 // pred_check_branch
        %357 = sbr.rel (%p355) target = $region32
      $region31: #{down_forward.1} parent=11 // pred_region
        _
      $region32: #{down_forward.1} parent=11 // pred_fallthru
        _
      // Predicated region
      $region33: #{down_forward.1} parent=11 // pred_check
        %p358 = pneg %p197
      $region34: #{down_forward.1} parent=11 // pred_check_branch
        %360 = sbr.rel (%p358) target = $region36
      $region35: #{down_forward.1} parent=11 // pred_region
        _
      $region36: #{down_forward.1} parent=11 // pred_fallthru
        _
      // Predicated region
      $region37: #{down_forward.1} parent=11 // pred_check
        %p361 = pneg %p218
      $region38: #{down_forward.1} parent=11 // pred_check_branch
        %363 = sbr.rel (%p361) target = $region40
      $region39: #{down_forward.1} parent=11 // pred_region
        _
      $region40: #{down_forward.1} parent=11 // pred_fallthru
        _
      // Predicated region
      $region41: #{down_forward.1} parent=11 // pred_check
        %p364 = pneg %p239
      $region42: #{down_forward.1} parent=11 // pred_check_branch
        %366 = sbr.rel (%p364) target = $region44
      $region43: #{down_forward.1} parent=11 // pred_region
        _
      $region44: #{down_forward.1} parent=11 // pred_fallthru
        _
      // Predicated region
      $region45: #{down_forward.1} parent=11 // pred_check
        %p367 = pneg %p260
      $region46: #{down_forward.1} parent=11 // pred_check_branch
        %369 = sbr.rel (%p367) target = $region48
      $region47: #{down_forward.1} parent=11 // pred_region
        _
      $region48: #{down_forward.1} parent=11 // pred_fallthru
        _
      // Predicated region
      $region49: #{down_forward.1} parent=11 // pred_check
        %p370 = pneg %p281
      $region50: #{down_forward.1} parent=11 // pred_check_branch
        %372 = sbr.rel (%p370) target = $region52
      $region51: #{down_forward.1} parent=11 // pred_region
        _
      $region52: #{down_forward.1} parent=11 // pred_fallthru
        _
      // Predicated region
      $region53: #{down_forward.1} parent=11 // pred_check
        %p373 = pneg %p302
      $region54: #{down_forward.1} parent=11 // pred_check_branch
        %375 = sbr.rel (%p373) target = $region56
      $region55: #{down_forward.1} parent=11 // pred_region
        _
      $region56: #{down_forward.1} parent=11 // pred_fallthru
        _
    $region12: #{down_forward.1} parent=5 // pred_fallthru
      _
    %p376 = scmp.lt.s32.totalorder %s19, 2
    // Predicated region
    $region57: #{down_forward.1} parent=5 // pred_check
      %p377 = pneg %p376
    $region58: #{down_forward.1} parent=5 // pred_check_branch
      %379 = sbr.rel (%p377) target = $region60
    $region59: #{down_forward.1} parent=5 // pred_region
      // Predicated region
      $region61: #{down_forward.1} parent=59 // pred_check
        %p380 = pneg %p39
      $region62: #{down_forward.1} parent=59 // pred_check_branch
        %382 = sbr.rel (%p380) target = $region64
      $region63: #{down_forward.1} parent=59 // pred_region
        %p383 = scmp.lt.s32.totalorder %s19, 1
        %s384 = scalar_select %p383, %s19, 1
        %s385 = smul.addr %s384, 3
        %s386 = smul.addr %s385, 4
        %s387 = scalar_lea.vmem %s0, %s386
      $region64: #{down_forward.1} parent=59 // pred_fallthru
        _
      // Predicated region
      $region65: #{down_forward.1} parent=59 // pred_check
        %p388 = pneg %p65
      $region66: #{down_forward.1} parent=59 // pred_check_branch
        %390 = sbr.rel (%p388) target = $region68
      $region67: #{down_forward.1} parent=59 // pred_region
        %p391 = scmp.lt.s32.totalorder %s19, 1
        %s392 = scalar_select %p391, %s19, 1
        %s393 = smul.addr %s392, 3
        %s394 = smul.addr %s393, 4
        %s395 = scalar_lea.vmem %s1, %s394
      $region68: #{down_forward.1} parent=59 // pred_fallthru
        _
    $region60: #{down_forward.1} parent=5 // pred_fallthru
      _
    %p396 = scmp.le.s32.totalorder 1, %s19
    %p397 = scmp.lt.s32.totalorder %s19, 3
    %p398 = pnand %p396, %p397
    %p399 = pneg %p398
    // Predicated region
    $region69: #{down_forward.1} parent=5 // pred_check
      _
    $region70: #{down_forward.1} parent=5 // pred_check_branch
      %401 = sbr.rel (%p398) target = $region72
    $region71: #{down_forward.1} parent=5 // pred_region
      %s402 = ssub.s32 %s19, 1
      %p403 = scmp.lt.s32.totalorder %s24, 1
      %s404 = scalar_select %p403, %s24, 1
      %s405 = smul.addr %s404, 3
      %s406 = smul.addr %s405, 4
      %s407 = scalar_lea.vmem %s0, %s406
      %p408 = pneg %p45
      %p409 = pneg %p42
      %p410 = scmp.lt.s32.totalorder %s24, 1
      %s411 = scalar_select %p410, %s24, 1
      %s412 = smul.addr %s411, 3
      %s413 = smul.addr %s412, 4
      %s414 = scalar_lea.vmem %s1, %s413
      %p415 = pneg %p71
      %p416 = pneg %p68
      %p417 = pneg %p92
      %p418 = pneg %p89
      %p419 = pneg %p113
      %p420 = pneg %p110
      %p421 = pneg %p134
      %p422 = pneg %p131
      %p423 = pneg %p155
      %p424 = pneg %p152
      %p425 = pneg %p176
      %p426 = pneg %p173
      %p427 = pneg %p197
      %p428 = pneg %p194
      %p429 = pneg %p218
      %p430 = pneg %p215
      %p431 = pneg %p239
      %p432 = pneg %p236
      %p433 = pneg %p260
      %p434 = pneg %p257
      %p435 = pneg %p281
      %p436 = pneg %p278
      %p437 = pneg %p302
      %p438 = pneg %p299
      %p439 = pneg %p328
      %p440 = pneg %p325
      %p441 = scmp.lt.s32.totalorder %s24, 1
      %s442 = scalar_select %p441, %s24, 1
      %s443 = smul.addr %s442, 8
      %s444 = scalar_lea.vmem %s13, %s443
      %p445 = scmp.lt.s32.totalorder %s24, 1
      %s446 = scalar_select %p445, %s24, 1
      %s447 = smul.addr %s446, 3
      %s448 = smul.addr %s447, 4
      %s449 = scalar_lea.vmem %s0, %s448
      %p450 = scmp.lt.s32.totalorder %s24, 1
      %s451 = scalar_select %p450, %s24, 1
      %s452 = smul.addr %s451, 3
      %s453 = smul.addr %s452, 4
      %s454 = scalar_lea.vmem %s1, %s453
      %p455 = scmp.lt.s32.totalorder %s24, 1
      %s456 = scalar_select %p455, %s24, 1
      %s457 = smul.addr %s456, 8
      %s458 = scalar_lea.vmem %s13, %s457
      %vm460 = vcmask 523264
      %461 = vst.msk [vmem:[#allocation2] sm:$0xff] %vm460, 0.0
      %462 = vst.msk [vmem:[#allocation2 + $0x8] sm:$0xff] %vm460, 0.0
      %vm463 = vcmask 519168
      %464 = vst.msk [vmem:[#allocation2 + $0x10] sm:$0xf] %vm463, 0.0
      %465 = vst.msk [vmem:[#allocation3] sm:$0xff] %vm460, 0.0
      %466 = vst.msk [vmem:[#allocation3 + $0x8] sm:$0xff] %vm460, 0.0
      %467 = vst.msk [vmem:[#allocation3 + $0x10] sm:$0xf] %vm463, 0.0
      %468 = vst [vmem:[#allocation4] sm:$0xff] 0.0
      %469 = vst [vmem:[#allocation4 + $0x8] sm:$0xff] 0.0
      %470 = vst [vmem:[#allocation4 + $0x10] sm:$0xf] 0.0
      %471 = vst [vmem:[#allocation5] sm:$0xff] 0.0
      %472 = vst [vmem:[#allocation5 + $0x8] sm:$0xff] 0.0
      %473 = vst [vmem:[#allocation5 + $0x10] sm:$0xf] 0.0
      %474 = vst.msk [vmem:[#allocation6] sm:$0xff] %vm460, 0.0
      %475 = vst.msk [vmem:[#allocation6 + $0x8] sm:$0xff] %vm460, 0.0
      %476 = vst.msk [vmem:[#allocation6 + $0x10] sm:$0xff] %vm460, 0.0
      %477 = vst.msk [vmem:[#allocation7] sm:$0xff] %vm460, 0.0
      %478 = vst.msk [vmem:[#allocation7 + $0x8] sm:$0xff] %vm460, 0.0
      %479 = vst.msk [vmem:[#allocation7 + $0x10] sm:$0xff] %vm460, 0.0
      %v480 = vld [vmem:[%s449] sm:$0xf]
      %v481 = vld [vmem:[%s449 + $0x4] sm:$0x1]
      %v482 = vunpack.c.l.bf16 %v480
      %v483 = vunpack.c.l.bf16 %v481
      %v484 = vld [vmem:[%s2] sm:$0x1]
      %v485 = vlaneseq
      %v486 = vshrl.u32 %v485, 7
      %v487 = vsub.s32 0, %v486
      %v488 = vrot.slane %v484, %v487
      %v489 = vmul.f32 %v482, %v488
      %v490 = vmul.f32 %v483, %v488
      %v491 = vld [vmem:[%s2 + $0x1] sm:$0x1]
      %v492 = vlaneseq
      %v493 = vshrl.u32 %v492, 7
      %v494 = vsub.s32 0, %v493
      %v495 = vrot.slane %v491, %v494
      %v496 = vadd.f32 %v489, %v495
      %v497 = vadd.f32 %v490, %v495
      %v498 = vmax.f32 %v496, 0.0
      %v499 = vmax.f32 %v497, 0.0
      %vm500 = vcmask 523265
      %501 = vst.msk [vmem:[#allocation2] sm:$0xfe] %vm500, %v498
      %vm502 = vcmask 516096
      %503 = vst.msk [vmem:[#allocation2 + $0x8] sm:$0x1] %vm502, %v499
      %v504 = vld [vmem:[%s454] sm:$0xf]
      %v505 = vld [vmem:[%s454 + $0x4] sm:$0x1]
      %v506 = vunpack.c.l.bf16 %v504
      %v507 = vunpack.c.l.bf16 %v505
      %v508 = vld [vmem:[%s2] sm:$0x1]
      %v509 = vlaneseq
      %v510 = vshrl.u32 %v509, 7
      %v511 = vsub.s32 0, %v510
      %v512 = vrot.slane %v508, %v511
      %v513 = vmul.f32 %v506, %v512
      %v514 = vmul.f32 %v507, %v512
      %v515 = vld [vmem:[%s2 + $0x1] sm:$0x1]
      %v516 = vlaneseq
      %v517 = vshrl.u32 %v516, 7
      %v518 = vsub.s32 0, %v517
      %v519 = vrot.slane %v515, %v518
      %v520 = vadd.f32 %v513, %v519
      %v521 = vadd.f32 %v514, %v519
      %v522 = vmax.f32 %v520, 0.0
      %v523 = vmax.f32 %v521, 0.0
      %524 = vst.msk [vmem:[#allocation3] sm:$0xfe] %vm500, %v522
      %525 = vst.msk [vmem:[#allocation3 + $0x8] sm:$0x1] %vm502, %v523
      %v526 = vld [vmem:[%s449 + $0x4] sm:$0xe]
      %v527 = vld [vmem:[%s449 + $0x8] sm:$0x3]
      %v528 = vunpack.c.l.bf16 %v526
      %v529 = vunpack.c.l.bf16 %v527
      %v530 = vld [vmem:[%s2] sm:$0x1]
      %v531 = vlaneseq
      %v532 = vshrl.u32 %v531, 7
      %v533 = vsub.s32 0, %v532
      %v534 = vrot.slane %v530, %v533
      %v535 = vmul.f32 %v528, %v534
      %v536 = vmul.f32 %v529, %v534
      %v537 = vld [vmem:[%s2 + $0x1] sm:$0x1]
      %v538 = vlaneseq
      %v539 = vshrl.u32 %v538, 7
      %v540 = vsub.s32 0, %v539
      %v541 = vrot.slane %v537, %v540
      %v542 = vadd.f32 %v535, %v541
      %v543 = vadd.f32 %v536, %v541
      %v544 = vmax.f32 %v542, 0.0
      %v545 = vmax.f32 %v543, 0.0
      %vm546 = vcmask 523267
      %547 = vst.msk [vmem:[#allocation2 + $0x8] sm:$0xf8] %vm546, %v544
      %vm548 = vcmask 518144
      %549 = vst.msk [vmem:[#allocation2 + $0x10] sm:$0x7] %vm548, %v545
      %v550 = vld [vmem:[%s454 + $0x4] sm:$0xe]
      %v551 = vld [vmem:[%s454 + $0x8] sm:$0x3]
      %v552 = vunpack.c.l.bf16 %v550
      %v553 = vunpack.c.l.bf16 %v551
      %v554 = vld [vmem:[%s2] sm:$0x1]
      %v555 = vlaneseq
      %v556 = vshrl.u32 %v555, 7
      %v557 = vsub.s32 0, %v556
      %v558 = vrot.slane %v554, %v557
      %v559 = vmul.f32 %v552, %v558
      %v560 = vmul.f32 %v553, %v558
      %v561 = vld [vmem:[%s2 + $0x1] sm:$0x1]
      %v562 = vlaneseq
      %v563 = vshrl.u32 %v562, 7
      %v564 = vsub.s32 0, %v563
      %v565 = vrot.slane %v561, %v564
      %v566 = vadd.f32 %v559, %v565
      %v567 = vadd.f32 %v560, %v565
      %v568 = vmax.f32 %v566, 0.0
      %v569 = vmax.f32 %v567, 0.0
      %570 = vst.msk [vmem:[#allocation3 + $0x8] sm:$0xf8] %vm546, %v568
      %571 = vst.msk [vmem:[#allocation3 + $0x10] sm:$0x7] %vm548, %v569
      %v572 = vld [vmem:[#allocation2] sm:$0xff]
      %v573 = vld [vmem:[#allocation2 + $0x8] sm:$0xff]
      %v574 = vld [vmem:[#allocation2 + $0x10] sm:$0x3]
      %v575 = vpack.c.bf16 %v573, %v572
      %v576 = vpack.c.bf16 %v574, %v574
      %v577 = vld [vmem:[%s6] sm:$0xf]
      %v578 = vld [vmem:[%s6 + $0x4] sm:$0xf]
      %v579 = vld [vmem:[%s6 + $0x8] sm:$0xf]
      %v580 = vld [vmem:[%s6 + $0xc] sm:$0xf]
      %v581 = vld [vmem:[%s6 + $0x10] sm:$0xf]
      %v582 = vld [vmem:[%s6 + $0x14] sm:$0xf]
      %v583 = vld [vmem:[%s6 + $0x18] sm:$0xf]
      %v584 = vld [vmem:[%s6 + $0x1c] sm:$0xf]
      %v585 = vld [vmem:[#allocation3] sm:$0xff]
      %v586 = vld [vmem:[#allocation3 + $0x8] sm:$0xff]
      %v587 = vld [vmem:[#allocation3 + $0x10] sm:$0x3]
      %v588 = vpack.c.bf16 %v586, %v585
      %v589 = vpack.c.bf16 %v587, %v587
      %s590 = scalar_lea.vmem %s6, 32
      %v591 = vld [vmem:[%s590] sm:$0xf]
      %v592 = vld [vmem:[%s590 + $0x4] sm:$0xf]
      %v593 = vld [vmem:[%s590 + $0x8] sm:$0xf]
      %v594 = vld [vmem:[%s590 + $0xc] sm:$0xf]
      %v595 = vld [vmem:[%s590 + $0x10] sm:$0xf]
      %v596 = vld [vmem:[%s590 + $0x14] sm:$0xf]
      %v597 = vld [vmem:[%s590 + $0x18] sm:$0xf]
      %v598 = vld [vmem:[%s590 + $0x1c] sm:$0xf]
      %v607 = vunpack.c.l.b16 %v591
      %v608 = vunpack.c.l.b16 %v592
      %v609 = vunpack.c.l.b16 %v593
      %v610 = vunpack.c.l.b16 %v594
      %v611 = vunpack.c.l.b16 %v595
      %v612 = vunpack.c.l.b16 %v596
      %v613 = vunpack.c.l.b16 %v597
      %v614 = vunpack.c.l.b16 %v598
      %v615 = vpack.c.b16 %v608, %v607
      %v616 = vpack.c.b16 %v610, %v609
      %v617 = vpack.c.b16 %v612, %v611
      %v618 = vpack.c.b16 %v614, %v613
      %v624 = vsel %vm460, %v588, 0
      %v627 = vsel %vm460, %v589, 0
      %629 = vmatprep.subr.bf16.mxu0 0
      %630 = vmatpush1.bf16.msra.mxu0 0
      %631 = vmatprep.subr.bf16.mxu0 0
      %632 = vmatpush1.bf16.msra.mxu0 0
      %633 = vmatprep.subr.bf16.mxu0 0
      %634 = vmatpush1.bf16.msra.mxu0 0
      %635 = vmatprep.subr.bf16.mxu0 0
      %636 = vmatpush1.bf16.msra.mxu0 0
      %637 = vmatprep.subr.bf16.mxu0 0
      %638 = vmatpush1.bf16.msra.mxu0 %v618
      %639 = vmatprep.subr.bf16.mxu0 0
      %640 = vmatpush1.bf16.msra.mxu0 %v617
      %641 = vmatprep.subr.bf16.mxu0 0
      %642 = vmatpush1.bf16.msra.mxu0 %v616
      %643 = vmatprep.subr.bf16.mxu0 0
      %644 = vmatpush1.bf16.msra.mxu0 %v615
      %645 = vmatprep.subr.bf16.mxu0 0
      %646 = vmatpush2.bf16.msra.mxu0 0
      %647 = vmatprep.subr.bf16.mxu0 0
      %648 = vmatpush2.bf16.msra.mxu0 0
      %649 = vmatprep.subr.bf16.mxu0 0
      %650 = vmatpush2.bf16.msra.mxu0 0
      %651 = vmatprep.subr.bf16.mxu0 0
      %652 = vmatpush2.bf16.msra.mxu0 0
      %653 = vmatprep.subr.bf16.mxu0 0
      %654 = vmatpush2.bf16.msra.mxu0 0
      %655 = vmatprep.subr.bf16.mxu0 0
      %656 = vmatpush2.bf16.msra.mxu0 0
      %657 = vmatprep.subr.bf16.mxu0 0
      %658 = vmatpush2.bf16.msra.mxu0 0
      %659 = vmatprep.subr.bf16.mxu0 0
      %660 = vmatpush2.bf16.msra.mxu0 0
      %661 = vmatprep.mubr.bf16.mxu0 0
      %662 = vmatmul.mubr.bf16.gmra.mxu0 %v624
      %v663 = vpop.f32.mrf.mxu0
      %v664 = vadd.f32 0.0, %v663
      %v665 = vpop.f32.mrf.mxu0
      %v666 = vpop.f32.mrf.mxu0
      %v667 = vadd.f32 0.0, %v666
      %v668 = vpop.f32.mrf.mxu0
      %669 = vmatprep.mubr.bf16.mxu0 0
      %670 = vmatmul.mubr.bf16.gmra.mxu0 %v627
      %v671 = vpop.f32.mrf.mxu0
      %v672 = vadd.f32 0.0, %v671
      %v673 = vpop.f32.mrf.mxu0
      %v674 = vpop.f32.mrf.mxu0
      %v675 = vpop.f32.mrf.mxu0
      %676 = vdwg.mxu0
      %v685 = vunpack.c.l.b16 %v577
      %v686 = vunpack.c.l.b16 %v578
      %v687 = vunpack.c.l.b16 %v579
      %v688 = vunpack.c.l.b16 %v580
      %v689 = vunpack.c.l.b16 %v581
      %v690 = vunpack.c.l.b16 %v582
      %v691 = vunpack.c.l.b16 %v583
      %v692 = vunpack.c.l.b16 %v584
      %v693 = vpack.c.b16 %v686, %v685
      %v694 = vpack.c.b16 %v688, %v687
      %v695 = vpack.c.b16 %v690, %v689
      %v696 = vpack.c.b16 %v692, %v691
      %v702 = vsel %vm460, %v575, 0
      %v705 = vsel %vm460, %v576, 0
      %707 = vmatprep.subr.bf16.mxu0 0
      %708 = vmatpush1.bf16.msra.mxu0 0
      %709 = vmatprep.subr.bf16.mxu0 0
      %710 = vmatpush1.bf16.msra.mxu0 0
      %711 = vmatprep.subr.bf16.mxu0 0
      %712 = vmatpush1.bf16.msra.mxu0 0
      %713 = vmatprep.subr.bf16.mxu0 0
      %714 = vmatpush1.bf16.msra.mxu0 0
      %715 = vmatprep.subr.bf16.mxu0 0
      %716 = vmatpush1.bf16.msra.mxu0 %v696
      %717 = vmatprep.subr.bf16.mxu0 0
      %718 = vmatpush1.bf16.msra.mxu0 %v695
      %719 = vmatprep.subr.bf16.mxu0 0
      %720 = vmatpush1.bf16.msra.mxu0 %v694
      %721 = vmatprep.subr.bf16.mxu0 0
      %722 = vmatpush1.bf16.msra.mxu0 %v693
      %723 = vmatprep.subr.bf16.mxu0 0
      %724 = vmatpush2.bf16.msra.mxu0 0
      %725 = vmatprep.subr.bf16.mxu0 0
      %726 = vmatpush2.bf16.msra.mxu0 0
      %727 = vmatprep.subr.bf16.mxu0 0
      %728 = vmatpush2.bf16.msra.mxu0 0
      %729 = vmatprep.subr.bf16.mxu0 0
      %730 = vmatpush2.bf16.msra.mxu0 0
      %731 = vmatprep.subr.bf16.mxu0 0
      %732 = vmatpush2.bf16.msra.mxu0 0
      %733 = vmatprep.subr.bf16.mxu0 0
      %734 = vmatpush2.bf16.msra.mxu0 0
      %735 = vmatprep.subr.bf16.mxu0 0
      %736 = vmatpush2.bf16.msra.mxu0 0
      %737 = vmatprep.subr.bf16.mxu0 0
      %738 = vmatpush2.bf16.msra.mxu0 0
      %739 = vmatprep.mubr.bf16.mxu0 0
      %740 = vmatmul.mubr.bf16.gmra.mxu0 %v702
      %v741 = vpop.f32.mrf.mxu0
      %v742 = vadd.f32 %v664, %v741
      %v743 = vpop.f32.mrf.mxu0
      %v744 = vpop.f32.mrf.mxu0
      %v745 = vadd.f32 %v667, %v744
      %v746 = vpop.f32.mrf.mxu0
      %747 = vmatprep.mubr.bf16.mxu0 0
      %748 = vmatmul.mubr.bf16.gmra.mxu0 %v705
      %v749 = vpop.f32.mrf.mxu0
      %v750 = vadd.f32 %v672, %v749
      %v751 = vpop.f32.mrf.mxu0
      %v752 = vpop.f32.mrf.mxu0
      %v753 = vpop.f32.mrf.mxu0
      %754 = vdwg.mxu0
      %v755 = vld [vmem:[#allocation2 + $0x1] sm:$0xff]
      %v756 = vld [vmem:[#allocation2 + $0x9] sm:$0xff]
      %v757 = vld [vmem:[#allocation2 + $0x11] sm:$0x3]
      %v758 = vpack.c.bf16 %v756, %v755
      %v759 = vpack.c.bf16 %v757, %v757
      %s760 = scalar_lea.vmem %s6, 64
      %v761 = vld [vmem:[%s760] sm:$0xf]
      %v762 = vld [vmem:[%s760 + $0x4] sm:$0xf]
      %v763 = vld [vmem:[%s760 + $0x8] sm:$0xf]
      %v764 = vld [vmem:[%s760 + $0xc] sm:$0xf]
      %v765 = vld [vmem:[%s760 + $0x10] sm:$0xf]
      %v766 = vld [vmem:[%s760 + $0x14] sm:$0xf]
      %v767 = vld [vmem:[%s760 + $0x18] sm:$0xf]
      %v768 = vld [vmem:[%s760 + $0x1c] sm:$0xf]
      %v777 = vunpack.c.l.b16 %v761
      %v778 = vunpack.c.l.b16 %v762
      %v779 = vunpack.c.l.b16 %v763
      %v780 = vunpack.c.l.b16 %v764
      %v781 = vunpack.c.l.b16 %v765
      %v782 = vunpack.c.l.b16 %v766
      %v783 = vunpack.c.l.b16 %v767
      %v784 = vunpack.c.l.b16 %v768
      %v785 = vpack.c.b16 %v778, %v777
      %v786 = vpack.c.b16 %v780, %v779
      %v787 = vpack.c.b16 %v782, %v781
      %v788 = vpack.c.b16 %v784, %v783
      %v794 = vsel %vm460, %v758, 0
      %v797 = vsel %vm460, %v759, 0
      %799 = vmatprep.subr.bf16.mxu0 0
      %800 = vmatpush1.bf16.msra.mxu0 0
      %801 = vmatprep.subr.bf16.mxu0 0
      %802 = vmatpush1.bf16.msra.mxu0 0
      %803 = vmatprep.subr.bf16.mxu0 0
      %804 = vmatpush1.bf16.msra.mxu0 0
      %805 = vmatprep.subr.bf16.mxu0 0
      %806 = vmatpush1.bf16.msra.mxu0 0
      %807 = vmatprep.subr.bf16.mxu0 0
      %808 = vmatpush1.bf16.msra.mxu0 %v788
      %809 = vmatprep.subr.bf16.mxu0 0
      %810 = vmatpush1.bf16.msra.mxu0 %v787
      %811 = vmatprep.subr.bf16.mxu0 0
      %812 = vmatpush1.bf16.msra.mxu0 %v786
      %813 = vmatprep.subr.bf16.mxu0 0
      %814 = vmatpush1.bf16.msra.mxu0 %v785
      %815 = vmatprep.subr.bf16.mxu0 0
      %816 = vmatpush2.bf16.msra.mxu0 0
      %817 = vmatprep.subr.bf16.mxu0 0
      %818 = vmatpush2.bf16.msra.mxu0 0
      %819 = vmatprep.subr.bf16.mxu0 0
      %820 = vmatpush2.bf16.msra.mxu0 0
      %821 = vmatprep.subr.bf16.mxu0 0
      %822 = vmatpush2.bf16.msra.mxu0 0
      %823 = vmatprep.subr.bf16.mxu0 0
      %824 = vmatpush2.bf16.msra.mxu0 0
      %825 = vmatprep.subr.bf16.mxu0 0
      %826 = vmatpush2.bf16.msra.mxu0 0
      %827 = vmatprep.subr.bf16.mxu0 0
      %828 = vmatpush2.bf16.msra.mxu0 0
      %829 = vmatprep.subr.bf16.mxu0 0
      %830 = vmatpush2.bf16.msra.mxu0 0
      %831 = vmatprep.mubr.bf16.mxu0 0
      %832 = vmatmul.mubr.bf16.gmra.mxu0 %v794
      %v833 = vpop.f32.mrf.mxu0
      %v834 = vadd.f32 0.0, %v833
      %v835 = vpop.f32.mrf.mxu0
      %v836 = vpop.f32.mrf.mxu0
      %v837 = vadd.f32 0.0, %v836
      %v838 = vpop.f32.mrf.mxu0
      %839 = vmatprep.mubr.bf16.mxu0 0
      %840 = vmatmul.mubr.bf16.gmra.mxu0 %v797
      %v841 = vpop.f32.mrf.mxu0
      %v842 = vadd.f32 0.0, %v841
      %v843 = vpop.f32.mrf.mxu0
      %v844 = vpop.f32.mrf.mxu0
      %v845 = vpop.f32.mrf.mxu0
      %846 = vdwg.mxu0
      %v847 = vadd.f32 %v742, %v834
      %v848 = vadd.f32 %v745, %v837
      %v849 = vadd.f32 %v750, %v842
      %v850 = vld [vmem:[#allocation3 + $0x1] sm:$0xff]
      %v851 = vld [vmem:[#allocation3 + $0x9] sm:$0xff]
      %v852 = vld [vmem:[#allocation3 + $0x11] sm:$0x3]
      %v853 = vpack.c.bf16 %v851, %v850
      %v854 = vpack.c.bf16 %v852, %v852
      %s855 = scalar_lea.vmem %s6, 96
      %v856 = vld [vmem:[%s855] sm:$0xf]
      %v857 = vld [vmem:[%s855 + $0x4] sm:$0xf]
      %v858 = vld [vmem:[%s855 + $0x8] sm:$0xf]
      %v859 = vld [vmem:[%s855 + $0xc] sm:$0xf]
      %v860 = vld [vmem:[%s855 + $0x10] sm:$0xf]
      %v861 = vld [vmem:[%s855 + $0x14] sm:$0xf]
      %v862 = vld [vmem:[%s855 + $0x18] sm:$0xf]
      %v863 = vld [vmem:[%s855 + $0x1c] sm:$0xf]
      %v872 = vunpack.c.l.b16 %v856
      %v873 = vunpack.c.l.b16 %v857
      %v874 = vunpack.c.l.b16 %v858
      %v875 = vunpack.c.l.b16 %v859
      %v876 = vunpack.c.l.b16 %v860
      %v877 = vunpack.c.l.b16 %v861
      %v878 = vunpack.c.l.b16 %v862
      %v879 = vunpack.c.l.b16 %v863
      %v880 = vpack.c.b16 %v873, %v872
      %v881 = vpack.c.b16 %v875, %v874
      %v882 = vpack.c.b16 %v877, %v876
      %v883 = vpack.c.b16 %v879, %v878
      %v889 = vsel %vm460, %v853, 0
      %v892 = vsel %vm460, %v854, 0
      %894 = vmatprep.subr.bf16.mxu0 0
      %895 = vmatpush1.bf16.msra.mxu0 0
      %896 = vmatprep.subr.bf16.mxu0 0
      %897 = vmatpush1.bf16.msra.mxu0 0
      %898 = vmatprep.subr.bf16.mxu0 0
      %899 = vmatpush1.bf16.msra.mxu0 0
      %900 = vmatprep.subr.bf16.mxu0 0
      %901 = vmatpush1.bf16.msra.mxu0 0
      %902 = vmatprep.subr.bf16.mxu0 0
      %903 = vmatpush1.bf16.msra.mxu0 %v883
      %904 = vmatprep.subr.bf16.mxu0 0
      %905 = vmatpush1.bf16.msra.mxu0 %v882
      %906 = vmatprep.subr.bf16.mxu0 0
      %907 = vmatpush1.bf16.msra.mxu0 %v881
      %908 = vmatprep.subr.bf16.mxu0 0
      %909 = vmatpush1.bf16.msra.mxu0 %v880
      %910 = vmatprep.subr.bf16.mxu0 0
      %911 = vmatpush2.bf16.msra.mxu0 0
      %912 = vmatprep.subr.bf16.mxu0 0
      %913 = vmatpush2.bf16.msra.mxu0 0
      %914 = vmatprep.subr.bf16.mxu0 0
      %915 = vmatpush2.bf16.msra.mxu0 0
      %916 = vmatprep.subr.bf16.mxu0 0
      %917 = vmatpush2.bf16.msra.mxu0 0
      %918 = vmatprep.subr.bf16.mxu0 0
      %919 = vmatpush2.bf16.msra.mxu0 0
      %920 = vmatprep.subr.bf16.mxu0 0
      %921 = vmatpush2.bf16.msra.mxu0 0
      %922 = vmatprep.subr.bf16.mxu0 0
      %923 = vmatpush2.bf16.msra.mxu0 0
      %924 = vmatprep.subr.bf16.mxu0 0
      %925 = vmatpush2.bf16.msra.mxu0 0
      %926 = vmatprep.mubr.bf16.mxu0 0
      %927 = vmatmul.mubr.bf16.gmra.mxu0 %v889
      %v928 = vpop.f32.mrf.mxu0
      %v929 = vadd.f32 0.0, %v928
      %v930 = vpop.f32.mrf.mxu0
      %v931 = vpop.f32.mrf.mxu0
      %v932 = vadd.f32 0.0, %v931
      %v933 = vpop.f32.mrf.mxu0
      %934 = vmatprep.mubr.bf16.mxu0 0
      %935 = vmatmul.mubr.bf16.gmra.mxu0 %v892
      %v936 = vpop.f32.mrf.mxu0
      %v937 = vadd.f32 0.0, %v936
      %v938 = vpop.f32.mrf.mxu0
      %v939 = vpop.f32.mrf.mxu0
      %v940 = vpop.f32.mrf.mxu0
      %941 = vdwg.mxu0
      %v942 = vadd.f32 %v847, %v929
      %v943 = vadd.f32 %v848, %v932
      %v944 = vadd.f32 %v849, %v937
      %v945 = vld [vmem:[#allocation2 + $0x2] sm:$0xff]
      %v946 = vld [vmem:[#allocation2 + $0xa] sm:$0xff]
      %v947 = vld [vmem:[#allocation2 + $0x12] sm:$0x3]
      %v948 = vpack.c.bf16 %v946, %v945
      %v949 = vpack.c.bf16 %v947, %v947
      %s950 = scalar_lea.vmem %s6, 128
      %v951 = vld [vmem:[%s950] sm:$0xf]
      %v952 = vld [vmem:[%s950 + $0x4] sm:$0xf]
      %v953 = vld [vmem:[%s950 + $0x8] sm:$0xf]
      %v954 = vld [vmem:[%s950 + $0xc] sm:$0xf]
      %v955 = vld [vmem:[%s950 + $0x10] sm:$0xf]
      %v956 = vld [vmem:[%s950 + $0x14] sm:$0xf]
      %v957 = vld [vmem:[%s950 + $0x18] sm:$0xf]
      %v958 = vld [vmem:[%s950 + $0x1c] sm:$0xf]
      %v967 = vunpack.c.l.b16 %v951
      %v968 = vunpack.c.l.b16 %v952
      %v969 = vunpack.c.l.b16 %v953
      %v970 = vunpack.c.l.b16 %v954
      %v971 = vunpack.c.l.b16 %v955
      %v972 = vunpack.c.l.b16 %v956
      %v973 = vunpack.c.l.b16 %v957
      %v974 = vunpack.c.l.b16 %v958
      %v975 = vpack.c.b16 %v968, %v967
      %v976 = vpack.c.b16 %v970, %v969
      %v977 = vpack.c.b16 %v972, %v971
      %v978 = vpack.c.b16 %v974, %v973
      %v984 = vsel %vm460, %v948, 0
      %v987 = vsel %vm460, %v949, 0
      %989 = vmatprep.subr.bf16.mxu0 0
      %990 = vmatpush1.bf16.msra.mxu0 0
      %991 = vmatprep.subr.bf16.mxu0 0
      %992 = vmatpush1.bf16.msra.mxu0 0
      %993 = vmatprep.subr.bf16.mxu0 0
      %994 = vmatpush1.bf16.msra.mxu0 0
      %995 = vmatprep.subr.bf16.mxu0 0
      %996 = vmatpush1.bf16.msra.mxu0 0
      %997 = vmatprep.subr.bf16.mxu0 0
      %998 = vmatpush1.bf16.msra.mxu0 %v978
      %999 = vmatprep.subr.bf16.mxu0 0
      %1000 = vmatpush1.bf16.msra.mxu0 %v977
      %1001 = vmatprep.subr.bf16.mxu0 0
      %1002 = vmatpush1.bf16.msra.mxu0 %v976
      %1003 = vmatprep.subr.bf16.mxu0 0
      %1004 = vmatpush1.bf16.msra.mxu0 %v975
      %1005 = vmatprep.subr.bf16.mxu0 0
      %1006 = vmatpush2.bf16.msra.mxu0 0
      %1007 = vmatprep.subr.bf16.mxu0 0
      %1008 = vmatpush2.bf16.msra.mxu0 0
      %1009 = vmatprep.subr.bf16.mxu0 0
      %1010 = vmatpush2.bf16.msra.mxu0 0
      %1011 = vmatprep.subr.bf16.mxu0 0
      %1012 = vmatpush2.bf16.msra.mxu0 0
      %1013 = vmatprep.subr.bf16.mxu0 0
      %1014 = vmatpush2.bf16.msra.mxu0 0
      %1015 = vmatprep.subr.bf16.mxu0 0
      %1016 = vmatpush2.bf16.msra.mxu0 0
      %1017 = vmatprep.subr.bf16.mxu0 0
      %1018 = vmatpush2.bf16.msra.mxu0 0
      %1019 = vmatprep.subr.bf16.mxu0 0
      %1020 = vmatpush2.bf16.msra.mxu0 0
      %1021 = vmatprep.mubr.bf16.mxu0 0
      %1022 = vmatmul.mubr.bf16.gmra.mxu0 %v984
      %v1023 = vpop.f32.mrf.mxu0
      %v1024 = vadd.f32 0.0, %v1023
      %v1025 = vpop.f32.mrf.mxu0
      %v1026 = vpop.f32.mrf.mxu0
      %v1027 = vadd.f32 0.0, %v1026
      %v1028 = vpop.f32.mrf.mxu0
      %1029 = vmatprep.mubr.bf16.mxu0 0
      %1030 = vmatmul.mubr.bf16.gmra.mxu0 %v987
      %v1031 = vpop.f32.mrf.mxu0
      %v1032 = vadd.f32 0.0, %v1031
      %v1033 = vpop.f32.mrf.mxu0
      %v1034 = vpop.f32.mrf.mxu0
      %v1035 = vpop.f32.mrf.mxu0
      %1036 = vdwg.mxu0
      %v1037 = vadd.f32 %v942, %v1024
      %v1038 = vadd.f32 %v943, %v1027
      %v1039 = vadd.f32 %v944, %v1032
      %1040 = vmatprep.subr.bf16.mxu0 0
      %1041 = vmatpush1.bf16.msra.mxu0 0
      %1042 = vmatprep.subr.bf16.mxu0 0
      %1043 = vmatpush1.bf16.msra.mxu0 0
      %1044 = vmatprep.subr.bf16.mxu0 0
      %1045 = vmatpush1.bf16.msra.mxu0 0
      %1046 = vmatprep.subr.bf16.mxu0 0
      %1047 = vmatpush1.bf16.msra.mxu0 0
      %1048 = vmatprep.subr.bf16.mxu0 0
      %1049 = vmatpush1.bf16.msra.mxu0 %v618
      %1050 = vmatprep.subr.bf16.mxu0 0
      %1051 = vmatpush1.bf16.msra.mxu0 %v617
      %1052 = vmatprep.subr.bf16.mxu0 0
      %1053 = vmatpush1.bf16.msra.mxu0 %v616
      %1054 = vmatprep.subr.bf16.mxu0 0
      %1055 = vmatpush1.bf16.msra.mxu0 %v615
      %1056 = vmatprep.subr.bf16.mxu0 0
      %1057 = vmatpush2.bf16.msra.mxu0 0
      %1058 = vmatprep.subr.bf16.mxu0 0
      %1059 = vmatpush2.bf16.msra.mxu0 0
      %1060 = vmatprep.subr.bf16.mxu0 0
      %1061 = vmatpush2.bf16.msra.mxu0 0
      %1062 = vmatprep.subr.bf16.mxu0 0
      %1063 = vmatpush2.bf16.msra.mxu0 0
      %1064 = vmatprep.subr.bf16.mxu0 0
      %1065 = vmatpush2.bf16.msra.mxu0 0
      %1066 = vmatprep.subr.bf16.mxu0 0
      %1067 = vmatpush2.bf16.msra.mxu0 0
      %1068 = vmatprep.subr.bf16.mxu0 0
      %1069 = vmatpush2.bf16.msra.mxu0 0
      %1070 = vmatprep.subr.bf16.mxu0 0
      %1071 = vmatpush2.bf16.msra.mxu0 0
      %1072 = vmatprep.mubr.bf16.mxu0 0
      %1073 = vmatmul.mubr.bf16.gmra.mxu0 %v794
      %v1074 = vpop.f32.mrf.mxu0
      %v1075 = vadd.f32 0.0, %v1074
      %v1076 = vpop.f32.mrf.mxu0
      %v1077 = vpop.f32.mrf.mxu0
      %v1078 = vadd.f32 0.0, %v1077
      %v1079 = vpop.f32.mrf.mxu0
      %1080 = vmatprep.mubr.bf16.mxu0 0
      %1081 = vmatmul.mubr.bf16.gmra.mxu0 %v797
      %v1082 = vpop.f32.mrf.mxu0
      %v1083 = vadd.f32 0.0, %v1082
      %v1084 = vpop.f32.mrf.mxu0
      %v1085 = vpop.f32.mrf.mxu0
      %v1086 = vpop.f32.mrf.mxu0
      %1087 = vdwg.mxu0
      %1088 = vmatprep.subr.bf16.mxu0 0
      %1089 = vmatpush1.bf16.msra.mxu0 0
      %1090 = vmatprep.subr.bf16.mxu0 0
      %1091 = vmatpush1.bf16.msra.mxu0 0
      %1092 = vmatprep.subr.bf16.mxu0 0
      %1093 = vmatpush1.bf16.msra.mxu0 0
      %1094 = vmatprep.subr.bf16.mxu0 0
      %1095 = vmatpush1.bf16.msra.mxu0 0
      %1096 = vmatprep.subr.bf16.mxu0 0
      %1097 = vmatpush1.bf16.msra.mxu0 %v696
      %1098 = vmatprep.subr.bf16.mxu0 0
      %1099 = vmatpush1.bf16.msra.mxu0 %v695
      %1100 = vmatprep.subr.bf16.mxu0 0
      %1101 = vmatpush1.bf16.msra.mxu0 %v694
      %1102 = vmatprep.subr.bf16.mxu0 0
      %1103 = vmatpush1.bf16.msra.mxu0 %v693
      %1104 = vmatprep.subr.bf16.mxu0 0
      %1105 = vmatpush2.bf16.msra.mxu0 0
      %1106 = vmatprep.subr.bf16.mxu0 0
      %1107 = vmatpush2.bf16.msra.mxu0 0
      %1108 = vmatprep.subr.bf16.mxu0 0
      %1109 = vmatpush2.bf16.msra.mxu0 0
      %1110 = vmatprep.subr.bf16.mxu0 0
      %1111 = vmatpush2.bf16.msra.mxu0 0
      %1112 = vmatprep.subr.bf16.mxu0 0
      %1113 = vmatpush2.bf16.msra.mxu0 0
      %1114 = vmatprep.subr.bf16.mxu0 0
      %1115 = vmatpush2.bf16.msra.mxu0 0
      %1116 = vmatprep.subr.bf16.mxu0 0
      %1117 = vmatpush2.bf16.msra.mxu0 0
      %1118 = vmatprep.subr.bf16.mxu0 0
      %1119 = vmatpush2.bf16.msra.mxu0 0
      %1120 = vmatprep.mubr.bf16.mxu0 0
      %1121 = vmatmul.mubr.bf16.gmra.mxu0 %v624
      %v1122 = vpop.f32.mrf.mxu0
      %v1123 = vadd.f32 %v1075, %v1122
      %v1124 = vpop.f32.mrf.mxu0
      %v1125 = vpop.f32.mrf.mxu0
      %v1126 = vadd.f32 %v1078, %v1125
      %v1127 = vpop.f32.mrf.mxu0
      %1128 = vmatprep.mubr.bf16.mxu0 0
      %1129 = vmatmul.mubr.bf16.gmra.mxu0 %v627
      %v1130 = vpop.f32.mrf.mxu0
      %v1131 = vadd.f32 %v1083, %v1130
      %v1132 = vpop.f32.mrf.mxu0
      %v1133 = vpop.f32.mrf.mxu0
      %v1134 = vpop.f32.mrf.mxu0
      %1135 = vdwg.mxu0
      %1136 = vmatprep.subr.bf16.mxu0 0
      %1137 = vmatpush1.bf16.msra.mxu0 0
      %1138 = vmatprep.subr.bf16.mxu0 0
      %1139 = vmatpush1.bf16.msra.mxu0 0
      %1140 = vmatprep.subr.bf16.mxu0 0
      %1141 = vmatpush1.bf16.msra.mxu0 0
      %1142 = vmatprep.subr.bf16.mxu0 0
      %1143 = vmatpush1.bf16.msra.mxu0 0
      %1144 = vmatprep.subr.bf16.mxu0 0
      %1145 = vmatpush1.bf16.msra.mxu0 %v788
      %1146 = vmatprep.subr.bf16.mxu0 0
      %1147 = vmatpush1.bf16.msra.mxu0 %v787
      %1148 = vmatprep.subr.bf16.mxu0 0
      %1149 = vmatpush1.bf16.msra.mxu0 %v786
      %1150 = vmatprep.subr.bf16.mxu0 0
      %1151 = vmatpush1.bf16.msra.mxu0 %v785
      %1152 = vmatprep.subr.bf16.mxu0 0
      %1153 = vmatpush2.bf16.msra.mxu0 0
      %1154 = vmatprep.subr.bf16.mxu0 0
      %1155 = vmatpush2.bf16.msra.mxu0 0
      %1156 = vmatprep.subr.bf16.mxu0 0
      %1157 = vmatpush2.bf16.msra.mxu0 0
      %1158 = vmatprep.subr.bf16.mxu0 0
      %1159 = vmatpush2.bf16.msra.mxu0 0
      %1160 = vmatprep.subr.bf16.mxu0 0
      %1161 = vmatpush2.bf16.msra.mxu0 0
      %1162 = vmatprep.subr.bf16.mxu0 0
      %1163 = vmatpush2.bf16.msra.mxu0 0
      %1164 = vmatprep.subr.bf16.mxu0 0
      %1165 = vmatpush2.bf16.msra.mxu0 0
      %1166 = vmatprep.subr.bf16.mxu0 0
      %1167 = vmatpush2.bf16.msra.mxu0 0
      %1168 = vmatprep.mubr.bf16.mxu0 0
      %1169 = vmatmul.mubr.bf16.gmra.mxu0 %v889
      %v1170 = vpop.f32.mrf.mxu0
      %v1171 = vadd.f32 0.0, %v1170
      %v1172 = vpop.f32.mrf.mxu0
      %v1173 = vpop.f32.mrf.mxu0
      %v1174 = vadd.f32 0.0, %v1173
      %v1175 = vpop.f32.mrf.mxu0
      %1176 = vmatprep.mubr.bf16.mxu0 0
      %1177 = vmatmul.mubr.bf16.gmra.mxu0 %v892
      %v1178 = vpop.f32.mrf.mxu0
      %v1179 = vadd.f32 0.0, %v1178
      %v1180 = vpop.f32.mrf.mxu0
      %v1181 = vpop.f32.mrf.mxu0
      %v1182 = vpop.f32.mrf.mxu0
      %1183 = vdwg.mxu0
      %v1184 = vadd.f32 %v1123, %v1171
      %v1185 = vadd.f32 %v1126, %v1174
      %v1186 = vadd.f32 %v1131, %v1179
      %1187 = vmatprep.subr.bf16.mxu0 0
      %1188 = vmatpush1.bf16.msra.mxu0 0
      %1189 = vmatprep.subr.bf16.mxu0 0
      %1190 = vmatpush1.bf16.msra.mxu0 0
      %1191 = vmatprep.subr.bf16.mxu0 0
      %1192 = vmatpush1.bf16.msra.mxu0 0
      %1193 = vmatprep.subr.bf16.mxu0 0
      %1194 = vmatpush1.bf16.msra.mxu0 0
      %1195 = vmatprep.subr.bf16.mxu0 0
      %1196 = vmatpush1.bf16.msra.mxu0 %v883
      %1197 = vmatprep.subr.bf16.mxu0 0
      %1198 = vmatpush1.bf16.msra.mxu0 %v882
      %1199 = vmatprep.subr.bf16.mxu0 0
      %1200 = vmatpush1.bf16.msra.mxu0 %v881
      %1201 = vmatprep.subr.bf16.mxu0 0
      %1202 = vmatpush1.bf16.msra.mxu0 %v880
      %1203 = vmatprep.subr.bf16.mxu0 0
      %1204 = vmatpush2.bf16.msra.mxu0 0
      %1205 = vmatprep.subr.bf16.mxu0 0
      %1206 = vmatpush2.bf16.msra.mxu0 0
      %1207 = vmatprep.subr.bf16.mxu0 0
      %1208 = vmatpush2.bf16.msra.mxu0 0
      %1209 = vmatprep.subr.bf16.mxu0 0
      %1210 = vmatpush2.bf16.msra.mxu0 0
      %1211 = vmatprep.subr.bf16.mxu0 0
      %1212 = vmatpush2.bf16.msra.mxu0 0
      %1213 = vmatprep.subr.bf16.mxu0 0
      %1214 = vmatpush2.bf16.msra.mxu0 0
      %1215 = vmatprep.subr.bf16.mxu0 0
      %1216 = vmatpush2.bf16.msra.mxu0 0
      %1217 = vmatprep.subr.bf16.mxu0 0
      %1218 = vmatpush2.bf16.msra.mxu0 0
      %1219 = vmatprep.mubr.bf16.mxu0 0
      %1220 = vmatmul.mubr.bf16.gmra.mxu0 %v984
      %v1221 = vpop.f32.mrf.mxu0
      %v1222 = vadd.f32 0.0, %v1221
      %v1223 = vpop.f32.mrf.mxu0
      %v1224 = vpop.f32.mrf.mxu0
      %v1225 = vadd.f32 0.0, %v1224
      %v1226 = vpop.f32.mrf.mxu0
      %1227 = vmatprep.mubr.bf16.mxu0 0
      %1228 = vmatmul.mubr.bf16.gmra.mxu0 %v987
      %v1229 = vpop.f32.mrf.mxu0
      %v1230 = vadd.f32 0.0, %v1229
      %v1231 = vpop.f32.mrf.mxu0
      %v1232 = vpop.f32.mrf.mxu0
      %v1233 = vpop.f32.mrf.mxu0
      %1234 = vdwg.mxu0
      %v1235 = vadd.f32 %v1184, %v1222
      %v1236 = vadd.f32 %v1185, %v1225
      %v1237 = vadd.f32 %v1186, %v1230
      %v1238 = vld [vmem:[#allocation3 + $0x2] sm:$0xff]
      %v1239 = vld [vmem:[#allocation3 + $0xa] sm:$0xff]
      %v1240 = vld [vmem:[#allocation3 + $0x12] sm:$0x3]
      %v1241 = vpack.c.bf16 %v1239, %v1238
      %v1242 = vpack.c.bf16 %v1240, %v1240
      %v1244 = vsel %vm460, %v1241, 0
      %v1247 = vsel %vm460, %v1242, 0
      %1249 = vmatprep.subr.bf16.mxu0 0
      %1250 = vmatpush1.bf16.msra.mxu0 0
      %1251 = vmatprep.subr.bf16.mxu0 0
      %1252 = vmatpush1.bf16.msra.mxu0 0
      %1253 = vmatprep.subr.bf16.mxu0 0
      %1254 = vmatpush1.bf16.msra.mxu0 0
      %1255 = vmatprep.subr.bf16.mxu0 0
      %1256 = vmatpush1.bf16.msra.mxu0 0
      %1257 = vmatprep.subr.bf16.mxu0 0
      %1258 = vmatpush1.bf16.msra.mxu0 %v978
      %1259 = vmatprep.subr.bf16.mxu0 0
      %1260 = vmatpush1.bf16.msra.mxu0 %v977
      %1261 = vmatprep.subr.bf16.mxu0 0
      %1262 = vmatpush1.bf16.msra.mxu0 %v976
      %1263 = vmatprep.subr.bf16.mxu0 0
      %1264 = vmatpush1.bf16.msra.mxu0 %v975
      %1265 = vmatprep.subr.bf16.mxu0 0
      %1266 = vmatpush2.bf16.msra.mxu0 0
      %1267 = vmatprep.subr.bf16.mxu0 0
      %1268 = vmatpush2.bf16.msra.mxu0 0
      %1269 = vmatprep.subr.bf16.mxu0 0
      %1270 = vmatpush2.bf16.msra.mxu0 0
      %1271 = vmatprep.subr.bf16.mxu0 0
      %1272 = vmatpush2.bf16.msra.mxu0 0
      %1273 = vmatprep.subr.bf16.mxu0 0
      %1274 = vmatpush2.bf16.msra.mxu0 0
      %1275 = vmatprep.subr.bf16.mxu0 0
      %1276 = vmatpush2.bf16.msra.mxu0 0
      %1277 = vmatprep.subr.bf16.mxu0 0
      %1278 = vmatpush2.bf16.msra.mxu0 0
      %1279 = vmatprep.subr.bf16.mxu0 0
      %1280 = vmatpush2.bf16.msra.mxu0 0
      %1281 = vmatprep.mubr.bf16.mxu0 0
      %1282 = vmatmul.mubr.bf16.gmra.mxu0 %v1244
      %v1283 = vpop.f32.mrf.mxu0
      %v1284 = vadd.f32 0.0, %v1283
      %v1285 = vpop.f32.mrf.mxu0
      %v1286 = vpop.f32.mrf.mxu0
      %v1287 = vadd.f32 0.0, %v1286
      %v1288 = vpop.f32.mrf.mxu0
      %1289 = vmatprep.mubr.bf16.mxu0 0
      %1290 = vmatmul.mubr.bf16.gmra.mxu0 %v1247
      %v1291 = vpop.f32.mrf.mxu0
      %v1292 = vadd.f32 0.0, %v1291
      %v1293 = vpop.f32.mrf.mxu0
      %v1294 = vpop.f32.mrf.mxu0
      %v1295 = vpop.f32.mrf.mxu0
      %1296 = vdwg.mxu0
      %v1297 = vadd.f32 %v1235, %v1284
      %v1298 = vadd.f32 %v1236, %v1287
      %v1299 = vadd.f32 %v1237, %v1292
      %v1300 = vld [vmem:[%s3] sm:$0x1]
      %v1301 = vlaneseq
      %v1302 = vshrl.u32 %v1301, 7
      %v1303 = vsub.s32 0, %v1302
      %v1304 = vrot.slane %v1300, %v1303
      %v1305 = vmul.f32 %v1037, %v1304
      %v1306 = vmul.f32 %v1038, %v1304
      %v1307 = vmul.f32 %v1039, %v1304
      %v1308 = vld [vmem:[%s3 + $0x1] sm:$0x1]
      %v1309 = vlaneseq
      %v1310 = vshrl.u32 %v1309, 7
      %v1311 = vsub.s32 0, %v1310
      %v1312 = vrot.slane %v1308, %v1311
      %v1313 = vadd.f32 %v1305, %v1312
      %v1314 = vadd.f32 %v1306, %v1312
      %v1315 = vadd.f32 %v1307, %v1312
      %v1316 = vmax.f32 %v1313, 0.0
      %v1317 = vmax.f32 %v1314, 0.0
      %v1318 = vmax.f32 %v1315, 0.0
      %v1319 = vmul.f32 %v1297, %v1304
      %v1320 = vmul.f32 %v1298, %v1304
      %v1321 = vmul.f32 %v1299, %v1304
      %v1322 = vadd.f32 %v1319, %v1312
      %v1323 = vadd.f32 %v1320, %v1312
      %v1324 = vadd.f32 %v1321, %v1312
      %v1325 = vmax.f32 %v1322, 0.0
      %v1326 = vmax.f32 %v1323, 0.0
      %v1327 = vmax.f32 %v1324, 0.0
      %1328 = vst [vmem:[#allocation4 + $0x1] sm:$0xff] %v1316
      %1329 = vst [vmem:[#allocation5 + $0x1] sm:$0xff] %v1325
      %1330 = vst [vmem:[#allocation4 + $0x9] sm:$0xfc] %v1317
      %1331 = vst [vmem:[#allocation4 + $0x11] sm:$0x3] %v1318
      %1332 = vst [vmem:[#allocation5 + $0x9] sm:$0xfc] %v1326
      %1333 = vst [vmem:[#allocation5 + $0x11] sm:$0x3] %v1327
      %v1334 = vld [vmem:[#allocation4] sm:$0xff]
      %v1335 = vld [vmem:[#allocation4 + $0x8] sm:$0xff]
      %v1336 = vld [vmem:[#allocation4 + $0x10] sm:$0x3]
      %v1337 = vpack.c.bf16 %v1335, %v1334
      %v1338 = vpack.c.bf16 %v1336, %v1336
      %v1339 = vld [vmem:[%s7] sm:$0xf]
      %v1340 = vld [vmem:[%s7 + $0x4] sm:$0xf]
      %v1341 = vld [vmem:[%s7 + $0x8] sm:$0xf]
      %v1342 = vld [vmem:[%s7 + $0xc] sm:$0xf]
      %v1343 = vld [vmem:[%s7 + $0x10] sm:$0xf]
      %v1344 = vld [vmem:[%s7 + $0x14] sm:$0xf]
      %v1345 = vld [vmem:[%s7 + $0x18] sm:$0xf]
      %v1346 = vld [vmem:[%s7 + $0x1c] sm:$0xf]
      %v1347 = vld [vmem:[%s7 + $0x20] sm:$0xf]
      %v1348 = vld [vmem:[%s7 + $0x24] sm:$0xf]
      %v1349 = vld [vmem:[%s7 + $0x28] sm:$0xf]
      %v1350 = vld [vmem:[%s7 + $0x2c] sm:$0xf]
      %v1351 = vld [vmem:[%s7 + $0x30] sm:$0xf]
      %v1352 = vld [vmem:[%s7 + $0x34] sm:$0xf]
      %v1353 = vld [vmem:[%s7 + $0x38] sm:$0xf]
      %v1354 = vld [vmem:[%s7 + $0x3c] sm:$0xf]
      %v1355 = vld [vmem:[#allocation5] sm:$0xff]
      %v1356 = vld [vmem:[#allocation5 + $0x8] sm:$0xff]
      %v1357 = vld [vmem:[#allocation5 + $0x10] sm:$0x3]
      %v1358 = vpack.c.bf16 %v1356, %v1355
      %v1359 = vpack.c.bf16 %v1357, %v1357
      %s1360 = scalar_lea.vmem %s7, 64
      %v1361 = vld [vmem:[%s1360] sm:$0xf]
      %v1362 = vld [vmem:[%s1360 + $0x4] sm:$0xf]
      %v1363 = vld [vmem:[%s1360 + $0x8] sm:$0xf]
      %v1364 = vld [vmem:[%s1360 + $0xc] sm:$0xf]
      %v1365 = vld [vmem:[%s1360 + $0x10] sm:$0xf]
      %v1366 = vld [vmem:[%s1360 + $0x14] sm:$0xf]
      %v1367 = vld [vmem:[%s1360 + $0x18] sm:$0xf]
      %v1368 = vld [vmem:[%s1360 + $0x1c] sm:$0xf]
      %v1369 = vld [vmem:[%s1360 + $0x20] sm:$0xf]
      %v1370 = vld [vmem:[%s1360 + $0x24] sm:$0xf]
      %v1371 = vld [vmem:[%s1360 + $0x28] sm:$0xf]
      %v1372 = vld [vmem:[%s1360 + $0x2c] sm:$0xf]
      %v1373 = vld [vmem:[%s1360 + $0x30] sm:$0xf]
      %v1374 = vld [vmem:[%s1360 + $0x34] sm:$0xf]
      %v1375 = vld [vmem:[%s1360 + $0x38] sm:$0xf]
      %v1376 = vld [vmem:[%s1360 + $0x3c] sm:$0xf]
      %v1393 = vunpack.c.l.b16 %v1361
      %v1394 = vunpack.c.l.b16 %v1362
      %v1395 = vunpack.c.l.b16 %v1363
      %v1396 = vunpack.c.l.b16 %v1364
      %v1397 = vunpack.c.l.b16 %v1365
      %v1398 = vunpack.c.l.b16 %v1366
      %v1399 = vunpack.c.l.b16 %v1367
      %v1400 = vunpack.c.l.b16 %v1368
      %v1401 = vunpack.c.l.b16 %v1369
      %v1402 = vunpack.c.l.b16 %v1370
      %v1403 = vunpack.c.l.b16 %v1371
      %v1404 = vunpack.c.l.b16 %v1372
      %v1405 = vunpack.c.l.b16 %v1373
      %v1406 = vunpack.c.l.b16 %v1374
      %v1407 = vunpack.c.l.b16 %v1375
      %v1408 = vunpack.c.l.b16 %v1376
      %v1409 = vpack.c.b16 %v1394, %v1393
      %v1410 = vpack.c.b16 %v1396, %v1395
      %v1411 = vpack.c.b16 %v1398, %v1397
      %v1412 = vpack.c.b16 %v1400, %v1399
      %v1413 = vpack.c.b16 %v1402, %v1401
      %v1414 = vpack.c.b16 %v1404, %v1403
      %v1415 = vpack.c.b16 %v1406, %v1405
      %v1416 = vpack.c.b16 %v1408, %v1407
      %1425 = vmatprep.subr.bf16.mxu0 0
      %1426 = vmatpush1.bf16.msra.mxu0 %v1416
      %1427 = vmatprep.subr.bf16.mxu0 0
      %1428 = vmatpush1.bf16.msra.mxu0 %v1415
      %1429 = vmatprep.subr.bf16.mxu0 0
      %1430 = vmatpush1.bf16.msra.mxu0 %v1414
      %1431 = vmatprep.subr.bf16.mxu0 0
      %1432 = vmatpush1.bf16.msra.mxu0 %v1413
      %1433 = vmatprep.subr.bf16.mxu0 0
      %1434 = vmatpush1.bf16.msra.mxu0 %v1412
      %1435 = vmatprep.subr.bf16.mxu0 0
      %1436 = vmatpush1.bf16.msra.mxu0 %v1411
      %1437 = vmatprep.subr.bf16.mxu0 0
      %1438 = vmatpush1.bf16.msra.mxu0 %v1410
      %1439 = vmatprep.subr.bf16.mxu0 0
      %1440 = vmatpush1.bf16.msra.mxu0 %v1409
      %1441 = vmatprep.subr.bf16.mxu0 0
      %1442 = vmatpush2.bf16.msra.mxu0 0
      %1443 = vmatprep.subr.bf16.mxu0 0
      %1444 = vmatpush2.bf16.msra.mxu0 0
      %1445 = vmatprep.subr.bf16.mxu0 0
      %1446 = vmatpush2.bf16.msra.mxu0 0
      %1447 = vmatprep.subr.bf16.mxu0 0
      %1448 = vmatpush2.bf16.msra.mxu0 0
      %1449 = vmatprep.subr.bf16.mxu0 0
      %1450 = vmatpush2.bf16.msra.mxu0 0
      %1451 = vmatprep.subr.bf16.mxu0 0
      %1452 = vmatpush2.bf16.msra.mxu0 0
      %1453 = vmatprep.subr.bf16.mxu0 0
      %1454 = vmatpush2.bf16.msra.mxu0 0
      %1455 = vmatprep.subr.bf16.mxu0 0
      %1456 = vmatpush2.bf16.msra.mxu0 0
      %1457 = vmatprep.mubr.bf16.mxu0 0
      %1458 = vmatmul.mubr.bf16.gmra.mxu0 %v1358
      %v1459 = vpop.f32.mrf.mxu0
      %v1460 = vadd.f32 0.0, %v1459
      %v1461 = vpop.f32.mrf.mxu0
      %v1462 = vpop.f32.mrf.mxu0
      %v1463 = vadd.f32 0.0, %v1462
      %v1464 = vpop.f32.mrf.mxu0
      %1465 = vmatprep.mubr.bf16.mxu0 0
      %1466 = vmatmul.mubr.bf16.gmra.mxu0 %v1359
      %v1467 = vpop.f32.mrf.mxu0
      %v1468 = vadd.f32 0.0, %v1467
      %v1469 = vpop.f32.mrf.mxu0
      %v1470 = vpop.f32.mrf.mxu0
      %v1471 = vpop.f32.mrf.mxu0
      %1472 = vdwg.mxu0
      %v1489 = vunpack.c.l.b16 %v1339
      %v1490 = vunpack.c.l.b16 %v1340
      %v1491 = vunpack.c.l.b16 %v1341
      %v1492 = vunpack.c.l.b16 %v1342
      %v1493 = vunpack.c.l.b16 %v1343
      %v1494 = vunpack.c.l.b16 %v1344
      %v1495 = vunpack.c.l.b16 %v1345
      %v1496 = vunpack.c.l.b16 %v1346
      %v1497 = vunpack.c.l.b16 %v1347
      %v1498 = vunpack.c.l.b16 %v1348
      %v1499 = vunpack.c.l.b16 %v1349
      %v1500 = vunpack.c.l.b16 %v1350
      %v1501 = vunpack.c.l.b16 %v1351
      %v1502 = vunpack.c.l.b16 %v1352
      %v1503 = vunpack.c.l.b16 %v1353
      %v1504 = vunpack.c.l.b16 %v1354
      %v1505 = vpack.c.b16 %v1490, %v1489
      %v1506 = vpack.c.b16 %v1492, %v1491
      %v1507 = vpack.c.b16 %v1494, %v1493
      %v1508 = vpack.c.b16 %v1496, %v1495
      %v1509 = vpack.c.b16 %v1498, %v1497
      %v1510 = vpack.c.b16 %v1500, %v1499
      %v1511 = vpack.c.b16 %v1502, %v1501
      %v1512 = vpack.c.b16 %v1504, %v1503
      %1521 = vmatprep.subr.bf16.mxu0 0
      %1522 = vmatpush1.bf16.msra.mxu0 %v1512
      %1523 = vmatprep.subr.bf16.mxu0 0
      %1524 = vmatpush1.bf16.msra.mxu0 %v1511
      %1525 = vmatprep.subr.bf16.mxu0 0
      %1526 = vmatpush1.bf16.msra.mxu0 %v1510
      %1527 = vmatprep.subr.bf16.mxu0 0
      %1528 = vmatpush1.bf16.msra.mxu0 %v1509
      %1529 = vmatprep.subr.bf16.mxu0 0
      %1530 = vmatpush1.bf16.msra.mxu0 %v1508
      %1531 = vmatprep.subr.bf16.mxu0 0
      %1532 = vmatpush1.bf16.msra.mxu0 %v1507
      %1533 = vmatprep.subr.bf16.mxu0 0
      %1534 = vmatpush1.bf16.msra.mxu0 %v1506
      %1535 = vmatprep.subr.bf16.mxu0 0
      %1536 = vmatpush1.bf16.msra.mxu0 %v1505
      %1537 = vmatprep.subr.bf16.mxu0 0
      %1538 = vmatpush2.bf16.msra.mxu0 0
      %1539 = vmatprep.subr.bf16.mxu0 0
      %1540 = vmatpush2.bf16.msra.mxu0 0
      %1541 = vmatprep.subr.bf16.mxu0 0
      %1542 = vmatpush2.bf16.msra.mxu0 0
      %1543 = vmatprep.subr.bf16.mxu0 0
      %1544 = vmatpush2.bf16.msra.mxu0 0
      %1545 = vmatprep.subr.bf16.mxu0 0
      %1546 = vmatpush2.bf16.msra.mxu0 0
      %1547 = vmatprep.subr.bf16.mxu0 0
      %1548 = vmatpush2.bf16.msra.mxu0 0
      %1549 = vmatprep.subr.bf16.mxu0 0
      %1550 = vmatpush2.bf16.msra.mxu0 0
      %1551 = vmatprep.subr.bf16.mxu0 0
      %1552 = vmatpush2.bf16.msra.mxu0 0
      %1553 = vmatprep.mubr.bf16.mxu0 0
      %1554 = vmatmul.mubr.bf16.gmra.mxu0 %v1337
      %v1555 = vpop.f32.mrf.mxu0
      %v1556 = vadd.f32 %v1460, %v1555
      %v1557 = vpop.f32.mrf.mxu0
      %v1558 = vpop.f32.mrf.mxu0
      %v1559 = vadd.f32 %v1463, %v1558
      %v1560 = vpop.f32.mrf.mxu0
      %1561 = vmatprep.mubr.bf16.mxu0 0
      %1562 = vmatmul.mubr.bf16.gmra.mxu0 %v1338
      %v1563 = vpop.f32.mrf.mxu0
      %v1564 = vadd.f32 %v1468, %v1563
      %v1565 = vpop.f32.mrf.mxu0
      %v1566 = vpop.f32.mrf.mxu0
      %v1567 = vpop.f32.mrf.mxu0
      %1568 = vdwg.mxu0
      %v1569 = vld [vmem:[#allocation4 + $0x1] sm:$0xff]
      %v1570 = vld [vmem:[#allocation4 + $0x9] sm:$0xff]
      %v1571 = vld [vmem:[#allocation4 + $0x11] sm:$0x3]
      %v1572 = vpack.c.bf16 %v1570, %v1569
      %v1573 = vpack.c.bf16 %v1571, %v1571
      %s1574 = scalar_lea.vmem %s7, 128
      %v1575 = vld [vmem:[%s1574] sm:$0xf]
      %v1576 = vld [vmem:[%s1574 + $0x4] sm:$0xf]
      %v1577 = vld [vmem:[%s1574 + $0x8] sm:$0xf]
      %v1578 = vld [vmem:[%s1574 + $0xc] sm:$0xf]
      %v1579 = vld [vmem:[%s1574 + $0x10] sm:$0xf]
      %v1580 = vld [vmem:[%s1574 + $0x14] sm:$0xf]
      %v1581 = vld [vmem:[%s1574 + $0x18] sm:$0xf]
      %v1582 = vld [vmem:[%s1574 + $0x1c] sm:$0xf]
      %v1583 = vld [vmem:[%s1574 + $0x20] sm:$0xf]
      %v1584 = vld [vmem:[%s1574 + $0x24] sm:$0xf]
      %v1585 = vld [vmem:[%s1574 + $0x28] sm:$0xf]
      %v1586 = vld [vmem:[%s1574 + $0x2c] sm:$0xf]
      %v1587 = vld [vmem:[%s1574 + $0x30] sm:$0xf]
      %v1588 = vld [vmem:[%s1574 + $0x34] sm:$0xf]
      %v1589 = vld [vmem:[%s1574 + $0x38] sm:$0xf]
      %v1590 = vld [vmem:[%s1574 + $0x3c] sm:$0xf]
      %v1607 = vunpack.c.l.b16 %v1575
      %v1608 = vunpack.c.l.b16 %v1576
      %v1609 = vunpack.c.l.b16 %v1577
      %v1610 = vunpack.c.l.b16 %v1578
      %v1611 = vunpack.c.l.b16 %v1579
      %v1612 = vunpack.c.l.b16 %v1580
      %v1613 = vunpack.c.l.b16 %v1581
      %v1614 = vunpack.c.l.b16 %v1582
      %v1615 = vunpack.c.l.b16 %v1583
      %v1616 = vunpack.c.l.b16 %v1584
      %v1617 = vunpack.c.l.b16 %v1585
      %v1618 = vunpack.c.l.b16 %v1586
      %v1619 = vunpack.c.l.b16 %v1587
      %v1620 = vunpack.c.l.b16 %v1588
      %v1621 = vunpack.c.l.b16 %v1589
      %v1622 = vunpack.c.l.b16 %v1590
      %v1623 = vpack.c.b16 %v1608, %v1607
      %v1624 = vpack.c.b16 %v1610, %v1609
      %v1625 = vpack.c.b16 %v1612, %v1611
      %v1626 = vpack.c.b16 %v1614, %v1613
      %v1627 = vpack.c.b16 %v1616, %v1615
      %v1628 = vpack.c.b16 %v1618, %v1617
      %v1629 = vpack.c.b16 %v1620, %v1619
      %v1630 = vpack.c.b16 %v1622, %v1621
      %1639 = vmatprep.subr.bf16.mxu0 0
      %1640 = vmatpush1.bf16.msra.mxu0 %v1630
      %1641 = vmatprep.subr.bf16.mxu0 0
      %1642 = vmatpush1.bf16.msra.mxu0 %v1629
      %1643 = vmatprep.subr.bf16.mxu0 0
      %1644 = vmatpush1.bf16.msra.mxu0 %v1628
      %1645 = vmatprep.subr.bf16.mxu0 0
      %1646 = vmatpush1.bf16.msra.mxu0 %v1627
      %1647 = vmatprep.subr.bf16.mxu0 0
      %1648 = vmatpush1.bf16.msra.mxu0 %v1626
      %1649 = vmatprep.subr.bf16.mxu0 0
      %1650 = vmatpush1.bf16.msra.mxu0 %v1625
      %1651 = vmatprep.subr.bf16.mxu0 0
      %1652 = vmatpush1.bf16.msra.mxu0 %v1624
      %1653 = vmatprep.subr.bf16.mxu0 0
      %1654 = vmatpush1.bf16.msra.mxu0 %v1623
      %1655 = vmatprep.subr.bf16.mxu0 0
      %1656 = vmatpush2.bf16.msra.mxu0 0
      %1657 = vmatprep.subr.bf16.mxu0 0
      %1658 = vmatpush2.bf16.msra.mxu0 0
      %1659 = vmatprep.subr.bf16.mxu0 0
      %1660 = vmatpush2.bf16.msra.mxu0 0
      %1661 = vmatprep.subr.bf16.mxu0 0
      %1662 = vmatpush2.bf16.msra.mxu0 0
      %1663 = vmatprep.subr.bf16.mxu0 0
      %1664 = vmatpush2.bf16.msra.mxu0 0
      %1665 = vmatprep.subr.bf16.mxu0 0
      %1666 = vmatpush2.bf16.msra.mxu0 0
      %1667 = vmatprep.subr.bf16.mxu0 0
      %1668 = vmatpush2.bf16.msra.mxu0 0
      %1669 = vmatprep.subr.bf16.mxu0 0
      %1670 = vmatpush2.bf16.msra.mxu0 0
      %1671 = vmatprep.mubr.bf16.mxu0 0
      %1672 = vmatmul.mubr.bf16.gmra.mxu0 %v1572
      %v1673 = vpop.f32.mrf.mxu0
      %v1674 = vadd.f32 0.0, %v1673
      %v1675 = vpop.f32.mrf.mxu0
      %v1676 = vpop.f32.mrf.mxu0
      %v1677 = vadd.f32 0.0, %v1676
      %v1678 = vpop.f32.mrf.mxu0
      %1679 = vmatprep.mubr.bf16.mxu0 0
      %1680 = vmatmul.mubr.bf16.gmra.mxu0 %v1573
      %v1681 = vpop.f32.mrf.mxu0
      %v1682 = vadd.f32 0.0, %v1681
      %v1683 = vpop.f32.mrf.mxu0
      %v1684 = vpop.f32.mrf.mxu0
      %v1685 = vpop.f32.mrf.mxu0
      %1686 = vdwg.mxu0
      %v1687 = vadd.f32 %v1556, %v1674
      %v1688 = vadd.f32 %v1559, %v1677
      %v1689 = vadd.f32 %v1564, %v1682
      %v1690 = vld [vmem:[#allocation5 + $0x1] sm:$0xff]
      %v1691 = vld [vmem:[#allocation5 + $0x9] sm:$0xff]
      %v1692 = vld [vmem:[#allocation5 + $0x11] sm:$0x3]
      %v1693 = vpack.c.bf16 %v1691, %v1690
      %v1694 = vpack.c.bf16 %v1692, %v1692
      %s1695 = scalar_lea.vmem %s7, 192
      %v1696 = vld [vmem:[%s1695] sm:$0xf]
      %v1697 = vld [vmem:[%s1695 + $0x4] sm:$0xf]
      %v1698 = vld [vmem:[%s1695 + $0x8] sm:$0xf]
      %v1699 = vld [vmem:[%s1695 + $0xc] sm:$0xf]
      %v1700 = vld [vmem:[%s1695 + $0x10] sm:$0xf]
      %v1701 = vld [vmem:[%s1695 + $0x14] sm:$0xf]
      %v1702 = vld [vmem:[%s1695 + $0x18] sm:$0xf]
      %v1703 = vld [vmem:[%s1695 + $0x1c] sm:$0xf]
      %v1704 = vld [vmem:[%s1695 + $0x20] sm:$0xf]
      %v1705 = vld [vmem:[%s1695 + $0x24] sm:$0xf]
      %v1706 = vld [vmem:[%s1695 + $0x28] sm:$0xf]
      %v1707 = vld [vmem:[%s1695 + $0x2c] sm:$0xf]
      %v1708 = vld [vmem:[%s1695 + $0x30] sm:$0xf]
      %v1709 = vld [vmem:[%s1695 + $0x34] sm:$0xf]
      %v1710 = vld [vmem:[%s1695 + $0x38] sm:$0xf]
      %v1711 = vld [vmem:[%s1695 + $0x3c] sm:$0xf]
      %v1728 = vunpack.c.l.b16 %v1696
      %v1729 = vunpack.c.l.b16 %v1697
      %v1730 = vunpack.c.l.b16 %v1698
      %v1731 = vunpack.c.l.b16 %v1699
      %v1732 = vunpack.c.l.b16 %v1700
      %v1733 = vunpack.c.l.b16 %v1701
      %v1734 = vunpack.c.l.b16 %v1702
      %v1735 = vunpack.c.l.b16 %v1703
      %v1736 = vunpack.c.l.b16 %v1704
      %v1737 = vunpack.c.l.b16 %v1705
      %v1738 = vunpack.c.l.b16 %v1706
      %v1739 = vunpack.c.l.b16 %v1707
      %v1740 = vunpack.c.l.b16 %v1708
      %v1741 = vunpack.c.l.b16 %v1709
      %v1742 = vunpack.c.l.b16 %v1710
      %v1743 = vunpack.c.l.b16 %v1711
      %v1744 = vpack.c.b16 %v1729, %v1728
      %v1745 = vpack.c.b16 %v1731, %v1730
      %v1746 = vpack.c.b16 %v1733, %v1732
      %v1747 = vpack.c.b16 %v1735, %v1734
      %v1748 = vpack.c.b16 %v1737, %v1736
      %v1749 = vpack.c.b16 %v1739, %v1738
      %v1750 = vpack.c.b16 %v1741, %v1740
      %v1751 = vpack.c.b16 %v1743, %v1742
      %1760 = vmatprep.subr.bf16.mxu0 0
      %1761 = vmatpush1.bf16.msra.mxu0 %v1751
      %1762 = vmatprep.subr.bf16.mxu0 0
      %1763 = vmatpush1.bf16.msra.mxu0 %v1750
      %1764 = vmatprep.subr.bf16.mxu0 0
      %1765 = vmatpush1.bf16.msra.mxu0 %v1749
      %1766 = vmatprep.subr.bf16.mxu0 0
      %1767 = vmatpush1.bf16.msra.mxu0 %v1748
      %1768 = vmatprep.subr.bf16.mxu0 0
      %1769 = vmatpush1.bf16.msra.mxu0 %v1747
      %1770 = vmatprep.subr.bf16.mxu0 0
      %1771 = vmatpush1.bf16.msra.mxu0 %v1746
      %1772 = vmatprep.subr.bf16.mxu0 0
      %1773 = vmatpush1.bf16.msra.mxu0 %v1745
      %1774 = vmatprep.subr.bf16.mxu0 0
      %1775 = vmatpush1.bf16.msra.mxu0 %v1744
      %1776 = vmatprep.subr.bf16.mxu0 0
      %1777 = vmatpush2.bf16.msra.mxu0 0
      %1778 = vmatprep.subr.bf16.mxu0 0
      %1779 = vmatpush2.bf16.msra.mxu0 0
      %1780 = vmatprep.subr.bf16.mxu0 0
      %1781 = vmatpush2.bf16.msra.mxu0 0
      %1782 = vmatprep.subr.bf16.mxu0 0
      %1783 = vmatpush2.bf16.msra.mxu0 0
      %1784 = vmatprep.subr.bf16.mxu0 0
      %1785 = vmatpush2.bf16.msra.mxu0 0
      %1786 = vmatprep.subr.bf16.mxu0 0
      %1787 = vmatpush2.bf16.msra.mxu0 0
      %1788 = vmatprep.subr.bf16.mxu0 0
      %1789 = vmatpush2.bf16.msra.mxu0 0
      %1790 = vmatprep.subr.bf16.mxu0 0
      %1791 = vmatpush2.bf16.msra.mxu0 0
      %1792 = vmatprep.mubr.bf16.mxu0 0
      %1793 = vmatmul.mubr.bf16.gmra.mxu0 %v1693
      %v1794 = vpop.f32.mrf.mxu0
      %v1795 = vadd.f32 0.0, %v1794
      %v1796 = vpop.f32.mrf.mxu0
      %v1797 = vpop.f32.mrf.mxu0
      %v1798 = vadd.f32 0.0, %v1797
      %v1799 = vpop.f32.mrf.mxu0
      %1800 = vmatprep.mubr.bf16.mxu0 0
      %1801 = vmatmul.mubr.bf16.gmra.mxu0 %v1694
      %v1802 = vpop.f32.mrf.mxu0
      %v1803 = vadd.f32 0.0, %v1802
      %v1804 = vpop.f32.mrf.mxu0
      %v1805 = vpop.f32.mrf.mxu0
      %v1806 = vpop.f32.mrf.mxu0
      %1807 = vdwg.mxu0
      %v1808 = vadd.f32 %v1687, %v1795
      %v1809 = vadd.f32 %v1688, %v1798
      %v1810 = vadd.f32 %v1689, %v1803
      %v1811 = vld [vmem:[#allocation4 + $0x2] sm:$0xff]
      %v1812 = vld [vmem:[#allocation4 + $0xa] sm:$0xff]
      %v1813 = vld [vmem:[#allocation4 + $0x12] sm:$0x3]
      %v1814 = vpack.c.bf16 %v1812, %v1811
      %v1815 = vpack.c.bf16 %v1813, %v1813
      %s1816 = scalar_lea.vmem %s7, 256
      %v1817 = vld [vmem:[%s1816] sm:$0xf]
      %v1818 = vld [vmem:[%s1816 + $0x4] sm:$0xf]
      %v1819 = vld [vmem:[%s1816 + $0x8] sm:$0xf]
      %v1820 = vld [vmem:[%s1816 + $0xc] sm:$0xf]
      %v1821 = vld [vmem:[%s1816 + $0x10] sm:$0xf]
      %v1822 = vld [vmem:[%s1816 + $0x14] sm:$0xf]
      %v1823 = vld [vmem:[%s1816 + $0x18] sm:$0xf]
      %v1824 = vld [vmem:[%s1816 + $0x1c] sm:$0xf]
      %v1825 = vld [vmem:[%s1816 + $0x20] sm:$0xf]
      %v1826 = vld [vmem:[%s1816 + $0x24] sm:$0xf]
      %v1827 = vld [vmem:[%s1816 + $0x28] sm:$0xf]
      %v1828 = vld [vmem:[%s1816 + $0x2c] sm:$0xf]
      %v1829 = vld [vmem:[%s1816 + $0x30] sm:$0xf]
      %v1830 = vld [vmem:[%s1816 + $0x34] sm:$0xf]
      %v1831 = vld [vmem:[%s1816 + $0x38] sm:$0xf]
      %v1832 = vld [vmem:[%s1816 + $0x3c] sm:$0xf]
      %v1849 = vunpack.c.l.b16 %v1817
      %v1850 = vunpack.c.l.b16 %v1818
      %v1851 = vunpack.c.l.b16 %v1819
      %v1852 = vunpack.c.l.b16 %v1820
      %v1853 = vunpack.c.l.b16 %v1821
      %v1854 = vunpack.c.l.b16 %v1822
      %v1855 = vunpack.c.l.b16 %v1823
      %v1856 = vunpack.c.l.b16 %v1824
      %v1857 = vunpack.c.l.b16 %v1825
      %v1858 = vunpack.c.l.b16 %v1826
      %v1859 = vunpack.c.l.b16 %v1827
      %v1860 = vunpack.c.l.b16 %v1828
      %v1861 = vunpack.c.l.b16 %v1829
      %v1862 = vunpack.c.l.b16 %v1830
      %v1863 = vunpack.c.l.b16 %v1831
      %v1864 = vunpack.c.l.b16 %v1832
      %v1865 = vpack.c.b16 %v1850, %v1849
      %v1866 = vpack.c.b16 %v1852, %v1851
      %v1867 = vpack.c.b16 %v1854, %v1853
      %v1868 = vpack.c.b16 %v1856, %v1855
      %v1869 = vpack.c.b16 %v1858, %v1857
      %v1870 = vpack.c.b16 %v1860, %v1859
      %v1871 = vpack.c.b16 %v1862, %v1861
      %v1872 = vpack.c.b16 %v1864, %v1863
      %1881 = vmatprep.subr.bf16.mxu0 0
      %1882 = vmatpush1.bf16.msra.mxu0 %v1872
      %1883 = vmatprep.subr.bf16.mxu0 0
      %1884 = vmatpush1.bf16.msra.mxu0 %v1871
      %1885 = vmatprep.subr.bf16.mxu0 0
      %1886 = vmatpush1.bf16.msra.mxu0 %v1870
      %1887 = vmatprep.subr.bf16.mxu0 0
      %1888 = vmatpush1.bf16.msra.mxu0 %v1869
      %1889 = vmatprep.subr.bf16.mxu0 0
      %1890 = vmatpush1.bf16.msra.mxu0 %v1868
      %1891 = vmatprep.subr.bf16.mxu0 0
      %1892 = vmatpush1.bf16.msra.mxu0 %v1867
      %1893 = vmatprep.subr.bf16.mxu0 0
      %1894 = vmatpush1.bf16.msra.mxu0 %v1866
      %1895 = vmatprep.subr.bf16.mxu0 0
      %1896 = vmatpush1.bf16.msra.mxu0 %v1865
      %1897 = vmatprep.subr.bf16.mxu0 0
      %1898 = vmatpush2.bf16.msra.mxu0 0
      %1899 = vmatprep.subr.bf16.mxu0 0
      %1900 = vmatpush2.bf16.msra.mxu0 0
      %1901 = vmatprep.subr.bf16.mxu0 0
      %1902 = vmatpush2.bf16.msra.mxu0 0
      %1903 = vmatprep.subr.bf16.mxu0 0
      %1904 = vmatpush2.bf16.msra.mxu0 0
      %1905 = vmatprep.subr.bf16.mxu0 0
      %1906 = vmatpush2.bf16.msra.mxu0 0
      %1907 = vmatprep.subr.bf16.mxu0 0
      %1908 = vmatpush2.bf16.msra.mxu0 0
      %1909 = vmatprep.subr.bf16.mxu0 0
      %1910 = vmatpush2.bf16.msra.mxu0 0
      %1911 = vmatprep.subr.bf16.mxu0 0
      %1912 = vmatpush2.bf16.msra.mxu0 0
      %1913 = vmatprep.mubr.bf16.mxu0 0
      %1914 = vmatmul.mubr.bf16.gmra.mxu0 %v1814
      %v1915 = vpop.f32.mrf.mxu0
      %v1916 = vadd.f32 0.0, %v1915
      %v1917 = vpop.f32.mrf.mxu0
      %v1918 = vpop.f32.mrf.mxu0
      %v1919 = vadd.f32 0.0, %v1918
      %v1920 = vpop.f32.mrf.mxu0
      %1921 = vmatprep.mubr.bf16.mxu0 0
      %1922 = vmatmul.mubr.bf16.gmra.mxu0 %v1815
      %v1923 = vpop.f32.mrf.mxu0
      %v1924 = vadd.f32 0.0, %v1923
      %v1925 = vpop.f32.mrf.mxu0
      %v1926 = vpop.f32.mrf.mxu0
      %v1927 = vpop.f32.mrf.mxu0
      %1928 = vdwg.mxu0
      %v1929 = vadd.f32 %v1808, %v1916
      %v1930 = vadd.f32 %v1809, %v1919
      %v1931 = vadd.f32 %v1810, %v1924
      %v1932 = vld [vmem:[%s449] sm:$0xf]
      %v1933 = vld [vmem:[%s449 + $0x4] sm:$0xf]
      %v1934 = vld [vmem:[%s449 + $0x8] sm:$0x1]
      %v1935 = vld [vmem:[%s8] sm:$0xf]
      %v1936 = vld [vmem:[%s8 + $0x4] sm:$0xf]
      %v1937 = vld [vmem:[%s8 + $0x8] sm:$0xf]
      %v1938 = vld [vmem:[%s8 + $0xc] sm:$0xf]
      %v1939 = vld [vmem:[%s8 + $0x10] sm:$0xf]
      %v1940 = vld [vmem:[%s8 + $0x14] sm:$0xf]
      %v1941 = vld [vmem:[%s8 + $0x18] sm:$0xf]
      %v1942 = vld [vmem:[%s8 + $0x1c] sm:$0xf]
      %v1943 = vld [vmem:[%s454] sm:$0xf]
      %v1944 = vld [vmem:[%s454 + $0x4] sm:$0xf]
      %v1945 = vld [vmem:[%s454 + $0x8] sm:$0x1]
      %s1946 = scalar_lea.vmem %s8, 32
      %v1947 = vld [vmem:[%s1946] sm:$0xf]
      %v1948 = vld [vmem:[%s1946 + $0x4] sm:$0xf]
      %v1949 = vld [vmem:[%s1946 + $0x8] sm:$0xf]
      %v1950 = vld [vmem:[%s1946 + $0xc] sm:$0xf]
      %v1951 = vld [vmem:[%s1946 + $0x10] sm:$0xf]
      %v1952 = vld [vmem:[%s1946 + $0x14] sm:$0xf]
      %v1953 = vld [vmem:[%s1946 + $0x18] sm:$0xf]
      %v1954 = vld [vmem:[%s1946 + $0x1c] sm:$0xf]
      %v1958 = vunpack.c.l.b16 %v1943
      %v1959 = vunpack.c.l.b16 %v1944
      %v1960 = vunpack.c.l.b16 %v1945
      %v1961 = vpack.c.b16 %v1959, %v1958
      %v1962 = vpack.c.b16 %v1960, %v1960
      %v1971 = vunpack.c.l.b16 %v1947
      %v1972 = vunpack.c.l.b16 %v1948
      %v1973 = vunpack.c.l.b16 %v1949
      %v1974 = vunpack.c.l.b16 %v1950
      %v1975 = vunpack.c.l.b16 %v1951
      %v1976 = vunpack.c.l.b16 %v1952
      %v1977 = vunpack.c.l.b16 %v1953
      %v1978 = vunpack.c.l.b16 %v1954
      %v1979 = vpack.c.b16 %v1972, %v1971
      %v1980 = vpack.c.b16 %v1974, %v1973
      %v1981 = vpack.c.b16 %v1976, %v1975
      %v1982 = vpack.c.b16 %v1978, %v1977
      %v1988 = vsel %vm460, %v1961, 0
      %v1991 = vsel %vm460, %v1962, 0
      %1993 = vmatprep.subr.bf16.mxu0 0
      %1994 = vmatpush1.bf16.msra.mxu0 0
      %1995 = vmatprep.subr.bf16.mxu0 0
      %1996 = vmatpush1.bf16.msra.mxu0 0
      %1997 = vmatprep.subr.bf16.mxu0 0
      %1998 = vmatpush1.bf16.msra.mxu0 0
      %1999 = vmatprep.subr.bf16.mxu0 0
      %2000 = vmatpush1.bf16.msra.mxu0 0
      %2001 = vmatprep.subr.bf16.mxu0 0
      %2002 = vmatpush1.bf16.msra.mxu0 %v1982
      %2003 = vmatprep.subr.bf16.mxu0 0
      %2004 = vmatpush1.bf16.msra.mxu0 %v1981
      %2005 = vmatprep.subr.bf16.mxu0 0
      %2006 = vmatpush1.bf16.msra.mxu0 %v1980
      %2007 = vmatprep.subr.bf16.mxu0 0
      %2008 = vmatpush1.bf16.msra.mxu0 %v1979
      %2009 = vmatprep.subr.bf16.mxu0 0
      %2010 = vmatpush2.bf16.msra.mxu0 0
      %2011 = vmatprep.subr.bf16.mxu0 0
      %2012 = vmatpush2.bf16.msra.mxu0 0
      %2013 = vmatprep.subr.bf16.mxu0 0
      %2014 = vmatpush2.bf16.msra.mxu0 0
      %2015 = vmatprep.subr.bf16.mxu0 0
      %2016 = vmatpush2.bf16.msra.mxu0 0
      %2017 = vmatprep.subr.bf16.mxu0 0
      %2018 = vmatpush2.bf16.msra.mxu0 0
      %2019 = vmatprep.subr.bf16.mxu0 0
      %2020 = vmatpush2.bf16.msra.mxu0 0
      %2021 = vmatprep.subr.bf16.mxu0 0
      %2022 = vmatpush2.bf16.msra.mxu0 0
      %2023 = vmatprep.subr.bf16.mxu0 0
      %2024 = vmatpush2.bf16.msra.mxu0 0
      %2025 = vmatprep.mubr.bf16.mxu0 0
      %2026 = vmatmul.mubr.bf16.gmra.mxu0 %v1988
      %v2027 = vpop.f32.mrf.mxu0
      %v2028 = vadd.f32 0.0, %v2027
      %v2029 = vpop.f32.mrf.mxu0
      %v2030 = vpop.f32.mrf.mxu0
      %v2031 = vadd.f32 0.0, %v2030
      %v2032 = vpop.f32.mrf.mxu0
      %2033 = vmatprep.mubr.bf16.mxu0 0
      %2034 = vmatmul.mubr.bf16.gmra.mxu0 %v1991
      %v2035 = vpop.f32.mrf.mxu0
      %v2036 = vadd.f32 0.0, %v2035
      %v2037 = vpop.f32.mrf.mxu0
      %v2038 = vpop.f32.mrf.mxu0
      %v2039 = vpop.f32.mrf.mxu0
      %2040 = vdwg.mxu0
      %v2044 = vunpack.c.l.b16 %v1932
      %v2045 = vunpack.c.l.b16 %v1933
      %v2046 = vunpack.c.l.b16 %v1934
      %v2047 = vpack.c.b16 %v2045, %v2044
      %v2048 = vpack.c.b16 %v2046, %v2046
      %v2057 = vunpack.c.l.b16 %v1935
      %v2058 = vunpack.c.l.b16 %v1936
      %v2059 = vunpack.c.l.b16 %v1937
      %v2060 = vunpack.c.l.b16 %v1938
      %v2061 = vunpack.c.l.b16 %v1939
      %v2062 = vunpack.c.l.b16 %v1940
      %v2063 = vunpack.c.l.b16 %v1941
      %v2064 = vunpack.c.l.b16 %v1942
      %v2065 = vpack.c.b16 %v2058, %v2057
      %v2066 = vpack.c.b16 %v2060, %v2059
      %v2067 = vpack.c.b16 %v2062, %v2061
      %v2068 = vpack.c.b16 %v2064, %v2063
      %v2074 = vsel %vm460, %v2047, 0
      %v2077 = vsel %vm460, %v2048, 0
      %2079 = vmatprep.subr.bf16.mxu0 0
      %2080 = vmatpush1.bf16.msra.mxu0 0
      %2081 = vmatprep.subr.bf16.mxu0 0
      %2082 = vmatpush1.bf16.msra.mxu0 0
      %2083 = vmatprep.subr.bf16.mxu0 0
      %2084 = vmatpush1.bf16.msra.mxu0 0
      %2085 = vmatprep.subr.bf16.mxu0 0
      %2086 = vmatpush1.bf16.msra.mxu0 0
      %2087 = vmatprep.subr.bf16.mxu0 0
      %2088 = vmatpush1.bf16.msra.mxu0 %v2068
      %2089 = vmatprep.subr.bf16.mxu0 0
      %2090 = vmatpush1.bf16.msra.mxu0 %v2067
      %2091 = vmatprep.subr.bf16.mxu0 0
      %2092 = vmatpush1.bf16.msra.mxu0 %v2066
      %2093 = vmatprep.subr.bf16.mxu0 0
      %2094 = vmatpush1.bf16.msra.mxu0 %v2065
      %2095 = vmatprep.subr.bf16.mxu0 0
      %2096 = vmatpush2.bf16.msra.mxu0 0
      %2097 = vmatprep.subr.bf16.mxu0 0
      %2098 = vmatpush2.bf16.msra.mxu0 0
      %2099 = vmatprep.subr.bf16.mxu0 0
      %2100 = vmatpush2.bf16.msra.mxu0 0
      %2101 = vmatprep.subr.bf16.mxu0 0
      %2102 = vmatpush2.bf16.msra.mxu0 0
      %2103 = vmatprep.subr.bf16.mxu0 0
      %2104 = vmatpush2.bf16.msra.mxu0 0
      %2105 = vmatprep.subr.bf16.mxu0 0
      %2106 = vmatpush2.bf16.msra.mxu0 0
      %2107 = vmatprep.subr.bf16.mxu0 0
      %2108 = vmatpush2.bf16.msra.mxu0 0
      %2109 = vmatprep.subr.bf16.mxu0 0
      %2110 = vmatpush2.bf16.msra.mxu0 0
      %2111 = vmatprep.mubr.bf16.mxu0 0
      %2112 = vmatmul.mubr.bf16.gmra.mxu0 %v2074
      %v2113 = vpop.f32.mrf.mxu0
      %v2114 = vadd.f32 %v2028, %v2113
      %v2115 = vpop.f32.mrf.mxu0
      %v2116 = vpop.f32.mrf.mxu0
      %v2117 = vadd.f32 %v2031, %v2116
      %v2118 = vpop.f32.mrf.mxu0
      %2119 = vmatprep.mubr.bf16.mxu0 0
      %2120 = vmatmul.mubr.bf16.gmra.mxu0 %v2077
      %v2121 = vpop.f32.mrf.mxu0
      %v2122 = vadd.f32 %v2036, %v2121
      %v2123 = vpop.f32.mrf.mxu0
      %v2124 = vpop.f32.mrf.mxu0
      %v2125 = vpop.f32.mrf.mxu0
      %2126 = vdwg.mxu0
      %v2127 = vld [vmem:[%s449 + $0x8] sm:$0x3]
      %s2128 = scalar_lea.vmem %s8, 64
      %v2129 = vld [vmem:[%s2128] sm:$0xf]
      %v2130 = vld [vmem:[%s2128 + $0x4] sm:$0xf]
      %v2131 = vld [vmem:[%s2128 + $0x8] sm:$0xf]
      %v2132 = vld [vmem:[%s2128 + $0xc] sm:$0xf]
      %v2133 = vld [vmem:[%s2128 + $0x10] sm:$0xf]
      %v2134 = vld [vmem:[%s2128 + $0x14] sm:$0xf]
      %v2135 = vld [vmem:[%s2128 + $0x18] sm:$0xf]
      %v2136 = vld [vmem:[%s2128 + $0x1c] sm:$0xf]
      %v2138 = vunpack.c.l.b16 %v2127
      %v2139 = vpack.c.b16 %v2138, %v2138
      %vm2140 = vsmask.f32 7424
      %v2141 = vshrl.u32 %v2047, 16
      %v2143 = vshll.u32 %v2047, 16
      %v2145 = vrot.slane %v2143, 1
      %v2146 = vor.u32 %v2141, %v2145
      %v2148 = vshll.u32 %v2139, 16
      %v2150 = vrot.slane %v2148, 1
      %v2151 = vsel %vm2140, %v2146, %v2150
      %v2152 = vshrl.u32 %v2139, 16
      %v2154 = vor.u32 %v2152, %v2150
      %v2163 = vunpack.c.l.b16 %v2129
      %v2164 = vunpack.c.l.b16 %v2130
      %v2165 = vunpack.c.l.b16 %v2131
      %v2166 = vunpack.c.l.b16 %v2132
      %v2167 = vunpack.c.l.b16 %v2133
      %v2168 = vunpack.c.l.b16 %v2134
      %v2169 = vunpack.c.l.b16 %v2135
      %v2170 = vunpack.c.l.b16 %v2136
      %v2171 = vpack.c.b16 %v2164, %v2163
      %v2172 = vpack.c.b16 %v2166, %v2165
      %v2173 = vpack.c.b16 %v2168, %v2167
      %v2174 = vpack.c.b16 %v2170, %v2169
      %v2180 = vsel %vm460, %v2151, 0
      %v2183 = vsel %vm460, %v2154, 0
      %2185 = vmatprep.subr.bf16.mxu0 0
      %2186 = vmatpush1.bf16.msra.mxu0 0
      %2187 = vmatprep.subr.bf16.mxu0 0
      %2188 = vmatpush1.bf16.msra.mxu0 0
      %2189 = vmatprep.subr.bf16.mxu0 0
      %2190 = vmatpush1.bf16.msra.mxu0 0
      %2191 = vmatprep.subr.bf16.mxu0 0
      %2192 = vmatpush1.bf16.msra.mxu0 0
      %2193 = vmatprep.subr.bf16.mxu0 0
      %2194 = vmatpush1.bf16.msra.mxu0 %v2174
      %2195 = vmatprep.subr.bf16.mxu0 0
      %2196 = vmatpush1.bf16.msra.mxu0 %v2173
      %2197 = vmatprep.subr.bf16.mxu0 0
      %2198 = vmatpush1.bf16.msra.mxu0 %v2172
      %2199 = vmatprep.subr.bf16.mxu0 0
      %2200 = vmatpush1.bf16.msra.mxu0 %v2171
      %2201 = vmatprep.subr.bf16.mxu0 0
      %2202 = vmatpush2.bf16.msra.mxu0 0
      %2203 = vmatprep.subr.bf16.mxu0 0
      %2204 = vmatpush2.bf16.msra.mxu0 0
      %2205 = vmatprep.subr.bf16.mxu0 0
      %2206 = vmatpush2.bf16.msra.mxu0 0
      %2207 = vmatprep.subr.bf16.mxu0 0
      %2208 = vmatpush2.bf16.msra.mxu0 0
      %2209 = vmatprep.subr.bf16.mxu0 0
      %2210 = vmatpush2.bf16.msra.mxu0 0
      %2211 = vmatprep.subr.bf16.mxu0 0
      %2212 = vmatpush2.bf16.msra.mxu0 0
      %2213 = vmatprep.subr.bf16.mxu0 0
      %2214 = vmatpush2.bf16.msra.mxu0 0
      %2215 = vmatprep.subr.bf16.mxu0 0
      %2216 = vmatpush2.bf16.msra.mxu0 0
      %2217 = vmatprep.mubr.bf16.mxu0 0
      %2218 = vmatmul.mubr.bf16.gmra.mxu0 %v2180
      %v2219 = vpop.f32.mrf.mxu0
      %v2220 = vadd.f32 0.0, %v2219
      %v2221 = vpop.f32.mrf.mxu0
      %v2222 = vpop.f32.mrf.mxu0
      %v2223 = vadd.f32 0.0, %v2222
      %v2224 = vpop.f32.mrf.mxu0
      %2225 = vmatprep.mubr.bf16.mxu0 0
      %2226 = vmatmul.mubr.bf16.gmra.mxu0 %v2183
      %v2227 = vpop.f32.mrf.mxu0
      %v2228 = vadd.f32 0.0, %v2227
      %v2229 = vpop.f32.mrf.mxu0
      %v2230 = vpop.f32.mrf.mxu0
      %v2231 = vpop.f32.mrf.mxu0
      %2232 = vdwg.mxu0
      %v2233 = vadd.f32 %v2114, %v2220
      %v2234 = vadd.f32 %v2117, %v2223
      %v2235 = vadd.f32 %v2122, %v2228
      %v2236 = vld [vmem:[%s454 + $0x8] sm:$0x3]
      %s2237 = scalar_lea.vmem %s8, 96
      %v2238 = vld [vmem:[%s2237] sm:$0xf]
      %v2239 = vld [vmem:[%s2237 + $0x4] sm:$0xf]
      %v2240 = vld [vmem:[%s2237 + $0x8] sm:$0xf]
      %v2241 = vld [vmem:[%s2237 + $0xc] sm:$0xf]
      %v2242 = vld [vmem:[%s2237 + $0x10] sm:$0xf]
      %v2243 = vld [vmem:[%s2237 + $0x14] sm:$0xf]
      %v2244 = vld [vmem:[%s2237 + $0x18] sm:$0xf]
      %v2245 = vld [vmem:[%s2237 + $0x1c] sm:$0xf]
      %v2247 = vunpack.c.l.b16 %v2236
      %v2248 = vpack.c.b16 %v2247, %v2247
      %v2249 = vshrl.u32 %v1961, 16
      %v2251 = vshll.u32 %v1961, 16
      %v2253 = vrot.slane %v2251, 1
      %v2254 = vor.u32 %v2249, %v2253
      %v2256 = vshll.u32 %v2248, 16
      %v2258 = vrot.slane %v2256, 1
      %v2259 = vsel %vm2140, %v2254, %v2258
      %v2260 = vshrl.u32 %v2248, 16
      %v2262 = vor.u32 %v2260, %v2258
      %v2271 = vunpack.c.l.b16 %v2238
      %v2272 = vunpack.c.l.b16 %v2239
      %v2273 = vunpack.c.l.b16 %v2240
      %v2274 = vunpack.c.l.b16 %v2241
      %v2275 = vunpack.c.l.b16 %v2242
      %v2276 = vunpack.c.l.b16 %v2243
      %v2277 = vunpack.c.l.b16 %v2244
      %v2278 = vunpack.c.l.b16 %v2245
      %v2279 = vpack.c.b16 %v2272, %v2271
      %v2280 = vpack.c.b16 %v2274, %v2273
      %v2281 = vpack.c.b16 %v2276, %v2275
      %v2282 = vpack.c.b16 %v2278, %v2277
      %v2288 = vsel %vm460, %v2259, 0
      %v2291 = vsel %vm460, %v2262, 0
      %2293 = vmatprep.subr.bf16.mxu0 0
      %2294 = vmatpush1.bf16.msra.mxu0 0
      %2295 = vmatprep.subr.bf16.mxu0 0
      %2296 = vmatpush1.bf16.msra.mxu0 0
      %2297 = vmatprep.subr.bf16.mxu0 0
      %2298 = vmatpush1.bf16.msra.mxu0 0
      %2299 = vmatprep.subr.bf16.mxu0 0
      %2300 = vmatpush1.bf16.msra.mxu0 0
      %2301 = vmatprep.subr.bf16.mxu0 0
      %2302 = vmatpush1.bf16.msra.mxu0 %v2282
      %2303 = vmatprep.subr.bf16.mxu0 0
      %2304 = vmatpush1.bf16.msra.mxu0 %v2281
      %2305 = vmatprep.subr.bf16.mxu0 0
      %2306 = vmatpush1.bf16.msra.mxu0 %v2280
      %2307 = vmatprep.subr.bf16.mxu0 0
      %2308 = vmatpush1.bf16.msra.mxu0 %v2279
      %2309 = vmatprep.subr.bf16.mxu0 0
      %2310 = vmatpush2.bf16.msra.mxu0 0
      %2311 = vmatprep.subr.bf16.mxu0 0
      %2312 = vmatpush2.bf16.msra.mxu0 0
      %2313 = vmatprep.subr.bf16.mxu0 0
      %2314 = vmatpush2.bf16.msra.mxu0 0
      %2315 = vmatprep.subr.bf16.mxu0 0
      %2316 = vmatpush2.bf16.msra.mxu0 0
      %2317 = vmatprep.subr.bf16.mxu0 0
      %2318 = vmatpush2.bf16.msra.mxu0 0
      %2319 = vmatprep.subr.bf16.mxu0 0
      %2320 = vmatpush2.bf16.msra.mxu0 0
      %2321 = vmatprep.subr.bf16.mxu0 0
      %2322 = vmatpush2.bf16.msra.mxu0 0
      %2323 = vmatprep.subr.bf16.mxu0 0
      %2324 = vmatpush2.bf16.msra.mxu0 0
      %2325 = vmatprep.mubr.bf16.mxu0 0
      %2326 = vmatmul.mubr.bf16.gmra.mxu0 %v2288
      %v2327 = vpop.f32.mrf.mxu0
      %v2328 = vadd.f32 0.0, %v2327
      %v2329 = vpop.f32.mrf.mxu0
      %v2330 = vpop.f32.mrf.mxu0
      %v2331 = vadd.f32 0.0, %v2330
      %v2332 = vpop.f32.mrf.mxu0
      %2333 = vmatprep.mubr.bf16.mxu0 0
      %2334 = vmatmul.mubr.bf16.gmra.mxu0 %v2291
      %v2335 = vpop.f32.mrf.mxu0
      %v2336 = vadd.f32 0.0, %v2335
      %v2337 = vpop.f32.mrf.mxu0
      %v2338 = vpop.f32.mrf.mxu0
      %v2339 = vpop.f32.mrf.mxu0
      %2340 = vdwg.mxu0
      %v2341 = vadd.f32 %v2233, %v2328
      %v2342 = vadd.f32 %v2234, %v2331
      %v2343 = vadd.f32 %v2235, %v2336
      %v2344 = vld [vmem:[%s449] sm:$0xe]
      %s2345 = scalar_lea.vmem %s8, 128
      %v2346 = vld [vmem:[%s2345] sm:$0xf]
      %v2347 = vld [vmem:[%s2345 + $0x4] sm:$0xf]
      %v2348 = vld [vmem:[%s2345 + $0x8] sm:$0xf]
      %v2349 = vld [vmem:[%s2345 + $0xc] sm:$0xf]
      %v2350 = vld [vmem:[%s2345 + $0x10] sm:$0xf]
      %v2351 = vld [vmem:[%s2345 + $0x14] sm:$0xf]
      %v2352 = vld [vmem:[%s2345 + $0x18] sm:$0xf]
      %v2353 = vld [vmem:[%s2345 + $0x1c] sm:$0xf]
      %v2355 = vunpack.c.l.b16 %v2344
      %v2356 = vpack.c.b16 %v2045, %v2355
      %vm2357 = vcmask 1046528
      %v2358 = vrot.slane %v2356, 1
      %v2359 = vrot.slane %v2139, 1
      %v2360 = vsel %vm2357, %v2358, %v2359
      %v2369 = vunpack.c.l.b16 %v2346
      %v2370 = vunpack.c.l.b16 %v2347
      %v2371 = vunpack.c.l.b16 %v2348
      %v2372 = vunpack.c.l.b16 %v2349
      %v2373 = vunpack.c.l.b16 %v2350
      %v2374 = vunpack.c.l.b16 %v2351
      %v2375 = vunpack.c.l.b16 %v2352
      %v2376 = vunpack.c.l.b16 %v2353
      %v2377 = vpack.c.b16 %v2370, %v2369
      %v2378 = vpack.c.b16 %v2372, %v2371
      %v2379 = vpack.c.b16 %v2374, %v2373
      %v2380 = vpack.c.b16 %v2376, %v2375
      %v2386 = vsel %vm460, %v2360, 0
      %v2389 = vsel %vm460, %v2359, 0
      %2391 = vmatprep.subr.bf16.mxu0 0
      %2392 = vmatpush1.bf16.msra.mxu0 0
      %2393 = vmatprep.subr.bf16.mxu0 0
      %2394 = vmatpush1.bf16.msra.mxu0 0
      %2395 = vmatprep.subr.bf16.mxu0 0
      %2396 = vmatpush1.bf16.msra.mxu0 0
      %2397 = vmatprep.subr.bf16.mxu0 0
      %2398 = vmatpush1.bf16.msra.mxu0 0
      %2399 = vmatprep.subr.bf16.mxu0 0
      %2400 = vmatpush1.bf16.msra.mxu0 %v2380
      %2401 = vmatprep.subr.bf16.mxu0 0
      %2402 = vmatpush1.bf16.msra.mxu0 %v2379
      %2403 = vmatprep.subr.bf16.mxu0 0
      %2404 = vmatpush1.bf16.msra.mxu0 %v2378
      %2405 = vmatprep.subr.bf16.mxu0 0
      %2406 = vmatpush1.bf16.msra.mxu0 %v2377
      %2407 = vmatprep.subr.bf16.mxu0 0
      %2408 = vmatpush2.bf16.msra.mxu0 0
      %2409 = vmatprep.subr.bf16.mxu0 0
      %2410 = vmatpush2.bf16.msra.mxu0 0
      %2411 = vmatprep.subr.bf16.mxu0 0
      %2412 = vmatpush2.bf16.msra.mxu0 0
      %2413 = vmatprep.subr.bf16.mxu0 0
      %2414 = vmatpush2.bf16.msra.mxu0 0
      %2415 = vmatprep.subr.bf16.mxu0 0
      %2416 = vmatpush2.bf16.msra.mxu0 0
      %2417 = vmatprep.subr.bf16.mxu0 0
      %2418 = vmatpush2.bf16.msra.mxu0 0
      %2419 = vmatprep.subr.bf16.mxu0 0
      %2420 = vmatpush2.bf16.msra.mxu0 0
      %2421 = vmatprep.subr.bf16.mxu0 0
      %2422 = vmatpush2.bf16.msra.mxu0 0
      %2423 = vmatprep.mubr.bf16.mxu0 0
      %2424 = vmatmul.mubr.bf16.gmra.mxu0 %v2386
      %v2425 = vpop.f32.mrf.mxu0
      %v2426 = vadd.f32 0.0, %v2425
      %v2427 = vpop.f32.mrf.mxu0
      %v2428 = vpop.f32.mrf.mxu0
      %v2429 = vadd.f32 0.0, %v2428
      %v2430 = vpop.f32.mrf.mxu0
      %2431 = vmatprep.mubr.bf16.mxu0 0
      %2432 = vmatmul.mubr.bf16.gmra.mxu0 %v2389
      %v2433 = vpop.f32.mrf.mxu0
      %v2434 = vadd.f32 0.0, %v2433
      %v2435 = vpop.f32.mrf.mxu0
      %v2436 = vpop.f32.mrf.mxu0
      %v2437 = vpop.f32.mrf.mxu0
      %2438 = vdwg.mxu0
      %v2439 = vadd.f32 %v2341, %v2426
      %v2440 = vadd.f32 %v2342, %v2429
      %v2441 = vadd.f32 %v2343, %v2434
      %v2442 = vadd.f32 %v1929, %v2439
      %v2443 = vld [vmem:[%s11] sm:$0x1]
      %v2445 = vlaneseq
      %v2446 = vshrl.u32 %v2445, 7
      %v2447 = vsub.s32 0, %v2446
      %v2448 = vrot.slane %v2443, %v2447
      %v2450 = vadd.f32 %v2442, %v2448
      %v2451 = vld [vmem:[%s4] sm:$0x1]
      %v2452 = vlaneseq
      %v2453 = vshrl.u32 %v2452, 7
      %v2454 = vsub.s32 0, %v2453
      %v2455 = vrot.slane %v2451, %v2454
      %v2456 = vmul.f32 %v2450, %v2455
      %v2457 = vld [vmem:[%s4 + $0x1] sm:$0x1]
      %v2458 = vlaneseq
      %v2459 = vshrl.u32 %v2458, 7
      %v2460 = vsub.s32 0, %v2459
      %v2461 = vrot.slane %v2457, %v2460
      %v2462 = vadd.f32 %v2456, %v2461
      %v2463 = vmax.f32 %v2462, 0.0
      %2464 = vst.msk [vmem:[#allocation6 + $0x2] sm:$0xff] %vm460, %v2463
      %v2465 = vadd.f32 %v1930, %v2440
      %v2466 = vadd.f32 %v1931, %v2441
      %v2467 = vld [vmem:[%s11] sm:$0x1]
      %v2469 = vlaneseq
      %v2470 = vshrl.u32 %v2469, 7
      %v2471 = vsub.s32 0, %v2470
      %v2472 = vrot.slane %v2467, %v2471
      %v2474 = vadd.f32 %v2465, %v2472
      %v2475 = vadd.f32 %v2466, %v2472
      %v2476 = vld [vmem:[%s4] sm:$0x1]
      %v2477 = vlaneseq
      %v2478 = vshrl.u32 %v2477, 7
      %v2479 = vsub.s32 0, %v2478
      %v2480 = vrot.slane %v2476, %v2479
      %v2481 = vmul.f32 %v2474, %v2480
      %v2482 = vmul.f32 %v2475, %v2480
      %v2483 = vld [vmem:[%s4 + $0x1] sm:$0x1]
      %v2484 = vlaneseq
      %v2485 = vshrl.u32 %v2484, 7
      %v2486 = vsub.s32 0, %v2485
      %v2487 = vrot.slane %v2483, %v2486
      %v2488 = vadd.f32 %v2481, %v2487
      %v2489 = vadd.f32 %v2482, %v2487
      %v2490 = vmax.f32 %v2488, 0.0
      %v2491 = vmax.f32 %v2489, 0.0
      %vm2492 = vcmask 523266
      %2493 = vst.msk [vmem:[#allocation6 + $0xc] sm:$0xfc] %vm2492, %v2490
      %vm2494 = vcmask 517120
      %2495 = vst.msk [vmem:[#allocation6 + $0x14] sm:$0x3] %vm2494, %v2491
      %v2496 = vld [vmem:[#allocation6] sm:$0xff]
      %v2497 = vld [vmem:[#allocation6 + $0x8] sm:$0xff]
      %v2498 = vld [vmem:[#allocation6 + $0x10] sm:$0xf]
      %v2499 = vpack.c.bf16 %v2497, %v2496
      %v2500 = vpack.c.bf16 %v2498, %v2498
      %v2501 = vld [vmem:[%s9] sm:$0xf]
      %v2502 = vld [vmem:[%s9 + $0x4] sm:$0xf]
      %v2503 = vld [vmem:[%s9 + $0x8] sm:$0xf]
      %v2504 = vld [vmem:[%s9 + $0xc] sm:$0xf]
      %v2505 = vld [vmem:[%s9 + $0x10] sm:$0xf]
      %v2506 = vld [vmem:[%s9 + $0x14] sm:$0xf]
      %v2507 = vld [vmem:[%s9 + $0x18] sm:$0xf]
      %v2508 = vld [vmem:[%s9 + $0x1c] sm:$0xf]
      %v2509 = vld [vmem:[#allocation6 + $0x1] sm:$0xff]
      %v2510 = vld [vmem:[#allocation6 + $0x9] sm:$0xff]
      %v2511 = vld [vmem:[#allocation6 + $0x11] sm:$0xf]
      %v2512 = vpack.c.bf16 %v2510, %v2509
      %v2513 = vpack.c.bf16 %v2511, %v2511
      %s2514 = scalar_lea.vmem %s9, 32
      %v2515 = vld [vmem:[%s2514] sm:$0xf]
      %v2516 = vld [vmem:[%s2514 + $0x4] sm:$0xf]
      %v2517 = vld [vmem:[%s2514 + $0x8] sm:$0xf]
      %v2518 = vld [vmem:[%s2514 + $0xc] sm:$0xf]
      %v2519 = vld [vmem:[%s2514 + $0x10] sm:$0xf]
      %v2520 = vld [vmem:[%s2514 + $0x14] sm:$0xf]
      %v2521 = vld [vmem:[%s2514 + $0x18] sm:$0xf]
      %v2522 = vld [vmem:[%s2514 + $0x1c] sm:$0xf]
      %v2531 = vunpack.c.l.b16 %v2515
      %v2532 = vunpack.c.l.b16 %v2516
      %v2533 = vunpack.c.l.b16 %v2517
      %v2534 = vunpack.c.l.b16 %v2518
      %v2535 = vunpack.c.l.b16 %v2519
      %v2536 = vunpack.c.l.b16 %v2520
      %v2537 = vunpack.c.l.b16 %v2521
      %v2538 = vunpack.c.l.b16 %v2522
      %v2539 = vpack.c.b16 %v2532, %v2531
      %v2540 = vpack.c.b16 %v2534, %v2533
      %v2541 = vpack.c.b16 %v2536, %v2535
      %v2542 = vpack.c.b16 %v2538, %v2537
      %v2548 = vsel %vm460, %v2512, 0
      %v2551 = vsel %vm460, %v2513, 0
      %2553 = vmatprep.subr.bf16.mxu0 0
      %2554 = vmatpush1.bf16.msra.mxu0 0
      %2555 = vmatprep.subr.bf16.mxu0 0
      %2556 = vmatpush1.bf16.msra.mxu0 0
      %2557 = vmatprep.subr.bf16.mxu0 0
      %2558 = vmatpush1.bf16.msra.mxu0 0
      %2559 = vmatprep.subr.bf16.mxu0 0
      %2560 = vmatpush1.bf16.msra.mxu0 0
      %2561 = vmatprep.subr.bf16.mxu0 0
      %2562 = vmatpush1.bf16.msra.mxu0 %v2542
      %2563 = vmatprep.subr.bf16.mxu0 0
      %2564 = vmatpush1.bf16.msra.mxu0 %v2541
      %2565 = vmatprep.subr.bf16.mxu0 0
      %2566 = vmatpush1.bf16.msra.mxu0 %v2540
      %2567 = vmatprep.subr.bf16.mxu0 0
      %2568 = vmatpush1.bf16.msra.mxu0 %v2539
      %2569 = vmatprep.subr.bf16.mxu0 0
      %2570 = vmatpush2.bf16.msra.mxu0 0
      %2571 = vmatprep.subr.bf16.mxu0 0
      %2572 = vmatpush2.bf16.msra.mxu0 0
      %2573 = vmatprep.subr.bf16.mxu0 0
      %2574 = vmatpush2.bf16.msra.mxu0 0
      %2575 = vmatprep.subr.bf16.mxu0 0
      %2576 = vmatpush2.bf16.msra.mxu0 0
      %2577 = vmatprep.subr.bf16.mxu0 0
      %2578 = vmatpush2.bf16.msra.mxu0 0
      %2579 = vmatprep.subr.bf16.mxu0 0
      %2580 = vmatpush2.bf16.msra.mxu0 0
      %2581 = vmatprep.subr.bf16.mxu0 0
      %2582 = vmatpush2.bf16.msra.mxu0 0
      %2583 = vmatprep.subr.bf16.mxu0 0
      %2584 = vmatpush2.bf16.msra.mxu0 0
      %2585 = vmatprep.mubr.bf16.mxu0 0
      %2586 = vmatmul.mubr.bf16.gmra.mxu0 %v2548
      %v2587 = vpop.f32.mrf.mxu0
      %v2588 = vadd.f32 0.0, %v2587
      %v2589 = vpop.f32.mrf.mxu0
      %v2590 = vpop.f32.mrf.mxu0
      %v2591 = vadd.f32 0.0, %v2590
      %v2592 = vpop.f32.mrf.mxu0
      %2593 = vmatprep.mubr.bf16.mxu0 0
      %2594 = vmatmul.mubr.bf16.gmra.mxu0 %v2551
      %v2595 = vpop.f32.mrf.mxu0
      %v2596 = vadd.f32 0.0, %v2595
      %v2597 = vpop.f32.mrf.mxu0
      %v2598 = vpop.f32.mrf.mxu0
      %v2599 = vpop.f32.mrf.mxu0
      %2600 = vdwg.mxu0
      %v2609 = vunpack.c.l.b16 %v2501
      %v2610 = vunpack.c.l.b16 %v2502
      %v2611 = vunpack.c.l.b16 %v2503
      %v2612 = vunpack.c.l.b16 %v2504
      %v2613 = vunpack.c.l.b16 %v2505
      %v2614 = vunpack.c.l.b16 %v2506
      %v2615 = vunpack.c.l.b16 %v2507
      %v2616 = vunpack.c.l.b16 %v2508
      %v2617 = vpack.c.b16 %v2610, %v2609
      %v2618 = vpack.c.b16 %v2612, %v2611
      %v2619 = vpack.c.b16 %v2614, %v2613
      %v2620 = vpack.c.b16 %v2616, %v2615
      %v2626 = vsel %vm460, %v2499, 0
      %v2629 = vsel %vm460, %v2500, 0
      %2631 = vmatprep.subr.bf16.mxu0 0
      %2632 = vmatpush1.bf16.msra.mxu0 0
      %2633 = vmatprep.subr.bf16.mxu0 0
      %2634 = vmatpush1.bf16.msra.mxu0 0
      %2635 = vmatprep.subr.bf16.mxu0 0
      %2636 = vmatpush1.bf16.msra.mxu0 0
      %2637 = vmatprep.subr.bf16.mxu0 0
      %2638 = vmatpush1.bf16.msra.mxu0 0
      %2639 = vmatprep.subr.bf16.mxu0 0
      %2640 = vmatpush1.bf16.msra.mxu0 %v2620
      %2641 = vmatprep.subr.bf16.mxu0 0
      %2642 = vmatpush1.bf16.msra.mxu0 %v2619
      %2643 = vmatprep.subr.bf16.mxu0 0
      %2644 = vmatpush1.bf16.msra.mxu0 %v2618
      %2645 = vmatprep.subr.bf16.mxu0 0
      %2646 = vmatpush1.bf16.msra.mxu0 %v2617
      %2647 = vmatprep.subr.bf16.mxu0 0
      %2648 = vmatpush2.bf16.msra.mxu0 0
      %2649 = vmatprep.subr.bf16.mxu0 0
      %2650 = vmatpush2.bf16.msra.mxu0 0
      %2651 = vmatprep.subr.bf16.mxu0 0
      %2652 = vmatpush2.bf16.msra.mxu0 0
      %2653 = vmatprep.subr.bf16.mxu0 0
      %2654 = vmatpush2.bf16.msra.mxu0 0
      %2655 = vmatprep.subr.bf16.mxu0 0
      %2656 = vmatpush2.bf16.msra.mxu0 0
      %2657 = vmatprep.subr.bf16.mxu0 0
      %2658 = vmatpush2.bf16.msra.mxu0 0
      %2659 = vmatprep.subr.bf16.mxu0 0
      %2660 = vmatpush2.bf16.msra.mxu0 0
      %2661 = vmatprep.subr.bf16.mxu0 0
      %2662 = vmatpush2.bf16.msra.mxu0 0
      %2663 = vmatprep.mubr.bf16.mxu0 0
      %2664 = vmatmul.mubr.bf16.gmra.mxu0 %v2626
      %v2665 = vpop.f32.mrf.mxu0
      %v2666 = vadd.f32 %v2588, %v2665
      %v2667 = vpop.f32.mrf.mxu0
      %v2668 = vpop.f32.mrf.mxu0
      %v2669 = vadd.f32 %v2591, %v2668
      %v2670 = vpop.f32.mrf.mxu0
      %2671 = vmatprep.mubr.bf16.mxu0 0
      %2672 = vmatmul.mubr.bf16.gmra.mxu0 %v2629
      %v2673 = vpop.f32.mrf.mxu0
      %v2674 = vadd.f32 %v2596, %v2673
      %v2675 = vpop.f32.mrf.mxu0
      %v2676 = vpop.f32.mrf.mxu0
      %v2677 = vpop.f32.mrf.mxu0
      %2678 = vdwg.mxu0
      %v2679 = vld [vmem:[#allocation6 + $0x2] sm:$0xff]
      %v2680 = vld [vmem:[#allocation6 + $0xa] sm:$0xff]
      %v2681 = vld [vmem:[#allocation6 + $0x12] sm:$0xf]
      %v2682 = vpack.c.bf16 %v2680, %v2679
      %v2683 = vpack.c.bf16 %v2681, %v2681
      %s2684 = scalar_lea.vmem %s9, 64
      %v2685 = vld [vmem:[%s2684] sm:$0xf]
      %v2686 = vld [vmem:[%s2684 + $0x4] sm:$0xf]
      %v2687 = vld [vmem:[%s2684 + $0x8] sm:$0xf]
      %v2688 = vld [vmem:[%s2684 + $0xc] sm:$0xf]
      %v2689 = vld [vmem:[%s2684 + $0x10] sm:$0xf]
      %v2690 = vld [vmem:[%s2684 + $0x14] sm:$0xf]
      %v2691 = vld [vmem:[%s2684 + $0x18] sm:$0xf]
      %v2692 = vld [vmem:[%s2684 + $0x1c] sm:$0xf]
      %v2701 = vunpack.c.l.b16 %v2685
      %v2702 = vunpack.c.l.b16 %v2686
      %v2703 = vunpack.c.l.b16 %v2687
      %v2704 = vunpack.c.l.b16 %v2688
      %v2705 = vunpack.c.l.b16 %v2689
      %v2706 = vunpack.c.l.b16 %v2690
      %v2707 = vunpack.c.l.b16 %v2691
      %v2708 = vunpack.c.l.b16 %v2692
      %v2709 = vpack.c.b16 %v2702, %v2701
      %v2710 = vpack.c.b16 %v2704, %v2703
      %v2711 = vpack.c.b16 %v2706, %v2705
      %v2712 = vpack.c.b16 %v2708, %v2707
      %v2718 = vsel %vm460, %v2682, 0
      %v2721 = vsel %vm460, %v2683, 0
      %2723 = vmatprep.subr.bf16.mxu0 0
      %2724 = vmatpush1.bf16.msra.mxu0 0
      %2725 = vmatprep.subr.bf16.mxu0 0
      %2726 = vmatpush1.bf16.msra.mxu0 0
      %2727 = vmatprep.subr.bf16.mxu0 0
      %2728 = vmatpush1.bf16.msra.mxu0 0
      %2729 = vmatprep.subr.bf16.mxu0 0
      %2730 = vmatpush1.bf16.msra.mxu0 0
      %2731 = vmatprep.subr.bf16.mxu0 0
      %2732 = vmatpush1.bf16.msra.mxu0 %v2712
      %2733 = vmatprep.subr.bf16.mxu0 0
      %2734 = vmatpush1.bf16.msra.mxu0 %v2711
      %2735 = vmatprep.subr.bf16.mxu0 0
      %2736 = vmatpush1.bf16.msra.mxu0 %v2710
      %2737 = vmatprep.subr.bf16.mxu0 0
      %2738 = vmatpush1.bf16.msra.mxu0 %v2709
      %2739 = vmatprep.subr.bf16.mxu0 0
      %2740 = vmatpush2.bf16.msra.mxu0 0
      %2741 = vmatprep.subr.bf16.mxu0 0
      %2742 = vmatpush2.bf16.msra.mxu0 0
      %2743 = vmatprep.subr.bf16.mxu0 0
      %2744 = vmatpush2.bf16.msra.mxu0 0
      %2745 = vmatprep.subr.bf16.mxu0 0
      %2746 = vmatpush2.bf16.msra.mxu0 0
      %2747 = vmatprep.subr.bf16.mxu0 0
      %2748 = vmatpush2.bf16.msra.mxu0 0
      %2749 = vmatprep.subr.bf16.mxu0 0
      %2750 = vmatpush2.bf16.msra.mxu0 0
      %2751 = vmatprep.subr.bf16.mxu0 0
      %2752 = vmatpush2.bf16.msra.mxu0 0
      %2753 = vmatprep.subr.bf16.mxu0 0
      %2754 = vmatpush2.bf16.msra.mxu0 0
      %2755 = vmatprep.mubr.bf16.mxu0 0
      %2756 = vmatmul.mubr.bf16.gmra.mxu0 %v2718
      %v2757 = vpop.f32.mrf.mxu0
      %v2758 = vadd.f32 0.0, %v2757
      %v2759 = vpop.f32.mrf.mxu0
      %v2760 = vpop.f32.mrf.mxu0
      %v2761 = vadd.f32 0.0, %v2760
      %v2762 = vpop.f32.mrf.mxu0
      %2763 = vmatprep.mubr.bf16.mxu0 0
      %2764 = vmatmul.mubr.bf16.gmra.mxu0 %v2721
      %v2765 = vpop.f32.mrf.mxu0
      %v2766 = vadd.f32 0.0, %v2765
      %v2767 = vpop.f32.mrf.mxu0
      %v2768 = vpop.f32.mrf.mxu0
      %v2769 = vpop.f32.mrf.mxu0
      %2770 = vdwg.mxu0
      %v2771 = vadd.f32 %v2666, %v2758
      %v2772 = vadd.f32 %v2669, %v2761
      %v2773 = vadd.f32 %v2674, %v2766
      %v2774 = vld [vmem:[#allocation6 + $0x3] sm:$0xff]
      %v2775 = vld [vmem:[#allocation6 + $0xb] sm:$0xff]
      %v2776 = vld [vmem:[#allocation6 + $0x13] sm:$0xf]
      %v2777 = vpack.c.bf16 %v2775, %v2774
      %v2778 = vpack.c.bf16 %v2776, %v2776
      %s2779 = scalar_lea.vmem %s9, 96
      %v2780 = vld [vmem:[%s2779] sm:$0xf]
      %v2781 = vld [vmem:[%s2779 + $0x4] sm:$0xf]
      %v2782 = vld [vmem:[%s2779 + $0x8] sm:$0xf]
      %v2783 = vld [vmem:[%s2779 + $0xc] sm:$0xf]
      %v2784 = vld [vmem:[%s2779 + $0x10] sm:$0xf]
      %v2785 = vld [vmem:[%s2779 + $0x14] sm:$0xf]
      %v2786 = vld [vmem:[%s2779 + $0x18] sm:$0xf]
      %v2787 = vld [vmem:[%s2779 + $0x1c] sm:$0xf]
      %v2796 = vunpack.c.l.b16 %v2780
      %v2797 = vunpack.c.l.b16 %v2781
      %v2798 = vunpack.c.l.b16 %v2782
      %v2799 = vunpack.c.l.b16 %v2783
      %v2800 = vunpack.c.l.b16 %v2784
      %v2801 = vunpack.c.l.b16 %v2785
      %v2802 = vunpack.c.l.b16 %v2786
      %v2803 = vunpack.c.l.b16 %v2787
      %v2804 = vpack.c.b16 %v2797, %v2796
      %v2805 = vpack.c.b16 %v2799, %v2798
      %v2806 = vpack.c.b16 %v2801, %v2800
      %v2807 = vpack.c.b16 %v2803, %v2802
      %v2813 = vsel %vm460, %v2777, 0
      %v2816 = vsel %vm460, %v2778, 0
      %2818 = vmatprep.subr.bf16.mxu0 0
      %2819 = vmatpush1.bf16.msra.mxu0 0
      %2820 = vmatprep.subr.bf16.mxu0 0
      %2821 = vmatpush1.bf16.msra.mxu0 0
      %2822 = vmatprep.subr.bf16.mxu0 0
      %2823 = vmatpush1.bf16.msra.mxu0 0
      %2824 = vmatprep.subr.bf16.mxu0 0
      %2825 = vmatpush1.bf16.msra.mxu0 0
      %2826 = vmatprep.subr.bf16.mxu0 0
      %2827 = vmatpush1.bf16.msra.mxu0 %v2807
      %2828 = vmatprep.subr.bf16.mxu0 0
      %2829 = vmatpush1.bf16.msra.mxu0 %v2806
      %2830 = vmatprep.subr.bf16.mxu0 0
      %2831 = vmatpush1.bf16.msra.mxu0 %v2805
      %2832 = vmatprep.subr.bf16.mxu0 0
      %2833 = vmatpush1.bf16.msra.mxu0 %v2804
      %2834 = vmatprep.subr.bf16.mxu0 0
      %2835 = vmatpush2.bf16.msra.mxu0 0
      %2836 = vmatprep.subr.bf16.mxu0 0
      %2837 = vmatpush2.bf16.msra.mxu0 0
      %2838 = vmatprep.subr.bf16.mxu0 0
      %2839 = vmatpush2.bf16.msra.mxu0 0
      %2840 = vmatprep.subr.bf16.mxu0 0
      %2841 = vmatpush2.bf16.msra.mxu0 0
      %2842 = vmatprep.subr.bf16.mxu0 0
      %2843 = vmatpush2.bf16.msra.mxu0 0
      %2844 = vmatprep.subr.bf16.mxu0 0
      %2845 = vmatpush2.bf16.msra.mxu0 0
      %2846 = vmatprep.subr.bf16.mxu0 0
      %2847 = vmatpush2.bf16.msra.mxu0 0
      %2848 = vmatprep.subr.bf16.mxu0 0
      %2849 = vmatpush2.bf16.msra.mxu0 0
      %2850 = vmatprep.mubr.bf16.mxu0 0
      %2851 = vmatmul.mubr.bf16.gmra.mxu0 %v2813
      %v2852 = vpop.f32.mrf.mxu0
      %v2853 = vadd.f32 0.0, %v2852
      %v2854 = vpop.f32.mrf.mxu0
      %v2855 = vpop.f32.mrf.mxu0
      %v2856 = vadd.f32 0.0, %v2855
      %v2857 = vpop.f32.mrf.mxu0
      %2858 = vmatprep.mubr.bf16.mxu0 0
      %2859 = vmatmul.mubr.bf16.gmra.mxu0 %v2816
      %v2860 = vpop.f32.mrf.mxu0
      %v2861 = vadd.f32 0.0, %v2860
      %v2862 = vpop.f32.mrf.mxu0
      %v2863 = vpop.f32.mrf.mxu0
      %v2864 = vpop.f32.mrf.mxu0
      %2865 = vdwg.mxu0
      %v2866 = vadd.f32 %v2771, %v2853
      %v2867 = vadd.f32 %v2772, %v2856
      %v2868 = vadd.f32 %v2773, %v2861
      %v2869 = vld [vmem:[#allocation6 + $0x4] sm:$0xff]
      %v2870 = vld [vmem:[#allocation6 + $0xc] sm:$0xff]
      %v2871 = vld [vmem:[#allocation6 + $0x14] sm:$0xf]
      %v2872 = vpack.c.bf16 %v2870, %v2869
      %v2873 = vpack.c.bf16 %v2871, %v2871
      %s2874 = scalar_lea.vmem %s9, 128
      %v2875 = vld [vmem:[%s2874] sm:$0xf]
      %v2876 = vld [vmem:[%s2874 + $0x4] sm:$0xf]
      %v2877 = vld [vmem:[%s2874 + $0x8] sm:$0xf]
      %v2878 = vld [vmem:[%s2874 + $0xc] sm:$0xf]
      %v2879 = vld [vmem:[%s2874 + $0x10] sm:$0xf]
      %v2880 = vld [vmem:[%s2874 + $0x14] sm:$0xf]
      %v2881 = vld [vmem:[%s2874 + $0x18] sm:$0xf]
      %v2882 = vld [vmem:[%s2874 + $0x1c] sm:$0xf]
      %v2891 = vunpack.c.l.b16 %v2875
      %v2892 = vunpack.c.l.b16 %v2876
      %v2893 = vunpack.c.l.b16 %v2877
      %v2894 = vunpack.c.l.b16 %v2878
      %v2895 = vunpack.c.l.b16 %v2879
      %v2896 = vunpack.c.l.b16 %v2880
      %v2897 = vunpack.c.l.b16 %v2881
      %v2898 = vunpack.c.l.b16 %v2882
      %v2899 = vpack.c.b16 %v2892, %v2891
      %v2900 = vpack.c.b16 %v2894, %v2893
      %v2901 = vpack.c.b16 %v2896, %v2895
      %v2902 = vpack.c.b16 %v2898, %v2897
      %v2908 = vsel %vm460, %v2872, 0
      %v2911 = vsel %vm460, %v2873, 0
      %2913 = vmatprep.subr.bf16.mxu0 0
      %2914 = vmatpush1.bf16.msra.mxu0 0
      %2915 = vmatprep.subr.bf16.mxu0 0
      %2916 = vmatpush1.bf16.msra.mxu0 0
      %2917 = vmatprep.subr.bf16.mxu0 0
      %2918 = vmatpush1.bf16.msra.mxu0 0
      %2919 = vmatprep.subr.bf16.mxu0 0
      %2920 = vmatpush1.bf16.msra.mxu0 0
      %2921 = vmatprep.subr.bf16.mxu0 0
      %2922 = vmatpush1.bf16.msra.mxu0 %v2902
      %2923 = vmatprep.subr.bf16.mxu0 0
      %2924 = vmatpush1.bf16.msra.mxu0 %v2901
      %2925 = vmatprep.subr.bf16.mxu0 0
      %2926 = vmatpush1.bf16.msra.mxu0 %v2900
      %2927 = vmatprep.subr.bf16.mxu0 0
      %2928 = vmatpush1.bf16.msra.mxu0 %v2899
      %2929 = vmatprep.subr.bf16.mxu0 0
      %2930 = vmatpush2.bf16.msra.mxu0 0
      %2931 = vmatprep.subr.bf16.mxu0 0
      %2932 = vmatpush2.bf16.msra.mxu0 0
      %2933 = vmatprep.subr.bf16.mxu0 0
      %2934 = vmatpush2.bf16.msra.mxu0 0
      %2935 = vmatprep.subr.bf16.mxu0 0
      %2936 = vmatpush2.bf16.msra.mxu0 0
      %2937 = vmatprep.subr.bf16.mxu0 0
      %2938 = vmatpush2.bf16.msra.mxu0 0
      %2939 = vmatprep.subr.bf16.mxu0 0
      %2940 = vmatpush2.bf16.msra.mxu0 0
      %2941 = vmatprep.subr.bf16.mxu0 0
      %2942 = vmatpush2.bf16.msra.mxu0 0
      %2943 = vmatprep.subr.bf16.mxu0 0
      %2944 = vmatpush2.bf16.msra.mxu0 0
      %2945 = vmatprep.mubr.bf16.mxu0 0
      %2946 = vmatmul.mubr.bf16.gmra.mxu0 %v2908
      %v2947 = vpop.f32.mrf.mxu0
      %v2948 = vadd.f32 0.0, %v2947
      %v2949 = vpop.f32.mrf.mxu0
      %v2950 = vpop.f32.mrf.mxu0
      %v2951 = vadd.f32 0.0, %v2950
      %v2952 = vpop.f32.mrf.mxu0
      %2953 = vmatprep.mubr.bf16.mxu0 0
      %2954 = vmatmul.mubr.bf16.gmra.mxu0 %v2911
      %v2955 = vpop.f32.mrf.mxu0
      %v2956 = vadd.f32 0.0, %v2955
      %v2957 = vpop.f32.mrf.mxu0
      %v2958 = vpop.f32.mrf.mxu0
      %v2959 = vpop.f32.mrf.mxu0
      %2960 = vdwg.mxu0
      %v2961 = vadd.f32 %v2866, %v2948
      %v2962 = vadd.f32 %v2867, %v2951
      %v2963 = vadd.f32 %v2868, %v2956
      %v2964 = vld [vmem:[%s5] sm:$0x1]
      %v2965 = vlaneseq
      %v2966 = vshrl.u32 %v2965, 7
      %v2967 = vsub.s32 0, %v2966
      %v2968 = vrot.slane %v2964, %v2967
      %v2969 = vmul.f32 %v2961, %v2968
      %v2970 = vmul.f32 %v2962, %v2968
      %v2971 = vmul.f32 %v2963, %v2968
      %v2972 = vld [vmem:[%s5 + $0x1] sm:$0x1]
      %v2973 = vlaneseq
      %v2974 = vshrl.u32 %v2973, 7
      %v2975 = vsub.s32 0, %v2974
      %v2976 = vrot.slane %v2972, %v2975
      %v2977 = vadd.f32 %v2969, %v2976
      %v2978 = vadd.f32 %v2970, %v2976
      %v2979 = vadd.f32 %v2971, %v2976
      %v2980 = vmax.f32 %v2977, 0.0
      %v2981 = vmax.f32 %v2978, 0.0
      %v2982 = vmax.f32 %v2979, 0.0
      %2983 = vst.msk [vmem:[#allocation7 + $0x2] sm:$0xff] %vm460, %v2980
      %vm2984 = vcmask 523268
      %2985 = vst.msk [vmem:[#allocation7 + $0xa] sm:$0xf0] %vm2984, %v2981
      %2986 = vst.msk [vmem:[#allocation7 + $0x12] sm:$0xf] %vm463, %v2982
      %v2987 = vld [vmem:[#allocation7] sm:$0xff]
      %v2988 = vld [vmem:[#allocation7 + $0x8] sm:$0xff]
      %v2989 = vld [vmem:[#allocation7 + $0x10] sm:$0xf]
      %v2990 = vpack.c.bf16 %v2988, %v2987
      %v2991 = vpack.c.bf16 %v2989, %v2989
      %v2992 = vld [vmem:[%s10] sm:$0xf]
      %v2993 = vld [vmem:[%s10 + $0x4] sm:$0xf]
      %v2994 = vld [vmem:[%s10 + $0x8] sm:$0xf]
      %v2995 = vld [vmem:[%s10 + $0xc] sm:$0xf]
      %v2996 = vld [vmem:[%s10 + $0x10] sm:$0xf]
      %v2997 = vld [vmem:[%s10 + $0x14] sm:$0xf]
      %v2998 = vld [vmem:[%s10 + $0x18] sm:$0xf]
      %v2999 = vld [vmem:[%s10 + $0x1c] sm:$0xf]
      %v3000 = vld [vmem:[#allocation7 + $0x1] sm:$0xff]
      %v3001 = vld [vmem:[#allocation7 + $0x9] sm:$0xff]
      %v3002 = vld [vmem:[#allocation7 + $0x11] sm:$0xf]
      %v3003 = vpack.c.bf16 %v3001, %v3000
      %v3004 = vpack.c.bf16 %v3002, %v3002
      %s3005 = scalar_lea.vmem %s10, 32
      %v3006 = vld [vmem:[%s3005] sm:$0xf]
      %v3007 = vld [vmem:[%s3005 + $0x4] sm:$0xf]
      %v3008 = vld [vmem:[%s3005 + $0x8] sm:$0xf]
      %v3009 = vld [vmem:[%s3005 + $0xc] sm:$0xf]
      %v3010 = vld [vmem:[%s3005 + $0x10] sm:$0xf]
      %v3011 = vld [vmem:[%s3005 + $0x14] sm:$0xf]
      %v3012 = vld [vmem:[%s3005 + $0x18] sm:$0xf]
      %v3013 = vld [vmem:[%s3005 + $0x1c] sm:$0xf]
      %v3022 = vunpack.c.l.b16 %v3006
      %v3023 = vunpack.c.l.b16 %v3007
      %v3024 = vunpack.c.l.b16 %v3008
      %v3025 = vunpack.c.l.b16 %v3009
      %v3026 = vunpack.c.l.b16 %v3010
      %v3027 = vunpack.c.l.b16 %v3011
      %v3028 = vunpack.c.l.b16 %v3012
      %v3029 = vunpack.c.l.b16 %v3013
      %v3030 = vpack.c.b16 %v3023, %v3022
      %v3031 = vpack.c.b16 %v3025, %v3024
      %v3032 = vpack.c.b16 %v3027, %v3026
      %v3033 = vpack.c.b16 %v3029, %v3028
      %v3039 = vsel %vm460, %v3003, 0
      %v3042 = vsel %vm460, %v3004, 0
      %3044 = vmatprep.subr.bf16.mxu0 0
      %3045 = vmatpush1.bf16.msra.mxu0 0
      %3046 = vmatprep.subr.bf16.mxu0 0
      %3047 = vmatpush1.bf16.msra.mxu0 0
      %3048 = vmatprep.subr.bf16.mxu0 0
      %3049 = vmatpush1.bf16.msra.mxu0 0
      %3050 = vmatprep.subr.bf16.mxu0 0
      %3051 = vmatpush1.bf16.msra.mxu0 0
      %3052 = vmatprep.subr.bf16.mxu0 0
      %3053 = vmatpush1.bf16.msra.mxu0 %v3033
      %3054 = vmatprep.subr.bf16.mxu0 0
      %3055 = vmatpush1.bf16.msra.mxu0 %v3032
      %3056 = vmatprep.subr.bf16.mxu0 0
      %3057 = vmatpush1.bf16.msra.mxu0 %v3031
      %3058 = vmatprep.subr.bf16.mxu0 0
      %3059 = vmatpush1.bf16.msra.mxu0 %v3030
      %3060 = vmatprep.subr.bf16.mxu0 0
      %3061 = vmatpush2.bf16.msra.mxu0 0
      %3062 = vmatprep.subr.bf16.mxu0 0
      %3063 = vmatpush2.bf16.msra.mxu0 0
      %3064 = vmatprep.subr.bf16.mxu0 0
      %3065 = vmatpush2.bf16.msra.mxu0 0
      %3066 = vmatprep.subr.bf16.mxu0 0
      %3067 = vmatpush2.bf16.msra.mxu0 0
      %3068 = vmatprep.subr.bf16.mxu0 0
      %3069 = vmatpush2.bf16.msra.mxu0 0
      %3070 = vmatprep.subr.bf16.mxu0 0
      %3071 = vmatpush2.bf16.msra.mxu0 0
      %3072 = vmatprep.subr.bf16.mxu0 0
      %3073 = vmatpush2.bf16.msra.mxu0 0
      %3074 = vmatprep.subr.bf16.mxu0 0
      %3075 = vmatpush2.bf16.msra.mxu0 0
      %3076 = vmatprep.mubr.bf16.mxu0 0
      %3077 = vmatmul.mubr.bf16.gmra.mxu0 %v3039
      %v3078 = vpop.f32.mrf.mxu0
      %v3079 = vadd.f32 0.0, %v3078
      %v3080 = vpop.f32.mrf.mxu0
      %v3081 = vpop.f32.mrf.mxu0
      %v3082 = vadd.f32 0.0, %v3081
      %v3083 = vpop.f32.mrf.mxu0
      %3084 = vmatprep.mubr.bf16.mxu0 0
      %3085 = vmatmul.mubr.bf16.gmra.mxu0 %v3042
      %v3086 = vpop.f32.mrf.mxu0
      %v3087 = vadd.f32 0.0, %v3086
      %v3088 = vpop.f32.mrf.mxu0
      %v3089 = vpop.f32.mrf.mxu0
      %v3090 = vpop.f32.mrf.mxu0
      %3091 = vdwg.mxu0
      %v3100 = vunpack.c.l.b16 %v2992
      %v3101 = vunpack.c.l.b16 %v2993
      %v3102 = vunpack.c.l.b16 %v2994
      %v3103 = vunpack.c.l.b16 %v2995
      %v3104 = vunpack.c.l.b16 %v2996
      %v3105 = vunpack.c.l.b16 %v2997
      %v3106 = vunpack.c.l.b16 %v2998
      %v3107 = vunpack.c.l.b16 %v2999
      %v3108 = vpack.c.b16 %v3101, %v3100
      %v3109 = vpack.c.b16 %v3103, %v3102
      %v3110 = vpack.c.b16 %v3105, %v3104
      %v3111 = vpack.c.b16 %v3107, %v3106
      %v3117 = vsel %vm460, %v2990, 0
      %v3120 = vsel %vm460, %v2991, 0
      %3122 = vmatprep.subr.bf16.mxu0 0
      %3123 = vmatpush1.bf16.msra.mxu0 0
      %3124 = vmatprep.subr.bf16.mxu0 0
      %3125 = vmatpush1.bf16.msra.mxu0 0
      %3126 = vmatprep.subr.bf16.mxu0 0
      %3127 = vmatpush1.bf16.msra.mxu0 0
      %3128 = vmatprep.subr.bf16.mxu0 0
      %3129 = vmatpush1.bf16.msra.mxu0 0
      %3130 = vmatprep.subr.bf16.mxu0 0
      %3131 = vmatpush1.bf16.msra.mxu0 %v3111
      %3132 = vmatprep.subr.bf16.mxu0 0
      %3133 = vmatpush1.bf16.msra.mxu0 %v3110
      %3134 = vmatprep.subr.bf16.mxu0 0
      %3135 = vmatpush1.bf16.msra.mxu0 %v3109
      %3136 = vmatprep.subr.bf16.mxu0 0
      %3137 = vmatpush1.bf16.msra.mxu0 %v3108
      %3138 = vmatprep.subr.bf16.mxu0 0
      %3139 = vmatpush2.bf16.msra.mxu0 0
      %3140 = vmatprep.subr.bf16.mxu0 0
      %3141 = vmatpush2.bf16.msra.mxu0 0
      %3142 = vmatprep.subr.bf16.mxu0 0
      %3143 = vmatpush2.bf16.msra.mxu0 0
      %3144 = vmatprep.subr.bf16.mxu0 0
      %3145 = vmatpush2.bf16.msra.mxu0 0
      %3146 = vmatprep.subr.bf16.mxu0 0
      %3147 = vmatpush2.bf16.msra.mxu0 0
      %3148 = vmatprep.subr.bf16.mxu0 0
      %3149 = vmatpush2.bf16.msra.mxu0 0
      %3150 = vmatprep.subr.bf16.mxu0 0
      %3151 = vmatpush2.bf16.msra.mxu0 0
      %3152 = vmatprep.subr.bf16.mxu0 0
      %3153 = vmatpush2.bf16.msra.mxu0 0
      %3154 = vmatprep.mubr.bf16.mxu0 0
      %3155 = vmatmul.mubr.bf16.gmra.mxu0 %v3117
      %v3156 = vpop.f32.mrf.mxu0
      %v3157 = vadd.f32 %v3079, %v3156
      %v3158 = vpop.f32.mrf.mxu0
      %v3159 = vpop.f32.mrf.mxu0
      %v3160 = vadd.f32 %v3082, %v3159
      %v3161 = vpop.f32.mrf.mxu0
      %3162 = vmatprep.mubr.bf16.mxu0 0
      %3163 = vmatmul.mubr.bf16.gmra.mxu0 %v3120
      %v3164 = vpop.f32.mrf.mxu0
      %v3165 = vadd.f32 %v3087, %v3164
      %v3166 = vpop.f32.mrf.mxu0
      %v3167 = vpop.f32.mrf.mxu0
      %v3168 = vpop.f32.mrf.mxu0
      %3169 = vdwg.mxu0
      %v3170 = vld [vmem:[#allocation7 + $0x2] sm:$0xff]
      %v3171 = vld [vmem:[#allocation7 + $0xa] sm:$0xff]
      %v3172 = vld [vmem:[#allocation7 + $0x12] sm:$0xf]
      %v3173 = vpack.c.bf16 %v3171, %v3170
      %v3174 = vpack.c.bf16 %v3172, %v3172
      %s3175 = scalar_lea.vmem %s10, 64
      %v3176 = vld [vmem:[%s3175] sm:$0xf]
      %v3177 = vld [vmem:[%s3175 + $0x4] sm:$0xf]
      %v3178 = vld [vmem:[%s3175 + $0x8] sm:$0xf]
      %v3179 = vld [vmem:[%s3175 + $0xc] sm:$0xf]
      %v3180 = vld [vmem:[%s3175 + $0x10] sm:$0xf]
      %v3181 = vld [vmem:[%s3175 + $0x14] sm:$0xf]
      %v3182 = vld [vmem:[%s3175 + $0x18] sm:$0xf]
      %v3183 = vld [vmem:[%s3175 + $0x1c] sm:$0xf]
      %v3192 = vunpack.c.l.b16 %v3176
      %v3193 = vunpack.c.l.b16 %v3177
      %v3194 = vunpack.c.l.b16 %v3178
      %v3195 = vunpack.c.l.b16 %v3179
      %v3196 = vunpack.c.l.b16 %v3180
      %v3197 = vunpack.c.l.b16 %v3181
      %v3198 = vunpack.c.l.b16 %v3182
      %v3199 = vunpack.c.l.b16 %v3183
      %v3200 = vpack.c.b16 %v3193, %v3192
      %v3201 = vpack.c.b16 %v3195, %v3194
      %v3202 = vpack.c.b16 %v3197, %v3196
      %v3203 = vpack.c.b16 %v3199, %v3198
      %v3209 = vsel %vm460, %v3173, 0
      %v3212 = vsel %vm460, %v3174, 0
      %3214 = vmatprep.subr.bf16.mxu0 0
      %3215 = vmatpush1.bf16.msra.mxu0 0
      %3216 = vmatprep.subr.bf16.mxu0 0
      %3217 = vmatpush1.bf16.msra.mxu0 0
      %3218 = vmatprep.subr.bf16.mxu0 0
      %3219 = vmatpush1.bf16.msra.mxu0 0
      %3220 = vmatprep.subr.bf16.mxu0 0
      %3221 = vmatpush1.bf16.msra.mxu0 0
      %3222 = vmatprep.subr.bf16.mxu0 0
      %3223 = vmatpush1.bf16.msra.mxu0 %v3203
      %3224 = vmatprep.subr.bf16.mxu0 0
      %3225 = vmatpush1.bf16.msra.mxu0 %v3202
      %3226 = vmatprep.subr.bf16.mxu0 0
      %3227 = vmatpush1.bf16.msra.mxu0 %v3201
      %3228 = vmatprep.subr.bf16.mxu0 0
      %3229 = vmatpush1.bf16.msra.mxu0 %v3200
      %3230 = vmatprep.subr.bf16.mxu0 0
      %3231 = vmatpush2.bf16.msra.mxu0 0
      %3232 = vmatprep.subr.bf16.mxu0 0
      %3233 = vmatpush2.bf16.msra.mxu0 0
      %3234 = vmatprep.subr.bf16.mxu0 0
      %3235 = vmatpush2.bf16.msra.mxu0 0
      %3236 = vmatprep.subr.bf16.mxu0 0
      %3237 = vmatpush2.bf16.msra.mxu0 0
      %3238 = vmatprep.subr.bf16.mxu0 0
      %3239 = vmatpush2.bf16.msra.mxu0 0
      %3240 = vmatprep.subr.bf16.mxu0 0
      %3241 = vmatpush2.bf16.msra.mxu0 0
      %3242 = vmatprep.subr.bf16.mxu0 0
      %3243 = vmatpush2.bf16.msra.mxu0 0
      %3244 = vmatprep.subr.bf16.mxu0 0
      %3245 = vmatpush2.bf16.msra.mxu0 0
      %3246 = vmatprep.mubr.bf16.mxu0 0
      %3247 = vmatmul.mubr.bf16.gmra.mxu0 %v3209
      %v3248 = vpop.f32.mrf.mxu0
      %v3249 = vadd.f32 0.0, %v3248
      %v3250 = vpop.f32.mrf.mxu0
      %v3251 = vpop.f32.mrf.mxu0
      %v3252 = vadd.f32 0.0, %v3251
      %v3253 = vpop.f32.mrf.mxu0
      %3254 = vmatprep.mubr.bf16.mxu0 0
      %3255 = vmatmul.mubr.bf16.gmra.mxu0 %v3212
      %v3256 = vpop.f32.mrf.mxu0
      %v3257 = vadd.f32 0.0, %v3256
      %v3258 = vpop.f32.mrf.mxu0
      %v3259 = vpop.f32.mrf.mxu0
      %v3260 = vpop.f32.mrf.mxu0
      %3261 = vdwg.mxu0
      %v3262 = vadd.f32 %v3157, %v3249
      %v3263 = vadd.f32 %v3160, %v3252
      %v3264 = vadd.f32 %v3165, %v3257
      %v3265 = vld [vmem:[#allocation7 + $0x3] sm:$0xff]
      %v3266 = vld [vmem:[#allocation7 + $0xb] sm:$0xff]
      %v3267 = vld [vmem:[#allocation7 + $0x13] sm:$0xf]
      %v3268 = vpack.c.bf16 %v3266, %v3265
      %v3269 = vpack.c.bf16 %v3267, %v3267
      %s3270 = scalar_lea.vmem %s10, 96
      %v3271 = vld [vmem:[%s3270] sm:$0xf]
      %v3272 = vld [vmem:[%s3270 + $0x4] sm:$0xf]
      %v3273 = vld [vmem:[%s3270 + $0x8] sm:$0xf]
      %v3274 = vld [vmem:[%s3270 + $0xc] sm:$0xf]
      %v3275 = vld [vmem:[%s3270 + $0x10] sm:$0xf]
      %v3276 = vld [vmem:[%s3270 + $0x14] sm:$0xf]
      %v3277 = vld [vmem:[%s3270 + $0x18] sm:$0xf]
      %v3278 = vld [vmem:[%s3270 + $0x1c] sm:$0xf]
      %v3287 = vunpack.c.l.b16 %v3271
      %v3288 = vunpack.c.l.b16 %v3272
      %v3289 = vunpack.c.l.b16 %v3273
      %v3290 = vunpack.c.l.b16 %v3274
      %v3291 = vunpack.c.l.b16 %v3275
      %v3292 = vunpack.c.l.b16 %v3276
      %v3293 = vunpack.c.l.b16 %v3277
      %v3294 = vunpack.c.l.b16 %v3278
      %v3295 = vpack.c.b16 %v3288, %v3287
      %v3296 = vpack.c.b16 %v3290, %v3289
      %v3297 = vpack.c.b16 %v3292, %v3291
      %v3298 = vpack.c.b16 %v3294, %v3293
      %v3304 = vsel %vm460, %v3268, 0
      %v3307 = vsel %vm460, %v3269, 0
      %3309 = vmatprep.subr.bf16.mxu0 0
      %3310 = vmatpush1.bf16.msra.mxu0 0
      %3311 = vmatprep.subr.bf16.mxu0 0
      %3312 = vmatpush1.bf16.msra.mxu0 0
      %3313 = vmatprep.subr.bf16.mxu0 0
      %3314 = vmatpush1.bf16.msra.mxu0 0
      %3315 = vmatprep.subr.bf16.mxu0 0
      %3316 = vmatpush1.bf16.msra.mxu0 0
      %3317 = vmatprep.subr.bf16.mxu0 0
      %3318 = vmatpush1.bf16.msra.mxu0 %v3298
      %3319 = vmatprep.subr.bf16.mxu0 0
      %3320 = vmatpush1.bf16.msra.mxu0 %v3297
      %3321 = vmatprep.subr.bf16.mxu0 0
      %3322 = vmatpush1.bf16.msra.mxu0 %v3296
      %3323 = vmatprep.subr.bf16.mxu0 0
      %3324 = vmatpush1.bf16.msra.mxu0 %v3295
      %3325 = vmatprep.subr.bf16.mxu0 0
      %3326 = vmatpush2.bf16.msra.mxu0 0
      %3327 = vmatprep.subr.bf16.mxu0 0
      %3328 = vmatpush2.bf16.msra.mxu0 0
      %3329 = vmatprep.subr.bf16.mxu0 0
      %3330 = vmatpush2.bf16.msra.mxu0 0
      %3331 = vmatprep.subr.bf16.mxu0 0
      %3332 = vmatpush2.bf16.msra.mxu0 0
      %3333 = vmatprep.subr.bf16.mxu0 0
      %3334 = vmatpush2.bf16.msra.mxu0 0
      %3335 = vmatprep.subr.bf16.mxu0 0
      %3336 = vmatpush2.bf16.msra.mxu0 0
      %3337 = vmatprep.subr.bf16.mxu0 0
      %3338 = vmatpush2.bf16.msra.mxu0 0
      %3339 = vmatprep.subr.bf16.mxu0 0
      %3340 = vmatpush2.bf16.msra.mxu0 0
      %3341 = vmatprep.mubr.bf16.mxu0 0
      %3342 = vmatmul.mubr.bf16.gmra.mxu0 %v3304
      %v3343 = vpop.f32.mrf.mxu0
      %v3344 = vadd.f32 0.0, %v3343
      %v3345 = vpop.f32.mrf.mxu0
      %v3346 = vpop.f32.mrf.mxu0
      %v3347 = vadd.f32 0.0, %v3346
      %v3348 = vpop.f32.mrf.mxu0
      %3349 = vmatprep.mubr.bf16.mxu0 0
      %3350 = vmatmul.mubr.bf16.gmra.mxu0 %v3307
      %v3351 = vpop.f32.mrf.mxu0
      %v3352 = vadd.f32 0.0, %v3351
      %v3353 = vpop.f32.mrf.mxu0
      %v3354 = vpop.f32.mrf.mxu0
      %v3355 = vpop.f32.mrf.mxu0
      %3356 = vdwg.mxu0
      %v3357 = vadd.f32 %v3262, %v3344
      %v3358 = vadd.f32 %v3263, %v3347
      %v3359 = vadd.f32 %v3264, %v3352
      %v3360 = vld [vmem:[#allocation7 + $0x4] sm:$0xff]
      %v3361 = vld [vmem:[#allocation7 + $0xc] sm:$0xff]
      %v3362 = vld [vmem:[#allocation7 + $0x14] sm:$0xf]
      %v3363 = vpack.c.bf16 %v3361, %v3360
      %v3364 = vpack.c.bf16 %v3362, %v3362
      %s3365 = scalar_lea.vmem %s10, 128
      %v3366 = vld [vmem:[%s3365] sm:$0xf]
      %v3367 = vld [vmem:[%s3365 + $0x4] sm:$0xf]
      %v3368 = vld [vmem:[%s3365 + $0x8] sm:$0xf]
      %v3369 = vld [vmem:[%s3365 + $0xc] sm:$0xf]
      %v3370 = vld [vmem:[%s3365 + $0x10] sm:$0xf]
      %v3371 = vld [vmem:[%s3365 + $0x14] sm:$0xf]
      %v3372 = vld [vmem:[%s3365 + $0x18] sm:$0xf]
      %v3373 = vld [vmem:[%s3365 + $0x1c] sm:$0xf]
      %v3382 = vunpack.c.l.b16 %v3366
      %v3383 = vunpack.c.l.b16 %v3367
      %v3384 = vunpack.c.l.b16 %v3368
      %v3385 = vunpack.c.l.b16 %v3369
      %v3386 = vunpack.c.l.b16 %v3370
      %v3387 = vunpack.c.l.b16 %v3371
      %v3388 = vunpack.c.l.b16 %v3372
      %v3389 = vunpack.c.l.b16 %v3373
      %v3390 = vpack.c.b16 %v3383, %v3382
      %v3391 = vpack.c.b16 %v3385, %v3384
      %v3392 = vpack.c.b16 %v3387, %v3386
      %v3393 = vpack.c.b16 %v3389, %v3388
      %v3399 = vsel %vm460, %v3363, 0
      %v3402 = vsel %vm460, %v3364, 0
      %3404 = vmatprep.subr.bf16.mxu0 0
      %3405 = vmatpush1.bf16.msra.mxu0 0
      %3406 = vmatprep.subr.bf16.mxu0 0
      %3407 = vmatpush1.bf16.msra.mxu0 0
      %3408 = vmatprep.subr.bf16.mxu0 0
      %3409 = vmatpush1.bf16.msra.mxu0 0
      %3410 = vmatprep.subr.bf16.mxu0 0
      %3411 = vmatpush1.bf16.msra.mxu0 0
      %3412 = vmatprep.subr.bf16.mxu0 0
      %3413 = vmatpush1.bf16.msra.mxu0 %v3393
      %3414 = vmatprep.subr.bf16.mxu0 0
      %3415 = vmatpush1.bf16.msra.mxu0 %v3392
      %3416 = vmatprep.subr.bf16.mxu0 0
      %3417 = vmatpush1.bf16.msra.mxu0 %v3391
      %3418 = vmatprep.subr.bf16.mxu0 0
      %3419 = vmatpush1.bf16.msra.mxu0 %v3390
      %3420 = vmatprep.subr.bf16.mxu0 0
      %3421 = vmatpush2.bf16.msra.mxu0 0
      %3422 = vmatprep.subr.bf16.mxu0 0
      %3423 = vmatpush2.bf16.msra.mxu0 0
      %3424 = vmatprep.subr.bf16.mxu0 0
      %3425 = vmatpush2.bf16.msra.mxu0 0
      %3426 = vmatprep.subr.bf16.mxu0 0
      %3427 = vmatpush2.bf16.msra.mxu0 0
      %3428 = vmatprep.subr.bf16.mxu0 0
      %3429 = vmatpush2.bf16.msra.mxu0 0
      %3430 = vmatprep.subr.bf16.mxu0 0
      %3431 = vmatpush2.bf16.msra.mxu0 0
      %3432 = vmatprep.subr.bf16.mxu0 0
      %3433 = vmatpush2.bf16.msra.mxu0 0
      %3434 = vmatprep.subr.bf16.mxu0 0
      %3435 = vmatpush2.bf16.msra.mxu0 0
      %3436 = vmatprep.mubr.bf16.mxu0 0
      %3437 = vmatmul.mubr.bf16.gmra.mxu0 %v3399
      %v3438 = vpop.f32.mrf.mxu0
      %v3439 = vadd.f32 0.0, %v3438
      %v3440 = vpop.f32.mrf.mxu0
      %v3441 = vpop.f32.mrf.mxu0
      %v3442 = vadd.f32 0.0, %v3441
      %v3443 = vpop.f32.mrf.mxu0
      %3444 = vmatprep.mubr.bf16.mxu0 0
      %3445 = vmatmul.mubr.bf16.gmra.mxu0 %v3402
      %v3446 = vpop.f32.mrf.mxu0
      %v3447 = vadd.f32 0.0, %v3446
      %v3448 = vpop.f32.mrf.mxu0
      %v3449 = vpop.f32.mrf.mxu0
      %v3450 = vpop.f32.mrf.mxu0
      %3451 = vdwg.mxu0
      %v3452 = vadd.f32 %v3357, %v3439
      %v3453 = vadd.f32 %v3358, %v3442
      %v3454 = vadd.f32 %v3359, %v3447
      %v3455 = vadd.f32 %v2450, %v3452
      %v3456 = vld [vmem:[%s12] sm:$0x1]
      %v3458 = vlaneseq
      %v3459 = vshrl.u32 %v3458, 7
      %v3460 = vsub.s32 0, %v3459
      %v3461 = vrot.slane %v3456, %v3460
      %v3463 = vadd.f32 %v3455, %v3461
      %vm3466 = vcmask 1045504
      %v3467 = vrot.slane %v3453, 2
      %v3468 = vrot.slane %v3454, 2
      %v3469 = vsel %vm3466, %v3467, %v3468
      %v3472 = vadd.f32 %v2474, %v3469
      %v3473 = vadd.f32 %v2475, %v3468
      %v3474 = vadd.f32 %v3472, %v3461
      %v3475 = vadd.f32 %v3473, %v3461
      %v3478 = vrot.slane %v3474, 2
      %v3479 = vrot.slane %v3475, 2
      %v3480 = vsel %vm3466, %v3478, %v3479
      %3481 = vrot.lane.b32.xlu0 %v3480, 64
      %v3482 = vpop.permute.xlu0 %3481
      %v3484 = vsel %vm460, %v3463, %v3482
      %3485 = vst [vmem:[%s458] sm:$0xff] %v3484
      %p3486 = scmp.lt.s32.totalorder %s24, 1
      %s3487 = scalar_select %p3486, %s24, 1
      %s3488 = smul.addr %s3487, 8
      %s3489 = scalar_lea.vmem %s13, %s3488
      // Predicated region
      $region73: #{down_forward.1} parent=71 // pred_check
        %p3490 = pneg %p325
      $region74: #{down_forward.1} parent=71 // pred_check_branch
        %3492 = sbr.rel (%p3490) target = $region76
      $region75: #{down_forward.1} parent=71 // pred_region
        _
      $region76: #{down_forward.1} parent=71 // pred_fallthru
        _
    $region72: #{down_forward.1} parent=5 // pred_fallthru
      _
    %p3493 = scmp.le.s32.totalorder 2, %s19
    // Predicated region
    $region77: #{down_forward.1} parent=5 // pred_check
      %p3494 = pneg %p3493
    $region78: #{down_forward.1} parent=5 // pred_check_branch
      %3496 = sbr.rel (%p3494) target = $region80
    $region79: #{down_forward.1} parent=5 // pred_region
      %s3497 = ssub.s32 %s19, 2
      // Predicated region
      $region81: #{down_forward.1} parent=79 // pred_check
        %p3498 = pneg %p331
      $region82: #{down_forward.1} parent=79 // pred_check_branch
        %3500 = sbr.rel (%p3498) target = $region84
      $region83: #{down_forward.1} parent=79 // pred_region
        %p3501 = scmp.lt.s32.totalorder %s25, 1
        %s3502 = scalar_select %p3501, %s25, 1
        %s3503 = smul.addr %s3502, 8
        %s3504 = scalar_lea.vmem %s13, %s3503
      $region84: #{down_forward.1} parent=79 // pred_fallthru
        _
    $region80: #{down_forward.1} parent=5 // pred_fallthru
      _
  $region6: #{down_forward.1} parent=0 // loop_footer
    %s23 = sadd.s32 1, %s19
  $region7: #{down_forward.1} parent=0 // loop_footer_branch
    %18 = sbr.rel target = $region3
  $region8: #{down_forward.1} parent=0 // loop_exit
    _

</llo_original>
